<compile_context>
chip_gen: v5e
topology: v5e:2x2
jax: 0.10.0
libtpu: 0.0.40
codegen_flags: <defaults>
</compile_context>

<pallas_src>
import functools

import jax
import jax.numpy as jnp
from jax.experimental import pallas as pl
from jax.experimental.pallas import tpu as pltpu


def _round_up(x, m):
    return (x + m - 1) // m * m


def _cdiv(a, b):
    return -(-a // b)


def _pick_m_tiling(m, tm_max=512):
    """Balanced M split; >=2 blocks once M >= 256 so v7x megacore has work."""
    nblk = max(1, _cdiv(m, tm_max))
    if m >= 256:
        nblk = max(nblk, 2)
    tm = _round_up(_cdiv(m, nblk), 8)
    mp = _cdiv(m, tm) * tm
    return tm, mp


# ----------------------------------------------------------------------------
# Kernel 1: fused 3x3 stride-1 conv (im2col fused in-kernel) + BN shift
#           (+ residual) (+ ReLU)
# ----------------------------------------------------------------------------
def _conv3x3_kernel(*refs, taps, ls, relu, has_res):
    if has_res:
        x_ref, w_ref, shift_ref, res_ref, o_ref, acc_ref = refs
    else:
        x_ref, w_ref, shift_ref, o_ref, acc_ref = refs
        res_ref = None

    tm = o_ref.shape[1]
    # 8-aligned dynamic slab start; the 9 tap offsets below are static ints.
    base = pl.multiple_of(pl.program_id(1) * tm, 8)
    slab = x_ref[0, pl.ds(base, ls), :]                      # (ls, Cin) bf16

    acc_ref[...] = jnp.dot(slab[taps[0]:taps[0] + tm, :], w_ref[0],
                           preferred_element_type=jnp.float32)
    for t in range(1, len(taps)):
        off = taps[t]
        acc_ref[...] += jnp.dot(slab[off:off + tm, :], w_ref[t],
                                preferred_element_type=jnp.float32)

    y = acc_ref[...] + shift_ref[...]
    if has_res:
        y = y + res_ref[0].astype(jnp.float32)
    if relu:
        y = jnp.maximum(y, 0.0)
    o_ref[0] = y.astype(o_ref.dtype)


def conv3x3_fused(x, prep, cout, residual=None, relu=True, tm_max=512):
    """3x3 / stride-1 / pad-1 conv + BN(+res)(+ReLU), no HBM im2col.

    The padded image is flattened to rows of width Wp = Wo + 2 and held whole
    in VMEM; output position (h, w) lives at row h*Wp + w, and each of the 9
    kernel taps is a fixed row offset i*Wp + j, so every tap is a contiguous
    leading-dim slice -> nine (tm, Cin) x (Cin, Coutp) MXU dots accumulated in
    f32.  Columns w >= Wo of each output row are garbage and sliced off.
    """
    n, h, w, cin = x.shape
    ho, wo = h, w
    wp, hp = w + 2, h + 2
    m = ho * wp                                   # rows incl. garbage columns
    tm, mp = _pick_m_tiling(m, tm_max)
    halo = 2 * wp + 2                             # (kh-1)*Wp + (kw-1)
    ls = _round_up(tm + halo, 8)                  # slab rows per grid step
    rows_needed = (mp - tm) + ls
    extra = max(0, -(-(rows_needed - hp * wp) // wp))
    xp = jnp.pad(x.astype(jnp.bfloat16), ((0, 0), (1, 1 + extra), (1, 1), (0, 0)))
    rt = (hp + extra) * wp
    x_flat = xp.reshape(n, rt, cin)

    coutp = prep["w"].shape[-1]
    taps = tuple(i * wp + j for i in range(3) for j in range(3))

    in_specs = [
        pl.BlockSpec((1, rt, cin), lambda b, r: (b, 0, 0)),       # whole image
        pl.BlockSpec((9, cin, coutp), lambda b, r: (0, 0, 0)),    # all weights
        pl.BlockSpec((1, coutp), lambda b, r: (0, 0)),
    ]
    args = [x_flat, prep["w"], prep["shift"]]

    if residual is not None:
        res = jnp.pad(residual.astype(jnp.bfloat16),
                      ((0, 0), (0, 0), (0, wp - wo), (0, coutp - residual.shape[-1])))
        res = res.reshape(n, ho * wp, coutp)
        if mp > ho * wp:
            res = jnp.pad(res, ((0, 0), (0, mp - ho * wp), (0, 0)))
        in_specs.append(pl.BlockSpec((1, tm, coutp), lambda b, r: (b, r, 0)))
        args.append(res)

    kern = functools.partial(_conv3x3_kernel, taps=taps, ls=ls, relu=relu,
                             has_res=residual is not None)
    out = pl.pallas_call(
        kern,
        out_shape=jax.ShapeDtypeStruct((n, mp, coutp), jnp.bfloat16),
        grid=(n, mp // tm),
        in_specs=in_specs,
        out_specs=pl.BlockSpec((1, tm, coutp), lambda b, r: (b, r, 0)),
        scratch_shapes=[pltpu.VMEM((tm, coutp), jnp.float32)],
        compiler_params=pltpu.CompilerParams(
            dimension_semantics=("parallel", "parallel")),
    )(*args)

    out = out[:, :ho * wp, :].reshape(n, ho, wp, coutp)
    return out[:, :, :wo, :cout]


# ----------------------------------------------------------------------------
# Kernel 2: tiled GEMM (single K step) + BN shift (+ ReLU) for the strided /
#           7x7 / 1x1 convs
# ----------------------------------------------------------------------------
def _gemm_bias_kernel(x_ref, w_ref, shift_ref, o_ref, *, relu):
    y = jnp.dot(x_ref[...], w_ref[...], preferred_element_type=jnp.float32)
    y = y + shift_ref[...]
    if relu:
        y = jnp.maximum(y, 0.0)
    o_ref[...] = y.astype(o_ref.dtype)


def gemm_bias(x2d, w2d, shift, cout, relu, tm_max=512):
    m, k = x2d.shape
    _, np_ = w2d.shape
    tm, mp = _pick_m_tiling(m, tm_max)
    tn = 256 if np_ % 256 == 0 else 128           # 256-wide MXU fill when Cout >= 128

    x = x2d.astype(jnp.bfloat16)
    if mp > m:
        x = jnp.pad(x, ((0, mp - m), (0, 0)))

    out = pl.pallas_call(
        functools.partial(_gemm_bias_kernel, relu=relu),
        out_shape=jax.ShapeDtypeStruct((mp, np_), jnp.bfloat16),
        grid=(mp // tm, np_ // tn),
        in_specs=[
            pl.BlockSpec((tm, k), lambda i, j: (i, 0)),
            pl.BlockSpec((k, tn), lambda i, j: (0, j)),
            pl.BlockSpec((1, tn), lambda i, j: (0, j)),
        ],
        out_specs=pl.BlockSpec((tm, tn), lambda i, j: (i, j)),
        compiler_params=pltpu.CompilerParams(
            dimension_semantics=("parallel", "parallel")),
    )(x, w2d, shift)
    return out[:m, :cout]


def _im2col(x, kh, kw, stride, pad):
    """Single-concatenate im2col (patches built directly, no second pad copy)."""
    n, h, w, c = x.shape
    xp = jnp.pad(x, ((0, 0), (pad, pad), (pad, pad), (0, 0)))
    ho = (h + 2 * pad - kh) // stride + 1
    wo = (w + 2 * pad - kw) // stride + 1
    cols = []
    for i in range(kh):
        for j in range(kw):
            win = xp[:, i:i + (ho - 1) * stride + 1:stride,
                     j:j + (wo - 1) * stride + 1:stride, :]
            cols.append(win.reshape(n * ho * wo, c))
    return jnp.concatenate(cols, axis=1), (n, ho, wo)


def conv_gemm(x, prep, kh, kw, stride, pad, cout, relu):
    if kh == 1 and kw == 1:
        xs = x[:, ::stride, ::stride, :] if stride > 1 else x
        n, ho, wo, cin = xs.shape
        x2d = xs.reshape(n * ho * wo, cin)
    else:
        x2d, (n, ho, wo) = _im2col(x, kh, kw, stride, pad)
    y = gemm_bias(x2d, prep["w"], prep["shift"], cout=cout, relu=relu)
    return y.reshape(n, ho, wo, cout)


# ----------------------------------------------------------------------------
# Pooling / glue (cheap XLA ops inside the jit)
# ----------------------------------------------------------------------------
def maxpool2d(x, ksize=3, stride=2, pad=1):
    n, h, w, c = x.shape
    neg = float(jnp.finfo(x.dtype).min)
    xp = jnp.pad(x, ((0, 0), (pad, pad), (pad, pad), (0, 0)), constant_values=neg)
    ho = (h + 2 * pad - ksize) // stride + 1
    wo = (w + 2 * pad - ksize) // stride + 1
    out = None
    for i in range(ksize):
        for j in range(ksize):
            win = xp[:, i:i + (ho - 1) * stride + 1:stride,
                     j:j + (wo - 1) * stride + 1:stride, :]
            out = win if out is None else jnp.maximum(out, win)
    return out


# ----------------------------------------------------------------------------
# Backbone (PaDiMPlus.forward)
# ----------------------------------------------------------------------------
def basic_block(x, bp, stride, cout):
    identity = x
    if stride == 1:
        out = conv3x3_fused(x, bp["conv1"], cout=cout, relu=True)
    else:
        out = conv_gemm(x, bp["conv1"], 3, 3, stride, 1, cout=cout, relu=True)
    if bp["down"] is not None:
        identity = conv_gemm(x, bp["down"], 1, 1, stride, 0, cout=cout, relu=False)
    # conv2 + bn2 + residual add + relu, all fused inside the Pallas kernel
    out = conv3x3_fused(out, bp["conv2"], cout=cout, residual=identity, relu=True)
    return out


def _forward_impl(x_nchw, prep, base_width=8):
    c0, c1, c2 = base_width, 2 * base_width, 4 * base_width
    x = jnp.transpose(x_nchw, (0, 2, 3, 1)).astype(jnp.bfloat16)    # NHWC bf16
    x = conv_gemm(x, prep["conv1"], 7, 7, 2, 3, cout=c0, relu=True)
    x = maxpool2d(x, 3, 2, 1)

    x = basic_block(x, prep["layer1"][0], stride=1, cout=c0)
    x = basic_block(x, prep["layer1"][1], stride=1, cout=c0)
    f1 = x
    x = basic_block(x, prep["layer2"][0], stride=2, cout=c1)
    x = basic_block(x, prep["layer2"][1], stride=1, cout=c1)
    f2 = x
    x = basic_block(x, prep["layer3"][0], stride=2, cout=c2)
    x = basic_block(x, prep["layer3"][1], stride=1, cout=c2)
    f3 = x

    # F.interpolate(..., scale_factor=2**i, mode='nearest') == integer repeat.
    f2 = jnp.repeat(jnp.repeat(f2, 2, axis=1), 2, axis=2)
    f3 = jnp.repeat(jnp.repeat(f3, 4, axis=1), 4, axis=2)
    out = jnp.concatenate([f1, f2, f3], axis=-1)                    # torch.cat dim=1
    return jnp.transpose(out, (0, 3, 1, 2)).astype(jnp.float32)     # NCHW


padim_forward = jax.jit(_forward_impl, static_argnames=("base_width",))


# ----------------------------------------------------------------------------
# One-time parameter preprocessing (BN scale folded into bf16 weights,
# Cout padded to the 128-lane boundary, shift padded) -- hoisted out of jit.
# ----------------------------------------------------------------------------
def _prep_gemm(p):
    w, scale, shift = p
    kh, kw, cin, cout = w.shape
    coutp = _round_up(cout, 128)
    wf = (w * scale).reshape(kh * kw * cin, cout)
    wf = jnp.pad(wf, ((0, 0), (0, coutp - cout))).astype(jnp.bfloat16)
    sh = jnp.pad(shift, (0, coutp - cout)).reshape(1, coutp).astype(jnp.float32)
    return {"w": wf, "shift": sh}


def _prep_fused(p):
    w, scale, shift = p
    kh, kw, cin, cout = w.shape
    coutp = _round_up(cout, 128)
    wf = (w * scale).reshape(kh * kw, cin, cout)
    wf = jnp.pad(wf, ((0, 0), (0, 0), (0, coutp - cout))).astype(jnp.bfloat16)
    sh = jnp.pad(shift, (0, coutp - cout)).reshape(1, coutp).astype(jnp.float32)
    return {"w": wf, "shift": sh}


def prepare_params(params):
    def prep_block(bp, stride):
        p1, p2, pdown = bp
        return {
            "conv1": _prep_fused(p1) if stride == 1 else _prep_gemm(p1),
            "conv2": _prep_fused(p2),
            "down": _prep_gemm(pdown) if pdown is not None else None,
        }

    return {
        "conv1": _prep_gemm(params["conv1"]),
        "layer1": [prep_block(params["layer1"][0], 1), prep_block(params["layer1"][1], 1)],
        "layer2": [prep_block(params["layer2"][0], 2), prep_block(params["layer2"][1], 1)],
        "layer3": [prep_block(params["layer3"][0], 2), prep_block(params["layer3"][1], 1)],
    }


# ----------------------------------------------------------------------------
# Deterministic synthetic parameters (scaled-down resnet18 topology)
# ----------------------------------------------------------------------------
def _init_conv_bn(key, kh, kw, cin, cout):
    k1, k2, k3 = jax.random.split(key, 3)
    fan_in = kh * kw * cin
    w = jax.random.normal(k1, (kh, kw, cin, cout), jnp.float32) / jnp.sqrt(float(fan_in))
    gamma = 1.0 + 0.1 * jax.random.normal(k2, (cout,), jnp.float32)
    beta = 0.1 * jax.random.normal(k3, (cout,), jnp.float32)
    running_mean = jnp.zeros((cout,), jnp.float32)
    running_var = jnp.ones((cout,), jnp.float32)
    eps = 1e-5
    scale = gamma / jnp.sqrt(running_var + eps)        # BN folded to scale/shift
    shift = beta - running_mean * scale
    return (w, scale, shift)


def init_params(key, base_width=8, in_ch=3):
    keys = iter(jax.random.split(key, 64))
    c0, c1, c2 = base_width, 2 * base_width, 4 * base_width

    def block(cin, cout, stride):
        p1 = _init_conv_bn(next(keys), 3, 3, cin, cout)
        p2 = _init_conv_bn(next(keys), 3, 3, cout, cout)
        pdown = (_init_conv_bn(next(keys), 1, 1, cin, cout)
                 if (stride != 1 or cin != cout) else None)
        return (p1, p2, pdown)

    return {
        "conv1": _init_conv_bn(next(keys), 7, 7, in_ch, c0),
        "layer1": [block(c0, c0, 1), block(c0, c0, 1)],
        "layer2": [block(c0, c1, 2), block(c1, c1, 1)],
        "layer3": [block(c1, c2, 2), block(c2, c2, 1)],
    }


if __name__ == "__main__":
    key = jax.random.PRNGKey(0)
    kx, kp = jax.random.split(key)

    B, C, H, W = 2, 3, 32, 32
    x = jax.random.normal(kx, (B, C, H, W), jnp.float32)
    params = init_params(kp, base_width=8, in_ch=3)

    prep = prepare_params(params)          # one-time weight fold / pad / cast
    prep = jax.block_until_ready(prep)

    out = padim_forward(x, prep, base_width=8)
    out = jax.block_until_ready(out)

    # layer1/2/3 widths = 8/16/32 -> concat channels 56, spatial H/4 x W/4
    assert out.shape == (B, 8 + 16 + 32, H // 4, W // 4), out.shape
    assert out.dtype == jnp.float32
    assert bool(jnp.all(jnp.isfinite(out)))
    print("KERNEL_OK")
</pallas_src>

<mosaic_0001>
module attributes {stable_mosaic.version = 11 : i64} {
  func.func @_gemm_bias_kernel(%arg0: i32, %arg1: i32, %arg2: memref<256x147xbf16, #tpu.memory_space<vmem>>, %arg3: memref<147x128xbf16, #tpu.memory_space<vmem>>, %arg4: memref<1x128xf32, #tpu.memory_space<vmem>>, %arg5: memref<256x128xbf16, #tpu.memory_space<vmem>>) attributes {dimension_semantics = [#tpu.dimension_semantics<parallel>, #tpu.dimension_semantics<parallel>], iteration_bounds = array<i64: 2, 1>, scalar_prefetch = 0 : i64, scratch_operands = 0 : i64, tpu.core_type = #tpu.core_type<tc>, window_params = [{transform_indices = @transform_0, window_bounds = array<i64: 256, 147>}, {transform_indices = @transform_1, window_bounds = array<i64: 147, 128>}, {transform_indices = @transform_2, window_bounds = array<i64: 1, 128>}, {transform_indices = @transform_3, window_bounds = array<i64: 256, 128>}]} {
    %c0 = arith.constant 0 : index
    %c0_0 = arith.constant 0 : index
    %0 = vector.load %arg2[%c0, %c0_0] : memref<256x147xbf16, #tpu.memory_space<vmem>>, vector<256x147xbf16>
    %c0_1 = arith.constant 0 : index
    %c0_2 = arith.constant 0 : index
    %1 = vector.load %arg3[%c0_1, %c0_2] : memref<147x128xbf16, #tpu.memory_space<vmem>>, vector<147x128xbf16>
    %cst = arith.constant dense<0.000000e+00> : vector<256x128xf32>
    %2 = tpu.matmul %0, %1, %cst {dimension_numbers = #tpu.dot_dimension_numbers<[1], [0], [0], [1], [0, 0, 1, 1], [], []>} : vector<256x147xbf16>, vector<147x128xbf16>, vector<256x128xf32> -> vector<256x128xf32>
    %c0_3 = arith.constant 0 : index
    %c0_4 = arith.constant 0 : index
    %3 = vector.load %arg4[%c0_3, %c0_4] : memref<1x128xf32, #tpu.memory_space<vmem>>, vector<1x128xf32>
    %4 = vector.broadcast %3 : vector<1x128xf32> to vector<256x128xf32>
    %5 = arith.addf %2, %4 : vector<256x128xf32>
    %cst_5 = arith.constant 0.000000e+00 : f32
    %6 = vector.broadcast %cst_5 : f32 to vector<256x128xf32>
    %7 = arith.maximumf %5, %6 : vector<256x128xf32>
    %8 = arith.truncf %7 : vector<256x128xf32> to vector<256x128xbf16>
    %c0_6 = arith.constant 0 : index
    %c0_7 = arith.constant 0 : index
    %9 = vector.load %arg5[%c0_6, %c0_7] : memref<256x128xbf16, #tpu.memory_space<vmem>>, vector<256x128xbf16>
    tpu.vector_store %arg5[%c0_6, %c0_7], %8 {strides = array<i32>} : memref<256x128xbf16, #tpu.memory_space<vmem>>, vector<256x128xbf16>,
    return
  }
  func.func @transform_0(%arg0: i32, %arg1: i32) -> (i32, i32) {
    %c0_i32 = arith.constant 0 : i32
    %c0_i32_0 = arith.constant 0 : i32
    return %arg0, %c0_i32 : i32, i32
  }
  func.func @transform_1(%arg0: i32, %arg1: i32) -> (i32, i32) {
    %c0_i32 = arith.constant 0 : i32
    %c0_i32_0 = arith.constant 0 : i32
    return %c0_i32, %arg1 : i32, i32
  }
  func.func @transform_2(%arg0: i32, %arg1: i32) -> (i32, i32) {
    %c0_i32 = arith.constant 0 : i32
    %c0_i32_0 = arith.constant 0 : i32
    return %c0_i32, %arg1 : i32, i32
  }
  func.func @transform_3(%arg0: i32, %arg1: i32) -> (i32, i32) {
    %c0_i32 = arith.constant 0 : i32
    return %arg0, %arg1 : i32, i32
  }
}

module attributes {stable_mosaic.version = 11 : i64} {
  func.func @_conv3x3_kernel(%arg0: i32, %arg1: i32, %arg2: memref<1x110x8xbf16, #tpu.memory_space<vmem>>, %arg3: memref<9x8x128xbf16, #tpu.memory_space<vmem>>, %arg4: memref<1x128xf32, #tpu.memory_space<vmem>>, %arg5: memref<1x80x128xbf16, #tpu.memory_space<vmem>>, %arg6: memref<80x128xf32, #tpu.memory_space<vmem>>) attributes {dimension_semantics = [#tpu.dimension_semantics<parallel>, #tpu.dimension_semantics<parallel>], iteration_bounds = array<i64: 2, 1>, scalar_prefetch = 0 : i64, scratch_operands = 1 : i64, tpu.core_type = #tpu.core_type<tc>, window_params = [{transform_indices = @transform_0, window_bounds = array<i64: 1, 110, 8>}, {pipeline_mode = #tpu.pipeline_mode<synchronous>, transform_indices = @transform_1, window_bounds = array<i64: 9, 8, 128>}, {pipeline_mode = #tpu.pipeline_mode<synchronous>, transform_indices = @transform_2, window_bounds = array<i64: 1, 128>}, {transform_indices = @transform_3, window_bounds = array<i64: 1, 80, 128>}]} {
    %c80_i32 = arith.constant 80 : i32
    %0 = arith.muli %arg1, %c80_i32 : i32
    %1 = tpu.assume_multiple %0, 8 : i32
    %c0 = arith.constant 0 : index
    %2 = arith.index_cast %1 : i32 to index
    %c0_0 = arith.constant 0 : index
    %3 = vector.load %arg2[%c0, %2, %c0_0] : memref<1x110x8xbf16, #tpu.memory_space<vmem>>, vector<1x104x8xbf16>
    %4 = vector.shape_cast %3 : vector<1x104x8xbf16> to vector<104x8xbf16>
    %5 = vector.extract_strided_slice %4 {offsets = [0, 0], sizes = [80, 8], strides = [1, 1]} : vector<104x8xbf16> to vector<80x8xbf16>
    %c0_1 = arith.constant 0 : index
    %c0_2 = arith.constant 0 : index
    %c0_3 = arith.constant 0 : index
    %6 = vector.load %arg3[%c0_1, %c0_2, %c0_3] : memref<9x8x128xbf16, #tpu.memory_space<vmem>>, vector<1x8x128xbf16>
    %7 = vector.shape_cast %6 : vector<1x8x128xbf16> to vector<8x128xbf16>
    %cst = arith.constant dense<0.000000e+00> : vector<80x128xf32>
    %8 = tpu.matmul %5, %7, %cst {dimension_numbers = #tpu.dot_dimension_numbers<[1], [0], [0], [1], [0, 0, 1, 1], [], []>} : vector<80x8xbf16>, vector<8x128xbf16>, vector<80x128xf32> -> vector<80x128xf32>
    %c0_4 = arith.constant 0 : index
    %c0_5 = arith.constant 0 : index
    %9 = vector.load %arg6[%c0_4, %c0_5] : memref<80x128xf32, #tpu.memory_space<vmem>>, vector<80x128xf32>
    tpu.vector_store %arg6[%c0_4, %c0_5], %8 {strides = array<i32>} : memref<80x128xf32, #tpu.memory_space<vmem>>, vector<80x128xf32>,
    %c0_6 = arith.constant 0 : index
    %c0_7 = arith.constant 0 : index
    %10 = vector.load %arg6[%c0_6, %c0_7] : memref<80x128xf32, #tpu.memory_space<vmem>>, vector<80x128xf32>
    %11 = vector.extract_strided_slice %4 {offsets = [1, 0], sizes = [80, 8], strides = [1, 1]} : vector<104x8xbf16> to vector<80x8xbf16>
    %c1 = arith.constant 1 : index
    %c0_8 = arith.constant 0 : index
    %c0_9 = arith.constant 0 : index
    %12 = vector.load %arg3[%c1, %c0_8, %c0_9] : memref<9x8x128xbf16, #tpu.memory_space<vmem>>, vector<1x8x128xbf16>
    %13 = vector.shape_cast %12 : vector<1x8x128xbf16> to vector<8x128xbf16>
    %cst_10 = arith.constant dense<0.000000e+00> : vector<80x128xf32>
    %14 = tpu.matmul %11, %13, %cst_10 {dimension_numbers = #tpu.dot_dimension_numbers<[1], [0], [0], [1], [0, 0, 1, 1], [], []>} : vector<80x8xbf16>, vector<8x128xbf16>, vector<80x128xf32> -> vector<80x128xf32>
    %15 = arith.addf %10, %14 : vector<80x128xf32>
    %c0_11 = arith.constant 0 : index
    %c0_12 = arith.constant 0 : index
    %16 = vector.load %arg6[%c0_11, %c0_12] : memref<80x128xf32, #tpu.memory_space<vmem>>, vector<80x128xf32>
    tpu.vector_store %arg6[%c0_11, %c0_12], %15 {strides = array<i32>} : memref<80x128xf32, #tpu.memory_space<vmem>>, vector<80x128xf32>,
    %c0_13 = arith.constant 0 : index
    %c0_14 = arith.constant 0 : index
    %17 = vector.load %arg6[%c0_13, %c0_14] : memref<80x128xf32, #tpu.memory_space<vmem>>, vector<80x128xf32>
    %18 = vector.extract_strided_slice %4 {offsets = [2, 0], sizes = [80, 8], strides = [1, 1]} : vector<104x8xbf16> to vector<80x8xbf16>
    %c2 = arith.constant 2 : index
    %c0_15 = arith.constant 0 : index
    %c0_16 = arith.constant 0 : index
    %19 = vector.load %arg3[%c2, %c0_15, %c0_16] : memref<9x8x128xbf16, #tpu.memory_space<vmem>>, vector<1x8x128xbf16>
    %20 = vector.shape_cast %19 : vector<1x8x128xbf16> to vector<8x128xbf16>
    %cst_17 = arith.constant dense<0.000000e+00> : vector<80x128xf32>
    %21 = tpu.matmul %18, %20, %cst_17 {dimension_numbers = #tpu.dot_dimension_numbers<[1], [0], [0], [1], [0, 0, 1, 1], [], []>} : vector<80x8xbf16>, vector<8x128xbf16>, vector<80x128xf32> -> vector<80x128xf32>
    %22 = arith.addf %17, %21 : vector<80x128xf32>
    %c0_18 = arith.constant 0 : index
    %c0_19 = arith.constant 0 : index
    %23 = vector.load %arg6[%c0_18, %c0_19] : memref<80x128xf32, #tpu.memory_space<vmem>>, vector<80x128xf32>
    tpu.vector_store %arg6[%c0_18, %c0_19], %22 {strides = array<i32>} : memref<80x128xf32, #tpu.memory_space<vmem>>, vector<80x128xf32>,
    %c0_20 = arith.constant 0 : index
    %c0_21 = arith.constant 0 : index
    %24 = vector.load %arg6[%c0_20, %c0_21] : memref<80x128xf32, #tpu.memory_space<vmem>>, vector<80x128xf32>
    %25 = vector.extract_strided_slice %4 {offsets = [10, 0], sizes = [80, 8], strides = [1, 1]} : vector<104x8xbf16> to vector<80x8xbf16>
    %c3 = arith.constant 3 : index
    %c0_22 = arith.constant 0 : index
    %c0_23 = arith.constant 0 : index
    %26 = vector.load %arg3[%c3, %c0_22, %c0_23] : memref<9x8x128xbf16, #tpu.memory_space<vmem>>, vector<1x8x128xbf16>
    %27 = vector.shape_cast %26 : vector<1x8x128xbf16> to vector<8x128xbf16>
    %cst_24 = arith.constant dense<0.000000e+00> : vector<80x128xf32>
    %28 = tpu.matmul %25, %27, %cst_24 {dimension_numbers = #tpu.dot_dimension_numbers<[1], [0], [0], [1], [0, 0, 1, 1], [], []>} : vector<80x8xbf16>, vector<8x128xbf16>, vector<80x128xf32> -> vector<80x128xf32>
    %29 = arith.addf %24, %28 : vector<80x128xf32>
    %c0_25 = arith.constant 0 : index
    %c0_26 = arith.constant 0 : index
    %30 = vector.load %arg6[%c0_25, %c0_26] : memref<80x128xf32, #tpu.memory_space<vmem>>, vector<80x128xf32>
    tpu.vector_store %arg6[%c0_25, %c0_26], %29 {strides = array<i32>} : memref<80x128xf32, #tpu.memory_space<vmem>>, vector<80x128xf32>,
    %c0_27 = arith.constant 0 : index
    %c0_28 = arith.constant 0 : index
    %31 = vector.load %arg6[%c0_27, %c0_28] : memref<80x128xf32, #tpu.memory_space<vmem>>, vector<80x128xf32>
    %32 = vector.extract_strided_slice %4 {offsets = [11, 0], sizes = [80, 8], strides = [1, 1]} : vector<104x8xbf16> to vector<80x8xbf16>
    %c4 = arith.constant 4 : index
    %c0_29 = arith.constant 0 : index
    %c0_30 = arith.constant 0 : index
    %33 = vector.load %arg3[%c4, %c0_29, %c0_30] : memref<9x8x128xbf16, #tpu.memory_space<vmem>>, vector<1x8x128xbf16>
    %34 = vector.shape_cast %33 : vector<1x8x128xbf16> to vector<8x128xbf16>
    %cst_31 = arith.constant dense<0.000000e+00> : vector<80x128xf32>
    %35 = tpu.matmul %32, %34, %cst_31 {dimension_numbers = #tpu.dot_dimension_numbers<[1], [0], [0], [1], [0, 0, 1, 1], [], []>} : vector<80x8xbf16>, vector<8x128xbf16>, vector<80x128xf32> -> vector<80x128xf32>
    %36 = arith.addf %31, %35 : vector<80x128xf32>
    %c0_32 = arith.constant 0 : index
    %c0_33 = arith.constant 0 : index
    %37 = vector.load %arg6[%c0_32, %c0_33] : memref<80x128xf32, #tpu.memory_space<vmem>>, vector<80x128xf32>
    tpu.vector_store %arg6[%c0_32, %c0_33], %36 {strides = array<i32>} : memref<80x128xf32, #tpu.memory_space<vmem>>, vector<80x128xf32>,
    %c0_34 = arith.constant 0 : index
    %c0_35 = arith.constant 0 : index
    %38 = vector.load %arg6[%c0_34, %c0_35] : memref<80x128xf32, #tpu.memory_space<vmem>>, vector<80x128xf32>
    %39 = vector.extract_strided_slice %4 {offsets = [12, 0], sizes = [80, 8], strides = [1, 1]} : vector<104x8xbf16> to vector<80x8xbf16>
    %c5 = arith.constant 5 : index
    %c0_36 = arith.constant 0 : index
    %c0_37 = arith.constant 0 : index
    %40 = vector.load %arg3[%c5, %c0_36, %c0_37] : memref<9x8x128xbf16, #tpu.memory_space<vmem>>, vector<1x8x128xbf16>
    %41 = vector.shape_cast %40 : vector<1x8x128xbf16> to vector<8x128xbf16>
    %cst_38 = arith.constant dense<0.000000e+00> : vector<80x128xf32>
    %42 = tpu.matmul %39, %41, %cst_38 {dimension_numbers = #tpu.dot_dimension_numbers<[1], [0], [0], [1], [0, 0, 1, 1], [], []>} : vector<80x8xbf16>, vector<8x128xbf16>, vector<80x128xf32> -> vector<80x128xf32>
    %43 = arith.addf %38, %42 : vector<80x128xf32>
    %c0_39 = arith.constant 0 : index
    %c0_40 = arith.constant 0 : index
    %44 = vector.load %arg6[%c0_39, %c0_40] : memref<80x128xf32, #tpu.memory_space<vmem>>, vector<80x128xf32>
    tpu.vector_store %arg6[%c0_39, %c0_40], %43 {strides = array<i32>} : memref<80x128xf32, #tpu.memory_space<vmem>>, vector<80x128xf32>,
    %c0_41 = arith.constant 0 : index
    %c0_42 = arith.constant 0 : index
    %45 = vector.load %arg6[%c0_41, %c0_42] : memref<80x128xf32, #tpu.memory_space<vmem>>, vector<80x128xf32>
    %46 = vector.extract_strided_slice %4 {offsets = [20, 0], sizes = [80, 8], strides = [1, 1]} : vector<104x8xbf16> to vector<80x8xbf16>
    %c6 = arith.constant 6 : index
    %c0_43 = arith.constant 0 : index
    %c0_44 = arith.constant 0 : index
    %47 = vector.load %arg3[%c6, %c0_43, %c0_44] : memref<9x8x128xbf16, #tpu.memory_space<vmem>>, vector<1x8x128xbf16>
    %48 = vector.shape_cast %47 : vector<1x8x128xbf16> to vector<8x128xbf16>
    %cst_45 = arith.constant dense<0.000000e+00> : vector<80x128xf32>
    %49 = tpu.matmul %46, %48, %cst_45 {dimension_numbers = #tpu.dot_dimension_numbers<[1], [0], [0], [1], [0, 0, 1, 1], [], []>} : vector<80x8xbf16>, vector<8x128xbf16>, vector<80x128xf32> -> vector<80x128xf32>
    %50 = arith.addf %45, %49 : vector<80x128xf32>
    %c0_46 = arith.constant 0 : index
    %c0_47 = arith.constant 0 : index
    %51 = vector.load %arg6[%c0_46, %c0_47] : memref<80x128xf32, #tpu.memory_space<vmem>>, vector<80x128xf32>
    tpu.vector_store %arg6[%c0_46, %c0_47], %50 {strides = array<i32>} : memref<80x128xf32, #tpu.memory_space<vmem>>, vector<80x128xf32>,
    %c0_48 = arith.constant 0 : index
    %c0_49 = arith.constant 0 : index
    %52 = vector.load %arg6[%c0_48, %c0_49] : memref<80x128xf32, #tpu.memory_space<vmem>>, vector<80x128xf32>
    %53 = vector.extract_strided_slice %4 {offsets = [21, 0], sizes = [80, 8], strides = [1, 1]} : vector<104x8xbf16> to vector<80x8xbf16>
    %c7 = arith.constant 7 : index
    %c0_50 = arith.constant 0 : index
    %c0_51 = arith.constant 0 : index
    %54 = vector.load %arg3[%c7, %c0_50, %c0_51] : memref<9x8x128xbf16, #tpu.memory_space<vmem>>, vector<1x8x128xbf16>
    %55 = vector.shape_cast %54 : vector<1x8x128xbf16> to vector<8x128xbf16>
    %cst_52 = arith.constant dense<0.000000e+00> : vector<80x128xf32>
    %56 = tpu.matmul %53, %55, %cst_52 {dimension_numbers = #tpu.dot_dimension_numbers<[1], [0], [0], [1], [0, 0, 1, 1], [], []>} : vector<80x8xbf16>, vector<8x128xbf16>, vector<80x128xf32> -> vector<80x128xf32>
    %57 = arith.addf %52, %56 : vector<80x128xf32>
    %c0_53 = arith.constant 0 : index
    %c0_54 = arith.constant 0 : index
    %58 = vector.load %arg6[%c0_53, %c0_54] : memref<80x128xf32, #tpu.memory_space<vmem>>, vector<80x128xf32>
    tpu.vector_store %arg6[%c0_53, %c0_54], %57 {strides = array<i32>} : memref<80x128xf32, #tpu.memory_space<vmem>>, vector<80x128xf32>,
    %c0_55 = arith.constant 0 : index
    %c0_56 = arith.constant 0 : index
    %59 = vector.load %arg6[%c0_55, %c0_56] : memref<80x128xf32, #tpu.memory_space<vmem>>, vector<80x128xf32>
    %60 = vector.extract_strided_slice %4 {offsets = [22, 0], sizes = [80, 8], strides = [1, 1]} : vector<104x8xbf16> to vector<80x8xbf16>
    %c8 = arith.constant 8 : index
    %c0_57 = arith.constant 0 : index
    %c0_58 = arith.constant 0 : index
    %61 = vector.load %arg3[%c8, %c0_57, %c0_58] : memref<9x8x128xbf16, #tpu.memory_space<vmem>>, vector<1x8x128xbf16>
    %62 = vector.shape_cast %61 : vector<1x8x128xbf16> to vector<8x128xbf16>
    %cst_59 = arith.constant dense<0.000000e+00> : vector<80x128xf32>
    %63 = tpu.matmul %60, %62, %cst_59 {dimension_numbers = #tpu.dot_dimension_numbers<[1], [0], [0], [1], [0, 0, 1, 1], [], []>} : vector<80x8xbf16>, vector<8x128xbf16>, vector<80x128xf32> -> vector<80x128xf32>
    %64 = arith.addf %59, %63 : vector<80x128xf32>
    %c0_60 = arith.constant 0 : index
    %c0_61 = arith.constant 0 : index
    %65 = vector.load %arg6[%c0_60, %c0_61] : memref<80x128xf32, #tpu.memory_space<vmem>>, vector<80x128xf32>
    tpu.vector_store %arg6[%c0_60, %c0_61], %64 {strides = array<i32>} : memref<80x128xf32, #tpu.memory_space<vmem>>, vector<80x128xf32>,
    %c0_62 = arith.constant 0 : index
    %c0_63 = arith.constant 0 : index
    %66 = vector.load %arg6[%c0_62, %c0_63] : memref<80x128xf32, #tpu.memory_space<vmem>>, vector<80x128xf32>
    %c0_64 = arith.constant 0 : index
    %c0_65 = arith.constant 0 : index
    %67 = vector.load %arg4[%c0_64, %c0_65] : memref<1x128xf32, #tpu.memory_space<vmem>>, vector<1x128xf32>
    %68 = vector.broadcast %67 : vector<1x128xf32> to vector<80x128xf32>
    %69 = arith.addf %66, %68 : vector<80x128xf32>
    %cst_66 = arith.constant 0.000000e+00 : f32
    %70 = vector.broadcast %cst_66 : f32 to vector<80x128xf32>
    %71 = arith.maximumf %69, %70 : vector<80x128xf32>
    %72 = arith.truncf %71 : vector<80x128xf32> to vector<80x128xbf16>
    %c0_67 = arith.constant 0 : index
    %c0_68 = arith.constant 0 : index
    %c0_69 = arith.constant 0 : index
    %73 = vector.load %arg5[%c0_67, %c0_68, %c0_69] : memref<1x80x128xbf16, #tpu.memory_space<vmem>>, vector<1x80x128xbf16>
    %74 = vector.shape_cast %73 : vector<1x80x128xbf16> to vector<80x128xbf16>
    %75 = vector.shape_cast %72 : vector<80x128xbf16> to vector<1x80x128xbf16>
    tpu.vector_store %arg5[%c0_67, %c0_68, %c0_69], %75 {strides = array<i32>} : memref<1x80x128xbf16, #tpu.memory_space<vmem>>, vector<1x80x128xbf16>,
    return
  }
  func.func @transform_0(%arg0: i32, %arg1: i32) -> (i32, i32, i32) {
    %c0_i32 = arith.constant 0 : i32
    %c0_i32_0 = arith.constant 0 : i32
    %c0_i32_1 = arith.constant 0 : i32
    return %arg0, %c0_i32, %c0_i32_0 : i32, i32, i32
  }
  func.func @transform_1(%arg0: i32, %arg1: i32) -> (i32, i32, i32) {
    %c0_i32 = arith.constant 0 : i32
    %c0_i32_0 = arith.constant 0 : i32
    %c0_i32_1 = arith.constant 0 : i32
    %c0_i32_2 = arith.constant 0 : i32
    return %c0_i32, %c0_i32_0, %c0_i32_1 : i32, i32, i32
  }
  func.func @transform_2(%arg0: i32, %arg1: i32) -> (i32, i32) {
    %c0_i32 = arith.constant 0 : i32
    %c0_i32_0 = arith.constant 0 : i32
    %c0_i32_1 = arith.constant 0 : i32
    return %c0_i32, %c0_i32_0 : i32, i32
  }
  func.func @transform_3(%arg0: i32, %arg1: i32) -> (i32, i32, i32) {
    %c0_i32 = arith.constant 0 : i32
    %c0_i32_0 = arith.constant 0 : i32
    return %arg0, %arg1, %c0_i32 : i32, i32, i32
  }
}

module attributes {stable_mosaic.version = 11 : i64} {
  func.func @_conv3x3_kernel(%arg0: i32, %arg1: i32, %arg2: memref<1x110x8xbf16, #tpu.memory_space<vmem>>, %arg3: memref<9x8x128xbf16, #tpu.memory_space<vmem>>, %arg4: memref<1x128xf32, #tpu.memory_space<vmem>>, %arg5: memref<1x80x128xbf16, #tpu.memory_space<vmem>>, %arg6: memref<1x80x128xbf16, #tpu.memory_space<vmem>>, %arg7: memref<80x128xf32, #tpu.memory_space<vmem>>) attributes {dimension_semantics = [#tpu.dimension_semantics<parallel>, #tpu.dimension_semantics<parallel>], iteration_bounds = array<i64: 2, 1>, scalar_prefetch = 0 : i64, scratch_operands = 1 : i64, tpu.core_type = #tpu.core_type<tc>, window_params = [{transform_indices = @transform_0, window_bounds = array<i64: 1, 110, 8>}, {pipeline_mode = #tpu.pipeline_mode<synchronous>, transform_indices = @transform_1, window_bounds = array<i64: 9, 8, 128>}, {pipeline_mode = #tpu.pipeline_mode<synchronous>, transform_indices = @transform_2, window_bounds = array<i64: 1, 128>}, {transform_indices = @transform_3, window_bounds = array<i64: 1, 80, 128>}, {transform_indices = @transform_4, window_bounds = array<i64: 1, 80, 128>}]} {
    %c80_i32 = arith.constant 80 : i32
    %0 = arith.muli %arg1, %c80_i32 : i32
    %1 = tpu.assume_multiple %0, 8 : i32
    %c0 = arith.constant 0 : index
    %2 = arith.index_cast %1 : i32 to index
    %c0_0 = arith.constant 0 : index
    %3 = vector.load %arg2[%c0, %2, %c0_0] : memref<1x110x8xbf16, #tpu.memory_space<vmem>>, vector<1x104x8xbf16>
    %4 = vector.shape_cast %3 : vector<1x104x8xbf16> to vector<104x8xbf16>
    %5 = vector.extract_strided_slice %4 {offsets = [0, 0], sizes = [80, 8], strides = [1, 1]} : vector<104x8xbf16> to vector<80x8xbf16>
    %c0_1 = arith.constant 0 : index
    %c0_2 = arith.constant 0 : index
    %c0_3 = arith.constant 0 : index
    %6 = vector.load %arg3[%c0_1, %c0_2, %c0_3] : memref<9x8x128xbf16, #tpu.memory_space<vmem>>, vector<1x8x128xbf16>
    %7 = vector.shape_cast %6 : vector<1x8x128xbf16> to vector<8x128xbf16>
    %cst = arith.constant dense<0.000000e+00> : vector<80x128xf32>
    %8 = tpu.matmul %5, %7, %cst {dimension_numbers = #tpu.dot_dimension_numbers<[1], [0], [0], [1], [0, 0, 1, 1], [], []>} : vector<80x8xbf16>, vector<8x128xbf16>, vector<80x128xf32> -> vector<80x128xf32>
    %c0_4 = arith.constant 0 : index
    %c0_5 = arith.constant 0 : index
    %9 = vector.load %arg7[%c0_4, %c0_5] : memref<80x128xf32, #tpu.memory_space<vmem>>, vector<80x128xf32>
    tpu.vector_store %arg7[%c0_4, %c0_5], %8 {strides = array<i32>} : memref<80x128xf32, #tpu.memory_space<vmem>>, vector<80x128xf32>,
    %c0_6 = arith.constant 0 : index
    %c0_7 = arith.constant 0 : index
    %10 = vector.load %arg7[%c0_6, %c0_7] : memref<80x128xf32, #tpu.memory_space<vmem>>, vector<80x128xf32>
    %11 = vector.extract_strided_slice %4 {offsets = [1, 0], sizes = [80, 8], strides = [1, 1]} : vector<104x8xbf16> to vector<80x8xbf16>
    %c1 = arith.constant 1 : index
    %c0_8 = arith.constant 0 : index
    %c0_9 = arith.constant 0 : index
    %12 = vector.load %arg3[%c1, %c0_8, %c0_9] : memref<9x8x128xbf16, #tpu.memory_space<vmem>>, vector<1x8x128xbf16>
    %13 = vector.shape_cast %12 : vector<1x8x128xbf16> to vector<8x128xbf16>
    %cst_10 = arith.constant dense<0.000000e+00> : vector<80x128xf32>
    %14 = tpu.matmul %11, %13, %cst_10 {dimension_numbers = #tpu.dot_dimension_numbers<[1], [0], [0], [1], [0, 0, 1, 1], [], []>} : vector<80x8xbf16>, vector<8x128xbf16>, vector<80x128xf32> -> vector<80x128xf32>
    %15 = arith.addf %10, %14 : vector<80x128xf32>
    %c0_11 = arith.constant 0 : index
    %c0_12 = arith.constant 0 : index
    %16 = vector.load %arg7[%c0_11, %c0_12] : memref<80x128xf32, #tpu.memory_space<vmem>>, vector<80x128xf32>
    tpu.vector_store %arg7[%c0_11, %c0_12], %15 {strides = array<i32>} : memref<80x128xf32, #tpu.memory_space<vmem>>, vector<80x128xf32>,
    %c0_13 = arith.constant 0 : index
    %c0_14 = arith.constant 0 : index
    %17 = vector.load %arg7[%c0_13, %c0_14] : memref<80x128xf32, #tpu.memory_space<vmem>>, vector<80x128xf32>
    %18 = vector.extract_strided_slice %4 {offsets = [2, 0], sizes = [80, 8], strides = [1, 1]} : vector<104x8xbf16> to vector<80x8xbf16>
    %c2 = arith.constant 2 : index
    %c0_15 = arith.constant 0 : index
    %c0_16 = arith.constant 0 : index
    %19 = vector.load %arg3[%c2, %c0_15, %c0_16] : memref<9x8x128xbf16, #tpu.memory_space<vmem>>, vector<1x8x128xbf16>
    %20 = vector.shape_cast %19 : vector<1x8x128xbf16> to vector<8x128xbf16>
    %cst_17 = arith.constant dense<0.000000e+00> : vector<80x128xf32>
    %21 = tpu.matmul %18, %20, %cst_17 {dimension_numbers = #tpu.dot_dimension_numbers<[1], [0], [0], [1], [0, 0, 1, 1], [], []>} : vector<80x8xbf16>, vector<8x128xbf16>, vector<80x128xf32> -> vector<80x128xf32>
    %22 = arith.addf %17, %21 : vector<80x128xf32>
    %c0_18 = arith.constant 0 : index
    %c0_19 = arith.constant 0 : index
    %23 = vector.load %arg7[%c0_18, %c0_19] : memref<80x128xf32, #tpu.memory_space<vmem>>, vector<80x128xf32>
    tpu.vector_store %arg7[%c0_18, %c0_19], %22 {strides = array<i32>} : memref<80x128xf32, #tpu.memory_space<vmem>>, vector<80x128xf32>,
    %c0_20 = arith.constant 0 : index
    %c0_21 = arith.constant 0 : index
    %24 = vector.load %arg7[%c0_20, %c0_21] : memref<80x128xf32, #tpu.memory_space<vmem>>, vector<80x128xf32>
    %25 = vector.extract_strided_slice %4 {offsets = [10, 0], sizes = [80, 8], strides = [1, 1]} : vector<104x8xbf16> to vector<80x8xbf16>
    %c3 = arith.constant 3 : index
    %c0_22 = arith.constant 0 : index
    %c0_23 = arith.constant 0 : index
    %26 = vector.load %arg3[%c3, %c0_22, %c0_23] : memref<9x8x128xbf16, #tpu.memory_space<vmem>>, vector<1x8x128xbf16>
    %27 = vector.shape_cast %26 : vector<1x8x128xbf16> to vector<8x128xbf16>
    %cst_24 = arith.constant dense<0.000000e+00> : vector<80x128xf32>
    %28 = tpu.matmul %25, %27, %cst_24 {dimension_numbers = #tpu.dot_dimension_numbers<[1], [0], [0], [1], [0, 0, 1, 1], [], []>} : vector<80x8xbf16>, vector<8x128xbf16>, vector<80x128xf32> -> vector<80x128xf32>
    %29 = arith.addf %24, %28 : vector<80x128xf32>
    %c0_25 = arith.constant 0 : index
    %c0_26 = arith.constant 0 : index
    %30 = vector.load %arg7[%c0_25, %c0_26] : memref<80x128xf32, #tpu.memory_space<vmem>>, vector<80x128xf32>
    tpu.vector_store %arg7[%c0_25, %c0_26], %29 {strides = array<i32>} : memref<80x128xf32, #tpu.memory_space<vmem>>, vector<80x128xf32>,
    %c0_27 = arith.constant 0 : index
    %c0_28 = arith.constant 0 : index
    %31 = vector.load %arg7[%c0_27, %c0_28] : memref<80x128xf32, #tpu.memory_space<vmem>>, vector<80x128xf32>
    %32 = vector.extract_strided_slice %4 {offsets = [11, 0], sizes = [80, 8], strides = [1, 1]} : vector<104x8xbf16> to vector<80x8xbf16>
    %c4 = arith.constant 4 : index
    %c0_29 = arith.constant 0 : index
    %c0_30 = arith.constant 0 : index
    %33 = vector.load %arg3[%c4, %c0_29, %c0_30] : memref<9x8x128xbf16, #tpu.memory_space<vmem>>, vector<1x8x128xbf16>
    %34 = vector.shape_cast %33 : vector<1x8x128xbf16> to vector<8x128xbf16>
    %cst_31 = arith.constant dense<0.000000e+00> : vector<80x128xf32>
    %35 = tpu.matmul %32, %34, %cst_31 {dimension_numbers = #tpu.dot_dimension_numbers<[1], [0], [0], [1], [0, 0, 1, 1], [], []>} : vector<80x8xbf16>, vector<8x128xbf16>, vector<80x128xf32> -> vector<80x128xf32>
    %36 = arith.addf %31, %35 : vector<80x128xf32>
    %c0_32 = arith.constant 0 : index
    %c0_33 = arith.constant 0 : index
    %37 = vector.load %arg7[%c0_32, %c0_33] : memref<80x128xf32, #tpu.memory_space<vmem>>, vector<80x128xf32>
    tpu.vector_store %arg7[%c0_32, %c0_33], %36 {strides = array<i32>} : memref<80x128xf32, #tpu.memory_space<vmem>>, vector<80x128xf32>,
    %c0_34 = arith.constant 0 : index
    %c0_35 = arith.constant 0 : index
    %38 = vector.load %arg7[%c0_34, %c0_35] : memref<80x128xf32, #tpu.memory_space<vmem>>, vector<80x128xf32>
    %39 = vector.extract_strided_slice %4 {offsets = [12, 0], sizes = [80, 8], strides = [1, 1]} : vector<104x8xbf16> to vector<80x8xbf16>
    %c5 = arith.constant 5 : index
    %c0_36 = arith.constant 0 : index
    %c0_37 = arith.constant 0 : index
    %40 = vector.load %arg3[%c5, %c0_36, %c0_37] : memref<9x8x128xbf16, #tpu.memory_space<vmem>>, vector<1x8x128xbf16>
    %41 = vector.shape_cast %40 : vector<1x8x128xbf16> to vector<8x128xbf16>
    %cst_38 = arith.constant dense<0.000000e+00> : vector<80x128xf32>
    %42 = tpu.matmul %39, %41, %cst_38 {dimension_numbers = #tpu.dot_dimension_numbers<[1], [0], [0], [1], [0, 0, 1, 1], [], []>} : vector<80x8xbf16>, vector<8x128xbf16>, vector<80x128xf32> -> vector<80x128xf32>
    %43 = arith.addf %38, %42 : vector<80x128xf32>
    %c0_39 = arith.constant 0 : index
    %c0_40 = arith.constant 0 : index
    %44 = vector.load %arg7[%c0_39, %c0_40] : memref<80x128xf32, #tpu.memory_space<vmem>>, vector<80x128xf32>
    tpu.vector_store %arg7[%c0_39, %c0_40], %43 {strides = array<i32>} : memref<80x128xf32, #tpu.memory_space<vmem>>, vector<80x128xf32>,
    %c0_41 = arith.constant 0 : index
    %c0_42 = arith.constant 0 : index
    %45 = vector.load %arg7[%c0_41, %c0_42] : memref<80x128xf32, #tpu.memory_space<vmem>>, vector<80x128xf32>
    %46 = vector.extract_strided_slice %4 {offsets = [20, 0], sizes = [80, 8], strides = [1, 1]} : vector<104x8xbf16> to vector<80x8xbf16>
    %c6 = arith.constant 6 : index
    %c0_43 = arith.constant 0 : index
    %c0_44 = arith.constant 0 : index
    %47 = vector.load %arg3[%c6, %c0_43, %c0_44] : memref<9x8x128xbf16, #tpu.memory_space<vmem>>, vector<1x8x128xbf16>
    %48 = vector.shape_cast %47 : vector<1x8x128xbf16> to vector<8x128xbf16>
    %cst_45 = arith.constant dense<0.000000e+00> : vector<80x128xf32>
    %49 = tpu.matmul %46, %48, %cst_45 {dimension_numbers = #tpu.dot_dimension_numbers<[1], [0], [0], [1], [0, 0, 1, 1], [], []>} : vector<80x8xbf16>, vector<8x128xbf16>, vector<80x128xf32> -> vector<80x128xf32>
    %50 = arith.addf %45, %49 : vector<80x128xf32>
    %c0_46 = arith.constant 0 : index
    %c0_47 = arith.constant 0 : index
    %51 = vector.load %arg7[%c0_46, %c0_47] : memref<80x128xf32, #tpu.memory_space<vmem>>, vector<80x128xf32>
    tpu.vector_store %arg7[%c0_46, %c0_47], %50 {strides = array<i32>} : memref<80x128xf32, #tpu.memory_space<vmem>>, vector<80x128xf32>,
    %c0_48 = arith.constant 0 : index
    %c0_49 = arith.constant 0 : index
    %52 = vector.load %arg7[%c0_48, %c0_49] : memref<80x128xf32, #tpu.memory_space<vmem>>, vector<80x128xf32>
    %53 = vector.extract_strided_slice %4 {offsets = [21, 0], sizes = [80, 8], strides = [1, 1]} : vector<104x8xbf16> to vector<80x8xbf16>
    %c7 = arith.constant 7 : index
    %c0_50 = arith.constant 0 : index
    %c0_51 = arith.constant 0 : index
    %54 = vector.load %arg3[%c7, %c0_50, %c0_51] : memref<9x8x128xbf16, #tpu.memory_space<vmem>>, vector<1x8x128xbf16>
    %55 = vector.shape_cast %54 : vector<1x8x128xbf16> to vector<8x128xbf16>
    %cst_52 = arith.constant dense<0.000000e+00> : vector<80x128xf32>
    %56 = tpu.matmul %53, %55, %cst_52 {dimension_numbers = #tpu.dot_dimension_numbers<[1], [0], [0], [1], [0, 0, 1, 1], [], []>} : vector<80x8xbf16>, vector<8x128xbf16>, vector<80x128xf32> -> vector<80x128xf32>
    %57 = arith.addf %52, %56 : vector<80x128xf32>
    %c0_53 = arith.constant 0 : index
    %c0_54 = arith.constant 0 : index
    %58 = vector.load %arg7[%c0_53, %c0_54] : memref<80x128xf32, #tpu.memory_space<vmem>>, vector<80x128xf32>
    tpu.vector_store %arg7[%c0_53, %c0_54], %57 {strides = array<i32>} : memref<80x128xf32, #tpu.memory_space<vmem>>, vector<80x128xf32>,
    %c0_55 = arith.constant 0 : index
    %c0_56 = arith.constant 0 : index
    %59 = vector.load %arg7[%c0_55, %c0_56] : memref<80x128xf32, #tpu.memory_space<vmem>>, vector<80x128xf32>
    %60 = vector.extract_strided_slice %4 {offsets = [22, 0], sizes = [80, 8], strides = [1, 1]} : vector<104x8xbf16> to vector<80x8xbf16>
    %c8 = arith.constant 8 : index
    %c0_57 = arith.constant 0 : index
    %c0_58 = arith.constant 0 : index
    %61 = vector.load %arg3[%c8, %c0_57, %c0_58] : memref<9x8x128xbf16, #tpu.memory_space<vmem>>, vector<1x8x128xbf16>
    %62 = vector.shape_cast %61 : vector<1x8x128xbf16> to vector<8x128xbf16>
    %cst_59 = arith.constant dense<0.000000e+00> : vector<80x128xf32>
    %63 = tpu.matmul %60, %62, %cst_59 {dimension_numbers = #tpu.dot_dimension_numbers<[1], [0], [0], [1], [0, 0, 1, 1], [], []>} : vector<80x8xbf16>, vector<8x128xbf16>, vector<80x128xf32> -> vector<80x128xf32>
    %64 = arith.addf %59, %63 : vector<80x128xf32>
    %c0_60 = arith.constant 0 : index
    %c0_61 = arith.constant 0 : index
    %65 = vector.load %arg7[%c0_60, %c0_61] : memref<80x128xf32, #tpu.memory_space<vmem>>, vector<80x128xf32>
    tpu.vector_store %arg7[%c0_60, %c0_61], %64 {strides = array<i32>} : memref<80x128xf32, #tpu.memory_space<vmem>>, vector<80x128xf32>,
    %c0_62 = arith.constant 0 : index
    %c0_63 = arith.constant 0 : index
    %66 = vector.load %arg7[%c0_62, %c0_63] : memref<80x128xf32, #tpu.memory_space<vmem>>, vector<80x128xf32>
    %c0_64 = arith.constant 0 : index
    %c0_65 = arith.constant 0 : index
    %67 = vector.load %arg4[%c0_64, %c0_65] : memref<1x128xf32, #tpu.memory_space<vmem>>, vector<1x128xf32>
    %68 = vector.broadcast %67 : vector<1x128xf32> to vector<80x128xf32>
    %69 = arith.addf %66, %68 : vector<80x128xf32>
    %c0_66 = arith.constant 0 : index
    %c0_67 = arith.constant 0 : index
    %c0_68 = arith.constant 0 : index
    %70 = vector.load %arg5[%c0_66, %c0_67, %c0_68] : memref<1x80x128xbf16, #tpu.memory_space<vmem>>, vector<1x80x128xbf16>
    %71 = vector.shape_cast %70 : vector<1x80x128xbf16> to vector<80x128xbf16>
    %72 = arith.extf %71 : vector<80x128xbf16> to vector<80x128xf32>
    %73 = arith.addf %69, %72 : vector<80x128xf32>
    %cst_69 = arith.constant 0.000000e+00 : f32
    %74 = vector.broadcast %cst_69 : f32 to vector<80x128xf32>
    %75 = arith.maximumf %73, %74 : vector<80x128xf32>
    %76 = arith.truncf %75 : vector<80x128xf32> to vector<80x128xbf16>
    %c0_70 = arith.constant 0 : index
    %c0_71 = arith.constant 0 : index
    %c0_72 = arith.constant 0 : index
    %77 = vector.load %arg6[%c0_70, %c0_71, %c0_72] : memref<1x80x128xbf16, #tpu.memory_space<vmem>>, vector<1x80x128xbf16>
    %78 = vector.shape_cast %77 : vector<1x80x128xbf16> to vector<80x128xbf16>
    %79 = vector.shape_cast %76 : vector<80x128xbf16> to vector<1x80x128xbf16>
    tpu.vector_store %arg6[%c0_70, %c0_71, %c0_72], %79 {strides = array<i32>} : memref<1x80x128xbf16, #tpu.memory_space<vmem>>, vector<1x80x128xbf16>,
    return
  }
  func.func @transform_0(%arg0: i32, %arg1: i32) -> (i32, i32, i32) {
    %c0_i32 = arith.constant 0 : i32
    %c0_i32_0 = arith.constant 0 : i32
    %c0_i32_1 = arith.constant 0 : i32
    return %arg0, %c0_i32, %c0_i32_0 : i32, i32, i32
  }
  func.func @transform_1(%arg0: i32, %arg1: i32) -> (i32, i32, i32) {
    %c0_i32 = arith.constant 0 : i32
    %c0_i32_0 = arith.constant 0 : i32
    %c0_i32_1 = arith.constant 0 : i32
    %c0_i32_2 = arith.constant 0 : i32
    return %c0_i32, %c0_i32_0, %c0_i32_1 : i32, i32, i32
  }
  func.func @transform_2(%arg0: i32, %arg1: i32) -> (i32, i32) {
    %c0_i32 = arith.constant 0 : i32
    %c0_i32_0 = arith.constant 0 : i32
    %c0_i32_1 = arith.constant 0 : i32
    return %c0_i32, %c0_i32_0 : i32, i32
  }
  func.func @transform_3(%arg0: i32, %arg1: i32) -> (i32, i32, i32) {
    %c0_i32 = arith.constant 0 : i32
    %c0_i32_0 = arith.constant 0 : i32
    return %arg0, %arg1, %c0_i32 : i32, i32, i32
  }
  func.func @transform_4(%arg0: i32, %arg1: i32) -> (i32, i32, i32) {
    %c0_i32 = arith.constant 0 : i32
    %c0_i32_0 = arith.constant 0 : i32
    return %arg0, %arg1, %c0_i32 : i32, i32, i32
  }
}

module attributes {stable_mosaic.version = 11 : i64} {
  func.func @_gemm_bias_kernel(%arg0: i32, %arg1: i32, %arg2: memref<32x8xbf16, #tpu.memory_space<vmem>>, %arg3: memref<8x128xbf16, #tpu.memory_space<vmem>>, %arg4: memref<1x128xf32, #tpu.memory_space<vmem>>, %arg5: memref<32x128xbf16, #tpu.memory_space<vmem>>) attributes {dimension_semantics = [#tpu.dimension_semantics<parallel>, #tpu.dimension_semantics<parallel>], iteration_bounds = array<i64: 1, 1>, scalar_prefetch = 0 : i64, scratch_operands = 0 : i64, tpu.core_type = #tpu.core_type<tc>, window_params = [{transform_indices = @transform_0, window_bounds = array<i64: 32, 8>}, {transform_indices = @transform_1, window_bounds = array<i64: 8, 128>}, {transform_indices = @transform_2, window_bounds = array<i64: 1, 128>}, {transform_indices = @transform_3, window_bounds = array<i64: 32, 128>}]} {
    %c0 = arith.constant 0 : index
    %c0_0 = arith.constant 0 : index
    %0 = vector.load %arg2[%c0, %c0_0] : memref<32x8xbf16, #tpu.memory_space<vmem>>, vector<32x8xbf16>
    %c0_1 = arith.constant 0 : index
    %c0_2 = arith.constant 0 : index
    %1 = vector.load %arg3[%c0_1, %c0_2] : memref<8x128xbf16, #tpu.memory_space<vmem>>, vector<8x128xbf16>
    %cst = arith.constant dense<0.000000e+00> : vector<32x128xf32>
    %2 = tpu.matmul %0, %1, %cst {dimension_numbers = #tpu.dot_dimension_numbers<[1], [0], [0], [1], [0, 0, 1, 1], [], []>} : vector<32x8xbf16>, vector<8x128xbf16>, vector<32x128xf32> -> vector<32x128xf32>
    %c0_3 = arith.constant 0 : index
    %c0_4 = arith.constant 0 : index
    %3 = vector.load %arg4[%c0_3, %c0_4] : memref<1x128xf32, #tpu.memory_space<vmem>>, vector<1x128xf32>
    %4 = vector.broadcast %3 : vector<1x128xf32> to vector<32x128xf32>
    %5 = arith.addf %2, %4 : vector<32x128xf32>
    %6 = arith.truncf %5 : vector<32x128xf32> to vector<32x128xbf16>
    %c0_5 = arith.constant 0 : index
    %c0_6 = arith.constant 0 : index
    %7 = vector.load %arg5[%c0_5, %c0_6] : memref<32x128xbf16, #tpu.memory_space<vmem>>, vector<32x128xbf16>
    tpu.vector_store %arg5[%c0_5, %c0_6], %6 {strides = array<i32>} : memref<32x128xbf16, #tpu.memory_space<vmem>>, vector<32x128xbf16>,
    return
  }
  func.func @transform_0(%arg0: i32, %arg1: i32) -> (i32, i32) {
    %c0_i32 = arith.constant 0 : i32
    %c0_i32_0 = arith.constant 0 : i32
    return %arg0, %c0_i32 : i32, i32
  }
  func.func @transform_1(%arg0: i32, %arg1: i32) -> (i32, i32) {
    %c0_i32 = arith.constant 0 : i32
    %c0_i32_0 = arith.constant 0 : i32
    return %c0_i32, %arg1 : i32, i32
  }
  func.func @transform_2(%arg0: i32, %arg1: i32) -> (i32, i32) {
    %c0_i32 = arith.constant 0 : i32
    %c0_i32_0 = arith.constant 0 : i32
    return %c0_i32, %arg1 : i32, i32
  }
  func.func @transform_3(%arg0: i32, %arg1: i32) -> (i32, i32) {
    %c0_i32 = arith.constant 0 : i32
    return %arg0, %arg1 : i32, i32
  }
}

module attributes {stable_mosaic.version = 11 : i64} {
  func.func @_gemm_bias_kernel(%arg0: i32, %arg1: i32, %arg2: memref<32x72xbf16, #tpu.memory_space<vmem>>, %arg3: memref<72x128xbf16, #tpu.memory_space<vmem>>, %arg4: memref<1x128xf32, #tpu.memory_space<vmem>>, %arg5: memref<32x128xbf16, #tpu.memory_space<vmem>>) attributes {dimension_semantics = [#tpu.dimension_semantics<parallel>, #tpu.dimension_semantics<parallel>], iteration_bounds = array<i64: 1, 1>, scalar_prefetch = 0 : i64, scratch_operands = 0 : i64, tpu.core_type = #tpu.core_type<tc>, window_params = [{transform_indices = @transform_0, window_bounds = array<i64: 32, 72>}, {transform_indices = @transform_1, window_bounds = array<i64: 72, 128>}, {transform_indices = @transform_2, window_bounds = array<i64: 1, 128>}, {transform_indices = @transform_3, window_bounds = array<i64: 32, 128>}]} {
    %c0 = arith.constant 0 : index
    %c0_0 = arith.constant 0 : index
    %0 = vector.load %arg2[%c0, %c0_0] : memref<32x72xbf16, #tpu.memory_space<vmem>>, vector<32x72xbf16>
    %c0_1 = arith.constant 0 : index
    %c0_2 = arith.constant 0 : index
    %1 = vector.load %arg3[%c0_1, %c0_2] : memref<72x128xbf16, #tpu.memory_space<vmem>>, vector<72x128xbf16>
    %cst = arith.constant dense<0.000000e+00> : vector<32x128xf32>
    %2 = tpu.matmul %0, %1, %cst {dimension_numbers = #tpu.dot_dimension_numbers<[1], [0], [0], [1], [0, 0, 1, 1], [], []>} : vector<32x72xbf16>, vector<72x128xbf16>, vector<32x128xf32> -> vector<32x128xf32>
    %c0_3 = arith.constant 0 : index
    %c0_4 = arith.constant 0 : index
    %3 = vector.load %arg4[%c0_3, %c0_4] : memref<1x128xf32, #tpu.memory_space<vmem>>, vector<1x128xf32>
    %4 = vector.broadcast %3 : vector<1x128xf32> to vector<32x128xf32>
    %5 = arith.addf %2, %4 : vector<32x128xf32>
    %cst_5 = arith.constant 0.000000e+00 : f32
    %6 = vector.broadcast %cst_5 : f32 to vector<32x128xf32>
    %7 = arith.maximumf %5, %6 : vector<32x128xf32>
    %8 = arith.truncf %7 : vector<32x128xf32> to vector<32x128xbf16>
    %c0_6 = arith.constant 0 : index
    %c0_7 = arith.constant 0 : index
    %9 = vector.load %arg5[%c0_6, %c0_7] : memref<32x128xbf16, #tpu.memory_space<vmem>>, vector<32x128xbf16>
    tpu.vector_store %arg5[%c0_6, %c0_7], %8 {strides = array<i32>} : memref<32x128xbf16, #tpu.memory_space<vmem>>, vector<32x128xbf16>,
    return
  }
  func.func @transform_0(%arg0: i32, %arg1: i32) -> (i32, i32) {
    %c0_i32 = arith.constant 0 : i32
    %c0_i32_0 = arith.constant 0 : i32
    return %arg0, %c0_i32 : i32, i32
  }
  func.func @transform_1(%arg0: i32, %arg1: i32) -> (i32, i32) {
    %c0_i32 = arith.constant 0 : i32
    %c0_i32_0 = arith.constant 0 : i32
    return %c0_i32, %arg1 : i32, i32
  }
  func.func @transform_2(%arg0: i32, %arg1: i32) -> (i32, i32) {
    %c0_i32 = arith.constant 0 : i32
    %c0_i32_0 = arith.constant 0 : i32
    return %c0_i32, %arg1 : i32, i32
  }
  func.func @transform_3(%arg0: i32, %arg1: i32) -> (i32, i32) {
    %c0_i32 = arith.constant 0 : i32
    return %arg0, %arg1 : i32, i32
  }
}

module attributes {stable_mosaic.version = 11 : i64} {
  func.func @_conv3x3_kernel(%arg0: i32, %arg1: i32, %arg2: memref<1x42x16xbf16, #tpu.memory_space<vmem>>, %arg3: memref<9x16x128xbf16, #tpu.memory_space<vmem>>, %arg4: memref<1x128xf32, #tpu.memory_space<vmem>>, %arg5: memref<1x24x128xbf16, #tpu.memory_space<vmem>>, %arg6: memref<1x24x128xbf16, #tpu.memory_space<vmem>>, %arg7: memref<24x128xf32, #tpu.memory_space<vmem>>) attributes {dimension_semantics = [#tpu.dimension_semantics<parallel>, #tpu.dimension_semantics<parallel>], iteration_bounds = array<i64: 2, 1>, scalar_prefetch = 0 : i64, scratch_operands = 1 : i64, tpu.core_type = #tpu.core_type<tc>, window_params = [{transform_indices = @transform_0, window_bounds = array<i64: 1, 42, 16>}, {pipeline_mode = #tpu.pipeline_mode<synchronous>, transform_indices = @transform_1, window_bounds = array<i64: 9, 16, 128>}, {pipeline_mode = #tpu.pipeline_mode<synchronous>, transform_indices = @transform_2, window_bounds = array<i64: 1, 128>}, {transform_indices = @transform_3, window_bounds = array<i64: 1, 24, 128>}, {transform_indices = @transform_4, window_bounds = array<i64: 1, 24, 128>}]} {
    %c24_i32 = arith.constant 24 : i32
    %0 = arith.muli %arg1, %c24_i32 : i32
    %1 = tpu.assume_multiple %0, 8 : i32
    %c0 = arith.constant 0 : index
    %2 = arith.index_cast %1 : i32 to index
    %c0_0 = arith.constant 0 : index
    %3 = vector.load %arg2[%c0, %2, %c0_0] : memref<1x42x16xbf16, #tpu.memory_space<vmem>>, vector<1x40x16xbf16>
    %4 = vector.shape_cast %3 : vector<1x40x16xbf16> to vector<40x16xbf16>
    %5 = vector.extract_strided_slice %4 {offsets = [0, 0], sizes = [24, 16], strides = [1, 1]} : vector<40x16xbf16> to vector<24x16xbf16>
    %c0_1 = arith.constant 0 : index
    %c0_2 = arith.constant 0 : index
    %c0_3 = arith.constant 0 : index
    %6 = vector.load %arg3[%c0_1, %c0_2, %c0_3] : memref<9x16x128xbf16, #tpu.memory_space<vmem>>, vector<1x16x128xbf16>
    %7 = vector.shape_cast %6 : vector<1x16x128xbf16> to vector<16x128xbf16>
    %cst = arith.constant dense<0.000000e+00> : vector<24x128xf32>
    %8 = tpu.matmul %5, %7, %cst {dimension_numbers = #tpu.dot_dimension_numbers<[1], [0], [0], [1], [0, 0, 1, 1], [], []>} : vector<24x16xbf16>, vector<16x128xbf16>, vector<24x128xf32> -> vector<24x128xf32>
    %c0_4 = arith.constant 0 : index
    %c0_5 = arith.constant 0 : index
    %9 = vector.load %arg7[%c0_4, %c0_5] : memref<24x128xf32, #tpu.memory_space<vmem>>, vector<24x128xf32>
    tpu.vector_store %arg7[%c0_4, %c0_5], %8 {strides = array<i32>} : memref<24x128xf32, #tpu.memory_space<vmem>>, vector<24x128xf32>,
    %c0_6 = arith.constant 0 : index
    %c0_7 = arith.constant 0 : index
    %10 = vector.load %arg7[%c0_6, %c0_7] : memref<24x128xf32, #tpu.memory_space<vmem>>, vector<24x128xf32>
    %11 = vector.extract_strided_slice %4 {offsets = [1, 0], sizes = [24, 16], strides = [1, 1]} : vector<40x16xbf16> to vector<24x16xbf16>
    %c1 = arith.constant 1 : index
    %c0_8 = arith.constant 0 : index
    %c0_9 = arith.constant 0 : index
    %12 = vector.load %arg3[%c1, %c0_8, %c0_9] : memref<9x16x128xbf16, #tpu.memory_space<vmem>>, vector<1x16x128xbf16>
    %13 = vector.shape_cast %12 : vector<1x16x128xbf16> to vector<16x128xbf16>
    %cst_10 = arith.constant dense<0.000000e+00> : vector<24x128xf32>
    %14 = tpu.matmul %11, %13, %cst_10 {dimension_numbers = #tpu.dot_dimension_numbers<[1], [0], [0], [1], [0, 0, 1, 1], [], []>} : vector<24x16xbf16>, vector<16x128xbf16>, vector<24x128xf32> -> vector<24x128xf32>
    %15 = arith.addf %10, %14 : vector<24x128xf32>
    %c0_11 = arith.constant 0 : index
    %c0_12 = arith.constant 0 : index
    %16 = vector.load %arg7[%c0_11, %c0_12] : memref<24x128xf32, #tpu.memory_space<vmem>>, vector<24x128xf32>
    tpu.vector_store %arg7[%c0_11, %c0_12], %15 {strides = array<i32>} : memref<24x128xf32, #tpu.memory_space<vmem>>, vector<24x128xf32>,
    %c0_13 = arith.constant 0 : index
    %c0_14 = arith.constant 0 : index
    %17 = vector.load %arg7[%c0_13, %c0_14] : memref<24x128xf32, #tpu.memory_space<vmem>>, vector<24x128xf32>
    %18 = vector.extract_strided_slice %4 {offsets = [2, 0], sizes = [24, 16], strides = [1, 1]} : vector<40x16xbf16> to vector<24x16xbf16>
    %c2 = arith.constant 2 : index
    %c0_15 = arith.constant 0 : index
    %c0_16 = arith.constant 0 : index
    %19 = vector.load %arg3[%c2, %c0_15, %c0_16] : memref<9x16x128xbf16, #tpu.memory_space<vmem>>, vector<1x16x128xbf16>
    %20 = vector.shape_cast %19 : vector<1x16x128xbf16> to vector<16x128xbf16>
    %cst_17 = arith.constant dense<0.000000e+00> : vector<24x128xf32>
    %21 = tpu.matmul %18, %20, %cst_17 {dimension_numbers = #tpu.dot_dimension_numbers<[1], [0], [0], [1], [0, 0, 1, 1], [], []>} : vector<24x16xbf16>, vector<16x128xbf16>, vector<24x128xf32> -> vector<24x128xf32>
    %22 = arith.addf %17, %21 : vector<24x128xf32>
    %c0_18 = arith.constant 0 : index
    %c0_19 = arith.constant 0 : index
    %23 = vector.load %arg7[%c0_18, %c0_19] : memref<24x128xf32, #tpu.memory_space<vmem>>, vector<24x128xf32>
    tpu.vector_store %arg7[%c0_18, %c0_19], %22 {strides = array<i32>} : memref<24x128xf32, #tpu.memory_space<vmem>>, vector<24x128xf32>,
    %c0_20 = arith.constant 0 : index
    %c0_21 = arith.constant 0 : index
    %24 = vector.load %arg7[%c0_20, %c0_21] : memref<24x128xf32, #tpu.memory_space<vmem>>, vector<24x128xf32>
    %25 = vector.extract_strided_slice %4 {offsets = [6, 0], sizes = [24, 16], strides = [1, 1]} : vector<40x16xbf16> to vector<24x16xbf16>
    %c3 = arith.constant 3 : index
    %c0_22 = arith.constant 0 : index
    %c0_23 = arith.constant 0 : index
    %26 = vector.load %arg3[%c3, %c0_22, %c0_23] : memref<9x16x128xbf16, #tpu.memory_space<vmem>>, vector<1x16x128xbf16>
    %27 = vector.shape_cast %26 : vector<1x16x128xbf16> to vector<16x128xbf16>
    %cst_24 = arith.constant dense<0.000000e+00> : vector<24x128xf32>
    %28 = tpu.matmul %25, %27, %cst_24 {dimension_numbers = #tpu.dot_dimension_numbers<[1], [0], [0], [1], [0, 0, 1, 1], [], []>} : vector<24x16xbf16>, vector<16x128xbf16>, vector<24x128xf32> -> vector<24x128xf32>
    %29 = arith.addf %24, %28 : vector<24x128xf32>
    %c0_25 = arith.constant 0 : index
    %c0_26 = arith.constant 0 : index
    %30 = vector.load %arg7[%c0_25, %c0_26] : memref<24x128xf32, #tpu.memory_space<vmem>>, vector<24x128xf32>
    tpu.vector_store %arg7[%c0_25, %c0_26], %29 {strides = array<i32>} : memref<24x128xf32, #tpu.memory_space<vmem>>, vector<24x128xf32>,
    %c0_27 = arith.constant 0 : index
    %c0_28 = arith.constant 0 : index
    %31 = vector.load %arg7[%c0_27, %c0_28] : memref<24x128xf32, #tpu.memory_space<vmem>>, vector<24x128xf32>
    %32 = vector.extract_strided_slice %4 {offsets = [7, 0], sizes = [24, 16], strides = [1, 1]} : vector<40x16xbf16> to vector<24x16xbf16>
    %c4 = arith.constant 4 : index
    %c0_29 = arith.constant 0 : index
    %c0_30 = arith.constant 0 : index
    %33 = vector.load %arg3[%c4, %c0_29, %c0_30] : memref<9x16x128xbf16, #tpu.memory_space<vmem>>, vector<1x16x128xbf16>
    %34 = vector.shape_cast %33 : vector<1x16x128xbf16> to vector<16x128xbf16>
    %cst_31 = arith.constant dense<0.000000e+00> : vector<24x128xf32>
    %35 = tpu.matmul %32, %34, %cst_31 {dimension_numbers = #tpu.dot_dimension_numbers<[1], [0], [0], [1], [0, 0, 1, 1], [], []>} : vector<24x16xbf16>, vector<16x128xbf16>, vector<24x128xf32> -> vector<24x128xf32>
    %36 = arith.addf %31, %35 : vector<24x128xf32>
    %c0_32 = arith.constant 0 : index
    %c0_33 = arith.constant 0 : index
    %37 = vector.load %arg7[%c0_32, %c0_33] : memref<24x128xf32, #tpu.memory_space<vmem>>, vector<24x128xf32>
    tpu.vector_store %arg7[%c0_32, %c0_33], %36 {strides = array<i32>} : memref<24x128xf32, #tpu.memory_space<vmem>>, vector<24x128xf32>,
    %c0_34 = arith.constant 0 : index
    %c0_35 = arith.constant 0 : index
    %38 = vector.load %arg7[%c0_34, %c0_35] : memref<24x128xf32, #tpu.memory_space<vmem>>, vector<24x128xf32>
    %39 = vector.extract_strided_slice %4 {offsets = [8, 0], sizes = [24, 16], strides = [1, 1]} : vector<40x16xbf16> to vector<24x16xbf16>
    %c5 = arith.constant 5 : index
    %c0_36 = arith.constant 0 : index
    %c0_37 = arith.constant 0 : index
    %40 = vector.load %arg3[%c5, %c0_36, %c0_37] : memref<9x16x128xbf16, #tpu.memory_space<vmem>>, vector<1x16x128xbf16>
    %41 = vector.shape_cast %40 : vector<1x16x128xbf16> to vector<16x128xbf16>
    %cst_38 = arith.constant dense<0.000000e+00> : vector<24x128xf32>
    %42 = tpu.matmul %39, %41, %cst_38 {dimension_numbers = #tpu.dot_dimension_numbers<[1], [0], [0], [1], [0, 0, 1, 1], [], []>} : vector<24x16xbf16>, vector<16x128xbf16>, vector<24x128xf32> -> vector<24x128xf32>
    %43 = arith.addf %38, %42 : vector<24x128xf32>
    %c0_39 = arith.constant 0 : index
    %c0_40 = arith.constant 0 : index
    %44 = vector.load %arg7[%c0_39, %c0_40] : memref<24x128xf32, #tpu.memory_space<vmem>>, vector<24x128xf32>
    tpu.vector_store %arg7[%c0_39, %c0_40], %43 {strides = array<i32>} : memref<24x128xf32, #tpu.memory_space<vmem>>, vector<24x128xf32>,
    %c0_41 = arith.constant 0 : index
    %c0_42 = arith.constant 0 : index
    %45 = vector.load %arg7[%c0_41, %c0_42] : memref<24x128xf32, #tpu.memory_space<vmem>>, vector<24x128xf32>
    %46 = vector.extract_strided_slice %4 {offsets = [12, 0], sizes = [24, 16], strides = [1, 1]} : vector<40x16xbf16> to vector<24x16xbf16>
    %c6 = arith.constant 6 : index
    %c0_43 = arith.constant 0 : index
    %c0_44 = arith.constant 0 : index
    %47 = vector.load %arg3[%c6, %c0_43, %c0_44] : memref<9x16x128xbf16, #tpu.memory_space<vmem>>, vector<1x16x128xbf16>
    %48 = vector.shape_cast %47 : vector<1x16x128xbf16> to vector<16x128xbf16>
    %cst_45 = arith.constant dense<0.000000e+00> : vector<24x128xf32>
    %49 = tpu.matmul %46, %48, %cst_45 {dimension_numbers = #tpu.dot_dimension_numbers<[1], [0], [0], [1], [0, 0, 1, 1], [], []>} : vector<24x16xbf16>, vector<16x128xbf16>, vector<24x128xf32> -> vector<24x128xf32>
    %50 = arith.addf %45, %49 : vector<24x128xf32>
    %c0_46 = arith.constant 0 : index
    %c0_47 = arith.constant 0 : index
    %51 = vector.load %arg7[%c0_46, %c0_47] : memref<24x128xf32, #tpu.memory_space<vmem>>, vector<24x128xf32>
    tpu.vector_store %arg7[%c0_46, %c0_47], %50 {strides = array<i32>} : memref<24x128xf32, #tpu.memory_space<vmem>>, vector<24x128xf32>,
    %c0_48 = arith.constant 0 : index
    %c0_49 = arith.constant 0 : index
    %52 = vector.load %arg7[%c0_48, %c0_49] : memref<24x128xf32, #tpu.memory_space<vmem>>, vector<24x128xf32>
    %53 = vector.extract_strided_slice %4 {offsets = [13, 0], sizes = [24, 16], strides = [1, 1]} : vector<40x16xbf16> to vector<24x16xbf16>
    %c7 = arith.constant 7 : index
    %c0_50 = arith.constant 0 : index
    %c0_51 = arith.constant 0 : index
    %54 = vector.load %arg3[%c7, %c0_50, %c0_51] : memref<9x16x128xbf16, #tpu.memory_space<vmem>>, vector<1x16x128xbf16>
    %55 = vector.shape_cast %54 : vector<1x16x128xbf16> to vector<16x128xbf16>
    %cst_52 = arith.constant dense<0.000000e+00> : vector<24x128xf32>
    %56 = tpu.matmul %53, %55, %cst_52 {dimension_numbers = #tpu.dot_dimension_numbers<[1], [0], [0], [1], [0, 0, 1, 1], [], []>} : vector<24x16xbf16>, vector<16x128xbf16>, vector<24x128xf32> -> vector<24x128xf32>
    %57 = arith.addf %52, %56 : vector<24x128xf32>
    %c0_53 = arith.constant 0 : index
    %c0_54 = arith.constant 0 : index
    %58 = vector.load %arg7[%c0_53, %c0_54] : memref<24x128xf32, #tpu.memory_space<vmem>>, vector<24x128xf32>
    tpu.vector_store %arg7[%c0_53, %c0_54], %57 {strides = array<i32>} : memref<24x128xf32, #tpu.memory_space<vmem>>, vector<24x128xf32>,
    %c0_55 = arith.constant 0 : index
    %c0_56 = arith.constant 0 : index
    %59 = vector.load %arg7[%c0_55, %c0_56] : memref<24x128xf32, #tpu.memory_space<vmem>>, vector<24x128xf32>
    %60 = vector.extract_strided_slice %4 {offsets = [14, 0], sizes = [24, 16], strides = [1, 1]} : vector<40x16xbf16> to vector<24x16xbf16>
    %c8 = arith.constant 8 : index
    %c0_57 = arith.constant 0 : index
    %c0_58 = arith.constant 0 : index
    %61 = vector.load %arg3[%c8, %c0_57, %c0_58] : memref<9x16x128xbf16, #tpu.memory_space<vmem>>, vector<1x16x128xbf16>
    %62 = vector.shape_cast %61 : vector<1x16x128xbf16> to vector<16x128xbf16>
    %cst_59 = arith.constant dense<0.000000e+00> : vector<24x128xf32>
    %63 = tpu.matmul %60, %62, %cst_59 {dimension_numbers = #tpu.dot_dimension_numbers<[1], [0], [0], [1], [0, 0, 1, 1], [], []>} : vector<24x16xbf16>, vector<16x128xbf16>, vector<24x128xf32> -> vector<24x128xf32>
    %64 = arith.addf %59, %63 : vector<24x128xf32>
    %c0_60 = arith.constant 0 : index
    %c0_61 = arith.constant 0 : index
    %65 = vector.load %arg7[%c0_60, %c0_61] : memref<24x128xf32, #tpu.memory_space<vmem>>, vector<24x128xf32>
    tpu.vector_store %arg7[%c0_60, %c0_61], %64 {strides = array<i32>} : memref<24x128xf32, #tpu.memory_space<vmem>>, vector<24x128xf32>,
    %c0_62 = arith.constant 0 : index
    %c0_63 = arith.constant 0 : index
    %66 = vector.load %arg7[%c0_62, %c0_63] : memref<24x128xf32, #tpu.memory_space<vmem>>, vector<24x128xf32>
    %c0_64 = arith.constant 0 : index
    %c0_65 = arith.constant 0 : index
    %67 = vector.load %arg4[%c0_64, %c0_65] : memref<1x128xf32, #tpu.memory_space<vmem>>, vector<1x128xf32>
    %68 = vector.broadcast %67 : vector<1x128xf32> to vector<24x128xf32>
    %69 = arith.addf %66, %68 : vector<24x128xf32>
    %c0_66 = arith.constant 0 : index
    %c0_67 = arith.constant 0 : index
    %c0_68 = arith.constant 0 : index
    %70 = vector.load %arg5[%c0_66, %c0_67, %c0_68] : memref<1x24x128xbf16, #tpu.memory_space<vmem>>, vector<1x24x128xbf16>
    %71 = vector.shape_cast %70 : vector<1x24x128xbf16> to vector<24x128xbf16>
    %72 = arith.extf %71 : vector<24x128xbf16> to vector<24x128xf32>
    %73 = arith.addf %69, %72 : vector<24x128xf32>
    %cst_69 = arith.constant 0.000000e+00 : f32
    %74 = vector.broadcast %cst_69 : f32 to vector<24x128xf32>
    %75 = arith.maximumf %73, %74 : vector<24x128xf32>
    %76 = arith.truncf %75 : vector<24x128xf32> to vector<24x128xbf16>
    %c0_70 = arith.constant 0 : index
    %c0_71 = arith.constant 0 : index
    %c0_72 = arith.constant 0 : index
    %77 = vector.load %arg6[%c0_70, %c0_71, %c0_72] : memref<1x24x128xbf16, #tpu.memory_space<vmem>>, vector<1x24x128xbf16>
    %78 = vector.shape_cast %77 : vector<1x24x128xbf16> to vector<24x128xbf16>
    %79 = vector.shape_cast %76 : vector<24x128xbf16> to vector<1x24x128xbf16>
    tpu.vector_store %arg6[%c0_70, %c0_71, %c0_72], %79 {strides = array<i32>} : memref<1x24x128xbf16, #tpu.memory_space<vmem>>, vector<1x24x128xbf16>,
    return
  }
  func.func @transform_0(%arg0: i32, %arg1: i32) -> (i32, i32, i32) {
    %c0_i32 = arith.constant 0 : i32
    %c0_i32_0 = arith.constant 0 : i32
    %c0_i32_1 = arith.constant 0 : i32
    return %arg0, %c0_i32, %c0_i32_0 : i32, i32, i32
  }
  func.func @transform_1(%arg0: i32, %arg1: i32) -> (i32, i32, i32) {
    %c0_i32 = arith.constant 0 : i32
    %c0_i32_0 = arith.constant 0 : i32
    %c0_i32_1 = arith.constant 0 : i32
    %c0_i32_2 = arith.constant 0 : i32
    return %c0_i32, %c0_i32_0, %c0_i32_1 : i32, i32, i32
  }
  func.func @transform_2(%arg0: i32, %arg1: i32) -> (i32, i32) {
    %c0_i32 = arith.constant 0 : i32
    %c0_i32_0 = arith.constant 0 : i32
    %c0_i32_1 = arith.constant 0 : i32
    return %c0_i32, %c0_i32_0 : i32, i32
  }
  func.func @transform_3(%arg0: i32, %arg1: i32) -> (i32, i32, i32) {
    %c0_i32 = arith.constant 0 : i32
    %c0_i32_0 = arith.constant 0 : i32
    return %arg0, %arg1, %c0_i32 : i32, i32, i32
  }
  func.func @transform_4(%arg0: i32, %arg1: i32) -> (i32, i32, i32) {
    %c0_i32 = arith.constant 0 : i32
    %c0_i32_0 = arith.constant 0 : i32
    return %arg0, %arg1, %c0_i32 : i32, i32, i32
  }
}

module attributes {stable_mosaic.version = 11 : i64} {
  func.func @_conv3x3_kernel(%arg0: i32, %arg1: i32, %arg2: memref<1x42x16xbf16, #tpu.memory_space<vmem>>, %arg3: memref<9x16x128xbf16, #tpu.memory_space<vmem>>, %arg4: memref<1x128xf32, #tpu.memory_space<vmem>>, %arg5: memref<1x24x128xbf16, #tpu.memory_space<vmem>>, %arg6: memref<24x128xf32, #tpu.memory_space<vmem>>) attributes {dimension_semantics = [#tpu.dimension_semantics<parallel>, #tpu.dimension_semantics<parallel>], iteration_bounds = array<i64: 2, 1>, scalar_prefetch = 0 : i64, scratch_operands = 1 : i64, tpu.core_type = #tpu.core_type<tc>, window_params = [{transform_indices = @transform_0, window_bounds = array<i64: 1, 42, 16>}, {pipeline_mode = #tpu.pipeline_mode<synchronous>, transform_indices = @transform_1, window_bounds = array<i64: 9, 16, 128>}, {pipeline_mode = #tpu.pipeline_mode<synchronous>, transform_indices = @transform_2, window_bounds = array<i64: 1, 128>}, {transform_indices = @transform_3, window_bounds = array<i64: 1, 24, 128>}]} {
    %c24_i32 = arith.constant 24 : i32
    %0 = arith.muli %arg1, %c24_i32 : i32
    %1 = tpu.assume_multiple %0, 8 : i32
    %c0 = arith.constant 0 : index
    %2 = arith.index_cast %1 : i32 to index
    %c0_0 = arith.constant 0 : index
    %3 = vector.load %arg2[%c0, %2, %c0_0] : memref<1x42x16xbf16, #tpu.memory_space<vmem>>, vector<1x40x16xbf16>
    %4 = vector.shape_cast %3 : vector<1x40x16xbf16> to vector<40x16xbf16>
    %5 = vector.extract_strided_slice %4 {offsets = [0, 0], sizes = [24, 16], strides = [1, 1]} : vector<40x16xbf16> to vector<24x16xbf16>
    %c0_1 = arith.constant 0 : index
    %c0_2 = arith.constant 0 : index
    %c0_3 = arith.constant 0 : index
    %6 = vector.load %arg3[%c0_1, %c0_2, %c0_3] : memref<9x16x128xbf16, #tpu.memory_space<vmem>>, vector<1x16x128xbf16>
    %7 = vector.shape_cast %6 : vector<1x16x128xbf16> to vector<16x128xbf16>
    %cst = arith.constant dense<0.000000e+00> : vector<24x128xf32>
    %8 = tpu.matmul %5, %7, %cst {dimension_numbers = #tpu.dot_dimension_numbers<[1], [0], [0], [1], [0, 0, 1, 1], [], []>} : vector<24x16xbf16>, vector<16x128xbf16>, vector<24x128xf32> -> vector<24x128xf32>
    %c0_4 = arith.constant 0 : index
    %c0_5 = arith.constant 0 : index
    %9 = vector.load %arg6[%c0_4, %c0_5] : memref<24x128xf32, #tpu.memory_space<vmem>>, vector<24x128xf32>
    tpu.vector_store %arg6[%c0_4, %c0_5], %8 {strides = array<i32>} : memref<24x128xf32, #tpu.memory_space<vmem>>, vector<24x128xf32>,
    %c0_6 = arith.constant 0 : index
    %c0_7 = arith.constant 0 : index
    %10 = vector.load %arg6[%c0_6, %c0_7] : memref<24x128xf32, #tpu.memory_space<vmem>>, vector<24x128xf32>
    %11 = vector.extract_strided_slice %4 {offsets = [1, 0], sizes = [24, 16], strides = [1, 1]} : vector<40x16xbf16> to vector<24x16xbf16>
    %c1 = arith.constant 1 : index
    %c0_8 = arith.constant 0 : index
    %c0_9 = arith.constant 0 : index
    %12 = vector.load %arg3[%c1, %c0_8, %c0_9] : memref<9x16x128xbf16, #tpu.memory_space<vmem>>, vector<1x16x128xbf16>
    %13 = vector.shape_cast %12 : vector<1x16x128xbf16> to vector<16x128xbf16>
    %cst_10 = arith.constant dense<0.000000e+00> : vector<24x128xf32>
    %14 = tpu.matmul %11, %13, %cst_10 {dimension_numbers = #tpu.dot_dimension_numbers<[1], [0], [0], [1], [0, 0, 1, 1], [], []>} : vector<24x16xbf16>, vector<16x128xbf16>, vector<24x128xf32> -> vector<24x128xf32>
    %15 = arith.addf %10, %14 : vector<24x128xf32>
    %c0_11 = arith.constant 0 : index
    %c0_12 = arith.constant 0 : index
    %16 = vector.load %arg6[%c0_11, %c0_12] : memref<24x128xf32, #tpu.memory_space<vmem>>, vector<24x128xf32>
    tpu.vector_store %arg6[%c0_11, %c0_12], %15 {strides = array<i32>} : memref<24x128xf32, #tpu.memory_space<vmem>>, vector<24x128xf32>,
    %c0_13 = arith.constant 0 : index
    %c0_14 = arith.constant 0 : index
    %17 = vector.load %arg6[%c0_13, %c0_14] : memref<24x128xf32, #tpu.memory_space<vmem>>, vector<24x128xf32>
    %18 = vector.extract_strided_slice %4 {offsets = [2, 0], sizes = [24, 16], strides = [1, 1]} : vector<40x16xbf16> to vector<24x16xbf16>
    %c2 = arith.constant 2 : index
    %c0_15 = arith.constant 0 : index
    %c0_16 = arith.constant 0 : index
    %19 = vector.load %arg3[%c2, %c0_15, %c0_16] : memref<9x16x128xbf16, #tpu.memory_space<vmem>>, vector<1x16x128xbf16>
    %20 = vector.shape_cast %19 : vector<1x16x128xbf16> to vector<16x128xbf16>
    %cst_17 = arith.constant dense<0.000000e+00> : vector<24x128xf32>
    %21 = tpu.matmul %18, %20, %cst_17 {dimension_numbers = #tpu.dot_dimension_numbers<[1], [0], [0], [1], [0, 0, 1, 1], [], []>} : vector<24x16xbf16>, vector<16x128xbf16>, vector<24x128xf32> -> vector<24x128xf32>
    %22 = arith.addf %17, %21 : vector<24x128xf32>
    %c0_18 = arith.constant 0 : index
    %c0_19 = arith.constant 0 : index
    %23 = vector.load %arg6[%c0_18, %c0_19] : memref<24x128xf32, #tpu.memory_space<vmem>>, vector<24x128xf32>
    tpu.vector_store %arg6[%c0_18, %c0_19], %22 {strides = array<i32>} : memref<24x128xf32, #tpu.memory_space<vmem>>, vector<24x128xf32>,
    %c0_20 = arith.constant 0 : index
    %c0_21 = arith.constant 0 : index
    %24 = vector.load %arg6[%c0_20, %c0_21] : memref<24x128xf32, #tpu.memory_space<vmem>>, vector<24x128xf32>
    %25 = vector.extract_strided_slice %4 {offsets = [6, 0], sizes = [24, 16], strides = [1, 1]} : vector<40x16xbf16> to vector<24x16xbf16>
    %c3 = arith.constant 3 : index
    %c0_22 = arith.constant 0 : index
    %c0_23 = arith.constant 0 : index
    %26 = vector.load %arg3[%c3, %c0_22, %c0_23] : memref<9x16x128xbf16, #tpu.memory_space<vmem>>, vector<1x16x128xbf16>
    %27 = vector.shape_cast %26 : vector<1x16x128xbf16> to vector<16x128xbf16>
    %cst_24 = arith.constant dense<0.000000e+00> : vector<24x128xf32>
    %28 = tpu.matmul %25, %27, %cst_24 {dimension_numbers = #tpu.dot_dimension_numbers<[1], [0], [0], [1], [0, 0, 1, 1], [], []>} : vector<24x16xbf16>, vector<16x128xbf16>, vector<24x128xf32> -> vector<24x128xf32>
    %29 = arith.addf %24, %28 : vector<24x128xf32>
    %c0_25 = arith.constant 0 : index
    %c0_26 = arith.constant 0 : index
    %30 = vector.load %arg6[%c0_25, %c0_26] : memref<24x128xf32, #tpu.memory_space<vmem>>, vector<24x128xf32>
    tpu.vector_store %arg6[%c0_25, %c0_26], %29 {strides = array<i32>} : memref<24x128xf32, #tpu.memory_space<vmem>>, vector<24x128xf32>,
    %c0_27 = arith.constant 0 : index
    %c0_28 = arith.constant 0 : index
    %31 = vector.load %arg6[%c0_27, %c0_28] : memref<24x128xf32, #tpu.memory_space<vmem>>, vector<24x128xf32>
    %32 = vector.extract_strided_slice %4 {offsets = [7, 0], sizes = [24, 16], strides = [1, 1]} : vector<40x16xbf16> to vector<24x16xbf16>
    %c4 = arith.constant 4 : index
    %c0_29 = arith.constant 0 : index
    %c0_30 = arith.constant 0 : index
    %33 = vector.load %arg3[%c4, %c0_29, %c0_30] : memref<9x16x128xbf16, #tpu.memory_space<vmem>>, vector<1x16x128xbf16>
    %34 = vector.shape_cast %33 : vector<1x16x128xbf16> to vector<16x128xbf16>
    %cst_31 = arith.constant dense<0.000000e+00> : vector<24x128xf32>
    %35 = tpu.matmul %32, %34, %cst_31 {dimension_numbers = #tpu.dot_dimension_numbers<[1], [0], [0], [1], [0, 0, 1, 1], [], []>} : vector<24x16xbf16>, vector<16x128xbf16>, vector<24x128xf32> -> vector<24x128xf32>
    %36 = arith.addf %31, %35 : vector<24x128xf32>
    %c0_32 = arith.constant 0 : index
    %c0_33 = arith.constant 0 : index
    %37 = vector.load %arg6[%c0_32, %c0_33] : memref<24x128xf32, #tpu.memory_space<vmem>>, vector<24x128xf32>
    tpu.vector_store %arg6[%c0_32, %c0_33], %36 {strides = array<i32>} : memref<24x128xf32, #tpu.memory_space<vmem>>, vector<24x128xf32>,
    %c0_34 = arith.constant 0 : index
    %c0_35 = arith.constant 0 : index
    %38 = vector.load %arg6[%c0_34, %c0_35] : memref<24x128xf32, #tpu.memory_space<vmem>>, vector<24x128xf32>
    %39 = vector.extract_strided_slice %4 {offsets = [8, 0], sizes = [24, 16], strides = [1, 1]} : vector<40x16xbf16> to vector<24x16xbf16>
    %c5 = arith.constant 5 : index
    %c0_36 = arith.constant 0 : index
    %c0_37 = arith.constant 0 : index
    %40 = vector.load %arg3[%c5, %c0_36, %c0_37] : memref<9x16x128xbf16, #tpu.memory_space<vmem>>, vector<1x16x128xbf16>
    %41 = vector.shape_cast %40 : vector<1x16x128xbf16> to vector<16x128xbf16>
    %cst_38 = arith.constant dense<0.000000e+00> : vector<24x128xf32>
    %42 = tpu.matmul %39, %41, %cst_38 {dimension_numbers = #tpu.dot_dimension_numbers<[1], [0], [0], [1], [0, 0, 1, 1], [], []>} : vector<24x16xbf16>, vector<16x128xbf16>, vector<24x128xf32> -> vector<24x128xf32>
    %43 = arith.addf %38, %42 : vector<24x128xf32>
    %c0_39 = arith.constant 0 : index
    %c0_40 = arith.constant 0 : index
    %44 = vector.load %arg6[%c0_39, %c0_40] : memref<24x128xf32, #tpu.memory_space<vmem>>, vector<24x128xf32>
    tpu.vector_store %arg6[%c0_39, %c0_40], %43 {strides = array<i32>} : memref<24x128xf32, #tpu.memory_space<vmem>>, vector<24x128xf32>,
    %c0_41 = arith.constant 0 : index
    %c0_42 = arith.constant 0 : index
    %45 = vector.load %arg6[%c0_41, %c0_42] : memref<24x128xf32, #tpu.memory_space<vmem>>, vector<24x128xf32>
    %46 = vector.extract_strided_slice %4 {offsets = [12, 0], sizes = [24, 16], strides = [1, 1]} : vector<40x16xbf16> to vector<24x16xbf16>
    %c6 = arith.constant 6 : index
    %c0_43 = arith.constant 0 : index
    %c0_44 = arith.constant 0 : index
    %47 = vector.load %arg3[%c6, %c0_43, %c0_44] : memref<9x16x128xbf16, #tpu.memory_space<vmem>>, vector<1x16x128xbf16>
    %48 = vector.shape_cast %47 : vector<1x16x128xbf16> to vector<16x128xbf16>
    %cst_45 = arith.constant dense<0.000000e+00> : vector<24x128xf32>
    %49 = tpu.matmul %46, %48, %cst_45 {dimension_numbers = #tpu.dot_dimension_numbers<[1], [0], [0], [1], [0, 0, 1, 1], [], []>} : vector<24x16xbf16>, vector<16x128xbf16>, vector<24x128xf32> -> vector<24x128xf32>
    %50 = arith.addf %45, %49 : vector<24x128xf32>
    %c0_46 = arith.constant 0 : index
    %c0_47 = arith.constant 0 : index
    %51 = vector.load %arg6[%c0_46, %c0_47] : memref<24x128xf32, #tpu.memory_space<vmem>>, vector<24x128xf32>
    tpu.vector_store %arg6[%c0_46, %c0_47], %50 {strides = array<i32>} : memref<24x128xf32, #tpu.memory_space<vmem>>, vector<24x128xf32>,
    %c0_48 = arith.constant 0 : index
    %c0_49 = arith.constant 0 : index
    %52 = vector.load %arg6[%c0_48, %c0_49] : memref<24x128xf32, #tpu.memory_space<vmem>>, vector<24x128xf32>
    %53 = vector.extract_strided_slice %4 {offsets = [13, 0], sizes = [24, 16], strides = [1, 1]} : vector<40x16xbf16> to vector<24x16xbf16>
    %c7 = arith.constant 7 : index
    %c0_50 = arith.constant 0 : index
    %c0_51 = arith.constant 0 : index
    %54 = vector.load %arg3[%c7, %c0_50, %c0_51] : memref<9x16x128xbf16, #tpu.memory_space<vmem>>, vector<1x16x128xbf16>
    %55 = vector.shape_cast %54 : vector<1x16x128xbf16> to vector<16x128xbf16>
    %cst_52 = arith.constant dense<0.000000e+00> : vector<24x128xf32>
    %56 = tpu.matmul %53, %55, %cst_52 {dimension_numbers = #tpu.dot_dimension_numbers<[1], [0], [0], [1], [0, 0, 1, 1], [], []>} : vector<24x16xbf16>, vector<16x128xbf16>, vector<24x128xf32> -> vector<24x128xf32>
    %57 = arith.addf %52, %56 : vector<24x128xf32>
    %c0_53 = arith.constant 0 : index
    %c0_54 = arith.constant 0 : index
    %58 = vector.load %arg6[%c0_53, %c0_54] : memref<24x128xf32, #tpu.memory_space<vmem>>, vector<24x128xf32>
    tpu.vector_store %arg6[%c0_53, %c0_54], %57 {strides = array<i32>} : memref<24x128xf32, #tpu.memory_space<vmem>>, vector<24x128xf32>,
    %c0_55 = arith.constant 0 : index
    %c0_56 = arith.constant 0 : index
    %59 = vector.load %arg6[%c0_55, %c0_56] : memref<24x128xf32, #tpu.memory_space<vmem>>, vector<24x128xf32>
    %60 = vector.extract_strided_slice %4 {offsets = [14, 0], sizes = [24, 16], strides = [1, 1]} : vector<40x16xbf16> to vector<24x16xbf16>
    %c8 = arith.constant 8 : index
    %c0_57 = arith.constant 0 : index
    %c0_58 = arith.constant 0 : index
    %61 = vector.load %arg3[%c8, %c0_57, %c0_58] : memref<9x16x128xbf16, #tpu.memory_space<vmem>>, vector<1x16x128xbf16>
    %62 = vector.shape_cast %61 : vector<1x16x128xbf16> to vector<16x128xbf16>
    %cst_59 = arith.constant dense<0.000000e+00> : vector<24x128xf32>
    %63 = tpu.matmul %60, %62, %cst_59 {dimension_numbers = #tpu.dot_dimension_numbers<[1], [0], [0], [1], [0, 0, 1, 1], [], []>} : vector<24x16xbf16>, vector<16x128xbf16>, vector<24x128xf32> -> vector<24x128xf32>
    %64 = arith.addf %59, %63 : vector<24x128xf32>
    %c0_60 = arith.constant 0 : index
    %c0_61 = arith.constant 0 : index
    %65 = vector.load %arg6[%c0_60, %c0_61] : memref<24x128xf32, #tpu.memory_space<vmem>>, vector<24x128xf32>
    tpu.vector_store %arg6[%c0_60, %c0_61], %64 {strides = array<i32>} : memref<24x128xf32, #tpu.memory_space<vmem>>, vector<24x128xf32>,
    %c0_62 = arith.constant 0 : index
    %c0_63 = arith.constant 0 : index
    %66 = vector.load %arg6[%c0_62, %c0_63] : memref<24x128xf32, #tpu.memory_space<vmem>>, vector<24x128xf32>
    %c0_64 = arith.constant 0 : index
    %c0_65 = arith.constant 0 : index
    %67 = vector.load %arg4[%c0_64, %c0_65] : memref<1x128xf32, #tpu.memory_space<vmem>>, vector<1x128xf32>
    %68 = vector.broadcast %67 : vector<1x128xf32> to vector<24x128xf32>
    %69 = arith.addf %66, %68 : vector<24x128xf32>
    %cst_66 = arith.constant 0.000000e+00 : f32
    %70 = vector.broadcast %cst_66 : f32 to vector<24x128xf32>
    %71 = arith.maximumf %69, %70 : vector<24x128xf32>
    %72 = arith.truncf %71 : vector<24x128xf32> to vector<24x128xbf16>
    %c0_67 = arith.constant 0 : index
    %c0_68 = arith.constant 0 : index
    %c0_69 = arith.constant 0 : index
    %73 = vector.load %arg5[%c0_67, %c0_68, %c0_69] : memref<1x24x128xbf16, #tpu.memory_space<vmem>>, vector<1x24x128xbf16>
    %74 = vector.shape_cast %73 : vector<1x24x128xbf16> to vector<24x128xbf16>
    %75 = vector.shape_cast %72 : vector<24x128xbf16> to vector<1x24x128xbf16>
    tpu.vector_store %arg5[%c0_67, %c0_68, %c0_69], %75 {strides = array<i32>} : memref<1x24x128xbf16, #tpu.memory_space<vmem>>, vector<1x24x128xbf16>,
    return
  }
  func.func @transform_0(%arg0: i32, %arg1: i32) -> (i32, i32, i32) {
    %c0_i32 = arith.constant 0 : i32
    %c0_i32_0 = arith.constant 0 : i32
    %c0_i32_1 = arith.constant 0 : i32
    return %arg0, %c0_i32, %c0_i32_0 : i32, i32, i32
  }
  func.func @transform_1(%arg0: i32, %arg1: i32) -> (i32, i32, i32) {
    %c0_i32 = arith.constant 0 : i32
    %c0_i32_0 = arith.constant 0 : i32
    %c0_i32_1 = arith.constant 0 : i32
    %c0_i32_2 = arith.constant 0 : i32
    return %c0_i32, %c0_i32_0, %c0_i32_1 : i32, i32, i32
  }
  func.func @transform_2(%arg0: i32, %arg1: i32) -> (i32, i32) {
    %c0_i32 = arith.constant 0 : i32
    %c0_i32_0 = arith.constant 0 : i32
    %c0_i32_1 = arith.constant 0 : i32
    return %c0_i32, %c0_i32_0 : i32, i32
  }
  func.func @transform_3(%arg0: i32, %arg1: i32) -> (i32, i32, i32) {
    %c0_i32 = arith.constant 0 : i32
    %c0_i32_0 = arith.constant 0 : i32
    return %arg0, %arg1, %c0_i32 : i32, i32, i32
  }
}

module attributes {stable_mosaic.version = 11 : i64} {
  func.func @_gemm_bias_kernel(%arg0: i32, %arg1: i32, %arg2: memref<8x16xbf16, #tpu.memory_space<vmem>>, %arg3: memref<16x128xbf16, #tpu.memory_space<vmem>>, %arg4: memref<1x128xf32, #tpu.memory_space<vmem>>, %arg5: memref<8x128xbf16, #tpu.memory_space<vmem>>) attributes {dimension_semantics = [#tpu.dimension_semantics<parallel>, #tpu.dimension_semantics<parallel>], iteration_bounds = array<i64: 1, 1>, scalar_prefetch = 0 : i64, scratch_operands = 0 : i64, tpu.core_type = #tpu.core_type<tc>, window_params = [{transform_indices = @transform_0, window_bounds = array<i64: 8, 16>}, {transform_indices = @transform_1, window_bounds = array<i64: 16, 128>}, {transform_indices = @transform_2, window_bounds = array<i64: 1, 128>}, {transform_indices = @transform_3, window_bounds = array<i64: 8, 128>}]} {
    %c0 = arith.constant 0 : index
    %c0_0 = arith.constant 0 : index
    %0 = vector.load %arg2[%c0, %c0_0] : memref<8x16xbf16, #tpu.memory_space<vmem>>, vector<8x16xbf16>
    %c0_1 = arith.constant 0 : index
    %c0_2 = arith.constant 0 : index
    %1 = vector.load %arg3[%c0_1, %c0_2] : memref<16x128xbf16, #tpu.memory_space<vmem>>, vector<16x128xbf16>
    %cst = arith.constant dense<0.000000e+00> : vector<8x128xf32>
    %2 = tpu.matmul %0, %1, %cst {dimension_numbers = #tpu.dot_dimension_numbers<[1], [0], [0], [1], [0, 0, 1, 1], [], []>} : vector<8x16xbf16>, vector<16x128xbf16>, vector<8x128xf32> -> vector<8x128xf32>
    %c0_3 = arith.constant 0 : index
    %c0_4 = arith.constant 0 : index
    %3 = vector.load %arg4[%c0_3, %c0_4] : memref<1x128xf32, #tpu.memory_space<vmem>>, vector<1x128xf32>
    %4 = vector.broadcast %3 : vector<1x128xf32> to vector<8x128xf32>
    %5 = arith.addf %2, %4 : vector<8x128xf32>
    %6 = arith.truncf %5 : vector<8x128xf32> to vector<8x128xbf16>
    %c0_5 = arith.constant 0 : index
    %c0_6 = arith.constant 0 : index
    %7 = vector.load %arg5[%c0_5, %c0_6] : memref<8x128xbf16, #tpu.memory_space<vmem>>, vector<8x128xbf16>
    tpu.vector_store %arg5[%c0_5, %c0_6], %6 {strides = array<i32>} : memref<8x128xbf16, #tpu.memory_space<vmem>>, vector<8x128xbf16>,
    return
  }
  func.func @transform_0(%arg0: i32, %arg1: i32) -> (i32, i32) {
    %c0_i32 = arith.constant 0 : i32
    %c0_i32_0 = arith.constant 0 : i32
    return %arg0, %c0_i32 : i32, i32
  }
  func.func @transform_1(%arg0: i32, %arg1: i32) -> (i32, i32) {
    %c0_i32 = arith.constant 0 : i32
    %c0_i32_0 = arith.constant 0 : i32
    return %c0_i32, %arg1 : i32, i32
  }
  func.func @transform_2(%arg0: i32, %arg1: i32) -> (i32, i32) {
    %c0_i32 = arith.constant 0 : i32
    %c0_i32_0 = arith.constant 0 : i32
    return %c0_i32, %arg1 : i32, i32
  }
  func.func @transform_3(%arg0: i32, %arg1: i32) -> (i32, i32) {
    %c0_i32 = arith.constant 0 : i32
    return %arg0, %arg1 : i32, i32
  }
}

module attributes {stable_mosaic.version = 11 : i64} {
  func.func @_gemm_bias_kernel(%arg0: i32, %arg1: i32, %arg2: memref<8x144xbf16, #tpu.memory_space<vmem>>, %arg3: memref<144x128xbf16, #tpu.memory_space<vmem>>, %arg4: memref<1x128xf32, #tpu.memory_space<vmem>>, %arg5: memref<8x128xbf16, #tpu.memory_space<vmem>>) attributes {dimension_semantics = [#tpu.dimension_semantics<parallel>, #tpu.dimension_semantics<parallel>], iteration_bounds = array<i64: 1, 1>, scalar_prefetch = 0 : i64, scratch_operands = 0 : i64, tpu.core_type = #tpu.core_type<tc>, window_params = [{transform_indices = @transform_0, window_bounds = array<i64: 8, 144>}, {transform_indices = @transform_1, window_bounds = array<i64: 144, 128>}, {transform_indices = @transform_2, window_bounds = array<i64: 1, 128>}, {transform_indices = @transform_3, window_bounds = array<i64: 8, 128>}]} {
    %c0 = arith.constant 0 : index
    %c0_0 = arith.constant 0 : index
    %0 = vector.load %arg2[%c0, %c0_0] : memref<8x144xbf16, #tpu.memory_space<vmem>>, vector<8x144xbf16>
    %c0_1 = arith.constant 0 : index
    %c0_2 = arith.constant 0 : index
    %1 = vector.load %arg3[%c0_1, %c0_2] : memref<144x128xbf16, #tpu.memory_space<vmem>>, vector<144x128xbf16>
    %cst = arith.constant dense<0.000000e+00> : vector<8x128xf32>
    %2 = tpu.matmul %0, %1, %cst {dimension_numbers = #tpu.dot_dimension_numbers<[1], [0], [0], [1], [0, 0, 1, 1], [], []>} : vector<8x144xbf16>, vector<144x128xbf16>, vector<8x128xf32> -> vector<8x128xf32>
    %c0_3 = arith.constant 0 : index
    %c0_4 = arith.constant 0 : index
    %3 = vector.load %arg4[%c0_3, %c0_4] : memref<1x128xf32, #tpu.memory_space<vmem>>, vector<1x128xf32>
    %4 = vector.broadcast %3 : vector<1x128xf32> to vector<8x128xf32>
    %5 = arith.addf %2, %4 : vector<8x128xf32>
    %cst_5 = arith.constant 0.000000e+00 : f32
    %6 = vector.broadcast %cst_5 : f32 to vector<8x128xf32>
    %7 = arith.maximumf %5, %6 : vector<8x128xf32>
    %8 = arith.truncf %7 : vector<8x128xf32> to vector<8x128xbf16>
    %c0_6 = arith.constant 0 : index
    %c0_7 = arith.constant 0 : index
    %9 = vector.load %arg5[%c0_6, %c0_7] : memref<8x128xbf16, #tpu.memory_space<vmem>>, vector<8x128xbf16>
    tpu.vector_store %arg5[%c0_6, %c0_7], %8 {strides = array<i32>} : memref<8x128xbf16, #tpu.memory_space<vmem>>, vector<8x128xbf16>,
    return
  }
  func.func @transform_0(%arg0: i32, %arg1: i32) -> (i32, i32) {
    %c0_i32 = arith.constant 0 : i32
    %c0_i32_0 = arith.constant 0 : i32
    return %arg0, %c0_i32 : i32, i32
  }
  func.func @transform_1(%arg0: i32, %arg1: i32) -> (i32, i32) {
    %c0_i32 = arith.constant 0 : i32
    %c0_i32_0 = arith.constant 0 : i32
    return %c0_i32, %arg1 : i32, i32
  }
  func.func @transform_2(%arg0: i32, %arg1: i32) -> (i32, i32) {
    %c0_i32 = arith.constant 0 : i32
    %c0_i32_0 = arith.constant 0 : i32
    return %c0_i32, %arg1 : i32, i32
  }
  func.func @transform_3(%arg0: i32, %arg1: i32) -> (i32, i32) {
    %c0_i32 = arith.constant 0 : i32
    return %arg0, %arg1 : i32, i32
  }
}

module attributes {stable_mosaic.version = 11 : i64} {
  func.func @_conv3x3_kernel(%arg0: i32, %arg1: i32, %arg2: memref<1x24x32xbf16, #tpu.memory_space<vmem>>, %arg3: memref<9x32x128xbf16, #tpu.memory_space<vmem>>, %arg4: memref<1x128xf32, #tpu.memory_space<vmem>>, %arg5: memref<1x8x128xbf16, #tpu.memory_space<vmem>>, %arg6: memref<1x8x128xbf16, #tpu.memory_space<vmem>>, %arg7: memref<8x128xf32, #tpu.memory_space<vmem>>) attributes {dimension_semantics = [#tpu.dimension_semantics<parallel>, #tpu.dimension_semantics<parallel>], iteration_bounds = array<i64: 2, 1>, scalar_prefetch = 0 : i64, scratch_operands = 1 : i64, tpu.core_type = #tpu.core_type<tc>, window_params = [{transform_indices = @transform_0, window_bounds = array<i64: 1, 24, 32>}, {pipeline_mode = #tpu.pipeline_mode<synchronous>, transform_indices = @transform_1, window_bounds = array<i64: 9, 32, 128>}, {pipeline_mode = #tpu.pipeline_mode<synchronous>, transform_indices = @transform_2, window_bounds = array<i64: 1, 128>}, {transform_indices = @transform_3, window_bounds = array<i64: 1, 8, 128>}, {transform_indices = @transform_4, window_bounds = array<i64: 1, 8, 128>}]} {
    %c8_i32 = arith.constant 8 : i32
    %0 = arith.muli %arg1, %c8_i32 : i32
    %1 = tpu.assume_multiple %0, 8 : i32
    %c0 = arith.constant 0 : index
    %2 = arith.index_cast %1 : i32 to index
    %c0_0 = arith.constant 0 : index
    %3 = vector.load %arg2[%c0, %2, %c0_0] : memref<1x24x32xbf16, #tpu.memory_space<vmem>>, vector<1x24x32xbf16>
    %4 = vector.shape_cast %3 : vector<1x24x32xbf16> to vector<24x32xbf16>
    %5 = vector.extract_strided_slice %4 {offsets = [0, 0], sizes = [8, 32], strides = [1, 1]} : vector<24x32xbf16> to vector<8x32xbf16>
    %c0_1 = arith.constant 0 : index
    %c0_2 = arith.constant 0 : index
    %c0_3 = arith.constant 0 : index
    %6 = vector.load %arg3[%c0_1, %c0_2, %c0_3] : memref<9x32x128xbf16, #tpu.memory_space<vmem>>, vector<1x32x128xbf16>
    %7 = vector.shape_cast %6 : vector<1x32x128xbf16> to vector<32x128xbf16>
    %cst = arith.constant dense<0.000000e+00> : vector<8x128xf32>
    %8 = tpu.matmul %5, %7, %cst {dimension_numbers = #tpu.dot_dimension_numbers<[1], [0], [0], [1], [0, 0, 1, 1], [], []>} : vector<8x32xbf16>, vector<32x128xbf16>, vector<8x128xf32> -> vector<8x128xf32>
    %c0_4 = arith.constant 0 : index
    %c0_5 = arith.constant 0 : index
    %9 = vector.load %arg7[%c0_4, %c0_5] : memref<8x128xf32, #tpu.memory_space<vmem>>, vector<8x128xf32>
    tpu.vector_store %arg7[%c0_4, %c0_5], %8 {strides = array<i32>} : memref<8x128xf32, #tpu.memory_space<vmem>>, vector<8x128xf32>,
    %c0_6 = arith.constant 0 : index
    %c0_7 = arith.constant 0 : index
    %10 = vector.load %arg7[%c0_6, %c0_7] : memref<8x128xf32, #tpu.memory_space<vmem>>, vector<8x128xf32>
    %11 = vector.extract_strided_slice %4 {offsets = [1, 0], sizes = [8, 32], strides = [1, 1]} : vector<24x32xbf16> to vector<8x32xbf16>
    %c1 = arith.constant 1 : index
    %c0_8 = arith.constant 0 : index
    %c0_9 = arith.constant 0 : index
    %12 = vector.load %arg3[%c1, %c0_8, %c0_9] : memref<9x32x128xbf16, #tpu.memory_space<vmem>>, vector<1x32x128xbf16>
    %13 = vector.shape_cast %12 : vector<1x32x128xbf16> to vector<32x128xbf16>
    %cst_10 = arith.constant dense<0.000000e+00> : vector<8x128xf32>
    %14 = tpu.matmul %11, %13, %cst_10 {dimension_numbers = #tpu.dot_dimension_numbers<[1], [0], [0], [1], [0, 0, 1, 1], [], []>} : vector<8x32xbf16>, vector<32x128xbf16>, vector<8x128xf32> -> vector<8x128xf32>
    %15 = arith.addf %10, %14 : vector<8x128xf32>
    %c0_11 = arith.constant 0 : index
    %c0_12 = arith.constant 0 : index
    %16 = vector.load %arg7[%c0_11, %c0_12] : memref<8x128xf32, #tpu.memory_space<vmem>>, vector<8x128xf32>
    tpu.vector_store %arg7[%c0_11, %c0_12], %15 {strides = array<i32>} : memref<8x128xf32, #tpu.memory_space<vmem>>, vector<8x128xf32>,
    %c0_13 = arith.constant 0 : index
    %c0_14 = arith.constant 0 : index
    %17 = vector.load %arg7[%c0_13, %c0_14] : memref<8x128xf32, #tpu.memory_space<vmem>>, vector<8x128xf32>
    %18 = vector.extract_strided_slice %4 {offsets = [2, 0], sizes = [8, 32], strides = [1, 1]} : vector<24x32xbf16> to vector<8x32xbf16>
    %c2 = arith.constant 2 : index
    %c0_15 = arith.constant 0 : index
    %c0_16 = arith.constant 0 : index
    %19 = vector.load %arg3[%c2, %c0_15, %c0_16] : memref<9x32x128xbf16, #tpu.memory_space<vmem>>, vector<1x32x128xbf16>
    %20 = vector.shape_cast %19 : vector<1x32x128xbf16> to vector<32x128xbf16>
    %cst_17 = arith.constant dense<0.000000e+00> : vector<8x128xf32>
    %21 = tpu.matmul %18, %20, %cst_17 {dimension_numbers = #tpu.dot_dimension_numbers<[1], [0], [0], [1], [0, 0, 1, 1], [], []>} : vector<8x32xbf16>, vector<32x128xbf16>, vector<8x128xf32> -> vector<8x128xf32>
    %22 = arith.addf %17, %21 : vector<8x128xf32>
    %c0_18 = arith.constant 0 : index
    %c0_19 = arith.constant 0 : index
    %23 = vector.load %arg7[%c0_18, %c0_19] : memref<8x128xf32, #tpu.memory_space<vmem>>, vector<8x128xf32>
    tpu.vector_store %arg7[%c0_18, %c0_19], %22 {strides = array<i32>} : memref<8x128xf32, #tpu.memory_space<vmem>>, vector<8x128xf32>,
    %c0_20 = arith.constant 0 : index
    %c0_21 = arith.constant 0 : index
    %24 = vector.load %arg7[%c0_20, %c0_21] : memref<8x128xf32, #tpu.memory_space<vmem>>, vector<8x128xf32>
    %25 = vector.extract_strided_slice %4 {offsets = [4, 0], sizes = [8, 32], strides = [1, 1]} : vector<24x32xbf16> to vector<8x32xbf16>
    %c3 = arith.constant 3 : index
    %c0_22 = arith.constant 0 : index
    %c0_23 = arith.constant 0 : index
    %26 = vector.load %arg3[%c3, %c0_22, %c0_23] : memref<9x32x128xbf16, #tpu.memory_space<vmem>>, vector<1x32x128xbf16>
    %27 = vector.shape_cast %26 : vector<1x32x128xbf16> to vector<32x128xbf16>
    %cst_24 = arith.constant dense<0.000000e+00> : vector<8x128xf32>
    %28 = tpu.matmul %25, %27, %cst_24 {dimension_numbers = #tpu.dot_dimension_numbers<[1], [0], [0], [1], [0, 0, 1, 1], [], []>} : vector<8x32xbf16>, vector<32x128xbf16>, vector<8x128xf32> -> vector<8x128xf32>
    %29 = arith.addf %24, %28 : vector<8x128xf32>
    %c0_25 = arith.constant 0 : index
    %c0_26 = arith.constant 0 : index
    %30 = vector.load %arg7[%c0_25, %c0_26] : memref<8x128xf32, #tpu.memory_space<vmem>>, vector<8x128xf32>
    tpu.vector_store %arg7[%c0_25, %c0_26], %29 {strides = array<i32>} : memref<8x128xf32, #tpu.memory_space<vmem>>, vector<8x128xf32>,
    %c0_27 = arith.constant 0 : index
    %c0_28 = arith.constant 0 : index
    %31 = vector.load %arg7[%c0_27, %c0_28] : memref<8x128xf32, #tpu.memory_space<vmem>>, vector<8x128xf32>
    %32 = vector.extract_strided_slice %4 {offsets = [5, 0], sizes = [8, 32], strides = [1, 1]} : vector<24x32xbf16> to vector<8x32xbf16>
    %c4 = arith.constant 4 : index
    %c0_29 = arith.constant 0 : index
    %c0_30 = arith.constant 0 : index
    %33 = vector.load %arg3[%c4, %c0_29, %c0_30] : memref<9x32x128xbf16, #tpu.memory_space<vmem>>, vector<1x32x128xbf16>
    %34 = vector.shape_cast %33 : vector<1x32x128xbf16> to vector<32x128xbf16>
    %cst_31 = arith.constant dense<0.000000e+00> : vector<8x128xf32>
    %35 = tpu.matmul %32, %34, %cst_31 {dimension_numbers = #tpu.dot_dimension_numbers<[1], [0], [0], [1], [0, 0, 1, 1], [], []>} : vector<8x32xbf16>, vector<32x128xbf16>, vector<8x128xf32> -> vector<8x128xf32>
    %36 = arith.addf %31, %35 : vector<8x128xf32>
    %c0_32 = arith.constant 0 : index
    %c0_33 = arith.constant 0 : index
    %37 = vector.load %arg7[%c0_32, %c0_33] : memref<8x128xf32, #tpu.memory_space<vmem>>, vector<8x128xf32>
    tpu.vector_store %arg7[%c0_32, %c0_33], %36 {strides = array<i32>} : memref<8x128xf32, #tpu.memory_space<vmem>>, vector<8x128xf32>,
    %c0_34 = arith.constant 0 : index
    %c0_35 = arith.constant 0 : index
    %38 = vector.load %arg7[%c0_34, %c0_35] : memref<8x128xf32, #tpu.memory_space<vmem>>, vector<8x128xf32>
    %39 = vector.extract_strided_slice %4 {offsets = [6, 0], sizes = [8, 32], strides = [1, 1]} : vector<24x32xbf16> to vector<8x32xbf16>
    %c5 = arith.constant 5 : index
    %c0_36 = arith.constant 0 : index
    %c0_37 = arith.constant 0 : index
    %40 = vector.load %arg3[%c5, %c0_36, %c0_37] : memref<9x32x128xbf16, #tpu.memory_space<vmem>>, vector<1x32x128xbf16>
    %41 = vector.shape_cast %40 : vector<1x32x128xbf16> to vector<32x128xbf16>
    %cst_38 = arith.constant dense<0.000000e+00> : vector<8x128xf32>
    %42 = tpu.matmul %39, %41, %cst_38 {dimension_numbers = #tpu.dot_dimension_numbers<[1], [0], [0], [1], [0, 0, 1, 1], [], []>} : vector<8x32xbf16>, vector<32x128xbf16>, vector<8x128xf32> -> vector<8x128xf32>
    %43 = arith.addf %38, %42 : vector<8x128xf32>
    %c0_39 = arith.constant 0 : index
    %c0_40 = arith.constant 0 : index
    %44 = vector.load %arg7[%c0_39, %c0_40] : memref<8x128xf32, #tpu.memory_space<vmem>>, vector<8x128xf32>
    tpu.vector_store %arg7[%c0_39, %c0_40], %43 {strides = array<i32>} : memref<8x128xf32, #tpu.memory_space<vmem>>, vector<8x128xf32>,
    %c0_41 = arith.constant 0 : index
    %c0_42 = arith.constant 0 : index
    %45 = vector.load %arg7[%c0_41, %c0_42] : memref<8x128xf32, #tpu.memory_space<vmem>>, vector<8x128xf32>
    %46 = vector.extract_strided_slice %4 {offsets = [8, 0], sizes = [8, 32], strides = [1, 1]} : vector<24x32xbf16> to vector<8x32xbf16>
    %c6 = arith.constant 6 : index
    %c0_43 = arith.constant 0 : index
    %c0_44 = arith.constant 0 : index
    %47 = vector.load %arg3[%c6, %c0_43, %c0_44] : memref<9x32x128xbf16, #tpu.memory_space<vmem>>, vector<1x32x128xbf16>
    %48 = vector.shape_cast %47 : vector<1x32x128xbf16> to vector<32x128xbf16>
    %cst_45 = arith.constant dense<0.000000e+00> : vector<8x128xf32>
    %49 = tpu.matmul %46, %48, %cst_45 {dimension_numbers = #tpu.dot_dimension_numbers<[1], [0], [0], [1], [0, 0, 1, 1], [], []>} : vector<8x32xbf16>, vector<32x128xbf16>, vector<8x128xf32> -> vector<8x128xf32>
    %50 = arith.addf %45, %49 : vector<8x128xf32>
    %c0_46 = arith.constant 0 : index
    %c0_47 = arith.constant 0 : index
    %51 = vector.load %arg7[%c0_46, %c0_47] : memref<8x128xf32, #tpu.memory_space<vmem>>, vector<8x128xf32>
    tpu.vector_store %arg7[%c0_46, %c0_47], %50 {strides = array<i32>} : memref<8x128xf32, #tpu.memory_space<vmem>>, vector<8x128xf32>,
    %c0_48 = arith.constant 0 : index
    %c0_49 = arith.constant 0 : index
    %52 = vector.load %arg7[%c0_48, %c0_49] : memref<8x128xf32, #tpu.memory_space<vmem>>, vector<8x128xf32>
    %53 = vector.extract_strided_slice %4 {offsets = [9, 0], sizes = [8, 32], strides = [1, 1]} : vector<24x32xbf16> to vector<8x32xbf16>
    %c7 = arith.constant 7 : index
    %c0_50 = arith.constant 0 : index
    %c0_51 = arith.constant 0 : index
    %54 = vector.load %arg3[%c7, %c0_50, %c0_51] : memref<9x32x128xbf16, #tpu.memory_space<vmem>>, vector<1x32x128xbf16>
    %55 = vector.shape_cast %54 : vector<1x32x128xbf16> to vector<32x128xbf16>
    %cst_52 = arith.constant dense<0.000000e+00> : vector<8x128xf32>
    %56 = tpu.matmul %53, %55, %cst_52 {dimension_numbers = #tpu.dot_dimension_numbers<[1], [0], [0], [1], [0, 0, 1, 1], [], []>} : vector<8x32xbf16>, vector<32x128xbf16>, vector<8x128xf32> -> vector<8x128xf32>
    %57 = arith.addf %52, %56 : vector<8x128xf32>
    %c0_53 = arith.constant 0 : index
    %c0_54 = arith.constant 0 : index
    %58 = vector.load %arg7[%c0_53, %c0_54] : memref<8x128xf32, #tpu.memory_space<vmem>>, vector<8x128xf32>
    tpu.vector_store %arg7[%c0_53, %c0_54], %57 {strides = array<i32>} : memref<8x128xf32, #tpu.memory_space<vmem>>, vector<8x128xf32>,
    %c0_55 = arith.constant 0 : index
    %c0_56 = arith.constant 0 : index
    %59 = vector.load %arg7[%c0_55, %c0_56] : memref<8x128xf32, #tpu.memory_space<vmem>>, vector<8x128xf32>
    %60 = vector.extract_strided_slice %4 {offsets = [10, 0], sizes = [8, 32], strides = [1, 1]} : vector<24x32xbf16> to vector<8x32xbf16>
    %c8 = arith.constant 8 : index
    %c0_57 = arith.constant 0 : index
    %c0_58 = arith.constant 0 : index
    %61 = vector.load %arg3[%c8, %c0_57, %c0_58] : memref<9x32x128xbf16, #tpu.memory_space<vmem>>, vector<1x32x128xbf16>
    %62 = vector.shape_cast %61 : vector<1x32x128xbf16> to vector<32x128xbf16>
    %cst_59 = arith.constant dense<0.000000e+00> : vector<8x128xf32>
    %63 = tpu.matmul %60, %62, %cst_59 {dimension_numbers = #tpu.dot_dimension_numbers<[1], [0], [0], [1], [0, 0, 1, 1], [], []>} : vector<8x32xbf16>, vector<32x128xbf16>, vector<8x128xf32> -> vector<8x128xf32>
    %64 = arith.addf %59, %63 : vector<8x128xf32>
    %c0_60 = arith.constant 0 : index
    %c0_61 = arith.constant 0 : index
    %65 = vector.load %arg7[%c0_60, %c0_61] : memref<8x128xf32, #tpu.memory_space<vmem>>, vector<8x128xf32>
    tpu.vector_store %arg7[%c0_60, %c0_61], %64 {strides = array<i32>} : memref<8x128xf32, #tpu.memory_space<vmem>>, vector<8x128xf32>,
    %c0_62 = arith.constant 0 : index
    %c0_63 = arith.constant 0 : index
    %66 = vector.load %arg7[%c0_62, %c0_63] : memref<8x128xf32, #tpu.memory_space<vmem>>, vector<8x128xf32>
    %c0_64 = arith.constant 0 : index
    %c0_65 = arith.constant 0 : index
    %67 = vector.load %arg4[%c0_64, %c0_65] : memref<1x128xf32, #tpu.memory_space<vmem>>, vector<1x128xf32>
    %68 = vector.broadcast %67 : vector<1x128xf32> to vector<8x128xf32>
    %69 = arith.addf %66, %68 : vector<8x128xf32>
    %c0_66 = arith.constant 0 : index
    %c0_67 = arith.constant 0 : index
    %c0_68 = arith.constant 0 : index
    %70 = vector.load %arg5[%c0_66, %c0_67, %c0_68] : memref<1x8x128xbf16, #tpu.memory_space<vmem>>, vector<1x8x128xbf16>
    %71 = vector.shape_cast %70 : vector<1x8x128xbf16> to vector<8x128xbf16>
    %72 = arith.extf %71 : vector<8x128xbf16> to vector<8x128xf32>
    %73 = arith.addf %69, %72 : vector<8x128xf32>
    %cst_69 = arith.constant 0.000000e+00 : f32
    %74 = vector.broadcast %cst_69 : f32 to vector<8x128xf32>
    %75 = arith.maximumf %73, %74 : vector<8x128xf32>
    %76 = arith.truncf %75 : vector<8x128xf32> to vector<8x128xbf16>
    %c0_70 = arith.constant 0 : index
    %c0_71 = arith.constant 0 : index
    %c0_72 = arith.constant 0 : index
    %77 = vector.load %arg6[%c0_70, %c0_71, %c0_72] : memref<1x8x128xbf16, #tpu.memory_space<vmem>>, vector<1x8x128xbf16>
    %78 = vector.shape_cast %77 : vector<1x8x128xbf16> to vector<8x128xbf16>
    %79 = vector.shape_cast %76 : vector<8x128xbf16> to vector<1x8x128xbf16>
    tpu.vector_store %arg6[%c0_70, %c0_71, %c0_72], %79 {strides = array<i32>} : memref<1x8x128xbf16, #tpu.memory_space<vmem>>, vector<1x8x128xbf16>,
    return
  }
  func.func @transform_0(%arg0: i32, %arg1: i32) -> (i32, i32, i32) {
    %c0_i32 = arith.constant 0 : i32
    %c0_i32_0 = arith.constant 0 : i32
    %c0_i32_1 = arith.constant 0 : i32
    return %arg0, %c0_i32, %c0_i32_0 : i32, i32, i32
  }
  func.func @transform_1(%arg0: i32, %arg1: i32) -> (i32, i32, i32) {
    %c0_i32 = arith.constant 0 : i32
    %c0_i32_0 = arith.constant 0 : i32
    %c0_i32_1 = arith.constant 0 : i32
    %c0_i32_2 = arith.constant 0 : i32
    return %c0_i32, %c0_i32_0, %c0_i32_1 : i32, i32, i32
  }
  func.func @transform_2(%arg0: i32, %arg1: i32) -> (i32, i32) {
    %c0_i32 = arith.constant 0 : i32
    %c0_i32_0 = arith.constant 0 : i32
    %c0_i32_1 = arith.constant 0 : i32
    return %c0_i32, %c0_i32_0 : i32, i32
  }
  func.func @transform_3(%arg0: i32, %arg1: i32) -> (i32, i32, i32) {
    %c0_i32 = arith.constant 0 : i32
    %c0_i32_0 = arith.constant 0 : i32
    return %arg0, %arg1, %c0_i32 : i32, i32, i32
  }
  func.func @transform_4(%arg0: i32, %arg1: i32) -> (i32, i32, i32) {
    %c0_i32 = arith.constant 0 : i32
    %c0_i32_0 = arith.constant 0 : i32
    return %arg0, %arg1, %c0_i32 : i32, i32, i32
  }
}

module attributes {stable_mosaic.version = 11 : i64} {
  func.func @_conv3x3_kernel(%arg0: i32, %arg1: i32, %arg2: memref<1x24x32xbf16, #tpu.memory_space<vmem>>, %arg3: memref<9x32x128xbf16, #tpu.memory_space<vmem>>, %arg4: memref<1x128xf32, #tpu.memory_space<vmem>>, %arg5: memref<1x8x128xbf16, #tpu.memory_space<vmem>>, %arg6: memref<8x128xf32, #tpu.memory_space<vmem>>) attributes {dimension_semantics = [#tpu.dimension_semantics<parallel>, #tpu.dimension_semantics<parallel>], iteration_bounds = array<i64: 2, 1>, scalar_prefetch = 0 : i64, scratch_operands = 1 : i64, tpu.core_type = #tpu.core_type<tc>, window_params = [{transform_indices = @transform_0, window_bounds = array<i64: 1, 24, 32>}, {pipeline_mode = #tpu.pipeline_mode<synchronous>, transform_indices = @transform_1, window_bounds = array<i64: 9, 32, 128>}, {pipeline_mode = #tpu.pipeline_mode<synchronous>, transform_indices = @transform_2, window_bounds = array<i64: 1, 128>}, {transform_indices = @transform_3, window_bounds = array<i64: 1, 8, 128>}]} {
    %c8_i32 = arith.constant 8 : i32
    %0 = arith.muli %arg1, %c8_i32 : i32
    %1 = tpu.assume_multiple %0, 8 : i32
    %c0 = arith.constant 0 : index
    %2 = arith.index_cast %1 : i32 to index
    %c0_0 = arith.constant 0 : index
    %3 = vector.load %arg2[%c0, %2, %c0_0] : memref<1x24x32xbf16, #tpu.memory_space<vmem>>, vector<1x24x32xbf16>
    %4 = vector.shape_cast %3 : vector<1x24x32xbf16> to vector<24x32xbf16>
    %5 = vector.extract_strided_slice %4 {offsets = [0, 0], sizes = [8, 32], strides = [1, 1]} : vector<24x32xbf16> to vector<8x32xbf16>
    %c0_1 = arith.constant 0 : index
    %c0_2 = arith.constant 0 : index
    %c0_3 = arith.constant 0 : index
    %6 = vector.load %arg3[%c0_1, %c0_2, %c0_3] : memref<9x32x128xbf16, #tpu.memory_space<vmem>>, vector<1x32x128xbf16>
    %7 = vector.shape_cast %6 : vector<1x32x128xbf16> to vector<32x128xbf16>
    %cst = arith.constant dense<0.000000e+00> : vector<8x128xf32>
    %8 = tpu.matmul %5, %7, %cst {dimension_numbers = #tpu.dot_dimension_numbers<[1], [0], [0], [1], [0, 0, 1, 1], [], []>} : vector<8x32xbf16>, vector<32x128xbf16>, vector<8x128xf32> -> vector<8x128xf32>
    %c0_4 = arith.constant 0 : index
    %c0_5 = arith.constant 0 : index
    %9 = vector.load %arg6[%c0_4, %c0_5] : memref<8x128xf32, #tpu.memory_space<vmem>>, vector<8x128xf32>
    tpu.vector_store %arg6[%c0_4, %c0_5], %8 {strides = array<i32>} : memref<8x128xf32, #tpu.memory_space<vmem>>, vector<8x128xf32>,
    %c0_6 = arith.constant 0 : index
    %c0_7 = arith.constant 0 : index
    %10 = vector.load %arg6[%c0_6, %c0_7] : memref<8x128xf32, #tpu.memory_space<vmem>>, vector<8x128xf32>
    %11 = vector.extract_strided_slice %4 {offsets = [1, 0], sizes = [8, 32], strides = [1, 1]} : vector<24x32xbf16> to vector<8x32xbf16>
    %c1 = arith.constant 1 : index
    %c0_8 = arith.constant 0 : index
    %c0_9 = arith.constant 0 : index
    %12 = vector.load %arg3[%c1, %c0_8, %c0_9] : memref<9x32x128xbf16, #tpu.memory_space<vmem>>, vector<1x32x128xbf16>
    %13 = vector.shape_cast %12 : vector<1x32x128xbf16> to vector<32x128xbf16>
    %cst_10 = arith.constant dense<0.000000e+00> : vector<8x128xf32>
    %14 = tpu.matmul %11, %13, %cst_10 {dimension_numbers = #tpu.dot_dimension_numbers<[1], [0], [0], [1], [0, 0, 1, 1], [], []>} : vector<8x32xbf16>, vector<32x128xbf16>, vector<8x128xf32> -> vector<8x128xf32>
    %15 = arith.addf %10, %14 : vector<8x128xf32>
    %c0_11 = arith.constant 0 : index
    %c0_12 = arith.constant 0 : index
    %16 = vector.load %arg6[%c0_11, %c0_12] : memref<8x128xf32, #tpu.memory_space<vmem>>, vector<8x128xf32>
    tpu.vector_store %arg6[%c0_11, %c0_12], %15 {strides = array<i32>} : memref<8x128xf32, #tpu.memory_space<vmem>>, vector<8x128xf32>,
    %c0_13 = arith.constant 0 : index
    %c0_14 = arith.constant 0 : index
    %17 = vector.load %arg6[%c0_13, %c0_14] : memref<8x128xf32, #tpu.memory_space<vmem>>, vector<8x128xf32>
    %18 = vector.extract_strided_slice %4 {offsets = [2, 0], sizes = [8, 32], strides = [1, 1]} : vector<24x32xbf16> to vector<8x32xbf16>
    %c2 = arith.constant 2 : index
    %c0_15 = arith.constant 0 : index
    %c0_16 = arith.constant 0 : index
    %19 = vector.load %arg3[%c2, %c0_15, %c0_16] : memref<9x32x128xbf16, #tpu.memory_space<vmem>>, vector<1x32x128xbf16>
    %20 = vector.shape_cast %19 : vector<1x32x128xbf16> to vector<32x128xbf16>
    %cst_17 = arith.constant dense<0.000000e+00> : vector<8x128xf32>
    %21 = tpu.matmul %18, %20, %cst_17 {dimension_numbers = #tpu.dot_dimension_numbers<[1], [0], [0], [1], [0, 0, 1, 1], [], []>} : vector<8x32xbf16>, vector<32x128xbf16>, vector<8x128xf32> -> vector<8x128xf32>
    %22 = arith.addf %17, %21 : vector<8x128xf32>
    %c0_18 = arith.constant 0 : index
    %c0_19 = arith.constant 0 : index
    %23 = vector.load %arg6[%c0_18, %c0_19] : memref<8x128xf32, #tpu.memory_space<vmem>>, vector<8x128xf32>
    tpu.vector_store %arg6[%c0_18, %c0_19], %22 {strides = array<i32>} : memref<8x128xf32, #tpu.memory_space<vmem>>, vector<8x128xf32>,
    %c0_20 = arith.constant 0 : index
    %c0_21 = arith.constant 0 : index
    %24 = vector.load %arg6[%c0_20, %c0_21] : memref<8x128xf32, #tpu.memory_space<vmem>>, vector<8x128xf32>
    %25 = vector.extract_strided_slice %4 {offsets = [4, 0], sizes = [8, 32], strides = [1, 1]} : vector<24x32xbf16> to vector<8x32xbf16>
    %c3 = arith.constant 3 : index
    %c0_22 = arith.constant 0 : index
    %c0_23 = arith.constant 0 : index
    %26 = vector.load %arg3[%c3, %c0_22, %c0_23] : memref<9x32x128xbf16, #tpu.memory_space<vmem>>, vector<1x32x128xbf16>
    %27 = vector.shape_cast %26 : vector<1x32x128xbf16> to vector<32x128xbf16>
    %cst_24 = arith.constant dense<0.000000e+00> : vector<8x128xf32>
    %28 = tpu.matmul %25, %27, %cst_24 {dimension_numbers = #tpu.dot_dimension_numbers<[1], [0], [0], [1], [0, 0, 1, 1], [], []>} : vector<8x32xbf16>, vector<32x128xbf16>, vector<8x128xf32> -> vector<8x128xf32>
    %29 = arith.addf %24, %28 : vector<8x128xf32>
    %c0_25 = arith.constant 0 : index
    %c0_26 = arith.constant 0 : index
    %30 = vector.load %arg6[%c0_25, %c0_26] : memref<8x128xf32, #tpu.memory_space<vmem>>, vector<8x128xf32>
    tpu.vector_store %arg6[%c0_25, %c0_26], %29 {strides = array<i32>} : memref<8x128xf32, #tpu.memory_space<vmem>>, vector<8x128xf32>,
    %c0_27 = arith.constant 0 : index
    %c0_28 = arith.constant 0 : index
    %31 = vector.load %arg6[%c0_27, %c0_28] : memref<8x128xf32, #tpu.memory_space<vmem>>, vector<8x128xf32>
    %32 = vector.extract_strided_slice %4 {offsets = [5, 0], sizes = [8, 32], strides = [1, 1]} : vector<24x32xbf16> to vector<8x32xbf16>
    %c4 = arith.constant 4 : index
    %c0_29 = arith.constant 0 : index
    %c0_30 = arith.constant 0 : index
    %33 = vector.load %arg3[%c4, %c0_29, %c0_30] : memref<9x32x128xbf16, #tpu.memory_space<vmem>>, vector<1x32x128xbf16>
    %34 = vector.shape_cast %33 : vector<1x32x128xbf16> to vector<32x128xbf16>
    %cst_31 = arith.constant dense<0.000000e+00> : vector<8x128xf32>
    %35 = tpu.matmul %32, %34, %cst_31 {dimension_numbers = #tpu.dot_dimension_numbers<[1], [0], [0], [1], [0, 0, 1, 1], [], []>} : vector<8x32xbf16>, vector<32x128xbf16>, vector<8x128xf32> -> vector<8x128xf32>
    %36 = arith.addf %31, %35 : vector<8x128xf32>
    %c0_32 = arith.constant 0 : index
    %c0_33 = arith.constant 0 : index
    %37 = vector.load %arg6[%c0_32, %c0_33] : memref<8x128xf32, #tpu.memory_space<vmem>>, vector<8x128xf32>
    tpu.vector_store %arg6[%c0_32, %c0_33], %36 {strides = array<i32>} : memref<8x128xf32, #tpu.memory_space<vmem>>, vector<8x128xf32>,
    %c0_34 = arith.constant 0 : index
    %c0_35 = arith.constant 0 : index
    %38 = vector.load %arg6[%c0_34, %c0_35] : memref<8x128xf32, #tpu.memory_space<vmem>>, vector<8x128xf32>
    %39 = vector.extract_strided_slice %4 {offsets = [6, 0], sizes = [8, 32], strides = [1, 1]} : vector<24x32xbf16> to vector<8x32xbf16>
    %c5 = arith.constant 5 : index
    %c0_36 = arith.constant 0 : index
    %c0_37 = arith.constant 0 : index
    %40 = vector.load %arg3[%c5, %c0_36, %c0_37] : memref<9x32x128xbf16, #tpu.memory_space<vmem>>, vector<1x32x128xbf16>
    %41 = vector.shape_cast %40 : vector<1x32x128xbf16> to vector<32x128xbf16>
    %cst_38 = arith.constant dense<0.000000e+00> : vector<8x128xf32>
    %42 = tpu.matmul %39, %41, %cst_38 {dimension_numbers = #tpu.dot_dimension_numbers<[1], [0], [0], [1], [0, 0, 1, 1], [], []>} : vector<8x32xbf16>, vector<32x128xbf16>, vector<8x128xf32> -> vector<8x128xf32>
    %43 = arith.addf %38, %42 : vector<8x128xf32>
    %c0_39 = arith.constant 0 : index
    %c0_40 = arith.constant 0 : index
    %44 = vector.load %arg6[%c0_39, %c0_40] : memref<8x128xf32, #tpu.memory_space<vmem>>, vector<8x128xf32>
    tpu.vector_store %arg6[%c0_39, %c0_40], %43 {strides = array<i32>} : memref<8x128xf32, #tpu.memory_space<vmem>>, vector<8x128xf32>,
    %c0_41 = arith.constant 0 : index
    %c0_42 = arith.constant 0 : index
    %45 = vector.load %arg6[%c0_41, %c0_42] : memref<8x128xf32, #tpu.memory_space<vmem>>, vector<8x128xf32>
    %46 = vector.extract_strided_slice %4 {offsets = [8, 0], sizes = [8, 32], strides = [1, 1]} : vector<24x32xbf16> to vector<8x32xbf16>
    %c6 = arith.constant 6 : index
    %c0_43 = arith.constant 0 : index
    %c0_44 = arith.constant 0 : index
    %47 = vector.load %arg3[%c6, %c0_43, %c0_44] : memref<9x32x128xbf16, #tpu.memory_space<vmem>>, vector<1x32x128xbf16>
    %48 = vector.shape_cast %47 : vector<1x32x128xbf16> to vector<32x128xbf16>
    %cst_45 = arith.constant dense<0.000000e+00> : vector<8x128xf32>
    %49 = tpu.matmul %46, %48, %cst_45 {dimension_numbers = #tpu.dot_dimension_numbers<[1], [0], [0], [1], [0, 0, 1, 1], [], []>} : vector<8x32xbf16>, vector<32x128xbf16>, vector<8x128xf32> -> vector<8x128xf32>
    %50 = arith.addf %45, %49 : vector<8x128xf32>
    %c0_46 = arith.constant 0 : index
    %c0_47 = arith.constant 0 : index
    %51 = vector.load %arg6[%c0_46, %c0_47] : memref<8x128xf32, #tpu.memory_space<vmem>>, vector<8x128xf32>
    tpu.vector_store %arg6[%c0_46, %c0_47], %50 {strides = array<i32>} : memref<8x128xf32, #tpu.memory_space<vmem>>, vector<8x128xf32>,
    %c0_48 = arith.constant 0 : index
    %c0_49 = arith.constant 0 : index
    %52 = vector.load %arg6[%c0_48, %c0_49] : memref<8x128xf32, #tpu.memory_space<vmem>>, vector<8x128xf32>
    %53 = vector.extract_strided_slice %4 {offsets = [9, 0], sizes = [8, 32], strides = [1, 1]} : vector<24x32xbf16> to vector<8x32xbf16>
    %c7 = arith.constant 7 : index
    %c0_50 = arith.constant 0 : index
    %c0_51 = arith.constant 0 : index
    %54 = vector.load %arg3[%c7, %c0_50, %c0_51] : memref<9x32x128xbf16, #tpu.memory_space<vmem>>, vector<1x32x128xbf16>
    %55 = vector.shape_cast %54 : vector<1x32x128xbf16> to vector<32x128xbf16>
    %cst_52 = arith.constant dense<0.000000e+00> : vector<8x128xf32>
    %56 = tpu.matmul %53, %55, %cst_52 {dimension_numbers = #tpu.dot_dimension_numbers<[1], [0], [0], [1], [0, 0, 1, 1], [], []>} : vector<8x32xbf16>, vector<32x128xbf16>, vector<8x128xf32> -> vector<8x128xf32>
    %57 = arith.addf %52, %56 : vector<8x128xf32>
    %c0_53 = arith.constant 0 : index
    %c0_54 = arith.constant 0 : index
    %58 = vector.load %arg6[%c0_53, %c0_54] : memref<8x128xf32, #tpu.memory_space<vmem>>, vector<8x128xf32>
    tpu.vector_store %arg6[%c0_53, %c0_54], %57 {strides = array<i32>} : memref<8x128xf32, #tpu.memory_space<vmem>>, vector<8x128xf32>,
    %c0_55 = arith.constant 0 : index
    %c0_56 = arith.constant 0 : index
    %59 = vector.load %arg6[%c0_55, %c0_56] : memref<8x128xf32, #tpu.memory_space<vmem>>, vector<8x128xf32>
    %60 = vector.extract_strided_slice %4 {offsets = [10, 0], sizes = [8, 32], strides = [1, 1]} : vector<24x32xbf16> to vector<8x32xbf16>
    %c8 = arith.constant 8 : index
    %c0_57 = arith.constant 0 : index
    %c0_58 = arith.constant 0 : index
    %61 = vector.load %arg3[%c8, %c0_57, %c0_58] : memref<9x32x128xbf16, #tpu.memory_space<vmem>>, vector<1x32x128xbf16>
    %62 = vector.shape_cast %61 : vector<1x32x128xbf16> to vector<32x128xbf16>
    %cst_59 = arith.constant dense<0.000000e+00> : vector<8x128xf32>
    %63 = tpu.matmul %60, %62, %cst_59 {dimension_numbers = #tpu.dot_dimension_numbers<[1], [0], [0], [1], [0, 0, 1, 1], [], []>} : vector<8x32xbf16>, vector<32x128xbf16>, vector<8x128xf32> -> vector<8x128xf32>
    %64 = arith.addf %59, %63 : vector<8x128xf32>
    %c0_60 = arith.constant 0 : index
    %c0_61 = arith.constant 0 : index
    %65 = vector.load %arg6[%c0_60, %c0_61] : memref<8x128xf32, #tpu.memory_space<vmem>>, vector<8x128xf32>
    tpu.vector_store %arg6[%c0_60, %c0_61], %64 {strides = array<i32>} : memref<8x128xf32, #tpu.memory_space<vmem>>, vector<8x128xf32>,
    %c0_62 = arith.constant 0 : index
    %c0_63 = arith.constant 0 : index
    %66 = vector.load %arg6[%c0_62, %c0_63] : memref<8x128xf32, #tpu.memory_space<vmem>>, vector<8x128xf32>
    %c0_64 = arith.constant 0 : index
    %c0_65 = arith.constant 0 : index
    %67 = vector.load %arg4[%c0_64, %c0_65] : memref<1x128xf32, #tpu.memory_space<vmem>>, vector<1x128xf32>
    %68 = vector.broadcast %67 : vector<1x128xf32> to vector<8x128xf32>
    %69 = arith.addf %66, %68 : vector<8x128xf32>
    %cst_66 = arith.constant 0.000000e+00 : f32
    %70 = vector.broadcast %cst_66 : f32 to vector<8x128xf32>
    %71 = arith.maximumf %69, %70 : vector<8x128xf32>
    %72 = arith.truncf %71 : vector<8x128xf32> to vector<8x128xbf16>
    %c0_67 = arith.constant 0 : index
    %c0_68 = arith.constant 0 : index
    %c0_69 = arith.constant 0 : index
    %73 = vector.load %arg5[%c0_67, %c0_68, %c0_69] : memref<1x8x128xbf16, #tpu.memory_space<vmem>>, vector<1x8x128xbf16>
    %74 = vector.shape_cast %73 : vector<1x8x128xbf16> to vector<8x128xbf16>
    %75 = vector.shape_cast %72 : vector<8x128xbf16> to vector<1x8x128xbf16>
    tpu.vector_store %arg5[%c0_67, %c0_68, %c0_69], %75 {strides = array<i32>} : memref<1x8x128xbf16, #tpu.memory_space<vmem>>, vector<1x8x128xbf16>,
    return
  }
  func.func @transform_0(%arg0: i32, %arg1: i32) -> (i32, i32, i32) {
    %c0_i32 = arith.constant 0 : i32
    %c0_i32_0 = arith.constant 0 : i32
    %c0_i32_1 = arith.constant 0 : i32
    return %arg0, %c0_i32, %c0_i32_0 : i32, i32, i32
  }
  func.func @transform_1(%arg0: i32, %arg1: i32) -> (i32, i32, i32) {
    %c0_i32 = arith.constant 0 : i32
    %c0_i32_0 = arith.constant 0 : i32
    %c0_i32_1 = arith.constant 0 : i32
    %c0_i32_2 = arith.constant 0 : i32
    return %c0_i32, %c0_i32_0, %c0_i32_1 : i32, i32, i32
  }
  func.func @transform_2(%arg0: i32, %arg1: i32) -> (i32, i32) {
    %c0_i32 = arith.constant 0 : i32
    %c0_i32_0 = arith.constant 0 : i32
    %c0_i32_1 = arith.constant 0 : i32
    return %c0_i32, %c0_i32_0 : i32, i32
  }
  func.func @transform_3(%arg0: i32, %arg1: i32) -> (i32, i32, i32) {
    %c0_i32 = arith.constant 0 : i32
    %c0_i32_0 = arith.constant 0 : i32
    return %arg0, %arg1, %c0_i32 : i32, i32, i32
  }
}

</mosaic_0001>

<llo_original>
// kernel: _forward_impl.15
$region0: #{_forward_impl.15}
  #allocation0 [shape = 'u32[]', space=smem, size = 0x4, offset = 0x4, fixed_abs, tag = 'smem constant byte address 0x4 - core index']
  #allocation1 [shape = 'u32[72,128]{1,0:T(1,128)}', space=vmem, size = 0x9000, scoped, tag = 'internal scratch']
  %s0 = inlined_call_operand.vmem [shape: bf16[512,147], index: 0, kind: input, shape index: {}]
  %s1 = inlined_call_operand.vmem [shape: bf16[147,128], index: 1, kind: input, shape index: {}]
  %s2 = inlined_call_operand.vmem [shape: f32[1,128], index: 2, kind: input, shape index: {}]
  %s3 = inlined_call_operand.vmem [shape: bf16[512,128], index: 3, kind: output, shape index: {}]
  %s4 = sld [smem:[#allocation0]]
  $region45: #{_forward_impl.15} parent=0
    _
  %s6 = ssub.s32 1, %s4
  %s7 = scalar_select 0, %s6, %s4
  loop: start=0, step=1, limit=4
  $region2: #{_forward_impl.15} parent=0 // loop_pre_header
    _
  $region3: #{_forward_impl.15} parent=0 // loop_header
    %s9 = sphi 0, %s13
    %p10 = scmp.ge.s32.totalorder %s9, 4
    %s16 = sphi 0, %s28
    %s17 = sphi 0, %s24
    %s18 = sphi 0, %s16
    %s19 = sphi 0, %s17
    %s20 = sphi 0, %s18
    %s21 = sphi 0, %s19
    %s31 = sphi 0, %s33
    %s34 = sphi 0, %s31
    %s35 = sphi 0, %s34
    %s51 = sphi 0, %s35
    %s57 = sphi 0, %s59
    %s60 = sphi 0, %s57
    %s61 = sphi 0, %s60
    %s77 = sphi 0, %s61
    %s83 = sphi 0, %s85
    %s86 = sphi 0, %s83
    %s87 = sphi 0, %s86
    %s103 = sphi 0, %s87
    %s111 = sphi 0, %s113
    %s114 = sphi 0, %s111
    %s115 = sphi 0, %s114
    %s131 = sphi 0, %s115
  $region4: #{_forward_impl.15} parent=0 // loop_header_branch
    %12 = sbr.rel (%p10) target = $region8
  $region5: #{_forward_impl.15} parent=0 // loop_body
    %s14 = ssub.s32 %s9, 1
    %s15 = ssub.s32 %s9, 2
    %s22 = sadd.s32 1, %s17
    %p23 = scmp.ge.s32.totalorder %s22, 1
    %s24 = scalar_select %p23, 0, %s22
    %s25 = sadd.s32 1, %s16
    %s26 = scalar_select %p23, %s25, %s16
    %p27 = scmp.ge.s32.totalorder %s26, 2
    %s28 = scalar_select %p27, 0, %s26
    %s29 = ssub.s32 %s16, %s28
    %p30 = scmp.eq.s32.totalorder %s29, 0
    %s32 = sadd.s32 %s31, 1
    %s33 = scalar_select %p30, %s31, %s32
    %p36 = pneg %p30
    %p37 = scmp.eq.s32.totalorder %s9, 1
    %p38 = por %p36, %p37
    %p39 = scmp.ne.s32.totalorder %s31, %s34
    %p40 = scmp.eq.s32.totalorder %s9, 0
    %p41 = por %p39, %p40
    %p42 = scmp.ne.s32.totalorder %s31, %s34
    %p43 = scmp.eq.s32.totalorder %s14, 1
    %p44 = por %p42, %p43
    %p45 = scmp.ne.s32.totalorder %s34, %s35
    %p46 = scmp.eq.s32.totalorder %s14, 0
    %p47 = por %p45, %p46
    %p48 = scmp.ne.s32.totalorder %s34, %s35
    %p49 = scmp.eq.s32.totalorder %s15, 1
    %p50 = por %p48, %p49
    %p52 = scmp.ne.s32.totalorder %s35, %s51
    %p53 = scmp.eq.s32.totalorder %s15, 0
    %p54 = por %p52, %p53
    %s55 = ssub.s32 %s17, %s24
    %p56 = scmp.eq.s32.totalorder %s55, 0
    %s58 = sadd.s32 %s57, 1
    %s59 = scalar_select %p56, %s57, %s58
    %p62 = pneg %p56
    %p63 = scmp.eq.s32.totalorder %s9, 1
    %p64 = por %p62, %p63
    %p65 = scmp.ne.s32.totalorder %s57, %s60
    %p66 = scmp.eq.s32.totalorder %s9, 0
    %p67 = por %p65, %p66
    %p68 = scmp.ne.s32.totalorder %s57, %s60
    %p69 = scmp.eq.s32.totalorder %s14, 1
    %p70 = por %p68, %p69
    %p71 = scmp.ne.s32.totalorder %s60, %s61
    %p72 = scmp.eq.s32.totalorder %s14, 0
    %p73 = por %p71, %p72
    %p74 = scmp.ne.s32.totalorder %s60, %s61
    %p75 = scmp.eq.s32.totalorder %s15, 1
    %p76 = por %p74, %p75
    %p78 = scmp.ne.s32.totalorder %s61, %s77
    %p79 = scmp.eq.s32.totalorder %s15, 0
    %p80 = por %p78, %p79
    %s81 = ssub.s32 %s17, %s24
    %p82 = scmp.eq.s32.totalorder %s81, 0
    %s84 = sadd.s32 %s83, 1
    %s85 = scalar_select %p82, %s83, %s84
    %p88 = pneg %p82
    %p89 = scmp.eq.s32.totalorder %s9, 1
    %p90 = por %p88, %p89
    %p91 = scmp.ne.s32.totalorder %s83, %s86
    %p92 = scmp.eq.s32.totalorder %s9, 0
    %p93 = por %p91, %p92
    %p94 = scmp.ne.s32.totalorder %s83, %s86
    %p95 = scmp.eq.s32.totalorder %s14, 1
    %p96 = por %p94, %p95
    %p97 = scmp.ne.s32.totalorder %s86, %s87
    %p98 = scmp.eq.s32.totalorder %s14, 0
    %p99 = por %p97, %p98
    %p100 = scmp.ne.s32.totalorder %s86, %s87
    %p101 = scmp.eq.s32.totalorder %s15, 1
    %p102 = por %p100, %p101
    %p104 = scmp.ne.s32.totalorder %s87, %s103
    %p105 = scmp.eq.s32.totalorder %s15, 0
    %p106 = por %p104, %p105
    %s107 = ssub.s32 %s16, %s28
    %s108 = ssub.s32 %s17, %s24
    %s109 = sor.u32 %s107, %s108
    %p110 = scmp.eq.s32.totalorder %s109, 0
    %s112 = sadd.s32 %s111, 1
    %s113 = scalar_select %p110, %s111, %s112
    %p116 = pneg %p110
    %p117 = scmp.eq.s32.totalorder %s9, 1
    %p118 = por %p116, %p117
    %p119 = scmp.ne.s32.totalorder %s111, %s114
    %p120 = scmp.eq.s32.totalorder %s9, 0
    %p121 = por %p119, %p120
    %p122 = scmp.ne.s32.totalorder %s111, %s114
    %p123 = scmp.eq.s32.totalorder %s14, 1
    %p124 = por %p122, %p123
    %p125 = scmp.ne.s32.totalorder %s114, %s115
    %p126 = scmp.eq.s32.totalorder %s14, 0
    %p127 = por %p125, %p126
    %p128 = scmp.ne.s32.totalorder %s114, %s115
    %p129 = scmp.eq.s32.totalorder %s15, 1
    %p130 = por %p128, %p129
    %p132 = scmp.ne.s32.totalorder %s115, %s131
    %p133 = scmp.eq.s32.totalorder %s15, 0
    %p134 = por %p132, %p133
    %p135 = scmp.le.s32.totalorder 1, %s9
    %p136 = scmp.lt.s32.totalorder %s9, 3
    %p137 = pnand %p135, %p136
    %p138 = pneg %p137
    // Predicated region
    $region9: #{_forward_impl.15} parent=5 // pred_check
      _
    $region10: #{_forward_impl.15} parent=5 // pred_check_branch
      %140 = sbr.rel (%p137) target = $region12
    $region11: #{_forward_impl.15} parent=5 // pred_region
      %s141 = ssub.s32 %s9, 1
      // Predicated region
      $region13: #{_forward_impl.15} parent=11 // pred_check
        %p142 = pneg %p73
      $region14: #{_forward_impl.15} parent=11 // pred_check_branch
        %144 = sbr.rel (%p142) target = $region16
      $region15: #{_forward_impl.15} parent=11 // pred_region
        %p145 = scmp.lt.s32.totalorder %s19, 0
        %s146 = scalar_select %p145, %s19, 0
        %s147 = smul.addr %s146, 4
        %s148 = scalar_lea.vmem %s1, %s147
      $region16: #{_forward_impl.15} parent=11 // pred_fallthru
        _
      // Predicated region
      $region17: #{_forward_impl.15} parent=11 // pred_check
        %p149 = pneg %p99
      $region18: #{_forward_impl.15} parent=11 // pred_check_branch
        %151 = sbr.rel (%p149) target = $region20
      $region19: #{_forward_impl.15} parent=11 // pred_region
        %p152 = scmp.lt.s32.totalorder %s19, 0
        %s153 = scalar_select %p152, %s19, 0
        %s154 = scalar_lea.vmem %s2, %s153
      $region20: #{_forward_impl.15} parent=11 // pred_fallthru
        _
    $region12: #{_forward_impl.15} parent=5 // pred_fallthru
      _
    %p155 = scmp.lt.s32.totalorder %s9, 2
    // Predicated region
    $region21: #{_forward_impl.15} parent=5 // pred_check
      %p156 = pneg %p155
    $region22: #{_forward_impl.15} parent=5 // pred_check_branch
      %158 = sbr.rel (%p156) target = $region24
    $region23: #{_forward_impl.15} parent=5 // pred_region
      // Predicated region
      $region25: #{_forward_impl.15} parent=23 // pred_check
        %p159 = pneg %p41
      $region26: #{_forward_impl.15} parent=23 // pred_check_branch
        %161 = sbr.rel (%p159) target = $region28
      $region27: #{_forward_impl.15} parent=23 // pred_region
        %s162 = smul.u32 32, %s16
        %p163 = scmp.lt.s32.totalorder %s162, 63
        %s164 = scalar_select %p163, %s162, 63
        %s165 = smul.addr %s164, 2
        %s166 = smul.addr %s165, 4
        %s167 = scalar_lea.vmem %s0, %s166
        %s168 = smul.u32 32, %s16
      $region28: #{_forward_impl.15} parent=23 // pred_fallthru
        _
    $region24: #{_forward_impl.15} parent=5 // pred_fallthru
      _
    %p169 = scmp.le.s32.totalorder 1, %s9
    %p170 = scmp.lt.s32.totalorder %s9, 3
    %p171 = pnand %p169, %p170
    %p172 = pneg %p171
    // Predicated region
    $region29: #{_forward_impl.15} parent=5 // pred_check
      _
    $region30: #{_forward_impl.15} parent=5 // pred_check_branch
      %174 = sbr.rel (%p171) target = $region32
    $region31: #{_forward_impl.15} parent=5 // pred_region
      %s175 = ssub.s32 %s9, 1
      %s176 = smul.u32 32, %s18
      %p177 = scmp.lt.s32.totalorder %s176, 63
      %s178 = scalar_select %p177, %s176, 63
      %s179 = smul.addr %s178, 2
      %s180 = smul.addr %s179, 4
      %s181 = scalar_lea.vmem %s0, %s180
      %p182 = pneg %p47
      %p183 = pneg %p44
      %p184 = scmp.lt.s32.totalorder %s19, 0
      %s185 = scalar_select %p184, %s19, 0
      %s186 = smul.addr %s185, 4
      %s187 = scalar_lea.vmem %s1, %s186
      %p188 = pneg %p73
      %p189 = pneg %p70
      %p190 = scmp.lt.s32.totalorder %s19, 0
      %s191 = scalar_select %p190, %s19, 0
      %s192 = scalar_lea.vmem %s2, %s191
      %p193 = pneg %p99
      %p194 = pneg %p96
      %p195 = pneg %p127
      %p196 = pneg %p124
      %s197 = smul.u32 32, %s18
      %p198 = scmp.lt.s32.totalorder %s197, 63
      %s199 = scalar_select %p198, %s197, 63
      %p200 = scmp.lt.s32.totalorder %s19, 0
      %s201 = scalar_select %p200, %s19, 0
      %s202 = sadd.s32 %s201, %s199
      %s203 = smul.addr %s202, 4
      %s204 = scalar_lea.vmem %s3, %s203
      %s205 = smul.u32 32, %s18
      %p206 = scmp.lt.s32.totalorder %s205, 63
      %s207 = scalar_select %p206, %s205, 63
      %s208 = smul.addr %s207, 2
      %s209 = smul.addr %s208, 4
      %s210 = scalar_lea.vmem %s0, %s209
      %s211 = smul.u32 32, %s18
      %p212 = scmp.lt.s32.totalorder %s19, 0
      %s213 = scalar_select %p212, %s19, 0
      %s214 = smul.addr %s213, 4
      %s215 = scalar_lea.vmem %s1, %s214
      %p216 = scmp.lt.s32.totalorder %s19, 0
      %s217 = scalar_select %p216, %s19, 0
      %s218 = scalar_lea.vmem %s2, %s217
      %s219 = smul.u32 32, %s18
      %p220 = scmp.lt.s32.totalorder %s219, 63
      %s221 = scalar_select %p220, %s219, 63
      %p222 = scmp.lt.s32.totalorder %s19, 0
      %s223 = scalar_select %p222, %s19, 0
      %s224 = sadd.s32 %s223, %s221
      %s225 = smul.addr %s224, 4
      %s226 = scalar_lea.vmem %s3, %s225
      %s227 = smul.u32 32, %s18
      %v229 = vld [vmem:[%s210] sm:$0xff]
      %v230 = vld [vmem:[%s210 + $0x8] sm:$0xff]
      %v231 = vld [vmem:[%s210 + $0x10] sm:$0xff]
      %v232 = vld [vmem:[%s210 + $0x18] sm:$0xff]
      %v233 = vld [vmem:[%s210 + $0x20] sm:$0xff]
      %v234 = vld [vmem:[%s210 + $0x28] sm:$0xff]
      %v235 = vld [vmem:[%s210 + $0x30] sm:$0xff]
      %v236 = vld [vmem:[%s210 + $0x38] sm:$0xff]
      %v237 = vld [vmem:[%s210 + $0x40] sm:$0xff]
      %v238 = vld [vmem:[%s210 + $0x48] sm:$0xff]
      %v239 = vld [vmem:[%s210 + $0x50] sm:$0xff]
      %v240 = vld [vmem:[%s210 + $0x58] sm:$0xff]
      %v241 = vld [vmem:[%s210 + $0x60] sm:$0xff]
      %v242 = vld [vmem:[%s210 + $0x68] sm:$0xff]
      %v243 = vld [vmem:[%s210 + $0x70] sm:$0xff]
      %v244 = vld [vmem:[%s210 + $0x78] sm:$0xff]
      %v245 = vld [vmem:[%s210 + $0x80] sm:$0xff]
      %v246 = vld [vmem:[%s210 + $0x88] sm:$0xff]
      %v247 = vld [vmem:[%s210 + $0x90] sm:$0xff]
      %v248 = vld [vmem:[%s210 + $0x98] sm:$0xff]
      %v249 = vld [vmem:[%s210 + $0xa0] sm:$0xff]
      %v250 = vld [vmem:[%s210 + $0xa8] sm:$0xff]
      %v251 = vld [vmem:[%s210 + $0xb0] sm:$0xff]
      %v252 = vld [vmem:[%s210 + $0xb8] sm:$0xff]
      %v253 = vld [vmem:[%s210 + $0xc0] sm:$0xff]
      %v254 = vld [vmem:[%s210 + $0xc8] sm:$0xff]
      %v255 = vld [vmem:[%s210 + $0xd0] sm:$0xff]
      %v256 = vld [vmem:[%s210 + $0xd8] sm:$0xff]
      %v257 = vld [vmem:[%s210 + $0xe0] sm:$0xff]
      %v258 = vld [vmem:[%s210 + $0xe8] sm:$0xff]
      %v259 = vld [vmem:[%s210 + $0xf0] sm:$0xff]
      %v260 = vld [vmem:[%s210 + $0xf8] sm:$0xff]
      %v261 = vld [vmem:[%s215] sm:$0xf]
      %v262 = vld [vmem:[%s215 + $0x4] sm:$0xf]
      %v263 = vld [vmem:[%s215 + $0x8] sm:$0xf]
      %v264 = vld [vmem:[%s215 + $0xc] sm:$0xf]
      %v265 = vld [vmem:[%s215 + $0x10] sm:$0xf]
      %v266 = vld [vmem:[%s215 + $0x14] sm:$0xf]
      %v267 = vld [vmem:[%s215 + $0x18] sm:$0xf]
      %v268 = vld [vmem:[%s215 + $0x1c] sm:$0xf]
      %v269 = vld [vmem:[%s215 + $0x20] sm:$0xf]
      %v270 = vld [vmem:[%s215 + $0x24] sm:$0xf]
      %v271 = vld [vmem:[%s215 + $0x28] sm:$0xf]
      %v272 = vld [vmem:[%s215 + $0x2c] sm:$0xf]
      %v273 = vld [vmem:[%s215 + $0x30] sm:$0xf]
      %v274 = vld [vmem:[%s215 + $0x34] sm:$0xf]
      %v275 = vld [vmem:[%s215 + $0x38] sm:$0xf]
      %v276 = vld [vmem:[%s215 + $0x3c] sm:$0xf]
      %v277 = vld [vmem:[%s215 + $0x40] sm:$0xf]
      %v278 = vld [vmem:[%s215 + $0x44] sm:$0xf]
      %v279 = vld [vmem:[%s215 + $0x48] sm:$0x3]
      %v280 = vld [vmem:[%s218] sm:$0x1]
      %v282 = vperm.slane %v280, 0
      %v316 = vunpack.c.l.b16 %v229
      %v317 = vunpack.c.h.b16 %v229
      %v318 = vunpack.c.l.b16 %v230
      %v319 = vunpack.c.h.b16 %v230
      %v320 = vunpack.c.l.b16 %v231
      %v321 = vunpack.c.h.b16 %v231
      %v322 = vunpack.c.l.b16 %v232
      %v323 = vunpack.c.h.b16 %v232
      %v324 = vunpack.c.l.b16 %v233
      %v325 = vunpack.c.h.b16 %v233
      %v326 = vunpack.c.l.b16 %v234
      %v327 = vunpack.c.h.b16 %v234
      %v328 = vunpack.c.l.b16 %v235
      %v329 = vunpack.c.h.b16 %v235
      %v330 = vunpack.c.l.b16 %v236
      %v331 = vunpack.c.h.b16 %v236
      %v332 = vunpack.c.l.b16 %v237
      %v333 = vunpack.c.h.b16 %v237
      %v334 = vunpack.c.l.b16 %v238
      %v335 = vunpack.c.h.b16 %v238
      %v336 = vunpack.c.l.b16 %v239
      %v337 = vunpack.c.h.b16 %v239
      %v338 = vunpack.c.l.b16 %v240
      %v339 = vunpack.c.h.b16 %v240
      %v340 = vunpack.c.l.b16 %v241
      %v341 = vunpack.c.h.b16 %v241
      %v342 = vunpack.c.l.b16 %v242
      %v343 = vunpack.c.h.b16 %v242
      %v344 = vunpack.c.l.b16 %v243
      %v345 = vunpack.c.h.b16 %v243
      %v346 = vunpack.c.l.b16 %v244
      %v347 = vunpack.c.h.b16 %v244
      %v348 = vunpack.c.l.b16 %v245
      %v349 = vunpack.c.h.b16 %v245
      %v350 = vunpack.c.l.b16 %v246
      %v351 = vunpack.c.h.b16 %v246
      %v352 = vunpack.c.l.b16 %v247
      %v353 = vunpack.c.h.b16 %v247
      %v354 = vunpack.c.l.b16 %v248
      %v355 = vunpack.c.h.b16 %v248
      %v356 = vunpack.c.l.b16 %v249
      %v357 = vunpack.c.h.b16 %v249
      %v358 = vunpack.c.l.b16 %v250
      %v359 = vunpack.c.h.b16 %v250
      %v360 = vunpack.c.l.b16 %v251
      %v361 = vunpack.c.h.b16 %v251
      %v362 = vunpack.c.l.b16 %v252
      %v363 = vunpack.c.h.b16 %v252
      %v364 = vunpack.c.l.b16 %v253
      %v365 = vunpack.c.h.b16 %v253
      %v366 = vunpack.c.l.b16 %v254
      %v367 = vunpack.c.h.b16 %v254
      %v368 = vunpack.c.l.b16 %v255
      %v369 = vunpack.c.h.b16 %v255
      %v370 = vunpack.c.l.b16 %v256
      %v371 = vunpack.c.h.b16 %v256
      %v372 = vunpack.c.l.b16 %v257
      %v373 = vunpack.c.h.b16 %v257
      %v374 = vunpack.c.l.b16 %v258
      %v375 = vunpack.c.h.b16 %v258
      %v376 = vunpack.c.l.b16 %v259
      %v377 = vunpack.c.h.b16 %v259
      %v378 = vunpack.c.l.b16 %v260
      %v379 = vunpack.c.h.b16 %v260
      %v380 = vpack.c.b16 %v318, %v316
      %v381 = vpack.c.b16 %v319, %v317
      %v382 = vpack.c.b16 %v322, %v320
      %v383 = vpack.c.b16 %v323, %v321
      %v384 = vpack.c.b16 %v326, %v324
      %v385 = vpack.c.b16 %v327, %v325
      %v386 = vpack.c.b16 %v330, %v328
      %v387 = vpack.c.b16 %v331, %v329
      %v388 = vpack.c.b16 %v334, %v332
      %v389 = vpack.c.b16 %v335, %v333
      %v390 = vpack.c.b16 %v338, %v336
      %v391 = vpack.c.b16 %v339, %v337
      %v392 = vpack.c.b16 %v342, %v340
      %v393 = vpack.c.b16 %v343, %v341
      %v394 = vpack.c.b16 %v346, %v344
      %v395 = vpack.c.b16 %v347, %v345
      %v396 = vpack.c.b16 %v350, %v348
      %v397 = vpack.c.b16 %v351, %v349
      %v398 = vpack.c.b16 %v354, %v352
      %v399 = vpack.c.b16 %v355, %v353
      %v400 = vpack.c.b16 %v358, %v356
      %v401 = vpack.c.b16 %v359, %v357
      %v402 = vpack.c.b16 %v362, %v360
      %v403 = vpack.c.b16 %v363, %v361
      %v404 = vpack.c.b16 %v366, %v364
      %v405 = vpack.c.b16 %v367, %v365
      %v406 = vpack.c.b16 %v370, %v368
      %v407 = vpack.c.b16 %v371, %v369
      %v408 = vpack.c.b16 %v374, %v372
      %v409 = vpack.c.b16 %v375, %v373
      %v410 = vpack.c.b16 %v378, %v376
      %v411 = vpack.c.b16 %v379, %v377
      %v447 = vunpack.c.l.b16 %v261
      %v448 = vunpack.c.l.b16 %v262
      %v449 = vunpack.c.l.b16 %v263
      %v450 = vunpack.c.l.b16 %v264
      %v451 = vunpack.c.l.b16 %v265
      %v452 = vunpack.c.l.b16 %v266
      %v453 = vunpack.c.l.b16 %v267
      %v454 = vunpack.c.l.b16 %v268
      %v455 = vunpack.c.l.b16 %v269
      %v456 = vunpack.c.l.b16 %v270
      %v457 = vunpack.c.l.b16 %v271
      %v458 = vunpack.c.l.b16 %v272
      %v459 = vunpack.c.l.b16 %v273
      %v460 = vunpack.c.l.b16 %v274
      %v461 = vunpack.c.l.b16 %v275
      %v462 = vunpack.c.l.b16 %v276
      %v463 = vunpack.c.l.b16 %v277
      %v464 = vunpack.c.l.b16 %v278
      %v465 = vunpack.c.l.b16 %v279
      %v466 = vpack.c.b16 %v448, %v447
      %v467 = vpack.c.b16 %v450, %v449
      %v468 = vpack.c.b16 %v452, %v451
      %v469 = vpack.c.b16 %v454, %v453
      %v470 = vpack.c.b16 %v456, %v455
      %v471 = vpack.c.b16 %v458, %v457
      %v472 = vpack.c.b16 %v460, %v459
      %v473 = vpack.c.b16 %v462, %v461
      %v474 = vpack.c.b16 %v464, %v463
      %v475 = vpack.c.b16 %v465, %v465
      %vm485 = vcmask 154624
      %v487 = vsel %vm485, %v381, 0
      %v490 = vsel %vm485, %v383, 0
      %v493 = vsel %vm485, %v385, 0
      %v496 = vsel %vm485, %v387, 0
      %v499 = vsel %vm485, %v389, 0
      %v502 = vsel %vm485, %v391, 0
      %v505 = vsel %vm485, %v393, 0
      %v508 = vsel %vm485, %v395, 0
      %v511 = vsel %vm485, %v397, 0
      %v514 = vsel %vm485, %v399, 0
      %v517 = vsel %vm485, %v401, 0
      %v520 = vsel %vm485, %v403, 0
      %v523 = vsel %vm485, %v405, 0
      %v526 = vsel %vm485, %v407, 0
      %v529 = vsel %vm485, %v409, 0
      %v532 = vsel %vm485, %v411, 0
      %vm534 = vcmask 1040384
      %vm535 = vcmask 1041408
      %v536 = vsel %vm534, 4294967295, 65535
      %v537 = vsel %vm535, %v536, 0
      %v539 = vand.u32 %v475, %v537
      %541 = vmatpush.bf16.msra.mxu0 %v473
      %542 = vmatpush.bf16.msra.mxu0 %v472
      %543 = vmatpush.bf16.msra.mxu0 %v471
      %544 = vmatpush.bf16.msra.mxu0 %v470
      %545 = vmatpush.bf16.msra.mxu0 %v469
      %546 = vmatpush.bf16.msra.mxu0 %v468
      %547 = vmatpush.bf16.msra.mxu0 %v467
      %548 = vmatpush.bf16.msra.mxu0 %v466
      %549 = vmatmul.bf16.gmra.mxu0 %v380
      %v550 = vpop.f32.mrf.mxu0
      %v551 = vadd.f32 %v282, %v550
      %v552 = vpop.f32.mrf.mxu0
      %v553 = vadd.f32 %v282, %v552
      %554 = vmatmul.bf16.gmra.mxu0 %v382
      %v555 = vpop.f32.mrf.mxu0
      %v556 = vadd.f32 %v282, %v555
      %v557 = vpop.f32.mrf.mxu0
      %v558 = vadd.f32 %v282, %v557
      %559 = vmatmul.bf16.gmra.mxu0 %v384
      %v560 = vpop.f32.mrf.mxu0
      %v561 = vadd.f32 %v282, %v560
      %v562 = vpop.f32.mrf.mxu0
      %v563 = vadd.f32 %v282, %v562
      %564 = vmatmul.bf16.gmra.mxu0 %v386
      %v565 = vpop.f32.mrf.mxu0
      %v566 = vadd.f32 %v282, %v565
      %v567 = vpop.f32.mrf.mxu0
      %v568 = vadd.f32 %v282, %v567
      %569 = vmatmul.bf16.gmra.mxu0 %v388
      %v570 = vpop.f32.mrf.mxu0
      %v571 = vadd.f32 %v282, %v570
      %v572 = vpop.f32.mrf.mxu0
      %v573 = vadd.f32 %v282, %v572
      %574 = vmatmul.bf16.gmra.mxu0 %v390
      %v575 = vpop.f32.mrf.mxu0
      %v576 = vadd.f32 %v282, %v575
      %v577 = vpop.f32.mrf.mxu0
      %v578 = vadd.f32 %v282, %v577
      %579 = vmatmul.bf16.gmra.mxu0 %v392
      %v580 = vpop.f32.mrf.mxu0
      %v581 = vadd.f32 %v282, %v580
      %v582 = vpop.f32.mrf.mxu0
      %v583 = vadd.f32 %v282, %v582
      %584 = vmatmul.bf16.gmra.mxu0 %v394
      %v585 = vpop.f32.mrf.mxu0
      %v586 = vadd.f32 %v282, %v585
      %v587 = vpop.f32.mrf.mxu0
      %v588 = vadd.f32 %v282, %v587
      %589 = vmatmul.bf16.gmra.mxu0 %v396
      %v590 = vpop.f32.mrf.mxu0
      %v591 = vadd.f32 %v282, %v590
      %v592 = vpop.f32.mrf.mxu0
      %v593 = vadd.f32 %v282, %v592
      %594 = vmatmul.bf16.gmra.mxu0 %v398
      %v595 = vpop.f32.mrf.mxu0
      %v596 = vadd.f32 %v282, %v595
      %v597 = vpop.f32.mrf.mxu0
      %v598 = vadd.f32 %v282, %v597
      %599 = vmatmul.bf16.gmra.mxu0 %v400
      %v600 = vpop.f32.mrf.mxu0
      %v601 = vadd.f32 %v282, %v600
      %v602 = vpop.f32.mrf.mxu0
      %v603 = vadd.f32 %v282, %v602
      %604 = vmatmul.bf16.gmra.mxu0 %v402
      %v605 = vpop.f32.mrf.mxu0
      %v606 = vadd.f32 %v282, %v605
      %v607 = vpop.f32.mrf.mxu0
      %v608 = vadd.f32 %v282, %v607
      %609 = vmatmul.bf16.gmra.mxu0 %v404
      %v610 = vpop.f32.mrf.mxu0
      %v611 = vadd.f32 %v282, %v610
      %v612 = vpop.f32.mrf.mxu0
      %v613 = vadd.f32 %v282, %v612
      %614 = vmatmul.bf16.gmra.mxu0 %v406
      %v615 = vpop.f32.mrf.mxu0
      %v616 = vadd.f32 %v282, %v615
      %v617 = vpop.f32.mrf.mxu0
      %v618 = vadd.f32 %v282, %v617
      %619 = vmatmul.bf16.gmra.mxu0 %v408
      %v620 = vpop.f32.mrf.mxu0
      %v621 = vadd.f32 %v282, %v620
      %v622 = vpop.f32.mrf.mxu0
      %v623 = vadd.f32 %v282, %v622
      %624 = vmatmul.bf16.gmra.mxu0 %v410
      %v625 = vpop.f32.mrf.mxu0
      %v626 = vadd.f32 %v282, %v625
      %v627 = vpop.f32.mrf.mxu0
      %v628 = vadd.f32 %v282, %v627
      %629 = vdwg.mxu0
      %630 = vmatpush.bf16.msra.mxu0 0
      %631 = vmatpush.bf16.msra.mxu0 0
      %632 = vmatpush.bf16.msra.mxu0 0
      %633 = vmatpush.bf16.msra.mxu0 0
      %634 = vmatpush.bf16.msra.mxu0 0
      %635 = vmatpush.bf16.msra.mxu0 0
      %636 = vmatpush.bf16.msra.mxu0 %v539
      %637 = vmatpush.bf16.msra.mxu0 %v474
      %638 = vmatmul.bf16.gmra.mxu0 %v487
      %v639 = vpop.f32.mrf.mxu0
      %v640 = vadd.f32 %v551, %v639
      %v641 = vpop.f32.mrf.mxu0
      %v642 = vadd.f32 %v553, %v641
      %643 = vmatmul.bf16.gmra.mxu0 %v490
      %v644 = vpop.f32.mrf.mxu0
      %v645 = vadd.f32 %v556, %v644
      %v646 = vpop.f32.mrf.mxu0
      %v647 = vadd.f32 %v558, %v646
      %648 = vmatmul.bf16.gmra.mxu0 %v493
      %v649 = vpop.f32.mrf.mxu0
      %v650 = vadd.f32 %v561, %v649
      %v651 = vpop.f32.mrf.mxu0
      %v652 = vadd.f32 %v563, %v651
      %653 = vmatmul.bf16.gmra.mxu0 %v496
      %v654 = vpop.f32.mrf.mxu0
      %v655 = vadd.f32 %v566, %v654
      %v656 = vpop.f32.mrf.mxu0
      %v657 = vadd.f32 %v568, %v656
      %658 = vmatmul.bf16.gmra.mxu0 %v499
      %v659 = vpop.f32.mrf.mxu0
      %v660 = vadd.f32 %v571, %v659
      %v661 = vpop.f32.mrf.mxu0
      %v662 = vadd.f32 %v573, %v661
      %663 = vmatmul.bf16.gmra.mxu0 %v502
      %v664 = vpop.f32.mrf.mxu0
      %v665 = vadd.f32 %v576, %v664
      %v666 = vpop.f32.mrf.mxu0
      %v667 = vadd.f32 %v578, %v666
      %668 = vmatmul.bf16.gmra.mxu0 %v505
      %v669 = vpop.f32.mrf.mxu0
      %v670 = vadd.f32 %v581, %v669
      %v671 = vpop.f32.mrf.mxu0
      %v672 = vadd.f32 %v583, %v671
      %673 = vmatmul.bf16.gmra.mxu0 %v508
      %v674 = vpop.f32.mrf.mxu0
      %v675 = vadd.f32 %v586, %v674
      %v676 = vpop.f32.mrf.mxu0
      %v677 = vadd.f32 %v588, %v676
      %678 = vmatmul.bf16.gmra.mxu0 %v511
      %v679 = vpop.f32.mrf.mxu0
      %v680 = vadd.f32 %v591, %v679
      %v681 = vpop.f32.mrf.mxu0
      %v682 = vadd.f32 %v593, %v681
      %683 = vmatmul.bf16.gmra.mxu0 %v514
      %v684 = vpop.f32.mrf.mxu0
      %v685 = vadd.f32 %v596, %v684
      %v686 = vpop.f32.mrf.mxu0
      %v687 = vadd.f32 %v598, %v686
      %688 = vmatmul.bf16.gmra.mxu0 %v517
      %v689 = vpop.f32.mrf.mxu0
      %v690 = vadd.f32 %v601, %v689
      %v691 = vpop.f32.mrf.mxu0
      %v692 = vadd.f32 %v603, %v691
      %693 = vmatmul.bf16.gmra.mxu0 %v520
      %v694 = vpop.f32.mrf.mxu0
      %v695 = vadd.f32 %v606, %v694
      %v696 = vpop.f32.mrf.mxu0
      %v697 = vadd.f32 %v608, %v696
      %698 = vmatmul.bf16.gmra.mxu0 %v523
      %v699 = vpop.f32.mrf.mxu0
      %v700 = vadd.f32 %v611, %v699
      %v701 = vpop.f32.mrf.mxu0
      %v702 = vadd.f32 %v613, %v701
      %703 = vmatmul.bf16.gmra.mxu0 %v526
      %v704 = vpop.f32.mrf.mxu0
      %v705 = vadd.f32 %v616, %v704
      %v706 = vpop.f32.mrf.mxu0
      %v707 = vadd.f32 %v618, %v706
      %708 = vmatmul.bf16.gmra.mxu0 %v529
      %v709 = vpop.f32.mrf.mxu0
      %v710 = vadd.f32 %v621, %v709
      %v711 = vpop.f32.mrf.mxu0
      %v712 = vadd.f32 %v623, %v711
      %713 = vmatmul.bf16.gmra.mxu0 %v532
      %v714 = vpop.f32.mrf.mxu0
      %v715 = vadd.f32 %v626, %v714
      %v716 = vpop.f32.mrf.mxu0
      %v717 = vadd.f32 %v628, %v716
      %718 = vdwg.mxu0
      %v719 = vmax.f32 %v640, 0.0
      %v720 = vmax.f32 %v642, 0.0
      %v721 = vmax.f32 %v645, 0.0
      %v722 = vmax.f32 %v647, 0.0
      %v723 = vmax.f32 %v650, 0.0
      %v724 = vmax.f32 %v652, 0.0
      %v725 = vmax.f32 %v655, 0.0
      %v726 = vmax.f32 %v657, 0.0
      %v727 = vmax.f32 %v660, 0.0
      %v728 = vmax.f32 %v662, 0.0
      %v729 = vmax.f32 %v665, 0.0
      %v730 = vmax.f32 %v667, 0.0
      %v731 = vmax.f32 %v670, 0.0
      %v732 = vmax.f32 %v672, 0.0
      %v733 = vmax.f32 %v675, 0.0
      %v734 = vmax.f32 %v677, 0.0
      %v735 = vmax.f32 %v680, 0.0
      %v736 = vmax.f32 %v682, 0.0
      %v737 = vmax.f32 %v685, 0.0
      %v738 = vmax.f32 %v687, 0.0
      %v739 = vmax.f32 %v690, 0.0
      %v740 = vmax.f32 %v692, 0.0
      %v741 = vmax.f32 %v695, 0.0
      %v742 = vmax.f32 %v697, 0.0
      %v743 = vmax.f32 %v700, 0.0
      %v744 = vmax.f32 %v702, 0.0
      %v745 = vmax.f32 %v705, 0.0
      %v746 = vmax.f32 %v707, 0.0
      %v747 = vmax.f32 %v710, 0.0
      %v748 = vmax.f32 %v712, 0.0
      %v749 = vmax.f32 %v715, 0.0
      %v750 = vmax.f32 %v717, 0.0
      %v751 = vpack.c.bf16 %v719, %v719
      %v752 = vpack.c.bf16 %v720, %v720
      %v753 = vpack.c.bf16 %v721, %v721
      %v754 = vpack.c.bf16 %v722, %v722
      %v755 = vpack.c.bf16 %v723, %v723
      %v756 = vpack.c.bf16 %v724, %v724
      %v757 = vpack.c.bf16 %v725, %v725
      %v758 = vpack.c.bf16 %v726, %v726
      %v759 = vpack.c.bf16 %v727, %v727
      %v760 = vpack.c.bf16 %v728, %v728
      %v761 = vpack.c.bf16 %v729, %v729
      %v762 = vpack.c.bf16 %v730, %v730
      %v763 = vpack.c.bf16 %v731, %v731
      %v764 = vpack.c.bf16 %v732, %v732
      %v765 = vpack.c.bf16 %v733, %v733
      %v766 = vpack.c.bf16 %v734, %v734
      %v767 = vpack.c.bf16 %v735, %v735
      %v768 = vpack.c.bf16 %v736, %v736
      %v769 = vpack.c.bf16 %v737, %v737
      %v770 = vpack.c.bf16 %v738, %v738
      %v771 = vpack.c.bf16 %v739, %v739
      %v772 = vpack.c.bf16 %v740, %v740
      %v773 = vpack.c.bf16 %v741, %v741
      %v774 = vpack.c.bf16 %v742, %v742
      %v775 = vpack.c.bf16 %v743, %v743
      %v776 = vpack.c.bf16 %v744, %v744
      %v777 = vpack.c.bf16 %v745, %v745
      %v778 = vpack.c.bf16 %v746, %v746
      %v779 = vpack.c.bf16 %v747, %v747
      %v780 = vpack.c.bf16 %v748, %v748
      %v781 = vpack.c.bf16 %v749, %v749
      %v782 = vpack.c.bf16 %v750, %v750
      %783 = vst [vmem:[%s226] sm:$0xf] %v751
      %784 = vst [vmem:[%s226 + $0x4] sm:$0xf] %v752
      %785 = vst [vmem:[%s226 + $0x8] sm:$0xf] %v753
      %786 = vst [vmem:[%s226 + $0xc] sm:$0xf] %v754
      %787 = vst [vmem:[%s226 + $0x10] sm:$0xf] %v755
      %788 = vst [vmem:[%s226 + $0x14] sm:$0xf] %v756
      %789 = vst [vmem:[%s226 + $0x18] sm:$0xf] %v757
      %790 = vst [vmem:[%s226 + $0x1c] sm:$0xf] %v758
      %791 = vst [vmem:[%s226 + $0x20] sm:$0xf] %v759
      %792 = vst [vmem:[%s226 + $0x24] sm:$0xf] %v760
      %793 = vst [vmem:[%s226 + $0x28] sm:$0xf] %v761
      %794 = vst [vmem:[%s226 + $0x2c] sm:$0xf] %v762
      %795 = vst [vmem:[%s226 + $0x30] sm:$0xf] %v763
      %796 = vst [vmem:[%s226 + $0x34] sm:$0xf] %v764
      %797 = vst [vmem:[%s226 + $0x38] sm:$0xf] %v765
      %798 = vst [vmem:[%s226 + $0x3c] sm:$0xf] %v766
      %799 = vst [vmem:[%s226 + $0x40] sm:$0xf] %v767
      %800 = vst [vmem:[%s226 + $0x44] sm:$0xf] %v768
      %801 = vst [vmem:[%s226 + $0x48] sm:$0xf] %v769
      %802 = vst [vmem:[%s226 + $0x4c] sm:$0xf] %v770
      %803 = vst [vmem:[%s226 + $0x50] sm:$0xf] %v771
      %804 = vst [vmem:[%s226 + $0x54] sm:$0xf] %v772
      %805 = vst [vmem:[%s226 + $0x58] sm:$0xf] %v773
      %806 = vst [vmem:[%s226 + $0x5c] sm:$0xf] %v774
      %807 = vst [vmem:[%s226 + $0x60] sm:$0xf] %v775
      %808 = vst [vmem:[%s226 + $0x64] sm:$0xf] %v776
      %809 = vst [vmem:[%s226 + $0x68] sm:$0xf] %v777
      %810 = vst [vmem:[%s226 + $0x6c] sm:$0xf] %v778
      %811 = vst [vmem:[%s226 + $0x70] sm:$0xf] %v779
      %812 = vst [vmem:[%s226 + $0x74] sm:$0xf] %v780
      %813 = vst [vmem:[%s226 + $0x78] sm:$0xf] %v781
      %814 = vst [vmem:[%s226 + $0x7c] sm:$0xf] %v782
      %s815 = smul.u32 32, %s18
      %p816 = scmp.lt.s32.totalorder %s815, 63
      %s817 = scalar_select %p816, %s815, 63
      %p818 = scmp.lt.s32.totalorder %s19, 0
      %s819 = scalar_select %p818, %s19, 0
      %s820 = sadd.s32 %s819, %s817
      %s821 = smul.addr %s820, 4
      %s822 = scalar_lea.vmem %s3, %s821
      // Predicated region
      $region33: #{_forward_impl.15} parent=31 // pred_check
        %p823 = pneg %p124
      $region34: #{_forward_impl.15} parent=31 // pred_check_branch
        %825 = sbr.rel (%p823) target = $region36
      $region35: #{_forward_impl.15} parent=31 // pred_region
        %s826 = smul.u32 32, %s18
      $region36: #{_forward_impl.15} parent=31 // pred_fallthru
        _
    $region32: #{_forward_impl.15} parent=5 // pred_fallthru
      _
    %p827 = scmp.le.s32.totalorder 2, %s9
    // Predicated region
    $region37: #{_forward_impl.15} parent=5 // pred_check
      %p828 = pneg %p827
    $region38: #{_forward_impl.15} parent=5 // pred_check_branch
      %830 = sbr.rel (%p828) target = $region40
    $region39: #{_forward_impl.15} parent=5 // pred_region
      %s831 = ssub.s32 %s9, 2
      // Predicated region
      $region41: #{_forward_impl.15} parent=39 // pred_check
        %p832 = pneg %p130
      $region42: #{_forward_impl.15} parent=39 // pred_check_branch
        %834 = sbr.rel (%p832) target = $region44
      $region43: #{_forward_impl.15} parent=39 // pred_region
        %s835 = smul.u32 32, %s20
        %p836 = scmp.lt.s32.totalorder %s835, 63
        %s837 = scalar_select %p836, %s835, 63
        %p838 = scmp.lt.s32.totalorder %s21, 0
        %s839 = scalar_select %p838, %s21, 0
        %s840 = sadd.s32 %s839, %s837
        %s841 = smul.addr %s840, 4
        %s842 = scalar_lea.vmem %s3, %s841
      $region44: #{_forward_impl.15} parent=39 // pred_fallthru
        _
    $region40: #{_forward_impl.15} parent=5 // pred_fallthru
      _
  $region6: #{_forward_impl.15} parent=0 // loop_footer
    %s13 = sadd.s32 1, %s9
  $region7: #{_forward_impl.15} parent=0 // loop_footer_branch
    %8 = sbr.rel target = $region3
  $region8: #{_forward_impl.15} parent=0 // loop_exit
    _

// kernel: _forward_impl.16
$region0: #{_forward_impl.16}
  #allocation0 [shape = 'u32[]', space=smem, size = 0x4, offset = 0x4, fixed_abs, tag = 'smem constant byte address 0x4 - core index']
  #allocation1 [shape = 'u32[72,128]{1,0:T(1,128)}', space=vmem, size = 0x9000, scoped, tag = 'internal scratch']
  #allocation2 [shape = 'f32[80,128]{1,0:T(8,128)}', space=vmem, size = 0xa000, scoped, tag = 'scratch operand']
  %s0 = inlined_call_operand.vmem [shape: bf16[2,110,8], index: 0, kind: input, shape index: {}]
  %s1 = inlined_call_operand.vmem [shape: bf16[9,8,128], index: 1, kind: input, shape index: {}]
  %s2 = inlined_call_operand.vmem [shape: f32[1,128], index: 2, kind: input, shape index: {}]
  %s3 = inlined_call_operand.vmem [shape: bf16[2,80,128], index: 3, kind: output, shape index: {}]
  %s4 = sld [smem:[#allocation0]]
  $region45: #{_forward_impl.16} parent=0
    _
  %s6 = ssub.s32 1, %s4
  %s7 = scalar_select 0, %s6, %s4
  loop: start=0, step=1, limit=4
  $region2: #{_forward_impl.16} parent=0 // loop_pre_header
    _
  $region3: #{_forward_impl.16} parent=0 // loop_header
    %s9 = sphi 0, %s13
    %p10 = scmp.ge.s32.totalorder %s9, 4
    %s16 = sphi 0, %s28
    %s17 = sphi 0, %s24
    %s18 = sphi 0, %s16
    %s19 = sphi 0, %s17
    %s20 = sphi 0, %s18
    %s21 = sphi 0, %s19
    %s31 = sphi 0, %s33
    %s34 = sphi 0, %s31
    %s35 = sphi 0, %s34
    %s51 = sphi 0, %s35
    %s55 = sphi 0, %s55
    %s57 = sphi 0, %s55
    %s58 = sphi 0, %s57
    %s72 = sphi 0, %s58
    %s76 = sphi 0, %s76
    %s78 = sphi 0, %s76
    %s79 = sphi 0, %s78
    %s93 = sphi 0, %s79
    %s101 = sphi 0, %s103
    %s104 = sphi 0, %s101
    %s105 = sphi 0, %s104
    %s121 = sphi 0, %s105
  $region4: #{_forward_impl.16} parent=0 // loop_header_branch
    %12 = sbr.rel (%p10) target = $region8
  $region5: #{_forward_impl.16} parent=0 // loop_body
    %s14 = ssub.s32 %s9, 1
    %s15 = ssub.s32 %s9, 2
    %s22 = sadd.s32 1, %s17
    %p23 = scmp.ge.s32.totalorder %s22, 1
    %s24 = scalar_select %p23, 0, %s22
    %s25 = sadd.s32 1, %s16
    %s26 = scalar_select %p23, %s25, %s16
    %p27 = scmp.ge.s32.totalorder %s26, 2
    %s28 = scalar_select %p27, 0, %s26
    %s29 = ssub.s32 %s16, %s28
    %p30 = scmp.eq.s32.totalorder %s29, 0
    %s32 = sadd.s32 %s31, 1
    %s33 = scalar_select %p30, %s31, %s32
    %p36 = pneg %p30
    %p37 = scmp.eq.s32.totalorder %s9, 1
    %p38 = por %p36, %p37
    %p39 = scmp.ne.s32.totalorder %s31, %s34
    %p40 = scmp.eq.s32.totalorder %s9, 0
    %p41 = por %p39, %p40
    %p42 = scmp.ne.s32.totalorder %s31, %s34
    %p43 = scmp.eq.s32.totalorder %s14, 1
    %p44 = por %p42, %p43
    %p45 = scmp.ne.s32.totalorder %s34, %s35
    %p46 = scmp.eq.s32.totalorder %s14, 0
    %p47 = por %p45, %p46
    %p48 = scmp.ne.s32.totalorder %s34, %s35
    %p49 = scmp.eq.s32.totalorder %s15, 1
    %p50 = por %p48, %p49
    %p52 = scmp.ne.s32.totalorder %s35, %s51
    %p53 = scmp.eq.s32.totalorder %s15, 0
    %p54 = por %p52, %p53
    %s56 = sadd.s32 %s55, 1
    %p59 = scmp.eq.s32.totalorder %s9, 1
    %p60 = scmp.ne.s32.totalorder %s55, %s57
    %p61 = scmp.eq.s32.totalorder %s9, 0
    %p62 = por %p60, %p61
    %p63 = scmp.ne.s32.totalorder %s55, %s57
    %p64 = scmp.eq.s32.totalorder %s14, 1
    %p65 = por %p63, %p64
    %p66 = scmp.ne.s32.totalorder %s57, %s58
    %p67 = scmp.eq.s32.totalorder %s14, 0
    %p68 = por %p66, %p67
    %p69 = scmp.ne.s32.totalorder %s57, %s58
    %p70 = scmp.eq.s32.totalorder %s15, 1
    %p71 = por %p69, %p70
    %p73 = scmp.ne.s32.totalorder %s58, %s72
    %p74 = scmp.eq.s32.totalorder %s15, 0
    %p75 = por %p73, %p74
    %s77 = sadd.s32 %s76, 1
    %p80 = scmp.eq.s32.totalorder %s9, 1
    %p81 = scmp.ne.s32.totalorder %s76, %s78
    %p82 = scmp.eq.s32.totalorder %s9, 0
    %p83 = por %p81, %p82
    %p84 = scmp.ne.s32.totalorder %s76, %s78
    %p85 = scmp.eq.s32.totalorder %s14, 1
    %p86 = por %p84, %p85
    %p87 = scmp.ne.s32.totalorder %s78, %s79
    %p88 = scmp.eq.s32.totalorder %s14, 0
    %p89 = por %p87, %p88
    %p90 = scmp.ne.s32.totalorder %s78, %s79
    %p91 = scmp.eq.s32.totalorder %s15, 1
    %p92 = por %p90, %p91
    %p94 = scmp.ne.s32.totalorder %s79, %s93
    %p95 = scmp.eq.s32.totalorder %s15, 0
    %p96 = por %p94, %p95
    %s97 = ssub.s32 %s16, %s28
    %s98 = ssub.s32 %s17, %s24
    %s99 = sor.u32 %s97, %s98
    %p100 = scmp.eq.s32.totalorder %s99, 0
    %s102 = sadd.s32 %s101, 1
    %s103 = scalar_select %p100, %s101, %s102
    %p106 = pneg %p100
    %p107 = scmp.eq.s32.totalorder %s9, 1
    %p108 = por %p106, %p107
    %p109 = scmp.ne.s32.totalorder %s101, %s104
    %p110 = scmp.eq.s32.totalorder %s9, 0
    %p111 = por %p109, %p110
    %p112 = scmp.ne.s32.totalorder %s101, %s104
    %p113 = scmp.eq.s32.totalorder %s14, 1
    %p114 = por %p112, %p113
    %p115 = scmp.ne.s32.totalorder %s104, %s105
    %p116 = scmp.eq.s32.totalorder %s14, 0
    %p117 = por %p115, %p116
    %p118 = scmp.ne.s32.totalorder %s104, %s105
    %p119 = scmp.eq.s32.totalorder %s15, 1
    %p120 = por %p118, %p119
    %p122 = scmp.ne.s32.totalorder %s105, %s121
    %p123 = scmp.eq.s32.totalorder %s15, 0
    %p124 = por %p122, %p123
    %p125 = scmp.le.s32.totalorder 1, %s9
    %p126 = scmp.lt.s32.totalorder %s9, 3
    %p127 = pnand %p125, %p126
    %p128 = pneg %p127
    // Predicated region
    $region9: #{_forward_impl.16} parent=5 // pred_check
      _
    $region10: #{_forward_impl.16} parent=5 // pred_check_branch
      %130 = sbr.rel (%p127) target = $region12
    $region11: #{_forward_impl.16} parent=5 // pred_region
      %s131 = ssub.s32 %s9, 1
      // Predicated region
      $region13: #{_forward_impl.16} parent=11 // pred_check
        %p132 = pneg %p68
      $region14: #{_forward_impl.16} parent=11 // pred_check_branch
        %134 = sbr.rel (%p132) target = $region16
      $region15: #{_forward_impl.16} parent=11 // pred_region
        _
      $region16: #{_forward_impl.16} parent=11 // pred_fallthru
        _
      // Predicated region
      $region17: #{_forward_impl.16} parent=11 // pred_check
        %p135 = pneg %p89
      $region18: #{_forward_impl.16} parent=11 // pred_check_branch
        %137 = sbr.rel (%p135) target = $region20
      $region19: #{_forward_impl.16} parent=11 // pred_region
        _
      $region20: #{_forward_impl.16} parent=11 // pred_fallthru
        _
    $region12: #{_forward_impl.16} parent=5 // pred_fallthru
      _
    %p138 = scmp.lt.s32.totalorder %s9, 2
    // Predicated region
    $region21: #{_forward_impl.16} parent=5 // pred_check
      %p139 = pneg %p138
    $region22: #{_forward_impl.16} parent=5 // pred_check_branch
      %141 = sbr.rel (%p139) target = $region24
    $region23: #{_forward_impl.16} parent=5 // pred_region
      // Predicated region
      $region25: #{_forward_impl.16} parent=23 // pred_check
        %p142 = pneg %p41
      $region26: #{_forward_impl.16} parent=23 // pred_check_branch
        %144 = sbr.rel (%p142) target = $region28
      $region27: #{_forward_impl.16} parent=23 // pred_region
        %p145 = scmp.lt.s32.totalorder %s16, 1
        %s146 = scalar_select %p145, %s16, 1
        %s147 = smul.addr %s146, 14
        %s148 = smul.addr %s147, 4
        %s149 = scalar_lea.vmem %s0, %s148
      $region28: #{_forward_impl.16} parent=23 // pred_fallthru
        _
    $region24: #{_forward_impl.16} parent=5 // pred_fallthru
      _
    %p150 = scmp.le.s32.totalorder 1, %s9
    %p151 = scmp.lt.s32.totalorder %s9, 3
    %p152 = pnand %p150, %p151
    %p153 = pneg %p152
    // Predicated region
    $region29: #{_forward_impl.16} parent=5 // pred_check
      _
    $region30: #{_forward_impl.16} parent=5 // pred_check_branch
      %155 = sbr.rel (%p152) target = $region32
    $region31: #{_forward_impl.16} parent=5 // pred_region
      %s156 = ssub.s32 %s9, 1
      %p157 = scmp.lt.s32.totalorder %s18, 1
      %s158 = scalar_select %p157, %s18, 1
      %s159 = smul.addr %s158, 14
      %s160 = smul.addr %s159, 4
      %s161 = scalar_lea.vmem %s0, %s160
      %p162 = pneg %p47
      %p163 = pneg %p44
      %p164 = pneg %p68
      %p165 = pneg %p65
      %p166 = pneg %p89
      %p167 = pneg %p86
      %p168 = pneg %p117
      %p169 = pneg %p114
      %s170 = smul.u32 10, %s19
      %p171 = scmp.lt.s32.totalorder %s18, 1
      %s172 = scalar_select %p171, %s18, 1
      %p173 = scmp.lt.s32.totalorder %s170, 9
      %s174 = scalar_select %p173, %s170, 9
      %s175 = smul.addr %s172, 10
      %s176 = sadd.s32 %s174, %s175
      %s177 = smul.addr %s176, 4
      %s178 = scalar_lea.vmem %s3, %s177
      %p179 = scmp.lt.s32.totalorder %s18, 1
      %s180 = scalar_select %p179, %s18, 1
      %s181 = smul.addr %s180, 14
      %s182 = smul.addr %s181, 4
      %s183 = scalar_lea.vmem %s0, %s182
      %s184 = smul.u32 10, %s19
      %p185 = scmp.lt.s32.totalorder %s18, 1
      %s186 = scalar_select %p185, %s18, 1
      %p187 = scmp.lt.s32.totalorder %s184, 9
      %s188 = scalar_select %p187, %s184, 9
      %s189 = smul.addr %s186, 10
      %s190 = sadd.s32 %s188, %s189
      %s191 = smul.addr %s190, 4
      %s192 = scalar_lea.vmem %s3, %s191
      %s193 = smul.u32 10, %s19
      %s195 = smul.u32 %s19, 80
      %s196 = sshra.s32 %s195, 3
      %s197 = sand.u32 %s195, 7
      %s198 = smul.addr %s196, 4
      %s199 = scalar_lea.vmem %s183, %s198
      %v200 = vld [vmem:[%s199] sm:$0xf]
      %v201 = vld [vmem:[%s199 + $0x4] sm:$0xf]
      %v202 = vld [vmem:[%s199 + $0x8] sm:$0xf]
      %v203 = vld [vmem:[%s199 + $0xc] sm:$0xf]
      %v204 = vld [vmem:[%s199 + $0x10] sm:$0xf]
      %v205 = vld [vmem:[%s199 + $0x14] sm:$0xf]
      %v206 = vld [vmem:[%s199 + $0x18] sm:$0xf]
      %v207 = vld [vmem:[%s199 + $0x1c] sm:$0xf]
      %v208 = vld [vmem:[%s199 + $0x20] sm:$0xf]
      %v209 = vld [vmem:[%s199 + $0x24] sm:$0xf]
      %v210 = vld [vmem:[%s199 + $0x28] sm:$0xf]
      %v211 = vld [vmem:[%s199 + $0x2c] sm:$0xf]
      %v212 = vld [vmem:[%s199 + $0x30] sm:$0xf]
      %v213 = vld [vmem:[%s1] sm:$0xf]
      %v224 = vunpack.c.l.b16 %v200
      %v225 = vunpack.c.l.b16 %v201
      %v226 = vunpack.c.l.b16 %v202
      %v227 = vunpack.c.l.b16 %v203
      %v228 = vunpack.c.l.b16 %v204
      %v229 = vunpack.c.l.b16 %v205
      %v230 = vunpack.c.l.b16 %v206
      %v231 = vunpack.c.l.b16 %v207
      %v232 = vunpack.c.l.b16 %v208
      %v233 = vunpack.c.l.b16 %v209
      %v234 = vpack.c.b16 %v225, %v224
      %v235 = vpack.c.b16 %v227, %v226
      %v236 = vpack.c.b16 %v229, %v228
      %v237 = vpack.c.b16 %v231, %v230
      %v238 = vpack.c.b16 %v233, %v232
      %vm239 = vcmask 64512
      %v241 = vsel %vm239, %v234, 0
      %v244 = vsel %vm239, %v235, 0
      %v247 = vsel %vm239, %v236, 0
      %v250 = vsel %vm239, %v237, 0
      %v253 = vsel %vm239, %v238, 0
      %vm255 = vcmask 1043456
      %v257 = vsel %vm255, %v213, 0
      %259 = vmatpush.bf16.msra.mxu0 0
      %260 = vmatpush.bf16.msra.mxu0 0
      %261 = vmatpush.bf16.msra.mxu0 0
      %262 = vmatpush.bf16.msra.mxu0 0
      %263 = vmatpush.bf16.msra.mxu0 0
      %264 = vmatpush.bf16.msra.mxu0 0
      %265 = vmatpush.bf16.msra.mxu0 0
      %266 = vmatpush.bf16.msra.mxu0 %v257
      %267 = vmatmul.bf16.gmra.mxu0 %v241
      %v268 = vpop.f32.mrf.mxu0
      %v269 = vadd.f32 0.0, %v268
      %v270 = vpop.f32.mrf.mxu0
      %v271 = vadd.f32 0.0, %v270
      %272 = vmatmul.bf16.gmra.mxu0 %v244
      %v273 = vpop.f32.mrf.mxu0
      %v274 = vadd.f32 0.0, %v273
      %v275 = vpop.f32.mrf.mxu0
      %v276 = vadd.f32 0.0, %v275
      %277 = vmatmul.bf16.gmra.mxu0 %v247
      %v278 = vpop.f32.mrf.mxu0
      %v279 = vadd.f32 0.0, %v278
      %v280 = vpop.f32.mrf.mxu0
      %v281 = vadd.f32 0.0, %v280
      %282 = vmatmul.bf16.gmra.mxu0 %v250
      %v283 = vpop.f32.mrf.mxu0
      %v284 = vadd.f32 0.0, %v283
      %v285 = vpop.f32.mrf.mxu0
      %v286 = vadd.f32 0.0, %v285
      %287 = vmatmul.bf16.gmra.mxu0 %v253
      %v288 = vpop.f32.mrf.mxu0
      %v289 = vadd.f32 0.0, %v288
      %v290 = vpop.f32.mrf.mxu0
      %v291 = vadd.f32 0.0, %v290
      %292 = vdwg.mxu0
      %293 = vst [vmem:[#allocation2] sm:$0xff] %v269
      %294 = vst [vmem:[#allocation2 + $0x8] sm:$0xff] %v271
      %295 = vst [vmem:[#allocation2 + $0x10] sm:$0xff] %v274
      %296 = vst [vmem:[#allocation2 + $0x18] sm:$0xff] %v276
      %297 = vst [vmem:[#allocation2 + $0x20] sm:$0xff] %v279
      %298 = vst [vmem:[#allocation2 + $0x28] sm:$0xff] %v281
      %299 = vst [vmem:[#allocation2 + $0x30] sm:$0xff] %v284
      %300 = vst [vmem:[#allocation2 + $0x38] sm:$0xff] %v286
      %301 = vst [vmem:[#allocation2 + $0x40] sm:$0xff] %v289
      %302 = vst [vmem:[#allocation2 + $0x48] sm:$0xff] %v291
      %v303 = vld [vmem:[#allocation2] sm:$0xff]
      %v304 = vld [vmem:[#allocation2 + $0x8] sm:$0xff]
      %v305 = vld [vmem:[#allocation2 + $0x10] sm:$0xff]
      %v306 = vld [vmem:[#allocation2 + $0x18] sm:$0xff]
      %v307 = vld [vmem:[#allocation2 + $0x20] sm:$0xff]
      %v308 = vld [vmem:[#allocation2 + $0x28] sm:$0xff]
      %v309 = vld [vmem:[#allocation2 + $0x30] sm:$0xff]
      %v310 = vld [vmem:[#allocation2 + $0x38] sm:$0xff]
      %v311 = vld [vmem:[#allocation2 + $0x40] sm:$0xff]
      %v312 = vld [vmem:[#allocation2 + $0x48] sm:$0xff]
      %s313 = scalar_lea.vmem %s1, 4
      %v314 = vld [vmem:[%s313] sm:$0xf]
      %v316 = vunpack.c.l.b16 %v210
      %v317 = vpack.c.b16 %v316, %v316
      %vm318 = vsmask.f32 7424
      %v319 = vshrl.u32 %v234, 16
      %v321 = vshll.u32 %v234, 16
      %v323 = vrot.slane %v321, 1
      %v324 = vor.u32 %v319, %v323
      %v325 = vshll.u32 %v235, 16
      %v327 = vrot.slane %v325, 1
      %v328 = vsel %vm318, %v324, %v327
      %v329 = vshrl.u32 %v235, 16
      %v331 = vor.u32 %v329, %v327
      %v332 = vshll.u32 %v236, 16
      %v334 = vrot.slane %v332, 1
      %v335 = vsel %vm318, %v331, %v334
      %v336 = vshrl.u32 %v236, 16
      %v338 = vor.u32 %v336, %v334
      %v339 = vshll.u32 %v237, 16
      %v341 = vrot.slane %v339, 1
      %v342 = vsel %vm318, %v338, %v341
      %v343 = vshrl.u32 %v237, 16
      %v345 = vor.u32 %v343, %v341
      %v346 = vshll.u32 %v238, 16
      %v348 = vrot.slane %v346, 1
      %v349 = vsel %vm318, %v345, %v348
      %v350 = vshrl.u32 %v238, 16
      %v352 = vor.u32 %v350, %v348
      %v354 = vshll.u32 %v317, 16
      %v356 = vrot.slane %v354, 1
      %v357 = vsel %vm318, %v352, %v356
      %v359 = vsel %vm239, %v328, 0
      %v362 = vsel %vm239, %v335, 0
      %v365 = vsel %vm239, %v342, 0
      %v368 = vsel %vm239, %v349, 0
      %v371 = vsel %vm239, %v357, 0
      %v374 = vsel %vm255, %v314, 0
      %376 = vmatpush.bf16.msra.mxu0 0
      %377 = vmatpush.bf16.msra.mxu0 0
      %378 = vmatpush.bf16.msra.mxu0 0
      %379 = vmatpush.bf16.msra.mxu0 0
      %380 = vmatpush.bf16.msra.mxu0 0
      %381 = vmatpush.bf16.msra.mxu0 0
      %382 = vmatpush.bf16.msra.mxu0 0
      %383 = vmatpush.bf16.msra.mxu0 %v374
      %384 = vmatmul.bf16.gmra.mxu0 %v359
      %v385 = vpop.f32.mrf.mxu0
      %v386 = vadd.f32 0.0, %v385
      %v387 = vpop.f32.mrf.mxu0
      %v388 = vadd.f32 0.0, %v387
      %389 = vmatmul.bf16.gmra.mxu0 %v362
      %v390 = vpop.f32.mrf.mxu0
      %v391 = vadd.f32 0.0, %v390
      %v392 = vpop.f32.mrf.mxu0
      %v393 = vadd.f32 0.0, %v392
      %394 = vmatmul.bf16.gmra.mxu0 %v365
      %v395 = vpop.f32.mrf.mxu0
      %v396 = vadd.f32 0.0, %v395
      %v397 = vpop.f32.mrf.mxu0
      %v398 = vadd.f32 0.0, %v397
      %399 = vmatmul.bf16.gmra.mxu0 %v368
      %v400 = vpop.f32.mrf.mxu0
      %v401 = vadd.f32 0.0, %v400
      %v402 = vpop.f32.mrf.mxu0
      %v403 = vadd.f32 0.0, %v402
      %404 = vmatmul.bf16.gmra.mxu0 %v371
      %v405 = vpop.f32.mrf.mxu0
      %v406 = vadd.f32 0.0, %v405
      %v407 = vpop.f32.mrf.mxu0
      %v408 = vadd.f32 0.0, %v407
      %409 = vdwg.mxu0
      %v410 = vadd.f32 %v303, %v386
      %v411 = vadd.f32 %v304, %v388
      %v412 = vadd.f32 %v305, %v391
      %v413 = vadd.f32 %v306, %v393
      %v414 = vadd.f32 %v307, %v396
      %v415 = vadd.f32 %v308, %v398
      %v416 = vadd.f32 %v309, %v401
      %v417 = vadd.f32 %v310, %v403
      %v418 = vadd.f32 %v311, %v406
      %v419 = vadd.f32 %v312, %v408
      %420 = vst [vmem:[#allocation2] sm:$0xff] %v410
      %421 = vst [vmem:[#allocation2 + $0x8] sm:$0xff] %v411
      %422 = vst [vmem:[#allocation2 + $0x10] sm:$0xff] %v412
      %423 = vst [vmem:[#allocation2 + $0x18] sm:$0xff] %v413
      %424 = vst [vmem:[#allocation2 + $0x20] sm:$0xff] %v414
      %425 = vst [vmem:[#allocation2 + $0x28] sm:$0xff] %v415
      %426 = vst [vmem:[#allocation2 + $0x30] sm:$0xff] %v416
      %427 = vst [vmem:[#allocation2 + $0x38] sm:$0xff] %v417
      %428 = vst [vmem:[#allocation2 + $0x40] sm:$0xff] %v418
      %429 = vst [vmem:[#allocation2 + $0x48] sm:$0xff] %v419
      %v430 = vld [vmem:[#allocation2] sm:$0xff]
      %v431 = vld [vmem:[#allocation2 + $0x8] sm:$0xff]
      %v432 = vld [vmem:[#allocation2 + $0x10] sm:$0xff]
      %v433 = vld [vmem:[#allocation2 + $0x18] sm:$0xff]
      %v434 = vld [vmem:[#allocation2 + $0x20] sm:$0xff]
      %v435 = vld [vmem:[#allocation2 + $0x28] sm:$0xff]
      %v436 = vld [vmem:[#allocation2 + $0x30] sm:$0xff]
      %v437 = vld [vmem:[#allocation2 + $0x38] sm:$0xff]
      %v438 = vld [vmem:[#allocation2 + $0x40] sm:$0xff]
      %v439 = vld [vmem:[#allocation2 + $0x48] sm:$0xff]
      %s440 = scalar_lea.vmem %s1, 8
      %v441 = vld [vmem:[%s440] sm:$0xf]
      %vm442 = vcmask 1046528
      %v443 = vrot.slane %v234, 1
      %v444 = vrot.slane %v235, 1
      %v445 = vsel %vm442, %v443, %v444
      %v446 = vrot.slane %v236, 1
      %v447 = vsel %vm442, %v444, %v446
      %v448 = vrot.slane %v237, 1
      %v449 = vsel %vm442, %v446, %v448
      %v450 = vrot.slane %v238, 1
      %v451 = vsel %vm442, %v448, %v450
      %v452 = vrot.slane %v317, 1
      %v453 = vsel %vm442, %v450, %v452
      %v455 = vsel %vm239, %v445, 0
      %v458 = vsel %vm239, %v447, 0
      %v461 = vsel %vm239, %v449, 0
      %v464 = vsel %vm239, %v451, 0
      %v467 = vsel %vm239, %v453, 0
      %v470 = vsel %vm255, %v441, 0
      %472 = vmatpush.bf16.msra.mxu0 0
      %473 = vmatpush.bf16.msra.mxu0 0
      %474 = vmatpush.bf16.msra.mxu0 0
      %475 = vmatpush.bf16.msra.mxu0 0
      %476 = vmatpush.bf16.msra.mxu0 0
      %477 = vmatpush.bf16.msra.mxu0 0
      %478 = vmatpush.bf16.msra.mxu0 0
      %479 = vmatpush.bf16.msra.mxu0 %v470
      %480 = vmatmul.bf16.gmra.mxu0 %v455
      %v481 = vpop.f32.mrf.mxu0
      %v482 = vadd.f32 0.0, %v481
      %v483 = vpop.f32.mrf.mxu0
      %v484 = vadd.f32 0.0, %v483
      %485 = vmatmul.bf16.gmra.mxu0 %v458
      %v486 = vpop.f32.mrf.mxu0
      %v487 = vadd.f32 0.0, %v486
      %v488 = vpop.f32.mrf.mxu0
      %v489 = vadd.f32 0.0, %v488
      %490 = vmatmul.bf16.gmra.mxu0 %v461
      %v491 = vpop.f32.mrf.mxu0
      %v492 = vadd.f32 0.0, %v491
      %v493 = vpop.f32.mrf.mxu0
      %v494 = vadd.f32 0.0, %v493
      %495 = vmatmul.bf16.gmra.mxu0 %v464
      %v496 = vpop.f32.mrf.mxu0
      %v497 = vadd.f32 0.0, %v496
      %v498 = vpop.f32.mrf.mxu0
      %v499 = vadd.f32 0.0, %v498
      %500 = vmatmul.bf16.gmra.mxu0 %v467
      %v501 = vpop.f32.mrf.mxu0
      %v502 = vadd.f32 0.0, %v501
      %v503 = vpop.f32.mrf.mxu0
      %v504 = vadd.f32 0.0, %v503
      %505 = vdwg.mxu0
      %v506 = vadd.f32 %v430, %v482
      %v507 = vadd.f32 %v431, %v484
      %v508 = vadd.f32 %v432, %v487
      %v509 = vadd.f32 %v433, %v489
      %v510 = vadd.f32 %v434, %v492
      %v511 = vadd.f32 %v435, %v494
      %v512 = vadd.f32 %v436, %v497
      %v513 = vadd.f32 %v437, %v499
      %v514 = vadd.f32 %v438, %v502
      %v515 = vadd.f32 %v439, %v504
      %516 = vst [vmem:[#allocation2] sm:$0xff] %v506
      %517 = vst [vmem:[#allocation2 + $0x8] sm:$0xff] %v507
      %518 = vst [vmem:[#allocation2 + $0x10] sm:$0xff] %v508
      %519 = vst [vmem:[#allocation2 + $0x18] sm:$0xff] %v509
      %520 = vst [vmem:[#allocation2 + $0x20] sm:$0xff] %v510
      %521 = vst [vmem:[#allocation2 + $0x28] sm:$0xff] %v511
      %522 = vst [vmem:[#allocation2 + $0x30] sm:$0xff] %v512
      %523 = vst [vmem:[#allocation2 + $0x38] sm:$0xff] %v513
      %524 = vst [vmem:[#allocation2 + $0x40] sm:$0xff] %v514
      %525 = vst [vmem:[#allocation2 + $0x48] sm:$0xff] %v515
      %v526 = vld [vmem:[#allocation2] sm:$0xff]
      %v527 = vld [vmem:[#allocation2 + $0x8] sm:$0xff]
      %v528 = vld [vmem:[#allocation2 + $0x10] sm:$0xff]
      %v529 = vld [vmem:[#allocation2 + $0x18] sm:$0xff]
      %v530 = vld [vmem:[#allocation2 + $0x20] sm:$0xff]
      %v531 = vld [vmem:[#allocation2 + $0x28] sm:$0xff]
      %v532 = vld [vmem:[#allocation2 + $0x30] sm:$0xff]
      %v533 = vld [vmem:[#allocation2 + $0x38] sm:$0xff]
      %v534 = vld [vmem:[#allocation2 + $0x40] sm:$0xff]
      %v535 = vld [vmem:[#allocation2 + $0x48] sm:$0xff]
      %s536 = scalar_lea.vmem %s1, 12
      %v537 = vld [vmem:[%s536] sm:$0xf]
      %v539 = vunpack.c.l.b16 %v211
      %v540 = vpack.c.b16 %v226, %v225
      %v541 = vpack.c.b16 %v228, %v227
      %v542 = vpack.c.b16 %v230, %v229
      %v543 = vpack.c.b16 %v232, %v231
      %v544 = vpack.c.b16 %v316, %v233
      %v545 = vpack.c.b16 %v539, %v539
      %v546 = vrot.slane %v540, 1
      %v547 = vrot.slane %v541, 1
      %v548 = vsel %vm442, %v546, %v547
      %v549 = vrot.slane %v542, 1
      %v550 = vsel %vm442, %v547, %v549
      %v551 = vrot.slane %v543, 1
      %v552 = vsel %vm442, %v549, %v551
      %v553 = vrot.slane %v544, 1
      %v554 = vsel %vm442, %v551, %v553
      %v555 = vrot.slane %v545, 1
      %v556 = vsel %vm442, %v553, %v555
      %v558 = vsel %vm239, %v548, 0
      %v561 = vsel %vm239, %v550, 0
      %v564 = vsel %vm239, %v552, 0
      %v567 = vsel %vm239, %v554, 0
      %v570 = vsel %vm239, %v556, 0
      %v573 = vsel %vm255, %v537, 0
      %575 = vmatpush.bf16.msra.mxu0 0
      %576 = vmatpush.bf16.msra.mxu0 0
      %577 = vmatpush.bf16.msra.mxu0 0
      %578 = vmatpush.bf16.msra.mxu0 0
      %579 = vmatpush.bf16.msra.mxu0 0
      %580 = vmatpush.bf16.msra.mxu0 0
      %581 = vmatpush.bf16.msra.mxu0 0
      %582 = vmatpush.bf16.msra.mxu0 %v573
      %583 = vmatmul.bf16.gmra.mxu0 %v558
      %v584 = vpop.f32.mrf.mxu0
      %v585 = vadd.f32 0.0, %v584
      %v586 = vpop.f32.mrf.mxu0
      %v587 = vadd.f32 0.0, %v586
      %588 = vmatmul.bf16.gmra.mxu0 %v561
      %v589 = vpop.f32.mrf.mxu0
      %v590 = vadd.f32 0.0, %v589
      %v591 = vpop.f32.mrf.mxu0
      %v592 = vadd.f32 0.0, %v591
      %593 = vmatmul.bf16.gmra.mxu0 %v564
      %v594 = vpop.f32.mrf.mxu0
      %v595 = vadd.f32 0.0, %v594
      %v596 = vpop.f32.mrf.mxu0
      %v597 = vadd.f32 0.0, %v596
      %598 = vmatmul.bf16.gmra.mxu0 %v567
      %v599 = vpop.f32.mrf.mxu0
      %v600 = vadd.f32 0.0, %v599
      %v601 = vpop.f32.mrf.mxu0
      %v602 = vadd.f32 0.0, %v601
      %603 = vmatmul.bf16.gmra.mxu0 %v570
      %v604 = vpop.f32.mrf.mxu0
      %v605 = vadd.f32 0.0, %v604
      %v606 = vpop.f32.mrf.mxu0
      %v607 = vadd.f32 0.0, %v606
      %608 = vdwg.mxu0
      %v609 = vadd.f32 %v526, %v585
      %v610 = vadd.f32 %v527, %v587
      %v611 = vadd.f32 %v528, %v590
      %v612 = vadd.f32 %v529, %v592
      %v613 = vadd.f32 %v530, %v595
      %v614 = vadd.f32 %v531, %v597
      %v615 = vadd.f32 %v532, %v600
      %v616 = vadd.f32 %v533, %v602
      %v617 = vadd.f32 %v534, %v605
      %v618 = vadd.f32 %v535, %v607
      %619 = vst [vmem:[#allocation2] sm:$0xff] %v609
      %620 = vst [vmem:[#allocation2 + $0x8] sm:$0xff] %v610
      %621 = vst [vmem:[#allocation2 + $0x10] sm:$0xff] %v611
      %622 = vst [vmem:[#allocation2 + $0x18] sm:$0xff] %v612
      %623 = vst [vmem:[#allocation2 + $0x20] sm:$0xff] %v613
      %624 = vst [vmem:[#allocation2 + $0x28] sm:$0xff] %v614
      %625 = vst [vmem:[#allocation2 + $0x30] sm:$0xff] %v615
      %626 = vst [vmem:[#allocation2 + $0x38] sm:$0xff] %v616
      %627 = vst [vmem:[#allocation2 + $0x40] sm:$0xff] %v617
      %628 = vst [vmem:[#allocation2 + $0x48] sm:$0xff] %v618
      %v629 = vld [vmem:[#allocation2] sm:$0xff]
      %v630 = vld [vmem:[#allocation2 + $0x8] sm:$0xff]
      %v631 = vld [vmem:[#allocation2 + $0x10] sm:$0xff]
      %v632 = vld [vmem:[#allocation2 + $0x18] sm:$0xff]
      %v633 = vld [vmem:[#allocation2 + $0x20] sm:$0xff]
      %v634 = vld [vmem:[#allocation2 + $0x28] sm:$0xff]
      %v635 = vld [vmem:[#allocation2 + $0x30] sm:$0xff]
      %v636 = vld [vmem:[#allocation2 + $0x38] sm:$0xff]
      %v637 = vld [vmem:[#allocation2 + $0x40] sm:$0xff]
      %v638 = vld [vmem:[#allocation2 + $0x48] sm:$0xff]
      %s639 = scalar_lea.vmem %s1, 16
      %v640 = vld [vmem:[%s639] sm:$0xf]
      %vm641 = vsmask.f32 6400
      %v643 = vshrl.u32 %v540, 16
      %v645 = vrot.slane %v643, 1
      %v646 = vshll.u32 %v540, 16
      %v648 = vrot.slane %v646, 2
      %v649 = vor.u32 %v645, %v648
      %v651 = vshrl.u32 %v541, 16
      %v653 = vrot.slane %v651, 1
      %v654 = vshll.u32 %v541, 16
      %v656 = vrot.slane %v654, 2
      %v657 = vor.u32 %v653, %v656
      %v658 = vsel %vm641, %v649, %v657
      %v660 = vshrl.u32 %v542, 16
      %v662 = vrot.slane %v660, 1
      %v663 = vshll.u32 %v542, 16
      %v665 = vrot.slane %v663, 2
      %v666 = vor.u32 %v662, %v665
      %v667 = vsel %vm641, %v657, %v666
      %v669 = vshrl.u32 %v543, 16
      %v671 = vrot.slane %v669, 1
      %v672 = vshll.u32 %v543, 16
      %v674 = vrot.slane %v672, 2
      %v675 = vor.u32 %v671, %v674
      %v676 = vsel %vm641, %v666, %v675
      %v678 = vshrl.u32 %v544, 16
      %v680 = vrot.slane %v678, 1
      %v681 = vshll.u32 %v544, 16
      %v683 = vrot.slane %v681, 2
      %v684 = vor.u32 %v680, %v683
      %v685 = vsel %vm641, %v675, %v684
      %v687 = vshrl.u32 %v545, 16
      %v689 = vrot.slane %v687, 1
      %v690 = vshll.u32 %v545, 16
      %v692 = vrot.slane %v690, 2
      %v693 = vor.u32 %v689, %v692
      %v694 = vsel %vm641, %v684, %v693
      %v696 = vsel %vm239, %v658, 0
      %v699 = vsel %vm239, %v667, 0
      %v702 = vsel %vm239, %v676, 0
      %v705 = vsel %vm239, %v685, 0
      %v708 = vsel %vm239, %v694, 0
      %v711 = vsel %vm255, %v640, 0
      %713 = vmatpush.bf16.msra.mxu0 0
      %714 = vmatpush.bf16.msra.mxu0 0
      %715 = vmatpush.bf16.msra.mxu0 0
      %716 = vmatpush.bf16.msra.mxu0 0
      %717 = vmatpush.bf16.msra.mxu0 0
      %718 = vmatpush.bf16.msra.mxu0 0
      %719 = vmatpush.bf16.msra.mxu0 0
      %720 = vmatpush.bf16.msra.mxu0 %v711
      %721 = vmatmul.bf16.gmra.mxu0 %v696
      %v722 = vpop.f32.mrf.mxu0
      %v723 = vadd.f32 0.0, %v722
      %v724 = vpop.f32.mrf.mxu0
      %v725 = vadd.f32 0.0, %v724
      %726 = vmatmul.bf16.gmra.mxu0 %v699
      %v727 = vpop.f32.mrf.mxu0
      %v728 = vadd.f32 0.0, %v727
      %v729 = vpop.f32.mrf.mxu0
      %v730 = vadd.f32 0.0, %v729
      %731 = vmatmul.bf16.gmra.mxu0 %v702
      %v732 = vpop.f32.mrf.mxu0
      %v733 = vadd.f32 0.0, %v732
      %v734 = vpop.f32.mrf.mxu0
      %v735 = vadd.f32 0.0, %v734
      %736 = vmatmul.bf16.gmra.mxu0 %v705
      %v737 = vpop.f32.mrf.mxu0
      %v738 = vadd.f32 0.0, %v737
      %v739 = vpop.f32.mrf.mxu0
      %v740 = vadd.f32 0.0, %v739
      %741 = vmatmul.bf16.gmra.mxu0 %v708
      %v742 = vpop.f32.mrf.mxu0
      %v743 = vadd.f32 0.0, %v742
      %v744 = vpop.f32.mrf.mxu0
      %v745 = vadd.f32 0.0, %v744
      %746 = vdwg.mxu0
      %v747 = vadd.f32 %v629, %v723
      %v748 = vadd.f32 %v630, %v725
      %v749 = vadd.f32 %v631, %v728
      %v750 = vadd.f32 %v632, %v730
      %v751 = vadd.f32 %v633, %v733
      %v752 = vadd.f32 %v634, %v735
      %v753 = vadd.f32 %v635, %v738
      %v754 = vadd.f32 %v636, %v740
      %v755 = vadd.f32 %v637, %v743
      %v756 = vadd.f32 %v638, %v745
      %757 = vst [vmem:[#allocation2] sm:$0xff] %v747
      %758 = vst [vmem:[#allocation2 + $0x8] sm:$0xff] %v748
      %759 = vst [vmem:[#allocation2 + $0x10] sm:$0xff] %v749
      %760 = vst [vmem:[#allocation2 + $0x18] sm:$0xff] %v750
      %761 = vst [vmem:[#allocation2 + $0x20] sm:$0xff] %v751
      %762 = vst [vmem:[#allocation2 + $0x28] sm:$0xff] %v752
      %763 = vst [vmem:[#allocation2 + $0x30] sm:$0xff] %v753
      %764 = vst [vmem:[#allocation2 + $0x38] sm:$0xff] %v754
      %765 = vst [vmem:[#allocation2 + $0x40] sm:$0xff] %v755
      %766 = vst [vmem:[#allocation2 + $0x48] sm:$0xff] %v756
      %v767 = vld [vmem:[#allocation2] sm:$0xff]
      %v768 = vld [vmem:[#allocation2 + $0x8] sm:$0xff]
      %v769 = vld [vmem:[#allocation2 + $0x10] sm:$0xff]
      %v770 = vld [vmem:[#allocation2 + $0x18] sm:$0xff]
      %v771 = vld [vmem:[#allocation2 + $0x20] sm:$0xff]
      %v772 = vld [vmem:[#allocation2 + $0x28] sm:$0xff]
      %v773 = vld [vmem:[#allocation2 + $0x30] sm:$0xff]
      %v774 = vld [vmem:[#allocation2 + $0x38] sm:$0xff]
      %v775 = vld [vmem:[#allocation2 + $0x40] sm:$0xff]
      %v776 = vld [vmem:[#allocation2 + $0x48] sm:$0xff]
      %s777 = scalar_lea.vmem %s1, 20
      %v778 = vld [vmem:[%s777] sm:$0xf]
      %vm779 = vcmask 1045504
      %v780 = vrot.slane %v540, 2
      %v781 = vrot.slane %v541, 2
      %v782 = vsel %vm779, %v780, %v781
      %v783 = vrot.slane %v542, 2
      %v784 = vsel %vm779, %v781, %v783
      %v785 = vrot.slane %v543, 2
      %v786 = vsel %vm779, %v783, %v785
      %v787 = vrot.slane %v544, 2
      %v788 = vsel %vm779, %v785, %v787
      %v789 = vrot.slane %v545, 2
      %v790 = vsel %vm779, %v787, %v789
      %v792 = vsel %vm239, %v782, 0
      %v795 = vsel %vm239, %v784, 0
      %v798 = vsel %vm239, %v786, 0
      %v801 = vsel %vm239, %v788, 0
      %v804 = vsel %vm239, %v790, 0
      %v807 = vsel %vm255, %v778, 0
      %809 = vmatpush.bf16.msra.mxu0 0
      %810 = vmatpush.bf16.msra.mxu0 0
      %811 = vmatpush.bf16.msra.mxu0 0
      %812 = vmatpush.bf16.msra.mxu0 0
      %813 = vmatpush.bf16.msra.mxu0 0
      %814 = vmatpush.bf16.msra.mxu0 0
      %815 = vmatpush.bf16.msra.mxu0 0
      %816 = vmatpush.bf16.msra.mxu0 %v807
      %817 = vmatmul.bf16.gmra.mxu0 %v792
      %v818 = vpop.f32.mrf.mxu0
      %v819 = vadd.f32 0.0, %v818
      %v820 = vpop.f32.mrf.mxu0
      %v821 = vadd.f32 0.0, %v820
      %822 = vmatmul.bf16.gmra.mxu0 %v795
      %v823 = vpop.f32.mrf.mxu0
      %v824 = vadd.f32 0.0, %v823
      %v825 = vpop.f32.mrf.mxu0
      %v826 = vadd.f32 0.0, %v825
      %827 = vmatmul.bf16.gmra.mxu0 %v798
      %v828 = vpop.f32.mrf.mxu0
      %v829 = vadd.f32 0.0, %v828
      %v830 = vpop.f32.mrf.mxu0
      %v831 = vadd.f32 0.0, %v830
      %832 = vmatmul.bf16.gmra.mxu0 %v801
      %v833 = vpop.f32.mrf.mxu0
      %v834 = vadd.f32 0.0, %v833
      %v835 = vpop.f32.mrf.mxu0
      %v836 = vadd.f32 0.0, %v835
      %837 = vmatmul.bf16.gmra.mxu0 %v804
      %v838 = vpop.f32.mrf.mxu0
      %v839 = vadd.f32 0.0, %v838
      %v840 = vpop.f32.mrf.mxu0
      %v841 = vadd.f32 0.0, %v840
      %842 = vdwg.mxu0
      %v843 = vadd.f32 %v767, %v819
      %v844 = vadd.f32 %v768, %v821
      %v845 = vadd.f32 %v769, %v824
      %v846 = vadd.f32 %v770, %v826
      %v847 = vadd.f32 %v771, %v829
      %v848 = vadd.f32 %v772, %v831
      %v849 = vadd.f32 %v773, %v834
      %v850 = vadd.f32 %v774, %v836
      %v851 = vadd.f32 %v775, %v839
      %v852 = vadd.f32 %v776, %v841
      %853 = vst [vmem:[#allocation2] sm:$0xff] %v843
      %854 = vst [vmem:[#allocation2 + $0x8] sm:$0xff] %v844
      %855 = vst [vmem:[#allocation2 + $0x10] sm:$0xff] %v845
      %856 = vst [vmem:[#allocation2 + $0x18] sm:$0xff] %v846
      %857 = vst [vmem:[#allocation2 + $0x20] sm:$0xff] %v847
      %858 = vst [vmem:[#allocation2 + $0x28] sm:$0xff] %v848
      %859 = vst [vmem:[#allocation2 + $0x30] sm:$0xff] %v849
      %860 = vst [vmem:[#allocation2 + $0x38] sm:$0xff] %v850
      %861 = vst [vmem:[#allocation2 + $0x40] sm:$0xff] %v851
      %862 = vst [vmem:[#allocation2 + $0x48] sm:$0xff] %v852
      %v863 = vld [vmem:[#allocation2] sm:$0xff]
      %v864 = vld [vmem:[#allocation2 + $0x8] sm:$0xff]
      %v865 = vld [vmem:[#allocation2 + $0x10] sm:$0xff]
      %v866 = vld [vmem:[#allocation2 + $0x18] sm:$0xff]
      %v867 = vld [vmem:[#allocation2 + $0x20] sm:$0xff]
      %v868 = vld [vmem:[#allocation2 + $0x28] sm:$0xff]
      %v869 = vld [vmem:[#allocation2 + $0x30] sm:$0xff]
      %v870 = vld [vmem:[#allocation2 + $0x38] sm:$0xff]
      %v871 = vld [vmem:[#allocation2 + $0x40] sm:$0xff]
      %v872 = vld [vmem:[#allocation2 + $0x48] sm:$0xff]
      %s873 = scalar_lea.vmem %s1, 24
      %v874 = vld [vmem:[%s873] sm:$0xf]
      %v876 = vunpack.c.l.b16 %v212
      %v877 = vpack.c.b16 %v539, %v316
      %v878 = vpack.c.b16 %v876, %v876
      %v879 = vrot.slane %v235, 2
      %v880 = vrot.slane %v236, 2
      %v881 = vsel %vm779, %v879, %v880
      %v882 = vrot.slane %v237, 2
      %v883 = vsel %vm779, %v880, %v882
      %v884 = vrot.slane %v238, 2
      %v885 = vsel %vm779, %v882, %v884
      %v886 = vrot.slane %v877, 2
      %v887 = vsel %vm779, %v884, %v886
      %v888 = vrot.slane %v878, 2
      %v889 = vsel %vm779, %v886, %v888
      %v891 = vsel %vm239, %v881, 0
      %v894 = vsel %vm239, %v883, 0
      %v897 = vsel %vm239, %v885, 0
      %v900 = vsel %vm239, %v887, 0
      %v903 = vsel %vm239, %v889, 0
      %v906 = vsel %vm255, %v874, 0
      %908 = vmatpush.bf16.msra.mxu0 0
      %909 = vmatpush.bf16.msra.mxu0 0
      %910 = vmatpush.bf16.msra.mxu0 0
      %911 = vmatpush.bf16.msra.mxu0 0
      %912 = vmatpush.bf16.msra.mxu0 0
      %913 = vmatpush.bf16.msra.mxu0 0
      %914 = vmatpush.bf16.msra.mxu0 0
      %915 = vmatpush.bf16.msra.mxu0 %v906
      %916 = vmatmul.bf16.gmra.mxu0 %v891
      %v917 = vpop.f32.mrf.mxu0
      %v918 = vadd.f32 0.0, %v917
      %v919 = vpop.f32.mrf.mxu0
      %v920 = vadd.f32 0.0, %v919
      %921 = vmatmul.bf16.gmra.mxu0 %v894
      %v922 = vpop.f32.mrf.mxu0
      %v923 = vadd.f32 0.0, %v922
      %v924 = vpop.f32.mrf.mxu0
      %v925 = vadd.f32 0.0, %v924
      %926 = vmatmul.bf16.gmra.mxu0 %v897
      %v927 = vpop.f32.mrf.mxu0
      %v928 = vadd.f32 0.0, %v927
      %v929 = vpop.f32.mrf.mxu0
      %v930 = vadd.f32 0.0, %v929
      %931 = vmatmul.bf16.gmra.mxu0 %v900
      %v932 = vpop.f32.mrf.mxu0
      %v933 = vadd.f32 0.0, %v932
      %v934 = vpop.f32.mrf.mxu0
      %v935 = vadd.f32 0.0, %v934
      %936 = vmatmul.bf16.gmra.mxu0 %v903
      %v937 = vpop.f32.mrf.mxu0
      %v938 = vadd.f32 0.0, %v937
      %v939 = vpop.f32.mrf.mxu0
      %v940 = vadd.f32 0.0, %v939
      %941 = vdwg.mxu0
      %v942 = vadd.f32 %v863, %v918
      %v943 = vadd.f32 %v864, %v920
      %v944 = vadd.f32 %v865, %v923
      %v945 = vadd.f32 %v866, %v925
      %v946 = vadd.f32 %v867, %v928
      %v947 = vadd.f32 %v868, %v930
      %v948 = vadd.f32 %v869, %v933
      %v949 = vadd.f32 %v870, %v935
      %v950 = vadd.f32 %v871, %v938
      %v951 = vadd.f32 %v872, %v940
      %952 = vst [vmem:[#allocation2] sm:$0xff] %v942
      %953 = vst [vmem:[#allocation2 + $0x8] sm:$0xff] %v943
      %954 = vst [vmem:[#allocation2 + $0x10] sm:$0xff] %v944
      %955 = vst [vmem:[#allocation2 + $0x18] sm:$0xff] %v945
      %956 = vst [vmem:[#allocation2 + $0x20] sm:$0xff] %v946
      %957 = vst [vmem:[#allocation2 + $0x28] sm:$0xff] %v947
      %958 = vst [vmem:[#allocation2 + $0x30] sm:$0xff] %v948
      %959 = vst [vmem:[#allocation2 + $0x38] sm:$0xff] %v949
      %960 = vst [vmem:[#allocation2 + $0x40] sm:$0xff] %v950
      %961 = vst [vmem:[#allocation2 + $0x48] sm:$0xff] %v951
      %v962 = vld [vmem:[#allocation2] sm:$0xff]
      %v963 = vld [vmem:[#allocation2 + $0x8] sm:$0xff]
      %v964 = vld [vmem:[#allocation2 + $0x10] sm:$0xff]
      %v965 = vld [vmem:[#allocation2 + $0x18] sm:$0xff]
      %v966 = vld [vmem:[#allocation2 + $0x20] sm:$0xff]
      %v967 = vld [vmem:[#allocation2 + $0x28] sm:$0xff]
      %v968 = vld [vmem:[#allocation2 + $0x30] sm:$0xff]
      %v969 = vld [vmem:[#allocation2 + $0x38] sm:$0xff]
      %v970 = vld [vmem:[#allocation2 + $0x40] sm:$0xff]
      %v971 = vld [vmem:[#allocation2 + $0x48] sm:$0xff]
      %s972 = scalar_lea.vmem %s1, 28
      %v973 = vld [vmem:[%s972] sm:$0xf]
      %vm974 = vsmask.f32 5376
      %v975 = vrot.slane %v329, 2
      %v976 = vrot.slane %v325, 3
      %v977 = vor.u32 %v975, %v976
      %v978 = vrot.slane %v336, 2
      %v979 = vrot.slane %v332, 3
      %v980 = vor.u32 %v978, %v979
      %v981 = vsel %vm974, %v977, %v980
      %v982 = vrot.slane %v343, 2
      %v983 = vrot.slane %v339, 3
      %v984 = vor.u32 %v982, %v983
      %v985 = vsel %vm974, %v980, %v984
      %v986 = vrot.slane %v350, 2
      %v987 = vrot.slane %v346, 3
      %v988 = vor.u32 %v986, %v987
      %v989 = vsel %vm974, %v984, %v988
      %v991 = vshrl.u32 %v877, 16
      %v993 = vrot.slane %v991, 2
      %v994 = vshll.u32 %v877, 16
      %v996 = vrot.slane %v994, 3
      %v997 = vor.u32 %v993, %v996
      %v998 = vsel %vm974, %v988, %v997
      %v1000 = vshrl.u32 %v878, 16
      %v1002 = vrot.slane %v1000, 2
      %v1003 = vshll.u32 %v878, 16
      %v1005 = vrot.slane %v1003, 3
      %v1006 = vor.u32 %v1002, %v1005
      %v1007 = vsel %vm974, %v997, %v1006
      %v1009 = vsel %vm239, %v981, 0
      %v1012 = vsel %vm239, %v985, 0
      %v1015 = vsel %vm239, %v989, 0
      %v1018 = vsel %vm239, %v998, 0
      %v1021 = vsel %vm239, %v1007, 0
      %v1024 = vsel %vm255, %v973, 0
      %1026 = vmatpush.bf16.msra.mxu0 0
      %1027 = vmatpush.bf16.msra.mxu0 0
      %1028 = vmatpush.bf16.msra.mxu0 0
      %1029 = vmatpush.bf16.msra.mxu0 0
      %1030 = vmatpush.bf16.msra.mxu0 0
      %1031 = vmatpush.bf16.msra.mxu0 0
      %1032 = vmatpush.bf16.msra.mxu0 0
      %1033 = vmatpush.bf16.msra.mxu0 %v1024
      %1034 = vmatmul.bf16.gmra.mxu0 %v1009
      %v1035 = vpop.f32.mrf.mxu0
      %v1036 = vadd.f32 0.0, %v1035
      %v1037 = vpop.f32.mrf.mxu0
      %v1038 = vadd.f32 0.0, %v1037
      %1039 = vmatmul.bf16.gmra.mxu0 %v1012
      %v1040 = vpop.f32.mrf.mxu0
      %v1041 = vadd.f32 0.0, %v1040
      %v1042 = vpop.f32.mrf.mxu0
      %v1043 = vadd.f32 0.0, %v1042
      %1044 = vmatmul.bf16.gmra.mxu0 %v1015
      %v1045 = vpop.f32.mrf.mxu0
      %v1046 = vadd.f32 0.0, %v1045
      %v1047 = vpop.f32.mrf.mxu0
      %v1048 = vadd.f32 0.0, %v1047
      %1049 = vmatmul.bf16.gmra.mxu0 %v1018
      %v1050 = vpop.f32.mrf.mxu0
      %v1051 = vadd.f32 0.0, %v1050
      %v1052 = vpop.f32.mrf.mxu0
      %v1053 = vadd.f32 0.0, %v1052
      %1054 = vmatmul.bf16.gmra.mxu0 %v1021
      %v1055 = vpop.f32.mrf.mxu0
      %v1056 = vadd.f32 0.0, %v1055
      %v1057 = vpop.f32.mrf.mxu0
      %v1058 = vadd.f32 0.0, %v1057
      %1059 = vdwg.mxu0
      %v1060 = vadd.f32 %v962, %v1036
      %v1061 = vadd.f32 %v963, %v1038
      %v1062 = vadd.f32 %v964, %v1041
      %v1063 = vadd.f32 %v965, %v1043
      %v1064 = vadd.f32 %v966, %v1046
      %v1065 = vadd.f32 %v967, %v1048
      %v1066 = vadd.f32 %v968, %v1051
      %v1067 = vadd.f32 %v969, %v1053
      %v1068 = vadd.f32 %v970, %v1056
      %v1069 = vadd.f32 %v971, %v1058
      %1070 = vst [vmem:[#allocation2] sm:$0xff] %v1060
      %1071 = vst [vmem:[#allocation2 + $0x8] sm:$0xff] %v1061
      %1072 = vst [vmem:[#allocation2 + $0x10] sm:$0xff] %v1062
      %1073 = vst [vmem:[#allocation2 + $0x18] sm:$0xff] %v1063
      %1074 = vst [vmem:[#allocation2 + $0x20] sm:$0xff] %v1064
      %1075 = vst [vmem:[#allocation2 + $0x28] sm:$0xff] %v1065
      %1076 = vst [vmem:[#allocation2 + $0x30] sm:$0xff] %v1066
      %1077 = vst [vmem:[#allocation2 + $0x38] sm:$0xff] %v1067
      %1078 = vst [vmem:[#allocation2 + $0x40] sm:$0xff] %v1068
      %1079 = vst [vmem:[#allocation2 + $0x48] sm:$0xff] %v1069
      %v1080 = vld [vmem:[#allocation2] sm:$0xff]
      %v1081 = vld [vmem:[#allocation2 + $0x8] sm:$0xff]
      %v1082 = vld [vmem:[#allocation2 + $0x10] sm:$0xff]
      %v1083 = vld [vmem:[#allocation2 + $0x18] sm:$0xff]
      %v1084 = vld [vmem:[#allocation2 + $0x20] sm:$0xff]
      %v1085 = vld [vmem:[#allocation2 + $0x28] sm:$0xff]
      %v1086 = vld [vmem:[#allocation2 + $0x30] sm:$0xff]
      %v1087 = vld [vmem:[#allocation2 + $0x38] sm:$0xff]
      %v1088 = vld [vmem:[#allocation2 + $0x40] sm:$0xff]
      %v1089 = vld [vmem:[#allocation2 + $0x48] sm:$0xff]
      %s1090 = scalar_lea.vmem %s1, 32
      %v1091 = vld [vmem:[%s1090] sm:$0xf]
      %vm1092 = vcmask 1044480
      %v1093 = vrot.slane %v235, 3
      %v1094 = vrot.slane %v236, 3
      %v1095 = vsel %vm1092, %v1093, %v1094
      %v1096 = vrot.slane %v237, 3
      %v1097 = vsel %vm1092, %v1094, %v1096
      %v1098 = vrot.slane %v238, 3
      %v1099 = vsel %vm1092, %v1096, %v1098
      %v1100 = vrot.slane %v877, 3
      %v1101 = vsel %vm1092, %v1098, %v1100
      %v1102 = vrot.slane %v878, 3
      %v1103 = vsel %vm1092, %v1100, %v1102
      %v1105 = vsel %vm239, %v1095, 0
      %v1108 = vsel %vm239, %v1097, 0
      %v1111 = vsel %vm239, %v1099, 0
      %v1114 = vsel %vm239, %v1101, 0
      %v1117 = vsel %vm239, %v1103, 0
      %v1120 = vsel %vm255, %v1091, 0
      %1122 = vmatpush.bf16.msra.mxu0 0
      %1123 = vmatpush.bf16.msra.mxu0 0
      %1124 = vmatpush.bf16.msra.mxu0 0
      %1125 = vmatpush.bf16.msra.mxu0 0
      %1126 = vmatpush.bf16.msra.mxu0 0
      %1127 = vmatpush.bf16.msra.mxu0 0
      %1128 = vmatpush.bf16.msra.mxu0 0
      %1129 = vmatpush.bf16.msra.mxu0 %v1120
      %1130 = vmatmul.bf16.gmra.mxu0 %v1105
      %v1131 = vpop.f32.mrf.mxu0
      %v1132 = vadd.f32 0.0, %v1131
      %v1133 = vpop.f32.mrf.mxu0
      %v1134 = vadd.f32 0.0, %v1133
      %1135 = vmatmul.bf16.gmra.mxu0 %v1108
      %v1136 = vpop.f32.mrf.mxu0
      %v1137 = vadd.f32 0.0, %v1136
      %v1138 = vpop.f32.mrf.mxu0
      %v1139 = vadd.f32 0.0, %v1138
      %1140 = vmatmul.bf16.gmra.mxu0 %v1111
      %v1141 = vpop.f32.mrf.mxu0
      %v1142 = vadd.f32 0.0, %v1141
      %v1143 = vpop.f32.mrf.mxu0
      %v1144 = vadd.f32 0.0, %v1143
      %1145 = vmatmul.bf16.gmra.mxu0 %v1114
      %v1146 = vpop.f32.mrf.mxu0
      %v1147 = vadd.f32 0.0, %v1146
      %v1148 = vpop.f32.mrf.mxu0
      %v1149 = vadd.f32 0.0, %v1148
      %1150 = vmatmul.bf16.gmra.mxu0 %v1117
      %v1151 = vpop.f32.mrf.mxu0
      %v1152 = vadd.f32 0.0, %v1151
      %v1153 = vpop.f32.mrf.mxu0
      %v1154 = vadd.f32 0.0, %v1153
      %1155 = vdwg.mxu0
      %v1156 = vadd.f32 %v1080, %v1132
      %v1157 = vadd.f32 %v1081, %v1134
      %v1158 = vadd.f32 %v1082, %v1137
      %v1159 = vadd.f32 %v1083, %v1139
      %v1160 = vadd.f32 %v1084, %v1142
      %v1161 = vadd.f32 %v1085, %v1144
      %v1162 = vadd.f32 %v1086, %v1147
      %v1163 = vadd.f32 %v1087, %v1149
      %v1164 = vadd.f32 %v1088, %v1152
      %v1165 = vadd.f32 %v1089, %v1154
      %1166 = vst [vmem:[#allocation2] sm:$0xff] %v1156
      %1167 = vst [vmem:[#allocation2 + $0x8] sm:$0xff] %v1157
      %1168 = vst [vmem:[#allocation2 + $0x10] sm:$0xff] %v1158
      %1169 = vst [vmem:[#allocation2 + $0x18] sm:$0xff] %v1159
      %1170 = vst [vmem:[#allocation2 + $0x20] sm:$0xff] %v1160
      %1171 = vst [vmem:[#allocation2 + $0x28] sm:$0xff] %v1161
      %1172 = vst [vmem:[#allocation2 + $0x30] sm:$0xff] %v1162
      %1173 = vst [vmem:[#allocation2 + $0x38] sm:$0xff] %v1163
      %1174 = vst [vmem:[#allocation2 + $0x40] sm:$0xff] %v1164
      %1175 = vst [vmem:[#allocation2 + $0x48] sm:$0xff] %v1165
      %v1176 = vld [vmem:[#allocation2] sm:$0xff]
      %v1177 = vld [vmem:[#allocation2 + $0x8] sm:$0xff]
      %v1178 = vld [vmem:[#allocation2 + $0x10] sm:$0xff]
      %v1179 = vld [vmem:[#allocation2 + $0x18] sm:$0xff]
      %v1180 = vld [vmem:[#allocation2 + $0x20] sm:$0xff]
      %v1181 = vld [vmem:[#allocation2 + $0x28] sm:$0xff]
      %v1182 = vld [vmem:[#allocation2 + $0x30] sm:$0xff]
      %v1183 = vld [vmem:[#allocation2 + $0x38] sm:$0xff]
      %v1184 = vld [vmem:[#allocation2 + $0x40] sm:$0xff]
      %v1185 = vld [vmem:[#allocation2 + $0x48] sm:$0xff]
      %v1186 = vld [vmem:[%s2] sm:$0x1]
      %v1188 = vperm.slane %v1186, 0
      %v1190 = vadd.f32 %v1176, %v1188
      %v1191 = vadd.f32 %v1177, %v1188
      %v1192 = vadd.f32 %v1178, %v1188
      %v1193 = vadd.f32 %v1179, %v1188
      %v1194 = vadd.f32 %v1180, %v1188
      %v1195 = vadd.f32 %v1181, %v1188
      %v1196 = vadd.f32 %v1182, %v1188
      %v1197 = vadd.f32 %v1183, %v1188
      %v1198 = vadd.f32 %v1184, %v1188
      %v1199 = vadd.f32 %v1185, %v1188
      %v1200 = vmax.f32 %v1190, 0.0
      %v1201 = vmax.f32 %v1191, 0.0
      %v1202 = vmax.f32 %v1192, 0.0
      %v1203 = vmax.f32 %v1193, 0.0
      %v1204 = vmax.f32 %v1194, 0.0
      %v1205 = vmax.f32 %v1195, 0.0
      %v1206 = vmax.f32 %v1196, 0.0
      %v1207 = vmax.f32 %v1197, 0.0
      %v1208 = vmax.f32 %v1198, 0.0
      %v1209 = vmax.f32 %v1199, 0.0
      %v1210 = vpack.c.bf16 %v1200, %v1200
      %v1211 = vpack.c.bf16 %v1201, %v1201
      %v1212 = vpack.c.bf16 %v1202, %v1202
      %v1213 = vpack.c.bf16 %v1203, %v1203
      %v1214 = vpack.c.bf16 %v1204, %v1204
      %v1215 = vpack.c.bf16 %v1205, %v1205
      %v1216 = vpack.c.bf16 %v1206, %v1206
      %v1217 = vpack.c.bf16 %v1207, %v1207
      %v1218 = vpack.c.bf16 %v1208, %v1208
      %v1219 = vpack.c.bf16 %v1209, %v1209
      %1220 = vst [vmem:[%s192] sm:$0xf] %v1210
      %1221 = vst [vmem:[%s192 + $0x4] sm:$0xf] %v1211
      %1222 = vst [vmem:[%s192 + $0x8] sm:$0xf] %v1212
      %1223 = vst [vmem:[%s192 + $0xc] sm:$0xf] %v1213
      %1224 = vst [vmem:[%s192 + $0x10] sm:$0xf] %v1214
      %1225 = vst [vmem:[%s192 + $0x14] sm:$0xf] %v1215
      %1226 = vst [vmem:[%s192 + $0x18] sm:$0xf] %v1216
      %1227 = vst [vmem:[%s192 + $0x1c] sm:$0xf] %v1217
      %1228 = vst [vmem:[%s192 + $0x20] sm:$0xf] %v1218
      %1229 = vst [vmem:[%s192 + $0x24] sm:$0xf] %v1219
      %s1230 = smul.u32 10, %s19
      %p1231 = scmp.lt.s32.totalorder %s18, 1
      %s1232 = scalar_select %p1231, %s18, 1
      %p1233 = scmp.lt.s32.totalorder %s1230, 9
      %s1234 = scalar_select %p1233, %s1230, 9
      %s1235 = smul.addr %s1232, 10
      %s1236 = sadd.s32 %s1234, %s1235
      %s1237 = smul.addr %s1236, 4
      %s1238 = scalar_lea.vmem %s3, %s1237
      // Predicated region
      $region33: #{_forward_impl.16} parent=31 // pred_check
        %p1239 = pneg %p114
      $region34: #{_forward_impl.16} parent=31 // pred_check_branch
        %1241 = sbr.rel (%p1239) target = $region36
      $region35: #{_forward_impl.16} parent=31 // pred_region
        %s1242 = smul.u32 10, %s19
      $region36: #{_forward_impl.16} parent=31 // pred_fallthru
        _
    $region32: #{_forward_impl.16} parent=5 // pred_fallthru
      _
    %p1243 = scmp.le.s32.totalorder 2, %s9
    // Predicated region
    $region37: #{_forward_impl.16} parent=5 // pred_check
      %p1244 = pneg %p1243
    $region38: #{_forward_impl.16} parent=5 // pred_check_branch
      %1246 = sbr.rel (%p1244) target = $region40
    $region39: #{_forward_impl.16} parent=5 // pred_region
      %s1247 = ssub.s32 %s9, 2
      // Predicated region
      $region41: #{_forward_impl.16} parent=39 // pred_check
        %p1248 = pneg %p120
      $region42: #{_forward_impl.16} parent=39 // pred_check_branch
        %1250 = sbr.rel (%p1248) target = $region44
      $region43: #{_forward_impl.16} parent=39 // pred_region
        %s1251 = smul.u32 10, %s21
        %p1252 = scmp.lt.s32.totalorder %s20, 1
        %s1253 = scalar_select %p1252, %s20, 1
        %p1254 = scmp.lt.s32.totalorder %s1251, 9
        %s1255 = scalar_select %p1254, %s1251, 9
        %s1256 = smul.addr %s1253, 10
        %s1257 = sadd.s32 %s1255, %s1256
        %s1258 = smul.addr %s1257, 4
        %s1259 = scalar_lea.vmem %s3, %s1258
      $region44: #{_forward_impl.16} parent=39 // pred_fallthru
        _
    $region40: #{_forward_impl.16} parent=5 // pred_fallthru
      _
  $region6: #{_forward_impl.16} parent=0 // loop_footer
    %s13 = sadd.s32 1, %s9
  $region7: #{_forward_impl.16} parent=0 // loop_footer_branch
    %8 = sbr.rel target = $region3
  $region8: #{_forward_impl.16} parent=0 // loop_exit
    _

// kernel: _forward_impl.21
$region0: #{_forward_impl.21}
  #allocation0 [shape = 'u32[]', space=smem, size = 0x4, offset = 0x4, fixed_abs, tag = 'smem constant byte address 0x4 - core index']
  #allocation1 [shape = 'u32[72,128]{1,0:T(1,128)}', space=vmem, size = 0x9000, scoped, tag = 'internal scratch']
  %s0 = inlined_call_operand.vmem [shape: bf16[32,8], index: 0, kind: input, shape index: {}]
  %s1 = inlined_call_operand.vmem [shape: bf16[8,128], index: 1, kind: input, shape index: {}]
  %s2 = inlined_call_operand.vmem [shape: f32[1,128], index: 2, kind: input, shape index: {}]
  %s3 = inlined_call_operand.vmem [shape: bf16[32,128], index: 3, kind: output, shape index: {}]
  %s4 = sld [smem:[#allocation0]]
  $region22: #{_forward_impl.21} parent=0
    _
  %s6 = ssub.s32 1, %s4
  %s7 = scalar_select 0, %s6, %s4
  // Predicated region
  $region2: #{_forward_impl.21} parent=0 // pred_check
    _
  $region3: #{_forward_impl.21} parent=0 // pred_check_branch
    %9 = sbr.rel (0) target = $region5
  $region4: #{_forward_impl.21} parent=0 // pred_region
    _
  $region5: #{_forward_impl.21} parent=0 // pred_fallthru
    _
  // Predicated region
  $region6: #{_forward_impl.21} parent=0 // pred_check
    _
  $region7: #{_forward_impl.21} parent=0 // pred_check_branch
    %11 = sbr.rel (0) target = $region9
  $region8: #{_forward_impl.21} parent=0 // pred_region
    _
  $region9: #{_forward_impl.21} parent=0 // pred_fallthru
    _
  // Predicated region
  $region10: #{_forward_impl.21} parent=0 // pred_check
    _
  $region11: #{_forward_impl.21} parent=0 // pred_check_branch
    %13 = sbr.rel (0) target = $region13
  $region12: #{_forward_impl.21} parent=0 // pred_region
    _
  $region13: #{_forward_impl.21} parent=0 // pred_fallthru
    _
  %v15 = vld [vmem:[%s0] sm:$0xf]
  %v16 = vld [vmem:[%s0 + $0x4] sm:$0xf]
  %v17 = vld [vmem:[%s0 + $0x8] sm:$0xf]
  %v18 = vld [vmem:[%s0 + $0xc] sm:$0xf]
  %v19 = vld [vmem:[%s1] sm:$0xf]
  %v20 = vld [vmem:[%s2] sm:$0x1]
  %v22 = vperm.slane %v20, 0
  %v28 = vunpack.c.l.b16 %v15
  %v29 = vunpack.c.l.b16 %v16
  %v30 = vunpack.c.l.b16 %v17
  %v31 = vunpack.c.l.b16 %v18
  %v32 = vpack.c.b16 %v29, %v28
  %v33 = vpack.c.b16 %v31, %v30
  %vm34 = vcmask 64512
  %v36 = vsel %vm34, %v32, 0
  %v39 = vsel %vm34, %v33, 0
  %vm41 = vcmask 1043456
  %v43 = vsel %vm41, %v19, 0
  %45 = vmatpush.bf16.msra.mxu0 0
  %46 = vmatpush.bf16.msra.mxu0 0
  %47 = vmatpush.bf16.msra.mxu0 0
  %48 = vmatpush.bf16.msra.mxu0 0
  %49 = vmatpush.bf16.msra.mxu0 0
  %50 = vmatpush.bf16.msra.mxu0 0
  %51 = vmatpush.bf16.msra.mxu0 0
  %52 = vmatpush.bf16.msra.mxu0 %v43
  %53 = vmatmul.bf16.gmra.mxu0 %v36
  %v54 = vpop.f32.mrf.mxu0
  %v55 = vadd.f32 %v22, %v54
  %v56 = vpop.f32.mrf.mxu0
  %v57 = vadd.f32 %v22, %v56
  %58 = vmatmul.bf16.gmra.mxu0 %v39
  %v59 = vpop.f32.mrf.mxu0
  %v60 = vadd.f32 %v22, %v59
  %v61 = vpop.f32.mrf.mxu0
  %v62 = vadd.f32 %v22, %v61
  %63 = vdwg.mxu0
  %v64 = vpack.c.bf16 %v55, %v55
  %v65 = vpack.c.bf16 %v57, %v57
  %v66 = vpack.c.bf16 %v60, %v60
  %v67 = vpack.c.bf16 %v62, %v62
  %68 = vst [vmem:[%s3] sm:$0xf] %v64
  %69 = vst [vmem:[%s3 + $0x4] sm:$0xf] %v65
  %70 = vst [vmem:[%s3 + $0x8] sm:$0xf] %v66
  %71 = vst [vmem:[%s3 + $0xc] sm:$0xf] %v67
  // Predicated region
  $region14: #{_forward_impl.21} parent=0 // pred_check
    _
  $region15: #{_forward_impl.21} parent=0 // pred_check_branch
    %73 = sbr.rel (0) target = $region17
  $region16: #{_forward_impl.21} parent=0 // pred_region
    _
  $region17: #{_forward_impl.21} parent=0 // pred_fallthru
    _
  // Predicated region
  $region18: #{_forward_impl.21} parent=0 // pred_check
    _
  $region19: #{_forward_impl.21} parent=0 // pred_check_branch
    %75 = sbr.rel (0) target = $region21
  $region20: #{_forward_impl.21} parent=0 // pred_region
    _
  $region21: #{_forward_impl.21} parent=0 // pred_fallthru
    _

// kernel: _forward_impl.20
$region0: #{_forward_impl.20}
  #allocation0 [shape = 'u32[]', space=smem, size = 0x4, offset = 0x4, fixed_abs, tag = 'smem constant byte address 0x4 - core index']
  #allocation1 [shape = 'u32[72,128]{1,0:T(1,128)}', space=vmem, size = 0x9000, scoped, tag = 'internal scratch']
  %s0 = inlined_call_operand.vmem [shape: bf16[32,72], index: 0, kind: input, shape index: {}]
  %s1 = inlined_call_operand.vmem [shape: bf16[72,128], index: 1, kind: input, shape index: {}]
  %s2 = inlined_call_operand.vmem [shape: f32[1,128], index: 2, kind: input, shape index: {}]
  %s3 = inlined_call_operand.vmem [shape: bf16[32,128], index: 3, kind: output, shape index: {}]
  %s4 = sld [smem:[#allocation0]]
  $region22: #{_forward_impl.20} parent=0
    _
  %s6 = ssub.s32 1, %s4
  %s7 = scalar_select 0, %s6, %s4
  // Predicated region
  $region2: #{_forward_impl.20} parent=0 // pred_check
    _
  $region3: #{_forward_impl.20} parent=0 // pred_check_branch
    %9 = sbr.rel (0) target = $region5
  $region4: #{_forward_impl.20} parent=0 // pred_region
    _
  $region5: #{_forward_impl.20} parent=0 // pred_fallthru
    _
  // Predicated region
  $region6: #{_forward_impl.20} parent=0 // pred_check
    _
  $region7: #{_forward_impl.20} parent=0 // pred_check_branch
    %11 = sbr.rel (0) target = $region9
  $region8: #{_forward_impl.20} parent=0 // pred_region
    _
  $region9: #{_forward_impl.20} parent=0 // pred_fallthru
    _
  // Predicated region
  $region10: #{_forward_impl.20} parent=0 // pred_check
    _
  $region11: #{_forward_impl.20} parent=0 // pred_check_branch
    %13 = sbr.rel (0) target = $region13
  $region12: #{_forward_impl.20} parent=0 // pred_region
    _
  $region13: #{_forward_impl.20} parent=0 // pred_fallthru
    _
  %v15 = vld [vmem:[%s0] sm:$0xf]
  %v16 = vld [vmem:[%s0 + $0x4] sm:$0xf]
  %v17 = vld [vmem:[%s0 + $0x8] sm:$0xf]
  %v18 = vld [vmem:[%s0 + $0xc] sm:$0xf]
  %v19 = vld [vmem:[%s1] sm:$0xf]
  %v20 = vld [vmem:[%s1 + $0x4] sm:$0xf]
  %v21 = vld [vmem:[%s1 + $0x8] sm:$0xf]
  %v22 = vld [vmem:[%s1 + $0xc] sm:$0xf]
  %v23 = vld [vmem:[%s1 + $0x10] sm:$0xf]
  %v24 = vld [vmem:[%s1 + $0x14] sm:$0xf]
  %v25 = vld [vmem:[%s1 + $0x18] sm:$0xf]
  %v26 = vld [vmem:[%s1 + $0x1c] sm:$0xf]
  %v27 = vld [vmem:[%s1 + $0x20] sm:$0xf]
  %v28 = vld [vmem:[%s2] sm:$0x1]
  %v30 = vperm.slane %v28, 0
  %v36 = vunpack.c.l.b16 %v15
  %v37 = vunpack.c.l.b16 %v16
  %v38 = vunpack.c.l.b16 %v17
  %v39 = vunpack.c.l.b16 %v18
  %v40 = vpack.c.b16 %v37, %v36
  %v41 = vpack.c.b16 %v39, %v38
  %v51 = vunpack.c.l.b16 %v19
  %v52 = vunpack.c.l.b16 %v20
  %v53 = vunpack.c.l.b16 %v21
  %v54 = vunpack.c.l.b16 %v22
  %v55 = vunpack.c.l.b16 %v23
  %v56 = vunpack.c.l.b16 %v24
  %v57 = vunpack.c.l.b16 %v25
  %v58 = vunpack.c.l.b16 %v26
  %v59 = vunpack.c.l.b16 %v27
  %v60 = vpack.c.b16 %v52, %v51
  %v61 = vpack.c.b16 %v54, %v53
  %v62 = vpack.c.b16 %v56, %v55
  %v63 = vpack.c.b16 %v58, %v57
  %v64 = vpack.c.b16 %v59, %v59
  %vm69 = vcmask 588800
  %v71 = vsel %vm69, %v40, 0
  %v74 = vsel %vm69, %v41, 0
  %vm76 = vcmask 1043456
  %v78 = vsel %vm76, %v64, 0
  %80 = vmatpush.bf16.msra.mxu0 0
  %81 = vmatpush.bf16.msra.mxu0 0
  %82 = vmatpush.bf16.msra.mxu0 0
  %83 = vmatpush.bf16.msra.mxu0 %v78
  %84 = vmatpush.bf16.msra.mxu0 %v63
  %85 = vmatpush.bf16.msra.mxu0 %v62
  %86 = vmatpush.bf16.msra.mxu0 %v61
  %87 = vmatpush.bf16.msra.mxu0 %v60
  %88 = vmatmul.bf16.gmra.mxu0 %v71
  %v89 = vpop.f32.mrf.mxu0
  %v90 = vadd.f32 %v30, %v89
  %v91 = vpop.f32.mrf.mxu0
  %v92 = vadd.f32 %v30, %v91
  %93 = vmatmul.bf16.gmra.mxu0 %v74
  %v94 = vpop.f32.mrf.mxu0
  %v95 = vadd.f32 %v30, %v94
  %v96 = vpop.f32.mrf.mxu0
  %v97 = vadd.f32 %v30, %v96
  %98 = vdwg.mxu0
  %v99 = vmax.f32 %v90, 0.0
  %v100 = vmax.f32 %v92, 0.0
  %v101 = vmax.f32 %v95, 0.0
  %v102 = vmax.f32 %v97, 0.0
  %v103 = vpack.c.bf16 %v99, %v99
  %v104 = vpack.c.bf16 %v100, %v100
  %v105 = vpack.c.bf16 %v101, %v101
  %v106 = vpack.c.bf16 %v102, %v102
  %107 = vst [vmem:[%s3] sm:$0xf] %v103
  %108 = vst [vmem:[%s3 + $0x4] sm:$0xf] %v104
  %109 = vst [vmem:[%s3 + $0x8] sm:$0xf] %v105
  %110 = vst [vmem:[%s3 + $0xc] sm:$0xf] %v106
  // Predicated region
  $region14: #{_forward_impl.20} parent=0 // pred_check
    _
  $region15: #{_forward_impl.20} parent=0 // pred_check_branch
    %112 = sbr.rel (0) target = $region17
  $region16: #{_forward_impl.20} parent=0 // pred_region
    _
  $region17: #{_forward_impl.20} parent=0 // pred_fallthru
    _
  // Predicated region
  $region18: #{_forward_impl.20} parent=0 // pred_check
    _
  $region19: #{_forward_impl.20} parent=0 // pred_check_branch
    %114 = sbr.rel (0) target = $region21
  $region20: #{_forward_impl.20} parent=0 // pred_region
    _
  $region21: #{_forward_impl.20} parent=0 // pred_fallthru
    _

// kernel: _forward_impl.17
$region0: #{_forward_impl.17}
  #allocation0 [shape = 'u32[]', space=smem, size = 0x4, offset = 0x4, fixed_abs, tag = 'smem constant byte address 0x4 - core index']
  #allocation1 [shape = 'u32[72,128]{1,0:T(1,128)}', space=vmem, size = 0x9000, scoped, tag = 'internal scratch']
  #allocation2 [shape = 'f32[80,128]{1,0:T(8,128)}', space=vmem, size = 0xa000, scoped, tag = 'scratch operand']
  %s0 = inlined_call_operand.vmem [shape: bf16[2,110,8], index: 0, kind: input, shape index: {}]
  %s1 = inlined_call_operand.vmem [shape: bf16[9,8,128], index: 1, kind: input, shape index: {}]
  %s2 = inlined_call_operand.vmem [shape: f32[1,128], index: 2, kind: input, shape index: {}]
  %s3 = inlined_call_operand.vmem [shape: bf16[2,80,128], index: 3, kind: input, shape index: {}]
  %s4 = inlined_call_operand.vmem [shape: bf16[2,80,128], index: 4, kind: output, shape index: {}]
  %s5 = sld [smem:[#allocation0]]
  $region49: #{_forward_impl.17} parent=0
    _
  %s7 = ssub.s32 1, %s5
  %s8 = scalar_select 0, %s7, %s5
  loop: start=0, step=1, limit=4
  $region2: #{_forward_impl.17} parent=0 // loop_pre_header
    _
  $region3: #{_forward_impl.17} parent=0 // loop_header
    %s10 = sphi 0, %s14
    %p11 = scmp.ge.s32.totalorder %s10, 4
    %s17 = sphi 0, %s29
    %s18 = sphi 0, %s25
    %s19 = sphi 0, %s17
    %s20 = sphi 0, %s18
    %s21 = sphi 0, %s19
    %s22 = sphi 0, %s20
    %s32 = sphi 0, %s34
    %s35 = sphi 0, %s32
    %s36 = sphi 0, %s35
    %s52 = sphi 0, %s36
    %s56 = sphi 0, %s56
    %s58 = sphi 0, %s56
    %s59 = sphi 0, %s58
    %s73 = sphi 0, %s59
    %s77 = sphi 0, %s77
    %s79 = sphi 0, %s77
    %s80 = sphi 0, %s79
    %s94 = sphi 0, %s80
    %s102 = sphi 0, %s104
    %s105 = sphi 0, %s102
    %s106 = sphi 0, %s105
    %s122 = sphi 0, %s106
    %s130 = sphi 0, %s132
    %s133 = sphi 0, %s130
    %s134 = sphi 0, %s133
    %s150 = sphi 0, %s134
  $region4: #{_forward_impl.17} parent=0 // loop_header_branch
    %13 = sbr.rel (%p11) target = $region8
  $region5: #{_forward_impl.17} parent=0 // loop_body
    %s15 = ssub.s32 %s10, 1
    %s16 = ssub.s32 %s10, 2
    %s23 = sadd.s32 1, %s18
    %p24 = scmp.ge.s32.totalorder %s23, 1
    %s25 = scalar_select %p24, 0, %s23
    %s26 = sadd.s32 1, %s17
    %s27 = scalar_select %p24, %s26, %s17
    %p28 = scmp.ge.s32.totalorder %s27, 2
    %s29 = scalar_select %p28, 0, %s27
    %s30 = ssub.s32 %s17, %s29
    %p31 = scmp.eq.s32.totalorder %s30, 0
    %s33 = sadd.s32 %s32, 1
    %s34 = scalar_select %p31, %s32, %s33
    %p37 = pneg %p31
    %p38 = scmp.eq.s32.totalorder %s10, 1
    %p39 = por %p37, %p38
    %p40 = scmp.ne.s32.totalorder %s32, %s35
    %p41 = scmp.eq.s32.totalorder %s10, 0
    %p42 = por %p40, %p41
    %p43 = scmp.ne.s32.totalorder %s32, %s35
    %p44 = scmp.eq.s32.totalorder %s15, 1
    %p45 = por %p43, %p44
    %p46 = scmp.ne.s32.totalorder %s35, %s36
    %p47 = scmp.eq.s32.totalorder %s15, 0
    %p48 = por %p46, %p47
    %p49 = scmp.ne.s32.totalorder %s35, %s36
    %p50 = scmp.eq.s32.totalorder %s16, 1
    %p51 = por %p49, %p50
    %p53 = scmp.ne.s32.totalorder %s36, %s52
    %p54 = scmp.eq.s32.totalorder %s16, 0
    %p55 = por %p53, %p54
    %s57 = sadd.s32 %s56, 1
    %p60 = scmp.eq.s32.totalorder %s10, 1
    %p61 = scmp.ne.s32.totalorder %s56, %s58
    %p62 = scmp.eq.s32.totalorder %s10, 0
    %p63 = por %p61, %p62
    %p64 = scmp.ne.s32.totalorder %s56, %s58
    %p65 = scmp.eq.s32.totalorder %s15, 1
    %p66 = por %p64, %p65
    %p67 = scmp.ne.s32.totalorder %s58, %s59
    %p68 = scmp.eq.s32.totalorder %s15, 0
    %p69 = por %p67, %p68
    %p70 = scmp.ne.s32.totalorder %s58, %s59
    %p71 = scmp.eq.s32.totalorder %s16, 1
    %p72 = por %p70, %p71
    %p74 = scmp.ne.s32.totalorder %s59, %s73
    %p75 = scmp.eq.s32.totalorder %s16, 0
    %p76 = por %p74, %p75
    %s78 = sadd.s32 %s77, 1
    %p81 = scmp.eq.s32.totalorder %s10, 1
    %p82 = scmp.ne.s32.totalorder %s77, %s79
    %p83 = scmp.eq.s32.totalorder %s10, 0
    %p84 = por %p82, %p83
    %p85 = scmp.ne.s32.totalorder %s77, %s79
    %p86 = scmp.eq.s32.totalorder %s15, 1
    %p87 = por %p85, %p86
    %p88 = scmp.ne.s32.totalorder %s79, %s80
    %p89 = scmp.eq.s32.totalorder %s15, 0
    %p90 = por %p88, %p89
    %p91 = scmp.ne.s32.totalorder %s79, %s80
    %p92 = scmp.eq.s32.totalorder %s16, 1
    %p93 = por %p91, %p92
    %p95 = scmp.ne.s32.totalorder %s80, %s94
    %p96 = scmp.eq.s32.totalorder %s16, 0
    %p97 = por %p95, %p96
    %s98 = ssub.s32 %s17, %s29
    %s99 = ssub.s32 %s18, %s25
    %s100 = sor.u32 %s98, %s99
    %p101 = scmp.eq.s32.totalorder %s100, 0
    %s103 = sadd.s32 %s102, 1
    %s104 = scalar_select %p101, %s102, %s103
    %p107 = pneg %p101
    %p108 = scmp.eq.s32.totalorder %s10, 1
    %p109 = por %p107, %p108
    %p110 = scmp.ne.s32.totalorder %s102, %s105
    %p111 = scmp.eq.s32.totalorder %s10, 0
    %p112 = por %p110, %p111
    %p113 = scmp.ne.s32.totalorder %s102, %s105
    %p114 = scmp.eq.s32.totalorder %s15, 1
    %p115 = por %p113, %p114
    %p116 = scmp.ne.s32.totalorder %s105, %s106
    %p117 = scmp.eq.s32.totalorder %s15, 0
    %p118 = por %p116, %p117
    %p119 = scmp.ne.s32.totalorder %s105, %s106
    %p120 = scmp.eq.s32.totalorder %s16, 1
    %p121 = por %p119, %p120
    %p123 = scmp.ne.s32.totalorder %s106, %s122
    %p124 = scmp.eq.s32.totalorder %s16, 0
    %p125 = por %p123, %p124
    %s126 = ssub.s32 %s17, %s29
    %s127 = ssub.s32 %s18, %s25
    %s128 = sor.u32 %s126, %s127
    %p129 = scmp.eq.s32.totalorder %s128, 0
    %s131 = sadd.s32 %s130, 1
    %s132 = scalar_select %p129, %s130, %s131
    %p135 = pneg %p129
    %p136 = scmp.eq.s32.totalorder %s10, 1
    %p137 = por %p135, %p136
    %p138 = scmp.ne.s32.totalorder %s130, %s133
    %p139 = scmp.eq.s32.totalorder %s10, 0
    %p140 = por %p138, %p139
    %p141 = scmp.ne.s32.totalorder %s130, %s133
    %p142 = scmp.eq.s32.totalorder %s15, 1
    %p143 = por %p141, %p142
    %p144 = scmp.ne.s32.totalorder %s133, %s134
    %p145 = scmp.eq.s32.totalorder %s15, 0
    %p146 = por %p144, %p145
    %p147 = scmp.ne.s32.totalorder %s133, %s134
    %p148 = scmp.eq.s32.totalorder %s16, 1
    %p149 = por %p147, %p148
    %p151 = scmp.ne.s32.totalorder %s134, %s150
    %p152 = scmp.eq.s32.totalorder %s16, 0
    %p153 = por %p151, %p152
    %p154 = scmp.le.s32.totalorder 1, %s10
    %p155 = scmp.lt.s32.totalorder %s10, 3
    %p156 = pnand %p154, %p155
    %p157 = pneg %p156
    // Predicated region
    $region9: #{_forward_impl.17} parent=5 // pred_check
      _
    $region10: #{_forward_impl.17} parent=5 // pred_check_branch
      %159 = sbr.rel (%p156) target = $region12
    $region11: #{_forward_impl.17} parent=5 // pred_region
      %s160 = ssub.s32 %s10, 1
      // Predicated region
      $region13: #{_forward_impl.17} parent=11 // pred_check
        %p161 = pneg %p69
      $region14: #{_forward_impl.17} parent=11 // pred_check_branch
        %163 = sbr.rel (%p161) target = $region16
      $region15: #{_forward_impl.17} parent=11 // pred_region
        _
      $region16: #{_forward_impl.17} parent=11 // pred_fallthru
        _
      // Predicated region
      $region17: #{_forward_impl.17} parent=11 // pred_check
        %p164 = pneg %p90
      $region18: #{_forward_impl.17} parent=11 // pred_check_branch
        %166 = sbr.rel (%p164) target = $region20
      $region19: #{_forward_impl.17} parent=11 // pred_region
        _
      $region20: #{_forward_impl.17} parent=11 // pred_fallthru
        _
    $region12: #{_forward_impl.17} parent=5 // pred_fallthru
      _
    %p167 = scmp.lt.s32.totalorder %s10, 2
    // Predicated region
    $region21: #{_forward_impl.17} parent=5 // pred_check
      %p168 = pneg %p167
    $region22: #{_forward_impl.17} parent=5 // pred_check_branch
      %170 = sbr.rel (%p168) target = $region24
    $region23: #{_forward_impl.17} parent=5 // pred_region
      // Predicated region
      $region25: #{_forward_impl.17} parent=23 // pred_check
        %p171 = pneg %p42
      $region26: #{_forward_impl.17} parent=23 // pred_check_branch
        %173 = sbr.rel (%p171) target = $region28
      $region27: #{_forward_impl.17} parent=23 // pred_region
        %p174 = scmp.lt.s32.totalorder %s17, 1
        %s175 = scalar_select %p174, %s17, 1
        %s176 = smul.addr %s175, 14
        %s177 = smul.addr %s176, 4
        %s178 = scalar_lea.vmem %s0, %s177
      $region28: #{_forward_impl.17} parent=23 // pred_fallthru
        _
      // Predicated region
      $region29: #{_forward_impl.17} parent=23 // pred_check
        %p179 = pneg %p112
      $region30: #{_forward_impl.17} parent=23 // pred_check_branch
        %181 = sbr.rel (%p179) target = $region32
      $region31: #{_forward_impl.17} parent=23 // pred_region
        %s182 = smul.u32 10, %s18
        %p183 = scmp.lt.s32.totalorder %s17, 1
        %s184 = scalar_select %p183, %s17, 1
        %p185 = scmp.lt.s32.totalorder %s182, 9
        %s186 = scalar_select %p185, %s182, 9
        %s187 = smul.addr %s184, 10
        %s188 = sadd.s32 %s186, %s187
        %s189 = smul.addr %s188, 4
        %s190 = scalar_lea.vmem %s3, %s189
        %s191 = smul.u32 10, %s18
      $region32: #{_forward_impl.17} parent=23 // pred_fallthru
        _
    $region24: #{_forward_impl.17} parent=5 // pred_fallthru
      _
    %p192 = scmp.le.s32.totalorder 1, %s10
    %p193 = scmp.lt.s32.totalorder %s10, 3
    %p194 = pnand %p192, %p193
    %p195 = pneg %p194
    // Predicated region
    $region33: #{_forward_impl.17} parent=5 // pred_check
      _
    $region34: #{_forward_impl.17} parent=5 // pred_check_branch
      %197 = sbr.rel (%p194) target = $region36
    $region35: #{_forward_impl.17} parent=5 // pred_region
      %s198 = ssub.s32 %s10, 1
      %p199 = scmp.lt.s32.totalorder %s19, 1
      %s200 = scalar_select %p199, %s19, 1
      %s201 = smul.addr %s200, 14
      %s202 = smul.addr %s201, 4
      %s203 = scalar_lea.vmem %s0, %s202
      %p204 = pneg %p48
      %p205 = pneg %p45
      %p206 = pneg %p69
      %p207 = pneg %p66
      %p208 = pneg %p90
      %p209 = pneg %p87
      %s210 = smul.u32 10, %s20
      %p211 = scmp.lt.s32.totalorder %s19, 1
      %s212 = scalar_select %p211, %s19, 1
      %p213 = scmp.lt.s32.totalorder %s210, 9
      %s214 = scalar_select %p213, %s210, 9
      %s215 = smul.addr %s212, 10
      %s216 = sadd.s32 %s214, %s215
      %s217 = smul.addr %s216, 4
      %s218 = scalar_lea.vmem %s3, %s217
      %p219 = pneg %p118
      %p220 = pneg %p115
      %p221 = pneg %p146
      %p222 = pneg %p143
      %s223 = smul.u32 10, %s20
      %p224 = scmp.lt.s32.totalorder %s19, 1
      %s225 = scalar_select %p224, %s19, 1
      %p226 = scmp.lt.s32.totalorder %s223, 9
      %s227 = scalar_select %p226, %s223, 9
      %s228 = smul.addr %s225, 10
      %s229 = sadd.s32 %s227, %s228
      %s230 = smul.addr %s229, 4
      %s231 = scalar_lea.vmem %s4, %s230
      %p232 = scmp.lt.s32.totalorder %s19, 1
      %s233 = scalar_select %p232, %s19, 1
      %s234 = smul.addr %s233, 14
      %s235 = smul.addr %s234, 4
      %s236 = scalar_lea.vmem %s0, %s235
      %s237 = smul.u32 10, %s20
      %p238 = scmp.lt.s32.totalorder %s19, 1
      %s239 = scalar_select %p238, %s19, 1
      %p240 = scmp.lt.s32.totalorder %s237, 9
      %s241 = scalar_select %p240, %s237, 9
      %s242 = smul.addr %s239, 10
      %s243 = sadd.s32 %s241, %s242
      %s244 = smul.addr %s243, 4
      %s245 = scalar_lea.vmem %s3, %s244
      %s246 = smul.u32 10, %s20
      %s247 = smul.u32 10, %s20
      %p248 = scmp.lt.s32.totalorder %s19, 1
      %s249 = scalar_select %p248, %s19, 1
      %p250 = scmp.lt.s32.totalorder %s247, 9
      %s251 = scalar_select %p250, %s247, 9
      %s252 = smul.addr %s249, 10
      %s253 = sadd.s32 %s251, %s252
      %s254 = smul.addr %s253, 4
      %s255 = scalar_lea.vmem %s4, %s254
      %s256 = smul.u32 10, %s20
      %s258 = smul.u32 %s20, 80
      %s259 = sshra.s32 %s258, 3
      %s260 = sand.u32 %s258, 7
      %s261 = smul.addr %s259, 4
      %s262 = scalar_lea.vmem %s236, %s261
      %v263 = vld [vmem:[%s262] sm:$0xf]
      %v264 = vld [vmem:[%s262 + $0x4] sm:$0xf]
      %v265 = vld [vmem:[%s262 + $0x8] sm:$0xf]
      %v266 = vld [vmem:[%s262 + $0xc] sm:$0xf]
      %v267 = vld [vmem:[%s262 + $0x10] sm:$0xf]
      %v268 = vld [vmem:[%s262 + $0x14] sm:$0xf]
      %v269 = vld [vmem:[%s262 + $0x18] sm:$0xf]
      %v270 = vld [vmem:[%s262 + $0x1c] sm:$0xf]
      %v271 = vld [vmem:[%s262 + $0x20] sm:$0xf]
      %v272 = vld [vmem:[%s262 + $0x24] sm:$0xf]
      %v273 = vld [vmem:[%s262 + $0x28] sm:$0xf]
      %v274 = vld [vmem:[%s262 + $0x2c] sm:$0xf]
      %v275 = vld [vmem:[%s262 + $0x30] sm:$0xf]
      %v276 = vld [vmem:[%s1] sm:$0xf]
      %v287 = vunpack.c.l.b16 %v263
      %v288 = vunpack.c.l.b16 %v264
      %v289 = vunpack.c.l.b16 %v265
      %v290 = vunpack.c.l.b16 %v266
      %v291 = vunpack.c.l.b16 %v267
      %v292 = vunpack.c.l.b16 %v268
      %v293 = vunpack.c.l.b16 %v269
      %v294 = vunpack.c.l.b16 %v270
      %v295 = vunpack.c.l.b16 %v271
      %v296 = vunpack.c.l.b16 %v272
      %v297 = vpack.c.b16 %v288, %v287
      %v298 = vpack.c.b16 %v290, %v289
      %v299 = vpack.c.b16 %v292, %v291
      %v300 = vpack.c.b16 %v294, %v293
      %v301 = vpack.c.b16 %v296, %v295
      %vm302 = vcmask 64512
      %v304 = vsel %vm302, %v297, 0
      %v307 = vsel %vm302, %v298, 0
      %v310 = vsel %vm302, %v299, 0
      %v313 = vsel %vm302, %v300, 0
      %v316 = vsel %vm302, %v301, 0
      %vm318 = vcmask 1043456
      %v320 = vsel %vm318, %v276, 0
      %322 = vmatpush.bf16.msra.mxu0 0
      %323 = vmatpush.bf16.msra.mxu0 0
      %324 = vmatpush.bf16.msra.mxu0 0
      %325 = vmatpush.bf16.msra.mxu0 0
      %326 = vmatpush.bf16.msra.mxu0 0
      %327 = vmatpush.bf16.msra.mxu0 0
      %328 = vmatpush.bf16.msra.mxu0 0
      %329 = vmatpush.bf16.msra.mxu0 %v320
      %330 = vmatmul.bf16.gmra.mxu0 %v304
      %v331 = vpop.f32.mrf.mxu0
      %v332 = vadd.f32 0.0, %v331
      %v333 = vpop.f32.mrf.mxu0
      %v334 = vadd.f32 0.0, %v333
      %335 = vmatmul.bf16.gmra.mxu0 %v307
      %v336 = vpop.f32.mrf.mxu0
      %v337 = vadd.f32 0.0, %v336
      %v338 = vpop.f32.mrf.mxu0
      %v339 = vadd.f32 0.0, %v338
      %340 = vmatmul.bf16.gmra.mxu0 %v310
      %v341 = vpop.f32.mrf.mxu0
      %v342 = vadd.f32 0.0, %v341
      %v343 = vpop.f32.mrf.mxu0
      %v344 = vadd.f32 0.0, %v343
      %345 = vmatmul.bf16.gmra.mxu0 %v313
      %v346 = vpop.f32.mrf.mxu0
      %v347 = vadd.f32 0.0, %v346
      %v348 = vpop.f32.mrf.mxu0
      %v349 = vadd.f32 0.0, %v348
      %350 = vmatmul.bf16.gmra.mxu0 %v316
      %v351 = vpop.f32.mrf.mxu0
      %v352 = vadd.f32 0.0, %v351
      %v353 = vpop.f32.mrf.mxu0
      %v354 = vadd.f32 0.0, %v353
      %355 = vdwg.mxu0
      %356 = vst [vmem:[#allocation2] sm:$0xff] %v332
      %357 = vst [vmem:[#allocation2 + $0x8] sm:$0xff] %v334
      %358 = vst [vmem:[#allocation2 + $0x10] sm:$0xff] %v337
      %359 = vst [vmem:[#allocation2 + $0x18] sm:$0xff] %v339
      %360 = vst [vmem:[#allocation2 + $0x20] sm:$0xff] %v342
      %361 = vst [vmem:[#allocation2 + $0x28] sm:$0xff] %v344
      %362 = vst [vmem:[#allocation2 + $0x30] sm:$0xff] %v347
      %363 = vst [vmem:[#allocation2 + $0x38] sm:$0xff] %v349
      %364 = vst [vmem:[#allocation2 + $0x40] sm:$0xff] %v352
      %365 = vst [vmem:[#allocation2 + $0x48] sm:$0xff] %v354
      %v366 = vld [vmem:[#allocation2] sm:$0xff]
      %v367 = vld [vmem:[#allocation2 + $0x8] sm:$0xff]
      %v368 = vld [vmem:[#allocation2 + $0x10] sm:$0xff]
      %v369 = vld [vmem:[#allocation2 + $0x18] sm:$0xff]
      %v370 = vld [vmem:[#allocation2 + $0x20] sm:$0xff]
      %v371 = vld [vmem:[#allocation2 + $0x28] sm:$0xff]
      %v372 = vld [vmem:[#allocation2 + $0x30] sm:$0xff]
      %v373 = vld [vmem:[#allocation2 + $0x38] sm:$0xff]
      %v374 = vld [vmem:[#allocation2 + $0x40] sm:$0xff]
      %v375 = vld [vmem:[#allocation2 + $0x48] sm:$0xff]
      %s376 = scalar_lea.vmem %s1, 4
      %v377 = vld [vmem:[%s376] sm:$0xf]
      %v379 = vunpack.c.l.b16 %v273
      %v380 = vpack.c.b16 %v379, %v379
      %vm381 = vsmask.f32 7424
      %v382 = vshrl.u32 %v297, 16
      %v384 = vshll.u32 %v297, 16
      %v386 = vrot.slane %v384, 1
      %v387 = vor.u32 %v382, %v386
      %v388 = vshll.u32 %v298, 16
      %v390 = vrot.slane %v388, 1
      %v391 = vsel %vm381, %v387, %v390
      %v392 = vshrl.u32 %v298, 16
      %v394 = vor.u32 %v392, %v390
      %v395 = vshll.u32 %v299, 16
      %v397 = vrot.slane %v395, 1
      %v398 = vsel %vm381, %v394, %v397
      %v399 = vshrl.u32 %v299, 16
      %v401 = vor.u32 %v399, %v397
      %v402 = vshll.u32 %v300, 16
      %v404 = vrot.slane %v402, 1
      %v405 = vsel %vm381, %v401, %v404
      %v406 = vshrl.u32 %v300, 16
      %v408 = vor.u32 %v406, %v404
      %v409 = vshll.u32 %v301, 16
      %v411 = vrot.slane %v409, 1
      %v412 = vsel %vm381, %v408, %v411
      %v413 = vshrl.u32 %v301, 16
      %v415 = vor.u32 %v413, %v411
      %v417 = vshll.u32 %v380, 16
      %v419 = vrot.slane %v417, 1
      %v420 = vsel %vm381, %v415, %v419
      %v422 = vsel %vm302, %v391, 0
      %v425 = vsel %vm302, %v398, 0
      %v428 = vsel %vm302, %v405, 0
      %v431 = vsel %vm302, %v412, 0
      %v434 = vsel %vm302, %v420, 0
      %v437 = vsel %vm318, %v377, 0
      %439 = vmatpush.bf16.msra.mxu0 0
      %440 = vmatpush.bf16.msra.mxu0 0
      %441 = vmatpush.bf16.msra.mxu0 0
      %442 = vmatpush.bf16.msra.mxu0 0
      %443 = vmatpush.bf16.msra.mxu0 0
      %444 = vmatpush.bf16.msra.mxu0 0
      %445 = vmatpush.bf16.msra.mxu0 0
      %446 = vmatpush.bf16.msra.mxu0 %v437
      %447 = vmatmul.bf16.gmra.mxu0 %v422
      %v448 = vpop.f32.mrf.mxu0
      %v449 = vadd.f32 0.0, %v448
      %v450 = vpop.f32.mrf.mxu0
      %v451 = vadd.f32 0.0, %v450
      %452 = vmatmul.bf16.gmra.mxu0 %v425
      %v453 = vpop.f32.mrf.mxu0
      %v454 = vadd.f32 0.0, %v453
      %v455 = vpop.f32.mrf.mxu0
      %v456 = vadd.f32 0.0, %v455
      %457 = vmatmul.bf16.gmra.mxu0 %v428
      %v458 = vpop.f32.mrf.mxu0
      %v459 = vadd.f32 0.0, %v458
      %v460 = vpop.f32.mrf.mxu0
      %v461 = vadd.f32 0.0, %v460
      %462 = vmatmul.bf16.gmra.mxu0 %v431
      %v463 = vpop.f32.mrf.mxu0
      %v464 = vadd.f32 0.0, %v463
      %v465 = vpop.f32.mrf.mxu0
      %v466 = vadd.f32 0.0, %v465
      %467 = vmatmul.bf16.gmra.mxu0 %v434
      %v468 = vpop.f32.mrf.mxu0
      %v469 = vadd.f32 0.0, %v468
      %v470 = vpop.f32.mrf.mxu0
      %v471 = vadd.f32 0.0, %v470
      %472 = vdwg.mxu0
      %v473 = vadd.f32 %v366, %v449
      %v474 = vadd.f32 %v367, %v451
      %v475 = vadd.f32 %v368, %v454
      %v476 = vadd.f32 %v369, %v456
      %v477 = vadd.f32 %v370, %v459
      %v478 = vadd.f32 %v371, %v461
      %v479 = vadd.f32 %v372, %v464
      %v480 = vadd.f32 %v373, %v466
      %v481 = vadd.f32 %v374, %v469
      %v482 = vadd.f32 %v375, %v471
      %483 = vst [vmem:[#allocation2] sm:$0xff] %v473
      %484 = vst [vmem:[#allocation2 + $0x8] sm:$0xff] %v474
      %485 = vst [vmem:[#allocation2 + $0x10] sm:$0xff] %v475
      %486 = vst [vmem:[#allocation2 + $0x18] sm:$0xff] %v476
      %487 = vst [vmem:[#allocation2 + $0x20] sm:$0xff] %v477
      %488 = vst [vmem:[#allocation2 + $0x28] sm:$0xff] %v478
      %489 = vst [vmem:[#allocation2 + $0x30] sm:$0xff] %v479
      %490 = vst [vmem:[#allocation2 + $0x38] sm:$0xff] %v480
      %491 = vst [vmem:[#allocation2 + $0x40] sm:$0xff] %v481
      %492 = vst [vmem:[#allocation2 + $0x48] sm:$0xff] %v482
      %v493 = vld [vmem:[#allocation2] sm:$0xff]
      %v494 = vld [vmem:[#allocation2 + $0x8] sm:$0xff]
      %v495 = vld [vmem:[#allocation2 + $0x10] sm:$0xff]
      %v496 = vld [vmem:[#allocation2 + $0x18] sm:$0xff]
      %v497 = vld [vmem:[#allocation2 + $0x20] sm:$0xff]
      %v498 = vld [vmem:[#allocation2 + $0x28] sm:$0xff]
      %v499 = vld [vmem:[#allocation2 + $0x30] sm:$0xff]
      %v500 = vld [vmem:[#allocation2 + $0x38] sm:$0xff]
      %v501 = vld [vmem:[#allocation2 + $0x40] sm:$0xff]
      %v502 = vld [vmem:[#allocation2 + $0x48] sm:$0xff]
      %s503 = scalar_lea.vmem %s1, 8
      %v504 = vld [vmem:[%s503] sm:$0xf]
      %vm505 = vcmask 1046528
      %v506 = vrot.slane %v297, 1
      %v507 = vrot.slane %v298, 1
      %v508 = vsel %vm505, %v506, %v507
      %v509 = vrot.slane %v299, 1
      %v510 = vsel %vm505, %v507, %v509
      %v511 = vrot.slane %v300, 1
      %v512 = vsel %vm505, %v509, %v511
      %v513 = vrot.slane %v301, 1
      %v514 = vsel %vm505, %v511, %v513
      %v515 = vrot.slane %v380, 1
      %v516 = vsel %vm505, %v513, %v515
      %v518 = vsel %vm302, %v508, 0
      %v521 = vsel %vm302, %v510, 0
      %v524 = vsel %vm302, %v512, 0
      %v527 = vsel %vm302, %v514, 0
      %v530 = vsel %vm302, %v516, 0
      %v533 = vsel %vm318, %v504, 0
      %535 = vmatpush.bf16.msra.mxu0 0
      %536 = vmatpush.bf16.msra.mxu0 0
      %537 = vmatpush.bf16.msra.mxu0 0
      %538 = vmatpush.bf16.msra.mxu0 0
      %539 = vmatpush.bf16.msra.mxu0 0
      %540 = vmatpush.bf16.msra.mxu0 0
      %541 = vmatpush.bf16.msra.mxu0 0
      %542 = vmatpush.bf16.msra.mxu0 %v533
      %543 = vmatmul.bf16.gmra.mxu0 %v518
      %v544 = vpop.f32.mrf.mxu0
      %v545 = vadd.f32 0.0, %v544
      %v546 = vpop.f32.mrf.mxu0
      %v547 = vadd.f32 0.0, %v546
      %548 = vmatmul.bf16.gmra.mxu0 %v521
      %v549 = vpop.f32.mrf.mxu0
      %v550 = vadd.f32 0.0, %v549
      %v551 = vpop.f32.mrf.mxu0
      %v552 = vadd.f32 0.0, %v551
      %553 = vmatmul.bf16.gmra.mxu0 %v524
      %v554 = vpop.f32.mrf.mxu0
      %v555 = vadd.f32 0.0, %v554
      %v556 = vpop.f32.mrf.mxu0
      %v557 = vadd.f32 0.0, %v556
      %558 = vmatmul.bf16.gmra.mxu0 %v527
      %v559 = vpop.f32.mrf.mxu0
      %v560 = vadd.f32 0.0, %v559
      %v561 = vpop.f32.mrf.mxu0
      %v562 = vadd.f32 0.0, %v561
      %563 = vmatmul.bf16.gmra.mxu0 %v530
      %v564 = vpop.f32.mrf.mxu0
      %v565 = vadd.f32 0.0, %v564
      %v566 = vpop.f32.mrf.mxu0
      %v567 = vadd.f32 0.0, %v566
      %568 = vdwg.mxu0
      %v569 = vadd.f32 %v493, %v545
      %v570 = vadd.f32 %v494, %v547
      %v571 = vadd.f32 %v495, %v550
      %v572 = vadd.f32 %v496, %v552
      %v573 = vadd.f32 %v497, %v555
      %v574 = vadd.f32 %v498, %v557
      %v575 = vadd.f32 %v499, %v560
      %v576 = vadd.f32 %v500, %v562
      %v577 = vadd.f32 %v501, %v565
      %v578 = vadd.f32 %v502, %v567
      %579 = vst [vmem:[#allocation2] sm:$0xff] %v569
      %580 = vst [vmem:[#allocation2 + $0x8] sm:$0xff] %v570
      %581 = vst [vmem:[#allocation2 + $0x10] sm:$0xff] %v571
      %582 = vst [vmem:[#allocation2 + $0x18] sm:$0xff] %v572
      %583 = vst [vmem:[#allocation2 + $0x20] sm:$0xff] %v573
      %584 = vst [vmem:[#allocation2 + $0x28] sm:$0xff] %v574
      %585 = vst [vmem:[#allocation2 + $0x30] sm:$0xff] %v575
      %586 = vst [vmem:[#allocation2 + $0x38] sm:$0xff] %v576
      %587 = vst [vmem:[#allocation2 + $0x40] sm:$0xff] %v577
      %588 = vst [vmem:[#allocation2 + $0x48] sm:$0xff] %v578
      %v589 = vld [vmem:[#allocation2] sm:$0xff]
      %v590 = vld [vmem:[#allocation2 + $0x8] sm:$0xff]
      %v591 = vld [vmem:[#allocation2 + $0x10] sm:$0xff]
      %v592 = vld [vmem:[#allocation2 + $0x18] sm:$0xff]
      %v593 = vld [vmem:[#allocation2 + $0x20] sm:$0xff]
      %v594 = vld [vmem:[#allocation2 + $0x28] sm:$0xff]
      %v595 = vld [vmem:[#allocation2 + $0x30] sm:$0xff]
      %v596 = vld [vmem:[#allocation2 + $0x38] sm:$0xff]
      %v597 = vld [vmem:[#allocation2 + $0x40] sm:$0xff]
      %v598 = vld [vmem:[#allocation2 + $0x48] sm:$0xff]
      %s599 = scalar_lea.vmem %s1, 12
      %v600 = vld [vmem:[%s599] sm:$0xf]
      %v602 = vunpack.c.l.b16 %v274
      %v603 = vpack.c.b16 %v289, %v288
      %v604 = vpack.c.b16 %v291, %v290
      %v605 = vpack.c.b16 %v293, %v292
      %v606 = vpack.c.b16 %v295, %v294
      %v607 = vpack.c.b16 %v379, %v296
      %v608 = vpack.c.b16 %v602, %v602
      %v609 = vrot.slane %v603, 1
      %v610 = vrot.slane %v604, 1
      %v611 = vsel %vm505, %v609, %v610
      %v612 = vrot.slane %v605, 1
      %v613 = vsel %vm505, %v610, %v612
      %v614 = vrot.slane %v606, 1
      %v615 = vsel %vm505, %v612, %v614
      %v616 = vrot.slane %v607, 1
      %v617 = vsel %vm505, %v614, %v616
      %v618 = vrot.slane %v608, 1
      %v619 = vsel %vm505, %v616, %v618
      %v621 = vsel %vm302, %v611, 0
      %v624 = vsel %vm302, %v613, 0
      %v627 = vsel %vm302, %v615, 0
      %v630 = vsel %vm302, %v617, 0
      %v633 = vsel %vm302, %v619, 0
      %v636 = vsel %vm318, %v600, 0
      %638 = vmatpush.bf16.msra.mxu0 0
      %639 = vmatpush.bf16.msra.mxu0 0
      %640 = vmatpush.bf16.msra.mxu0 0
      %641 = vmatpush.bf16.msra.mxu0 0
      %642 = vmatpush.bf16.msra.mxu0 0
      %643 = vmatpush.bf16.msra.mxu0 0
      %644 = vmatpush.bf16.msra.mxu0 0
      %645 = vmatpush.bf16.msra.mxu0 %v636
      %646 = vmatmul.bf16.gmra.mxu0 %v621
      %v647 = vpop.f32.mrf.mxu0
      %v648 = vadd.f32 0.0, %v647
      %v649 = vpop.f32.mrf.mxu0
      %v650 = vadd.f32 0.0, %v649
      %651 = vmatmul.bf16.gmra.mxu0 %v624
      %v652 = vpop.f32.mrf.mxu0
      %v653 = vadd.f32 0.0, %v652
      %v654 = vpop.f32.mrf.mxu0
      %v655 = vadd.f32 0.0, %v654
      %656 = vmatmul.bf16.gmra.mxu0 %v627
      %v657 = vpop.f32.mrf.mxu0
      %v658 = vadd.f32 0.0, %v657
      %v659 = vpop.f32.mrf.mxu0
      %v660 = vadd.f32 0.0, %v659
      %661 = vmatmul.bf16.gmra.mxu0 %v630
      %v662 = vpop.f32.mrf.mxu0
      %v663 = vadd.f32 0.0, %v662
      %v664 = vpop.f32.mrf.mxu0
      %v665 = vadd.f32 0.0, %v664
      %666 = vmatmul.bf16.gmra.mxu0 %v633
      %v667 = vpop.f32.mrf.mxu0
      %v668 = vadd.f32 0.0, %v667
      %v669 = vpop.f32.mrf.mxu0
      %v670 = vadd.f32 0.0, %v669
      %671 = vdwg.mxu0
      %v672 = vadd.f32 %v589, %v648
      %v673 = vadd.f32 %v590, %v650
      %v674 = vadd.f32 %v591, %v653
      %v675 = vadd.f32 %v592, %v655
      %v676 = vadd.f32 %v593, %v658
      %v677 = vadd.f32 %v594, %v660
      %v678 = vadd.f32 %v595, %v663
      %v679 = vadd.f32 %v596, %v665
      %v680 = vadd.f32 %v597, %v668
      %v681 = vadd.f32 %v598, %v670
      %682 = vst [vmem:[#allocation2] sm:$0xff] %v672
      %683 = vst [vmem:[#allocation2 + $0x8] sm:$0xff] %v673
      %684 = vst [vmem:[#allocation2 + $0x10] sm:$0xff] %v674
      %685 = vst [vmem:[#allocation2 + $0x18] sm:$0xff] %v675
      %686 = vst [vmem:[#allocation2 + $0x20] sm:$0xff] %v676
      %687 = vst [vmem:[#allocation2 + $0x28] sm:$0xff] %v677
      %688 = vst [vmem:[#allocation2 + $0x30] sm:$0xff] %v678
      %689 = vst [vmem:[#allocation2 + $0x38] sm:$0xff] %v679
      %690 = vst [vmem:[#allocation2 + $0x40] sm:$0xff] %v680
      %691 = vst [vmem:[#allocation2 + $0x48] sm:$0xff] %v681
      %v692 = vld [vmem:[#allocation2] sm:$0xff]
      %v693 = vld [vmem:[#allocation2 + $0x8] sm:$0xff]
      %v694 = vld [vmem:[#allocation2 + $0x10] sm:$0xff]
      %v695 = vld [vmem:[#allocation2 + $0x18] sm:$0xff]
      %v696 = vld [vmem:[#allocation2 + $0x20] sm:$0xff]
      %v697 = vld [vmem:[#allocation2 + $0x28] sm:$0xff]
      %v698 = vld [vmem:[#allocation2 + $0x30] sm:$0xff]
      %v699 = vld [vmem:[#allocation2 + $0x38] sm:$0xff]
      %v700 = vld [vmem:[#allocation2 + $0x40] sm:$0xff]
      %v701 = vld [vmem:[#allocation2 + $0x48] sm:$0xff]
      %s702 = scalar_lea.vmem %s1, 16
      %v703 = vld [vmem:[%s702] sm:$0xf]
      %vm704 = vsmask.f32 6400
      %v706 = vshrl.u32 %v603, 16
      %v708 = vrot.slane %v706, 1
      %v709 = vshll.u32 %v603, 16
      %v711 = vrot.slane %v709, 2
      %v712 = vor.u32 %v708, %v711
      %v714 = vshrl.u32 %v604, 16
      %v716 = vrot.slane %v714, 1
      %v717 = vshll.u32 %v604, 16
      %v719 = vrot.slane %v717, 2
      %v720 = vor.u32 %v716, %v719
      %v721 = vsel %vm704, %v712, %v720
      %v723 = vshrl.u32 %v605, 16
      %v725 = vrot.slane %v723, 1
      %v726 = vshll.u32 %v605, 16
      %v728 = vrot.slane %v726, 2
      %v729 = vor.u32 %v725, %v728
      %v730 = vsel %vm704, %v720, %v729
      %v732 = vshrl.u32 %v606, 16
      %v734 = vrot.slane %v732, 1
      %v735 = vshll.u32 %v606, 16
      %v737 = vrot.slane %v735, 2
      %v738 = vor.u32 %v734, %v737
      %v739 = vsel %vm704, %v729, %v738
      %v741 = vshrl.u32 %v607, 16
      %v743 = vrot.slane %v741, 1
      %v744 = vshll.u32 %v607, 16
      %v746 = vrot.slane %v744, 2
      %v747 = vor.u32 %v743, %v746
      %v748 = vsel %vm704, %v738, %v747
      %v750 = vshrl.u32 %v608, 16
      %v752 = vrot.slane %v750, 1
      %v753 = vshll.u32 %v608, 16
      %v755 = vrot.slane %v753, 2
      %v756 = vor.u32 %v752, %v755
      %v757 = vsel %vm704, %v747, %v756
      %v759 = vsel %vm302, %v721, 0
      %v762 = vsel %vm302, %v730, 0
      %v765 = vsel %vm302, %v739, 0
      %v768 = vsel %vm302, %v748, 0
      %v771 = vsel %vm302, %v757, 0
      %v774 = vsel %vm318, %v703, 0
      %776 = vmatpush.bf16.msra.mxu0 0
      %777 = vmatpush.bf16.msra.mxu0 0
      %778 = vmatpush.bf16.msra.mxu0 0
      %779 = vmatpush.bf16.msra.mxu0 0
      %780 = vmatpush.bf16.msra.mxu0 0
      %781 = vmatpush.bf16.msra.mxu0 0
      %782 = vmatpush.bf16.msra.mxu0 0
      %783 = vmatpush.bf16.msra.mxu0 %v774
      %784 = vmatmul.bf16.gmra.mxu0 %v759
      %v785 = vpop.f32.mrf.mxu0
      %v786 = vadd.f32 0.0, %v785
      %v787 = vpop.f32.mrf.mxu0
      %v788 = vadd.f32 0.0, %v787
      %789 = vmatmul.bf16.gmra.mxu0 %v762
      %v790 = vpop.f32.mrf.mxu0
      %v791 = vadd.f32 0.0, %v790
      %v792 = vpop.f32.mrf.mxu0
      %v793 = vadd.f32 0.0, %v792
      %794 = vmatmul.bf16.gmra.mxu0 %v765
      %v795 = vpop.f32.mrf.mxu0
      %v796 = vadd.f32 0.0, %v795
      %v797 = vpop.f32.mrf.mxu0
      %v798 = vadd.f32 0.0, %v797
      %799 = vmatmul.bf16.gmra.mxu0 %v768
      %v800 = vpop.f32.mrf.mxu0
      %v801 = vadd.f32 0.0, %v800
      %v802 = vpop.f32.mrf.mxu0
      %v803 = vadd.f32 0.0, %v802
      %804 = vmatmul.bf16.gmra.mxu0 %v771
      %v805 = vpop.f32.mrf.mxu0
      %v806 = vadd.f32 0.0, %v805
      %v807 = vpop.f32.mrf.mxu0
      %v808 = vadd.f32 0.0, %v807
      %809 = vdwg.mxu0
      %v810 = vadd.f32 %v692, %v786
      %v811 = vadd.f32 %v693, %v788
      %v812 = vadd.f32 %v694, %v791
      %v813 = vadd.f32 %v695, %v793
      %v814 = vadd.f32 %v696, %v796
      %v815 = vadd.f32 %v697, %v798
      %v816 = vadd.f32 %v698, %v801
      %v817 = vadd.f32 %v699, %v803
      %v818 = vadd.f32 %v700, %v806
      %v819 = vadd.f32 %v701, %v808
      %820 = vst [vmem:[#allocation2] sm:$0xff] %v810
      %821 = vst [vmem:[#allocation2 + $0x8] sm:$0xff] %v811
      %822 = vst [vmem:[#allocation2 + $0x10] sm:$0xff] %v812
      %823 = vst [vmem:[#allocation2 + $0x18] sm:$0xff] %v813
      %824 = vst [vmem:[#allocation2 + $0x20] sm:$0xff] %v814
      %825 = vst [vmem:[#allocation2 + $0x28] sm:$0xff] %v815
      %826 = vst [vmem:[#allocation2 + $0x30] sm:$0xff] %v816
      %827 = vst [vmem:[#allocation2 + $0x38] sm:$0xff] %v817
      %828 = vst [vmem:[#allocation2 + $0x40] sm:$0xff] %v818
      %829 = vst [vmem:[#allocation2 + $0x48] sm:$0xff] %v819
      %v830 = vld [vmem:[#allocation2] sm:$0xff]
      %v831 = vld [vmem:[#allocation2 + $0x8] sm:$0xff]
      %v832 = vld [vmem:[#allocation2 + $0x10] sm:$0xff]
      %v833 = vld [vmem:[#allocation2 + $0x18] sm:$0xff]
      %v834 = vld [vmem:[#allocation2 + $0x20] sm:$0xff]
      %v835 = vld [vmem:[#allocation2 + $0x28] sm:$0xff]
      %v836 = vld [vmem:[#allocation2 + $0x30] sm:$0xff]
      %v837 = vld [vmem:[#allocation2 + $0x38] sm:$0xff]
      %v838 = vld [vmem:[#allocation2 + $0x40] sm:$0xff]
      %v839 = vld [vmem:[#allocation2 + $0x48] sm:$0xff]
      %s840 = scalar_lea.vmem %s1, 20
      %v841 = vld [vmem:[%s840] sm:$0xf]
      %vm842 = vcmask 1045504
      %v843 = vrot.slane %v603, 2
      %v844 = vrot.slane %v604, 2
      %v845 = vsel %vm842, %v843, %v844
      %v846 = vrot.slane %v605, 2
      %v847 = vsel %vm842, %v844, %v846
      %v848 = vrot.slane %v606, 2
      %v849 = vsel %vm842, %v846, %v848
      %v850 = vrot.slane %v607, 2
      %v851 = vsel %vm842, %v848, %v850
      %v852 = vrot.slane %v608, 2
      %v853 = vsel %vm842, %v850, %v852
      %v855 = vsel %vm302, %v845, 0
      %v858 = vsel %vm302, %v847, 0
      %v861 = vsel %vm302, %v849, 0
      %v864 = vsel %vm302, %v851, 0
      %v867 = vsel %vm302, %v853, 0
      %v870 = vsel %vm318, %v841, 0
      %872 = vmatpush.bf16.msra.mxu0 0
      %873 = vmatpush.bf16.msra.mxu0 0
      %874 = vmatpush.bf16.msra.mxu0 0
      %875 = vmatpush.bf16.msra.mxu0 0
      %876 = vmatpush.bf16.msra.mxu0 0
      %877 = vmatpush.bf16.msra.mxu0 0
      %878 = vmatpush.bf16.msra.mxu0 0
      %879 = vmatpush.bf16.msra.mxu0 %v870
      %880 = vmatmul.bf16.gmra.mxu0 %v855
      %v881 = vpop.f32.mrf.mxu0
      %v882 = vadd.f32 0.0, %v881
      %v883 = vpop.f32.mrf.mxu0
      %v884 = vadd.f32 0.0, %v883
      %885 = vmatmul.bf16.gmra.mxu0 %v858
      %v886 = vpop.f32.mrf.mxu0
      %v887 = vadd.f32 0.0, %v886
      %v888 = vpop.f32.mrf.mxu0
      %v889 = vadd.f32 0.0, %v888
      %890 = vmatmul.bf16.gmra.mxu0 %v861
      %v891 = vpop.f32.mrf.mxu0
      %v892 = vadd.f32 0.0, %v891
      %v893 = vpop.f32.mrf.mxu0
      %v894 = vadd.f32 0.0, %v893
      %895 = vmatmul.bf16.gmra.mxu0 %v864
      %v896 = vpop.f32.mrf.mxu0
      %v897 = vadd.f32 0.0, %v896
      %v898 = vpop.f32.mrf.mxu0
      %v899 = vadd.f32 0.0, %v898
      %900 = vmatmul.bf16.gmra.mxu0 %v867
      %v901 = vpop.f32.mrf.mxu0
      %v902 = vadd.f32 0.0, %v901
      %v903 = vpop.f32.mrf.mxu0
      %v904 = vadd.f32 0.0, %v903
      %905 = vdwg.mxu0
      %v906 = vadd.f32 %v830, %v882
      %v907 = vadd.f32 %v831, %v884
      %v908 = vadd.f32 %v832, %v887
      %v909 = vadd.f32 %v833, %v889
      %v910 = vadd.f32 %v834, %v892
      %v911 = vadd.f32 %v835, %v894
      %v912 = vadd.f32 %v836, %v897
      %v913 = vadd.f32 %v837, %v899
      %v914 = vadd.f32 %v838, %v902
      %v915 = vadd.f32 %v839, %v904
      %916 = vst [vmem:[#allocation2] sm:$0xff] %v906
      %917 = vst [vmem:[#allocation2 + $0x8] sm:$0xff] %v907
      %918 = vst [vmem:[#allocation2 + $0x10] sm:$0xff] %v908
      %919 = vst [vmem:[#allocation2 + $0x18] sm:$0xff] %v909
      %920 = vst [vmem:[#allocation2 + $0x20] sm:$0xff] %v910
      %921 = vst [vmem:[#allocation2 + $0x28] sm:$0xff] %v911
      %922 = vst [vmem:[#allocation2 + $0x30] sm:$0xff] %v912
      %923 = vst [vmem:[#allocation2 + $0x38] sm:$0xff] %v913
      %924 = vst [vmem:[#allocation2 + $0x40] sm:$0xff] %v914
      %925 = vst [vmem:[#allocation2 + $0x48] sm:$0xff] %v915
      %v926 = vld [vmem:[#allocation2] sm:$0xff]
      %v927 = vld [vmem:[#allocation2 + $0x8] sm:$0xff]
      %v928 = vld [vmem:[#allocation2 + $0x10] sm:$0xff]
      %v929 = vld [vmem:[#allocation2 + $0x18] sm:$0xff]
      %v930 = vld [vmem:[#allocation2 + $0x20] sm:$0xff]
      %v931 = vld [vmem:[#allocation2 + $0x28] sm:$0xff]
      %v932 = vld [vmem:[#allocation2 + $0x30] sm:$0xff]
      %v933 = vld [vmem:[#allocation2 + $0x38] sm:$0xff]
      %v934 = vld [vmem:[#allocation2 + $0x40] sm:$0xff]
      %v935 = vld [vmem:[#allocation2 + $0x48] sm:$0xff]
      %s936 = scalar_lea.vmem %s1, 24
      %v937 = vld [vmem:[%s936] sm:$0xf]
      %v939 = vunpack.c.l.b16 %v275
      %v940 = vpack.c.b16 %v602, %v379
      %v941 = vpack.c.b16 %v939, %v939
      %v942 = vrot.slane %v298, 2
      %v943 = vrot.slane %v299, 2
      %v944 = vsel %vm842, %v942, %v943
      %v945 = vrot.slane %v300, 2
      %v946 = vsel %vm842, %v943, %v945
      %v947 = vrot.slane %v301, 2
      %v948 = vsel %vm842, %v945, %v947
      %v949 = vrot.slane %v940, 2
      %v950 = vsel %vm842, %v947, %v949
      %v951 = vrot.slane %v941, 2
      %v952 = vsel %vm842, %v949, %v951
      %v954 = vsel %vm302, %v944, 0
      %v957 = vsel %vm302, %v946, 0
      %v960 = vsel %vm302, %v948, 0
      %v963 = vsel %vm302, %v950, 0
      %v966 = vsel %vm302, %v952, 0
      %v969 = vsel %vm318, %v937, 0
      %971 = vmatpush.bf16.msra.mxu0 0
      %972 = vmatpush.bf16.msra.mxu0 0
      %973 = vmatpush.bf16.msra.mxu0 0
      %974 = vmatpush.bf16.msra.mxu0 0
      %975 = vmatpush.bf16.msra.mxu0 0
      %976 = vmatpush.bf16.msra.mxu0 0
      %977 = vmatpush.bf16.msra.mxu0 0
      %978 = vmatpush.bf16.msra.mxu0 %v969
      %979 = vmatmul.bf16.gmra.mxu0 %v954
      %v980 = vpop.f32.mrf.mxu0
      %v981 = vadd.f32 0.0, %v980
      %v982 = vpop.f32.mrf.mxu0
      %v983 = vadd.f32 0.0, %v982
      %984 = vmatmul.bf16.gmra.mxu0 %v957
      %v985 = vpop.f32.mrf.mxu0
      %v986 = vadd.f32 0.0, %v985
      %v987 = vpop.f32.mrf.mxu0
      %v988 = vadd.f32 0.0, %v987
      %989 = vmatmul.bf16.gmra.mxu0 %v960
      %v990 = vpop.f32.mrf.mxu0
      %v991 = vadd.f32 0.0, %v990
      %v992 = vpop.f32.mrf.mxu0
      %v993 = vadd.f32 0.0, %v992
      %994 = vmatmul.bf16.gmra.mxu0 %v963
      %v995 = vpop.f32.mrf.mxu0
      %v996 = vadd.f32 0.0, %v995
      %v997 = vpop.f32.mrf.mxu0
      %v998 = vadd.f32 0.0, %v997
      %999 = vmatmul.bf16.gmra.mxu0 %v966
      %v1000 = vpop.f32.mrf.mxu0
      %v1001 = vadd.f32 0.0, %v1000
      %v1002 = vpop.f32.mrf.mxu0
      %v1003 = vadd.f32 0.0, %v1002
      %1004 = vdwg.mxu0
      %v1005 = vadd.f32 %v926, %v981
      %v1006 = vadd.f32 %v927, %v983
      %v1007 = vadd.f32 %v928, %v986
      %v1008 = vadd.f32 %v929, %v988
      %v1009 = vadd.f32 %v930, %v991
      %v1010 = vadd.f32 %v931, %v993
      %v1011 = vadd.f32 %v932, %v996
      %v1012 = vadd.f32 %v933, %v998
      %v1013 = vadd.f32 %v934, %v1001
      %v1014 = vadd.f32 %v935, %v1003
      %1015 = vst [vmem:[#allocation2] sm:$0xff] %v1005
      %1016 = vst [vmem:[#allocation2 + $0x8] sm:$0xff] %v1006
      %1017 = vst [vmem:[#allocation2 + $0x10] sm:$0xff] %v1007
      %1018 = vst [vmem:[#allocation2 + $0x18] sm:$0xff] %v1008
      %1019 = vst [vmem:[#allocation2 + $0x20] sm:$0xff] %v1009
      %1020 = vst [vmem:[#allocation2 + $0x28] sm:$0xff] %v1010
      %1021 = vst [vmem:[#allocation2 + $0x30] sm:$0xff] %v1011
      %1022 = vst [vmem:[#allocation2 + $0x38] sm:$0xff] %v1012
      %1023 = vst [vmem:[#allocation2 + $0x40] sm:$0xff] %v1013
      %1024 = vst [vmem:[#allocation2 + $0x48] sm:$0xff] %v1014
      %v1025 = vld [vmem:[#allocation2] sm:$0xff]
      %v1026 = vld [vmem:[#allocation2 + $0x8] sm:$0xff]
      %v1027 = vld [vmem:[#allocation2 + $0x10] sm:$0xff]
      %v1028 = vld [vmem:[#allocation2 + $0x18] sm:$0xff]
      %v1029 = vld [vmem:[#allocation2 + $0x20] sm:$0xff]
      %v1030 = vld [vmem:[#allocation2 + $0x28] sm:$0xff]
      %v1031 = vld [vmem:[#allocation2 + $0x30] sm:$0xff]
      %v1032 = vld [vmem:[#allocation2 + $0x38] sm:$0xff]
      %v1033 = vld [vmem:[#allocation2 + $0x40] sm:$0xff]
      %v1034 = vld [vmem:[#allocation2 + $0x48] sm:$0xff]
      %s1035 = scalar_lea.vmem %s1, 28
      %v1036 = vld [vmem:[%s1035] sm:$0xf]
      %vm1037 = vsmask.f32 5376
      %v1038 = vrot.slane %v392, 2
      %v1039 = vrot.slane %v388, 3
      %v1040 = vor.u32 %v1038, %v1039
      %v1041 = vrot.slane %v399, 2
      %v1042 = vrot.slane %v395, 3
      %v1043 = vor.u32 %v1041, %v1042
      %v1044 = vsel %vm1037, %v1040, %v1043
      %v1045 = vrot.slane %v406, 2
      %v1046 = vrot.slane %v402, 3
      %v1047 = vor.u32 %v1045, %v1046
      %v1048 = vsel %vm1037, %v1043, %v1047
      %v1049 = vrot.slane %v413, 2
      %v1050 = vrot.slane %v409, 3
      %v1051 = vor.u32 %v1049, %v1050
      %v1052 = vsel %vm1037, %v1047, %v1051
      %v1054 = vshrl.u32 %v940, 16
      %v1056 = vrot.slane %v1054, 2
      %v1057 = vshll.u32 %v940, 16
      %v1059 = vrot.slane %v1057, 3
      %v1060 = vor.u32 %v1056, %v1059
      %v1061 = vsel %vm1037, %v1051, %v1060
      %v1063 = vshrl.u32 %v941, 16
      %v1065 = vrot.slane %v1063, 2
      %v1066 = vshll.u32 %v941, 16
      %v1068 = vrot.slane %v1066, 3
      %v1069 = vor.u32 %v1065, %v1068
      %v1070 = vsel %vm1037, %v1060, %v1069
      %v1072 = vsel %vm302, %v1044, 0
      %v1075 = vsel %vm302, %v1048, 0
      %v1078 = vsel %vm302, %v1052, 0
      %v1081 = vsel %vm302, %v1061, 0
      %v1084 = vsel %vm302, %v1070, 0
      %v1087 = vsel %vm318, %v1036, 0
      %1089 = vmatpush.bf16.msra.mxu0 0
      %1090 = vmatpush.bf16.msra.mxu0 0
      %1091 = vmatpush.bf16.msra.mxu0 0
      %1092 = vmatpush.bf16.msra.mxu0 0
      %1093 = vmatpush.bf16.msra.mxu0 0
      %1094 = vmatpush.bf16.msra.mxu0 0
      %1095 = vmatpush.bf16.msra.mxu0 0
      %1096 = vmatpush.bf16.msra.mxu0 %v1087
      %1097 = vmatmul.bf16.gmra.mxu0 %v1072
      %v1098 = vpop.f32.mrf.mxu0
      %v1099 = vadd.f32 0.0, %v1098
      %v1100 = vpop.f32.mrf.mxu0
      %v1101 = vadd.f32 0.0, %v1100
      %1102 = vmatmul.bf16.gmra.mxu0 %v1075
      %v1103 = vpop.f32.mrf.mxu0
      %v1104 = vadd.f32 0.0, %v1103
      %v1105 = vpop.f32.mrf.mxu0
      %v1106 = vadd.f32 0.0, %v1105
      %1107 = vmatmul.bf16.gmra.mxu0 %v1078
      %v1108 = vpop.f32.mrf.mxu0
      %v1109 = vadd.f32 0.0, %v1108
      %v1110 = vpop.f32.mrf.mxu0
      %v1111 = vadd.f32 0.0, %v1110
      %1112 = vmatmul.bf16.gmra.mxu0 %v1081
      %v1113 = vpop.f32.mrf.mxu0
      %v1114 = vadd.f32 0.0, %v1113
      %v1115 = vpop.f32.mrf.mxu0
      %v1116 = vadd.f32 0.0, %v1115
      %1117 = vmatmul.bf16.gmra.mxu0 %v1084
      %v1118 = vpop.f32.mrf.mxu0
      %v1119 = vadd.f32 0.0, %v1118
      %v1120 = vpop.f32.mrf.mxu0
      %v1121 = vadd.f32 0.0, %v1120
      %1122 = vdwg.mxu0
      %v1123 = vadd.f32 %v1025, %v1099
      %v1124 = vadd.f32 %v1026, %v1101
      %v1125 = vadd.f32 %v1027, %v1104
      %v1126 = vadd.f32 %v1028, %v1106
      %v1127 = vadd.f32 %v1029, %v1109
      %v1128 = vadd.f32 %v1030, %v1111
      %v1129 = vadd.f32 %v1031, %v1114
      %v1130 = vadd.f32 %v1032, %v1116
      %v1131 = vadd.f32 %v1033, %v1119
      %v1132 = vadd.f32 %v1034, %v1121
      %1133 = vst [vmem:[#allocation2] sm:$0xff] %v1123
      %1134 = vst [vmem:[#allocation2 + $0x8] sm:$0xff] %v1124
      %1135 = vst [vmem:[#allocation2 + $0x10] sm:$0xff] %v1125
      %1136 = vst [vmem:[#allocation2 + $0x18] sm:$0xff] %v1126
      %1137 = vst [vmem:[#allocation2 + $0x20] sm:$0xff] %v1127
      %1138 = vst [vmem:[#allocation2 + $0x28] sm:$0xff] %v1128
      %1139 = vst [vmem:[#allocation2 + $0x30] sm:$0xff] %v1129
      %1140 = vst [vmem:[#allocation2 + $0x38] sm:$0xff] %v1130
      %1141 = vst [vmem:[#allocation2 + $0x40] sm:$0xff] %v1131
      %1142 = vst [vmem:[#allocation2 + $0x48] sm:$0xff] %v1132
      %v1143 = vld [vmem:[#allocation2] sm:$0xff]
      %v1144 = vld [vmem:[#allocation2 + $0x8] sm:$0xff]
      %v1145 = vld [vmem:[#allocation2 + $0x10] sm:$0xff]
      %v1146 = vld [vmem:[#allocation2 + $0x18] sm:$0xff]
      %v1147 = vld [vmem:[#allocation2 + $0x20] sm:$0xff]
      %v1148 = vld [vmem:[#allocation2 + $0x28] sm:$0xff]
      %v1149 = vld [vmem:[#allocation2 + $0x30] sm:$0xff]
      %v1150 = vld [vmem:[#allocation2 + $0x38] sm:$0xff]
      %v1151 = vld [vmem:[#allocation2 + $0x40] sm:$0xff]
      %v1152 = vld [vmem:[#allocation2 + $0x48] sm:$0xff]
      %s1153 = scalar_lea.vmem %s1, 32
      %v1154 = vld [vmem:[%s1153] sm:$0xf]
      %vm1155 = vcmask 1044480
      %v1156 = vrot.slane %v298, 3
      %v1157 = vrot.slane %v299, 3
      %v1158 = vsel %vm1155, %v1156, %v1157
      %v1159 = vrot.slane %v300, 3
      %v1160 = vsel %vm1155, %v1157, %v1159
      %v1161 = vrot.slane %v301, 3
      %v1162 = vsel %vm1155, %v1159, %v1161
      %v1163 = vrot.slane %v940, 3
      %v1164 = vsel %vm1155, %v1161, %v1163
      %v1165 = vrot.slane %v941, 3
      %v1166 = vsel %vm1155, %v1163, %v1165
      %v1168 = vsel %vm302, %v1158, 0
      %v1171 = vsel %vm302, %v1160, 0
      %v1174 = vsel %vm302, %v1162, 0
      %v1177 = vsel %vm302, %v1164, 0
      %v1180 = vsel %vm302, %v1166, 0
      %v1183 = vsel %vm318, %v1154, 0
      %1185 = vmatpush.bf16.msra.mxu0 0
      %1186 = vmatpush.bf16.msra.mxu0 0
      %1187 = vmatpush.bf16.msra.mxu0 0
      %1188 = vmatpush.bf16.msra.mxu0 0
      %1189 = vmatpush.bf16.msra.mxu0 0
      %1190 = vmatpush.bf16.msra.mxu0 0
      %1191 = vmatpush.bf16.msra.mxu0 0
      %1192 = vmatpush.bf16.msra.mxu0 %v1183
      %1193 = vmatmul.bf16.gmra.mxu0 %v1168
      %v1194 = vpop.f32.mrf.mxu0
      %v1195 = vadd.f32 0.0, %v1194
      %v1196 = vpop.f32.mrf.mxu0
      %v1197 = vadd.f32 0.0, %v1196
      %1198 = vmatmul.bf16.gmra.mxu0 %v1171
      %v1199 = vpop.f32.mrf.mxu0
      %v1200 = vadd.f32 0.0, %v1199
      %v1201 = vpop.f32.mrf.mxu0
      %v1202 = vadd.f32 0.0, %v1201
      %1203 = vmatmul.bf16.gmra.mxu0 %v1174
      %v1204 = vpop.f32.mrf.mxu0
      %v1205 = vadd.f32 0.0, %v1204
      %v1206 = vpop.f32.mrf.mxu0
      %v1207 = vadd.f32 0.0, %v1206
      %1208 = vmatmul.bf16.gmra.mxu0 %v1177
      %v1209 = vpop.f32.mrf.mxu0
      %v1210 = vadd.f32 0.0, %v1209
      %v1211 = vpop.f32.mrf.mxu0
      %v1212 = vadd.f32 0.0, %v1211
      %1213 = vmatmul.bf16.gmra.mxu0 %v1180
      %v1214 = vpop.f32.mrf.mxu0
      %v1215 = vadd.f32 0.0, %v1214
      %v1216 = vpop.f32.mrf.mxu0
      %v1217 = vadd.f32 0.0, %v1216
      %1218 = vdwg.mxu0
      %v1219 = vadd.f32 %v1143, %v1195
      %v1220 = vadd.f32 %v1144, %v1197
      %v1221 = vadd.f32 %v1145, %v1200
      %v1222 = vadd.f32 %v1146, %v1202
      %v1223 = vadd.f32 %v1147, %v1205
      %v1224 = vadd.f32 %v1148, %v1207
      %v1225 = vadd.f32 %v1149, %v1210
      %v1226 = vadd.f32 %v1150, %v1212
      %v1227 = vadd.f32 %v1151, %v1215
      %v1228 = vadd.f32 %v1152, %v1217
      %1229 = vst [vmem:[#allocation2] sm:$0xff] %v1219
      %1230 = vst [vmem:[#allocation2 + $0x8] sm:$0xff] %v1220
      %1231 = vst [vmem:[#allocation2 + $0x10] sm:$0xff] %v1221
      %1232 = vst [vmem:[#allocation2 + $0x18] sm:$0xff] %v1222
      %1233 = vst [vmem:[#allocation2 + $0x20] sm:$0xff] %v1223
      %1234 = vst [vmem:[#allocation2 + $0x28] sm:$0xff] %v1224
      %1235 = vst [vmem:[#allocation2 + $0x30] sm:$0xff] %v1225
      %1236 = vst [vmem:[#allocation2 + $0x38] sm:$0xff] %v1226
      %1237 = vst [vmem:[#allocation2 + $0x40] sm:$0xff] %v1227
      %1238 = vst [vmem:[#allocation2 + $0x48] sm:$0xff] %v1228
      %v1239 = vld [vmem:[#allocation2] sm:$0xff]
      %v1240 = vld [vmem:[#allocation2 + $0x8] sm:$0xff]
      %v1241 = vld [vmem:[#allocation2 + $0x10] sm:$0xff]
      %v1242 = vld [vmem:[#allocation2 + $0x18] sm:$0xff]
      %v1243 = vld [vmem:[#allocation2 + $0x20] sm:$0xff]
      %v1244 = vld [vmem:[#allocation2 + $0x28] sm:$0xff]
      %v1245 = vld [vmem:[#allocation2 + $0x30] sm:$0xff]
      %v1246 = vld [vmem:[#allocation2 + $0x38] sm:$0xff]
      %v1247 = vld [vmem:[#allocation2 + $0x40] sm:$0xff]
      %v1248 = vld [vmem:[#allocation2 + $0x48] sm:$0xff]
      %v1249 = vld [vmem:[%s2] sm:$0x1]
      %v1251 = vperm.slane %v1249, 0
      %v1253 = vadd.f32 %v1239, %v1251
      %v1254 = vadd.f32 %v1240, %v1251
      %v1255 = vadd.f32 %v1241, %v1251
      %v1256 = vadd.f32 %v1242, %v1251
      %v1257 = vadd.f32 %v1243, %v1251
      %v1258 = vadd.f32 %v1244, %v1251
      %v1259 = vadd.f32 %v1245, %v1251
      %v1260 = vadd.f32 %v1246, %v1251
      %v1261 = vadd.f32 %v1247, %v1251
      %v1262 = vadd.f32 %v1248, %v1251
      %v1263 = vld [vmem:[%s245] sm:$0xf]
      %v1264 = vld [vmem:[%s245 + $0x4] sm:$0xf]
      %v1265 = vld [vmem:[%s245 + $0x8] sm:$0xf]
      %v1266 = vld [vmem:[%s245 + $0xc] sm:$0xf]
      %v1267 = vld [vmem:[%s245 + $0x10] sm:$0xf]
      %v1268 = vld [vmem:[%s245 + $0x14] sm:$0xf]
      %v1269 = vld [vmem:[%s245 + $0x18] sm:$0xf]
      %v1270 = vld [vmem:[%s245 + $0x1c] sm:$0xf]
      %v1271 = vld [vmem:[%s245 + $0x20] sm:$0xf]
      %v1272 = vld [vmem:[%s245 + $0x24] sm:$0xf]
      %v1273 = vunpack.c.l.bf16 %v1263
      %v1274 = vunpack.c.l.bf16 %v1264
      %v1275 = vunpack.c.l.bf16 %v1265
      %v1276 = vunpack.c.l.bf16 %v1266
      %v1277 = vunpack.c.l.bf16 %v1267
      %v1278 = vunpack.c.l.bf16 %v1268
      %v1279 = vunpack.c.l.bf16 %v1269
      %v1280 = vunpack.c.l.bf16 %v1270
      %v1281 = vunpack.c.l.bf16 %v1271
      %v1282 = vunpack.c.l.bf16 %v1272
      %v1283 = vadd.f32 %v1253, %v1273
      %v1284 = vadd.f32 %v1254, %v1274
      %v1285 = vadd.f32 %v1255, %v1275
      %v1286 = vadd.f32 %v1256, %v1276
      %v1287 = vadd.f32 %v1257, %v1277
      %v1288 = vadd.f32 %v1258, %v1278
      %v1289 = vadd.f32 %v1259, %v1279
      %v1290 = vadd.f32 %v1260, %v1280
      %v1291 = vadd.f32 %v1261, %v1281
      %v1292 = vadd.f32 %v1262, %v1282
      %v1293 = vmax.f32 %v1283, 0.0
      %v1294 = vmax.f32 %v1284, 0.0
      %v1295 = vmax.f32 %v1285, 0.0
      %v1296 = vmax.f32 %v1286, 0.0
      %v1297 = vmax.f32 %v1287, 0.0
      %v1298 = vmax.f32 %v1288, 0.0
      %v1299 = vmax.f32 %v1289, 0.0
      %v1300 = vmax.f32 %v1290, 0.0
      %v1301 = vmax.f32 %v1291, 0.0
      %v1302 = vmax.f32 %v1292, 0.0
      %v1303 = vpack.c.bf16 %v1293, %v1293
      %v1304 = vpack.c.bf16 %v1294, %v1294
      %v1305 = vpack.c.bf16 %v1295, %v1295
      %v1306 = vpack.c.bf16 %v1296, %v1296
      %v1307 = vpack.c.bf16 %v1297, %v1297
      %v1308 = vpack.c.bf16 %v1298, %v1298
      %v1309 = vpack.c.bf16 %v1299, %v1299
      %v1310 = vpack.c.bf16 %v1300, %v1300
      %v1311 = vpack.c.bf16 %v1301, %v1301
      %v1312 = vpack.c.bf16 %v1302, %v1302
      %1313 = vst [vmem:[%s255] sm:$0xf] %v1303
      %1314 = vst [vmem:[%s255 + $0x4] sm:$0xf] %v1304
      %1315 = vst [vmem:[%s255 + $0x8] sm:$0xf] %v1305
      %1316 = vst [vmem:[%s255 + $0xc] sm:$0xf] %v1306
      %1317 = vst [vmem:[%s255 + $0x10] sm:$0xf] %v1307
      %1318 = vst [vmem:[%s255 + $0x14] sm:$0xf] %v1308
      %1319 = vst [vmem:[%s255 + $0x18] sm:$0xf] %v1309
      %1320 = vst [vmem:[%s255 + $0x1c] sm:$0xf] %v1310
      %1321 = vst [vmem:[%s255 + $0x20] sm:$0xf] %v1311
      %1322 = vst [vmem:[%s255 + $0x24] sm:$0xf] %v1312
      %s1323 = smul.u32 10, %s20
      %p1324 = scmp.lt.s32.totalorder %s19, 1
      %s1325 = scalar_select %p1324, %s19, 1
      %p1326 = scmp.lt.s32.totalorder %s1323, 9
      %s1327 = scalar_select %p1326, %s1323, 9
      %s1328 = smul.addr %s1325, 10
      %s1329 = sadd.s32 %s1327, %s1328
      %s1330 = smul.addr %s1329, 4
      %s1331 = scalar_lea.vmem %s4, %s1330
      // Predicated region
      $region37: #{_forward_impl.17} parent=35 // pred_check
        %p1332 = pneg %p143
      $region38: #{_forward_impl.17} parent=35 // pred_check_branch
        %1334 = sbr.rel (%p1332) target = $region40
      $region39: #{_forward_impl.17} parent=35 // pred_region
        %s1335 = smul.u32 10, %s20
      $region40: #{_forward_impl.17} parent=35 // pred_fallthru
        _
    $region36: #{_forward_impl.17} parent=5 // pred_fallthru
      _
    %p1336 = scmp.le.s32.totalorder 2, %s10
    // Predicated region
    $region41: #{_forward_impl.17} parent=5 // pred_check
      %p1337 = pneg %p1336
    $region42: #{_forward_impl.17} parent=5 // pred_check_branch
      %1339 = sbr.rel (%p1337) target = $region44
    $region43: #{_forward_impl.17} parent=5 // pred_region
      %s1340 = ssub.s32 %s10, 2
      // Predicated region
      $region45: #{_forward_impl.17} parent=43 // pred_check
        %p1341 = pneg %p149
      $region46: #{_forward_impl.17} parent=43 // pred_check_branch
        %1343 = sbr.rel (%p1341) target = $region48
      $region47: #{_forward_impl.17} parent=43 // pred_region
        %s1344 = smul.u32 10, %s22
        %p1345 = scmp.lt.s32.totalorder %s21, 1
        %s1346 = scalar_select %p1345, %s21, 1
        %p1347 = scmp.lt.s32.totalorder %s1344, 9
        %s1348 = scalar_select %p1347, %s1344, 9
        %s1349 = smul.addr %s1346, 10
        %s1350 = sadd.s32 %s1348, %s1349
        %s1351 = smul.addr %s1350, 4
        %s1352 = scalar_lea.vmem %s4, %s1351
      $region48: #{_forward_impl.17} parent=43 // pred_fallthru
        _
    $region44: #{_forward_impl.17} parent=5 // pred_fallthru
      _
  $region6: #{_forward_impl.17} parent=0 // loop_footer
    %s14 = sadd.s32 1, %s10
  $region7: #{_forward_impl.17} parent=0 // loop_footer_branch
    %9 = sbr.rel target = $region3
  $region8: #{_forward_impl.17} parent=0 // loop_exit
    _

// kernel: _forward_impl.26
$region0: #{_forward_impl.26}
  #allocation0 [shape = 'u32[]', space=smem, size = 0x4, offset = 0x4, fixed_abs, tag = 'smem constant byte address 0x4 - core index']
  #allocation1 [shape = 'u32[72,128]{1,0:T(1,128)}', space=vmem, size = 0x9000, scoped, tag = 'internal scratch']
  %s0 = inlined_call_operand.vmem [shape: bf16[8,16], index: 0, kind: input, shape index: {}]
  %s1 = inlined_call_operand.vmem [shape: bf16[16,128], index: 1, kind: input, shape index: {}]
  %s2 = inlined_call_operand.vmem [shape: f32[1,128], index: 2, kind: input, shape index: {}]
  %s3 = inlined_call_operand.vmem [shape: bf16[8,128], index: 3, kind: output, shape index: {}]
  %s4 = sld [smem:[#allocation0]]
  $region22: #{_forward_impl.26} parent=0
    _
  %s6 = ssub.s32 1, %s4
  %s7 = scalar_select 0, %s6, %s4
  // Predicated region
  $region2: #{_forward_impl.26} parent=0 // pred_check
    _
  $region3: #{_forward_impl.26} parent=0 // pred_check_branch
    %9 = sbr.rel (0) target = $region5
  $region4: #{_forward_impl.26} parent=0 // pred_region
    _
  $region5: #{_forward_impl.26} parent=0 // pred_fallthru
    _
  // Predicated region
  $region6: #{_forward_impl.26} parent=0 // pred_check
    _
  $region7: #{_forward_impl.26} parent=0 // pred_check_branch
    %11 = sbr.rel (0) target = $region9
  $region8: #{_forward_impl.26} parent=0 // pred_region
    _
  $region9: #{_forward_impl.26} parent=0 // pred_fallthru
    _
  // Predicated region
  $region10: #{_forward_impl.26} parent=0 // pred_check
    _
  $region11: #{_forward_impl.26} parent=0 // pred_check_branch
    %13 = sbr.rel (0) target = $region13
  $region12: #{_forward_impl.26} parent=0 // pred_region
    _
  $region13: #{_forward_impl.26} parent=0 // pred_fallthru
    _
  %v15 = vld [vmem:[%s0] sm:$0xf]
  %v16 = vld [vmem:[%s1] sm:$0xf]
  %v17 = vld [vmem:[%s1 + $0x4] sm:$0xf]
  %v18 = vld [vmem:[%s2] sm:$0x1]
  %v20 = vperm.slane %v18, 0
  %v24 = vunpack.c.l.b16 %v16
  %v25 = vunpack.c.l.b16 %v17
  %v26 = vpack.c.b16 %v25, %v24
  %vm28 = vcmask 130048
  %v30 = vsel %vm28, %v15, 0
  %32 = vmatpush.bf16.msra.mxu0 0
  %33 = vmatpush.bf16.msra.mxu0 0
  %34 = vmatpush.bf16.msra.mxu0 0
  %35 = vmatpush.bf16.msra.mxu0 0
  %36 = vmatpush.bf16.msra.mxu0 0
  %37 = vmatpush.bf16.msra.mxu0 0
  %38 = vmatpush.bf16.msra.mxu0 0
  %39 = vmatpush.bf16.msra.mxu0 %v26
  %40 = vmatmul.bf16.gmra.mxu0 %v30
  %v41 = vpop.f32.mrf.mxu0
  %v42 = vadd.f32 %v20, %v41
  %v43 = vpop.f32.mrf.mxu0
  %44 = vdwg.mxu0
  %v45 = vpack.c.bf16 %v42, %v42
  %46 = vst [vmem:[%s3] sm:$0xf] %v45
  // Predicated region
  $region14: #{_forward_impl.26} parent=0 // pred_check
    _
  $region15: #{_forward_impl.26} parent=0 // pred_check_branch
    %48 = sbr.rel (0) target = $region17
  $region16: #{_forward_impl.26} parent=0 // pred_region
    _
  $region17: #{_forward_impl.26} parent=0 // pred_fallthru
    _
  // Predicated region
  $region18: #{_forward_impl.26} parent=0 // pred_check
    _
  $region19: #{_forward_impl.26} parent=0 // pred_check_branch
    %50 = sbr.rel (0) target = $region21
  $region20: #{_forward_impl.26} parent=0 // pred_region
    _
  $region21: #{_forward_impl.26} parent=0 // pred_fallthru
    _

// kernel: _forward_impl.22
$region0: #{_forward_impl.22}
  #allocation0 [shape = 'u32[]', space=smem, size = 0x4, offset = 0x4, fixed_abs, tag = 'smem constant byte address 0x4 - core index']
  #allocation1 [shape = 'u32[72,128]{1,0:T(1,128)}', space=vmem, size = 0x9000, scoped, tag = 'internal scratch']
  #allocation2 [shape = 'f32[24,128]{1,0:T(8,128)}', space=vmem, size = 0x3000, scoped, tag = 'scratch operand']
  %s0 = inlined_call_operand.vmem [shape: bf16[2,42,16], index: 0, kind: input, shape index: {}]
  %s1 = inlined_call_operand.vmem [shape: bf16[9,16,128], index: 1, kind: input, shape index: {}]
  %s2 = inlined_call_operand.vmem [shape: f32[1,128], index: 2, kind: input, shape index: {}]
  %s3 = inlined_call_operand.vmem [shape: bf16[2,24,128], index: 3, kind: input, shape index: {}]
  %s4 = inlined_call_operand.vmem [shape: bf16[2,24,128], index: 4, kind: output, shape index: {}]
  %s5 = sld [smem:[#allocation0]]
  $region49: #{_forward_impl.22} parent=0
    _
  %s7 = ssub.s32 1, %s5
  %s8 = scalar_select 0, %s7, %s5
  loop: start=0, step=1, limit=4
  $region2: #{_forward_impl.22} parent=0 // loop_pre_header
    _
  $region3: #{_forward_impl.22} parent=0 // loop_header
    %s10 = sphi 0, %s14
    %p11 = scmp.ge.s32.totalorder %s10, 4
    %s17 = sphi 0, %s29
    %s18 = sphi 0, %s25
    %s19 = sphi 0, %s17
    %s20 = sphi 0, %s18
    %s21 = sphi 0, %s19
    %s22 = sphi 0, %s20
    %s32 = sphi 0, %s34
    %s35 = sphi 0, %s32
    %s36 = sphi 0, %s35
    %s52 = sphi 0, %s36
    %s56 = sphi 0, %s56
    %s58 = sphi 0, %s56
    %s59 = sphi 0, %s58
    %s73 = sphi 0, %s59
    %s77 = sphi 0, %s77
    %s79 = sphi 0, %s77
    %s80 = sphi 0, %s79
    %s94 = sphi 0, %s80
    %s102 = sphi 0, %s104
    %s105 = sphi 0, %s102
    %s106 = sphi 0, %s105
    %s122 = sphi 0, %s106
    %s130 = sphi 0, %s132
    %s133 = sphi 0, %s130
    %s134 = sphi 0, %s133
    %s150 = sphi 0, %s134
  $region4: #{_forward_impl.22} parent=0 // loop_header_branch
    %13 = sbr.rel (%p11) target = $region8
  $region5: #{_forward_impl.22} parent=0 // loop_body
    %s15 = ssub.s32 %s10, 1
    %s16 = ssub.s32 %s10, 2
    %s23 = sadd.s32 1, %s18
    %p24 = scmp.ge.s32.totalorder %s23, 1
    %s25 = scalar_select %p24, 0, %s23
    %s26 = sadd.s32 1, %s17
    %s27 = scalar_select %p24, %s26, %s17
    %p28 = scmp.ge.s32.totalorder %s27, 2
    %s29 = scalar_select %p28, 0, %s27
    %s30 = ssub.s32 %s17, %s29
    %p31 = scmp.eq.s32.totalorder %s30, 0
    %s33 = sadd.s32 %s32, 1
    %s34 = scalar_select %p31, %s32, %s33
    %p37 = pneg %p31
    %p38 = scmp.eq.s32.totalorder %s10, 1
    %p39 = por %p37, %p38
    %p40 = scmp.ne.s32.totalorder %s32, %s35
    %p41 = scmp.eq.s32.totalorder %s10, 0
    %p42 = por %p40, %p41
    %p43 = scmp.ne.s32.totalorder %s32, %s35
    %p44 = scmp.eq.s32.totalorder %s15, 1
    %p45 = por %p43, %p44
    %p46 = scmp.ne.s32.totalorder %s35, %s36
    %p47 = scmp.eq.s32.totalorder %s15, 0
    %p48 = por %p46, %p47
    %p49 = scmp.ne.s32.totalorder %s35, %s36
    %p50 = scmp.eq.s32.totalorder %s16, 1
    %p51 = por %p49, %p50
    %p53 = scmp.ne.s32.totalorder %s36, %s52
    %p54 = scmp.eq.s32.totalorder %s16, 0
    %p55 = por %p53, %p54
    %s57 = sadd.s32 %s56, 1
    %p60 = scmp.eq.s32.totalorder %s10, 1
    %p61 = scmp.ne.s32.totalorder %s56, %s58
    %p62 = scmp.eq.s32.totalorder %s10, 0
    %p63 = por %p61, %p62
    %p64 = scmp.ne.s32.totalorder %s56, %s58
    %p65 = scmp.eq.s32.totalorder %s15, 1
    %p66 = por %p64, %p65
    %p67 = scmp.ne.s32.totalorder %s58, %s59
    %p68 = scmp.eq.s32.totalorder %s15, 0
    %p69 = por %p67, %p68
    %p70 = scmp.ne.s32.totalorder %s58, %s59
    %p71 = scmp.eq.s32.totalorder %s16, 1
    %p72 = por %p70, %p71
    %p74 = scmp.ne.s32.totalorder %s59, %s73
    %p75 = scmp.eq.s32.totalorder %s16, 0
    %p76 = por %p74, %p75
    %s78 = sadd.s32 %s77, 1
    %p81 = scmp.eq.s32.totalorder %s10, 1
    %p82 = scmp.ne.s32.totalorder %s77, %s79
    %p83 = scmp.eq.s32.totalorder %s10, 0
    %p84 = por %p82, %p83
    %p85 = scmp.ne.s32.totalorder %s77, %s79
    %p86 = scmp.eq.s32.totalorder %s15, 1
    %p87 = por %p85, %p86
    %p88 = scmp.ne.s32.totalorder %s79, %s80
    %p89 = scmp.eq.s32.totalorder %s15, 0
    %p90 = por %p88, %p89
    %p91 = scmp.ne.s32.totalorder %s79, %s80
    %p92 = scmp.eq.s32.totalorder %s16, 1
    %p93 = por %p91, %p92
    %p95 = scmp.ne.s32.totalorder %s80, %s94
    %p96 = scmp.eq.s32.totalorder %s16, 0
    %p97 = por %p95, %p96
    %s98 = ssub.s32 %s17, %s29
    %s99 = ssub.s32 %s18, %s25
    %s100 = sor.u32 %s98, %s99
    %p101 = scmp.eq.s32.totalorder %s100, 0
    %s103 = sadd.s32 %s102, 1
    %s104 = scalar_select %p101, %s102, %s103
    %p107 = pneg %p101
    %p108 = scmp.eq.s32.totalorder %s10, 1
    %p109 = por %p107, %p108
    %p110 = scmp.ne.s32.totalorder %s102, %s105
    %p111 = scmp.eq.s32.totalorder %s10, 0
    %p112 = por %p110, %p111
    %p113 = scmp.ne.s32.totalorder %s102, %s105
    %p114 = scmp.eq.s32.totalorder %s15, 1
    %p115 = por %p113, %p114
    %p116 = scmp.ne.s32.totalorder %s105, %s106
    %p117 = scmp.eq.s32.totalorder %s15, 0
    %p118 = por %p116, %p117
    %p119 = scmp.ne.s32.totalorder %s105, %s106
    %p120 = scmp.eq.s32.totalorder %s16, 1
    %p121 = por %p119, %p120
    %p123 = scmp.ne.s32.totalorder %s106, %s122
    %p124 = scmp.eq.s32.totalorder %s16, 0
    %p125 = por %p123, %p124
    %s126 = ssub.s32 %s17, %s29
    %s127 = ssub.s32 %s18, %s25
    %s128 = sor.u32 %s126, %s127
    %p129 = scmp.eq.s32.totalorder %s128, 0
    %s131 = sadd.s32 %s130, 1
    %s132 = scalar_select %p129, %s130, %s131
    %p135 = pneg %p129
    %p136 = scmp.eq.s32.totalorder %s10, 1
    %p137 = por %p135, %p136
    %p138 = scmp.ne.s32.totalorder %s130, %s133
    %p139 = scmp.eq.s32.totalorder %s10, 0
    %p140 = por %p138, %p139
    %p141 = scmp.ne.s32.totalorder %s130, %s133
    %p142 = scmp.eq.s32.totalorder %s15, 1
    %p143 = por %p141, %p142
    %p144 = scmp.ne.s32.totalorder %s133, %s134
    %p145 = scmp.eq.s32.totalorder %s15, 0
    %p146 = por %p144, %p145
    %p147 = scmp.ne.s32.totalorder %s133, %s134
    %p148 = scmp.eq.s32.totalorder %s16, 1
    %p149 = por %p147, %p148
    %p151 = scmp.ne.s32.totalorder %s134, %s150
    %p152 = scmp.eq.s32.totalorder %s16, 0
    %p153 = por %p151, %p152
    %p154 = scmp.le.s32.totalorder 1, %s10
    %p155 = scmp.lt.s32.totalorder %s10, 3
    %p156 = pnand %p154, %p155
    %p157 = pneg %p156
    // Predicated region
    $region9: #{_forward_impl.22} parent=5 // pred_check
      _
    $region10: #{_forward_impl.22} parent=5 // pred_check_branch
      %159 = sbr.rel (%p156) target = $region12
    $region11: #{_forward_impl.22} parent=5 // pred_region
      %s160 = ssub.s32 %s10, 1
      // Predicated region
      $region13: #{_forward_impl.22} parent=11 // pred_check
        %p161 = pneg %p69
      $region14: #{_forward_impl.22} parent=11 // pred_check_branch
        %163 = sbr.rel (%p161) target = $region16
      $region15: #{_forward_impl.22} parent=11 // pred_region
        _
      $region16: #{_forward_impl.22} parent=11 // pred_fallthru
        _
      // Predicated region
      $region17: #{_forward_impl.22} parent=11 // pred_check
        %p164 = pneg %p90
      $region18: #{_forward_impl.22} parent=11 // pred_check_branch
        %166 = sbr.rel (%p164) target = $region20
      $region19: #{_forward_impl.22} parent=11 // pred_region
        _
      $region20: #{_forward_impl.22} parent=11 // pred_fallthru
        _
    $region12: #{_forward_impl.22} parent=5 // pred_fallthru
      _
    %p167 = scmp.lt.s32.totalorder %s10, 2
    // Predicated region
    $region21: #{_forward_impl.22} parent=5 // pred_check
      %p168 = pneg %p167
    $region22: #{_forward_impl.22} parent=5 // pred_check_branch
      %170 = sbr.rel (%p168) target = $region24
    $region23: #{_forward_impl.22} parent=5 // pred_region
      // Predicated region
      $region25: #{_forward_impl.22} parent=23 // pred_check
        %p171 = pneg %p42
      $region26: #{_forward_impl.22} parent=23 // pred_check_branch
        %173 = sbr.rel (%p171) target = $region28
      $region27: #{_forward_impl.22} parent=23 // pred_region
        %p174 = scmp.lt.s32.totalorder %s17, 1
        %s175 = scalar_select %p174, %s17, 1
        %s176 = smul.addr %s175, 6
        %s177 = smul.addr %s176, 4
        %s178 = scalar_lea.vmem %s0, %s177
      $region28: #{_forward_impl.22} parent=23 // pred_fallthru
        _
      // Predicated region
      $region29: #{_forward_impl.22} parent=23 // pred_check
        %p179 = pneg %p112
      $region30: #{_forward_impl.22} parent=23 // pred_check_branch
        %181 = sbr.rel (%p179) target = $region32
      $region31: #{_forward_impl.22} parent=23 // pred_region
        %s182 = smul.u32 3, %s18
        %p183 = scmp.lt.s32.totalorder %s17, 1
        %s184 = scalar_select %p183, %s17, 1
        %p185 = scmp.lt.s32.totalorder %s182, 2
        %s186 = scalar_select %p185, %s182, 2
        %s187 = smul.addr %s184, 3
        %s188 = sadd.s32 %s186, %s187
        %s189 = smul.addr %s188, 4
        %s190 = scalar_lea.vmem %s3, %s189
        %s191 = smul.u32 3, %s18
      $region32: #{_forward_impl.22} parent=23 // pred_fallthru
        _
    $region24: #{_forward_impl.22} parent=5 // pred_fallthru
      _
    %p192 = scmp.le.s32.totalorder 1, %s10
    %p193 = scmp.lt.s32.totalorder %s10, 3
    %p194 = pnand %p192, %p193
    %p195 = pneg %p194
    // Predicated region
    $region33: #{_forward_impl.22} parent=5 // pred_check
      _
    $region34: #{_forward_impl.22} parent=5 // pred_check_branch
      %197 = sbr.rel (%p194) target = $region36
    $region35: #{_forward_impl.22} parent=5 // pred_region
      %s198 = ssub.s32 %s10, 1
      %p199 = scmp.lt.s32.totalorder %s19, 1
      %s200 = scalar_select %p199, %s19, 1
      %s201 = smul.addr %s200, 6
      %s202 = smul.addr %s201, 4
      %s203 = scalar_lea.vmem %s0, %s202
      %p204 = pneg %p48
      %p205 = pneg %p45
      %p206 = pneg %p69
      %p207 = pneg %p66
      %p208 = pneg %p90
      %p209 = pneg %p87
      %s210 = smul.u32 3, %s20
      %p211 = scmp.lt.s32.totalorder %s19, 1
      %s212 = scalar_select %p211, %s19, 1
      %p213 = scmp.lt.s32.totalorder %s210, 2
      %s214 = scalar_select %p213, %s210, 2
      %s215 = smul.addr %s212, 3
      %s216 = sadd.s32 %s214, %s215
      %s217 = smul.addr %s216, 4
      %s218 = scalar_lea.vmem %s3, %s217
      %p219 = pneg %p118
      %p220 = pneg %p115
      %p221 = pneg %p146
      %p222 = pneg %p143
      %s223 = smul.u32 3, %s20
      %p224 = scmp.lt.s32.totalorder %s19, 1
      %s225 = scalar_select %p224, %s19, 1
      %p226 = scmp.lt.s32.totalorder %s223, 2
      %s227 = scalar_select %p226, %s223, 2
      %s228 = smul.addr %s225, 3
      %s229 = sadd.s32 %s227, %s228
      %s230 = smul.addr %s229, 4
      %s231 = scalar_lea.vmem %s4, %s230
      %p232 = scmp.lt.s32.totalorder %s19, 1
      %s233 = scalar_select %p232, %s19, 1
      %s234 = smul.addr %s233, 6
      %s235 = smul.addr %s234, 4
      %s236 = scalar_lea.vmem %s0, %s235
      %s237 = smul.u32 3, %s20
      %p238 = scmp.lt.s32.totalorder %s19, 1
      %s239 = scalar_select %p238, %s19, 1
      %p240 = scmp.lt.s32.totalorder %s237, 2
      %s241 = scalar_select %p240, %s237, 2
      %s242 = smul.addr %s239, 3
      %s243 = sadd.s32 %s241, %s242
      %s244 = smul.addr %s243, 4
      %s245 = scalar_lea.vmem %s3, %s244
      %s246 = smul.u32 3, %s20
      %s247 = smul.u32 3, %s20
      %p248 = scmp.lt.s32.totalorder %s19, 1
      %s249 = scalar_select %p248, %s19, 1
      %p250 = scmp.lt.s32.totalorder %s247, 2
      %s251 = scalar_select %p250, %s247, 2
      %s252 = smul.addr %s249, 3
      %s253 = sadd.s32 %s251, %s252
      %s254 = smul.addr %s253, 4
      %s255 = scalar_lea.vmem %s4, %s254
      %s256 = smul.u32 3, %s20
      %s258 = smul.u32 %s20, 24
      %s259 = sshra.s32 %s258, 3
      %s260 = sand.u32 %s258, 7
      %s261 = smul.addr %s259, 4
      %s262 = scalar_lea.vmem %s236, %s261
      %v263 = vld [vmem:[%s262] sm:$0xf]
      %v264 = vld [vmem:[%s262 + $0x4] sm:$0xf]
      %v265 = vld [vmem:[%s262 + $0x8] sm:$0xf]
      %v266 = vld [vmem:[%s262 + $0xc] sm:$0xf]
      %v267 = vld [vmem:[%s262 + $0x10] sm:$0xf]
      %v268 = vld [vmem:[%s1] sm:$0xf]
      %v269 = vld [vmem:[%s1 + $0x4] sm:$0xf]
      %v273 = vunpack.c.l.b16 %v263
      %v274 = vunpack.c.l.b16 %v264
      %v275 = vunpack.c.l.b16 %v265
      %v276 = vpack.c.b16 %v274, %v273
      %v277 = vpack.c.b16 %v275, %v275
      %v280 = vunpack.c.l.b16 %v268
      %v281 = vunpack.c.l.b16 %v269
      %v282 = vpack.c.b16 %v281, %v280
      %vm284 = vcmask 130048
      %v286 = vsel %vm284, %v276, 0
      %v289 = vsel %vm284, %v277, 0
      %291 = vmatpush.bf16.msra.mxu0 0
      %292 = vmatpush.bf16.msra.mxu0 0
      %293 = vmatpush.bf16.msra.mxu0 0
      %294 = vmatpush.bf16.msra.mxu0 0
      %295 = vmatpush.bf16.msra.mxu0 0
      %296 = vmatpush.bf16.msra.mxu0 0
      %297 = vmatpush.bf16.msra.mxu0 0
      %298 = vmatpush.bf16.msra.mxu0 %v282
      %299 = vmatmul.bf16.gmra.mxu0 %v286
      %v300 = vpop.f32.mrf.mxu0
      %v301 = vadd.f32 0.0, %v300
      %v302 = vpop.f32.mrf.mxu0
      %v303 = vadd.f32 0.0, %v302
      %304 = vmatmul.bf16.gmra.mxu0 %v289
      %v305 = vpop.f32.mrf.mxu0
      %v306 = vadd.f32 0.0, %v305
      %v307 = vpop.f32.mrf.mxu0
      %308 = vdwg.mxu0
      %309 = vst [vmem:[#allocation2] sm:$0xff] %v301
      %310 = vst [vmem:[#allocation2 + $0x8] sm:$0xff] %v303
      %311 = vst [vmem:[#allocation2 + $0x10] sm:$0xff] %v306
      %v312 = vld [vmem:[#allocation2] sm:$0xff]
      %v313 = vld [vmem:[#allocation2 + $0x8] sm:$0xff]
      %v314 = vld [vmem:[#allocation2 + $0x10] sm:$0xff]
      %s315 = scalar_lea.vmem %s1, 8
      %v316 = vld [vmem:[%s315] sm:$0xf]
      %v317 = vld [vmem:[%s315 + $0x4] sm:$0xf]
      %v319 = vunpack.c.l.b16 %v266
      %v320 = vpack.c.b16 %v319, %v275
      %vm321 = vsmask.f32 7424
      %v322 = vshrl.u32 %v276, 16
      %v324 = vshll.u32 %v276, 16
      %v326 = vrot.slane %v324, 1
      %v327 = vor.u32 %v322, %v326
      %v329 = vshll.u32 %v320, 16
      %v331 = vrot.slane %v329, 1
      %v332 = vsel %vm321, %v327, %v331
      %v333 = vshrl.u32 %v320, 16
      %v335 = vor.u32 %v333, %v331
      %v338 = vunpack.c.l.b16 %v316
      %v339 = vunpack.c.l.b16 %v317
      %v340 = vpack.c.b16 %v339, %v338
      %v343 = vsel %vm284, %v332, 0
      %v346 = vsel %vm284, %v335, 0
      %348 = vmatpush.bf16.msra.mxu0 0
      %349 = vmatpush.bf16.msra.mxu0 0
      %350 = vmatpush.bf16.msra.mxu0 0
      %351 = vmatpush.bf16.msra.mxu0 0
      %352 = vmatpush.bf16.msra.mxu0 0
      %353 = vmatpush.bf16.msra.mxu0 0
      %354 = vmatpush.bf16.msra.mxu0 0
      %355 = vmatpush.bf16.msra.mxu0 %v340
      %356 = vmatmul.bf16.gmra.mxu0 %v343
      %v357 = vpop.f32.mrf.mxu0
      %v358 = vadd.f32 0.0, %v357
      %v359 = vpop.f32.mrf.mxu0
      %v360 = vadd.f32 0.0, %v359
      %361 = vmatmul.bf16.gmra.mxu0 %v346
      %v362 = vpop.f32.mrf.mxu0
      %v363 = vadd.f32 0.0, %v362
      %v364 = vpop.f32.mrf.mxu0
      %365 = vdwg.mxu0
      %v366 = vadd.f32 %v312, %v358
      %v367 = vadd.f32 %v313, %v360
      %v368 = vadd.f32 %v314, %v363
      %369 = vst [vmem:[#allocation2] sm:$0xff] %v366
      %370 = vst [vmem:[#allocation2 + $0x8] sm:$0xff] %v367
      %371 = vst [vmem:[#allocation2 + $0x10] sm:$0xff] %v368
      %v372 = vld [vmem:[#allocation2] sm:$0xff]
      %v373 = vld [vmem:[#allocation2 + $0x8] sm:$0xff]
      %v374 = vld [vmem:[#allocation2 + $0x10] sm:$0xff]
      %s375 = scalar_lea.vmem %s1, 16
      %v376 = vld [vmem:[%s375] sm:$0xf]
      %v377 = vld [vmem:[%s375 + $0x4] sm:$0xf]
      %vm378 = vcmask 1046528
      %v379 = vrot.slane %v276, 1
      %v380 = vrot.slane %v320, 1
      %v381 = vsel %vm378, %v379, %v380
      %v384 = vunpack.c.l.b16 %v376
      %v385 = vunpack.c.l.b16 %v377
      %v386 = vpack.c.b16 %v385, %v384
      %v389 = vsel %vm284, %v381, 0
      %v392 = vsel %vm284, %v380, 0
      %394 = vmatpush.bf16.msra.mxu0 0
      %395 = vmatpush.bf16.msra.mxu0 0
      %396 = vmatpush.bf16.msra.mxu0 0
      %397 = vmatpush.bf16.msra.mxu0 0
      %398 = vmatpush.bf16.msra.mxu0 0
      %399 = vmatpush.bf16.msra.mxu0 0
      %400 = vmatpush.bf16.msra.mxu0 0
      %401 = vmatpush.bf16.msra.mxu0 %v386
      %402 = vmatmul.bf16.gmra.mxu0 %v389
      %v403 = vpop.f32.mrf.mxu0
      %v404 = vadd.f32 0.0, %v403
      %v405 = vpop.f32.mrf.mxu0
      %v406 = vadd.f32 0.0, %v405
      %407 = vmatmul.bf16.gmra.mxu0 %v392
      %v408 = vpop.f32.mrf.mxu0
      %v409 = vadd.f32 0.0, %v408
      %v410 = vpop.f32.mrf.mxu0
      %411 = vdwg.mxu0
      %v412 = vadd.f32 %v372, %v404
      %v413 = vadd.f32 %v373, %v406
      %v414 = vadd.f32 %v374, %v409
      %415 = vst [vmem:[#allocation2] sm:$0xff] %v412
      %416 = vst [vmem:[#allocation2 + $0x8] sm:$0xff] %v413
      %417 = vst [vmem:[#allocation2 + $0x10] sm:$0xff] %v414
      %v418 = vld [vmem:[#allocation2] sm:$0xff]
      %v419 = vld [vmem:[#allocation2 + $0x8] sm:$0xff]
      %v420 = vld [vmem:[#allocation2 + $0x10] sm:$0xff]
      %s421 = scalar_lea.vmem %s1, 24
      %v422 = vld [vmem:[%s421] sm:$0xf]
      %v423 = vld [vmem:[%s421 + $0x4] sm:$0xf]
      %vm424 = vcmask 1044480
      %v425 = vrot.slane %v276, 3
      %v426 = vrot.slane %v320, 3
      %v427 = vsel %vm424, %v425, %v426
      %v430 = vunpack.c.l.b16 %v422
      %v431 = vunpack.c.l.b16 %v423
      %v432 = vpack.c.b16 %v431, %v430
      %v435 = vsel %vm284, %v427, 0
      %v438 = vsel %vm284, %v426, 0
      %440 = vmatpush.bf16.msra.mxu0 0
      %441 = vmatpush.bf16.msra.mxu0 0
      %442 = vmatpush.bf16.msra.mxu0 0
      %443 = vmatpush.bf16.msra.mxu0 0
      %444 = vmatpush.bf16.msra.mxu0 0
      %445 = vmatpush.bf16.msra.mxu0 0
      %446 = vmatpush.bf16.msra.mxu0 0
      %447 = vmatpush.bf16.msra.mxu0 %v432
      %448 = vmatmul.bf16.gmra.mxu0 %v435
      %v449 = vpop.f32.mrf.mxu0
      %v450 = vadd.f32 0.0, %v449
      %v451 = vpop.f32.mrf.mxu0
      %v452 = vadd.f32 0.0, %v451
      %453 = vmatmul.bf16.gmra.mxu0 %v438
      %v454 = vpop.f32.mrf.mxu0
      %v455 = vadd.f32 0.0, %v454
      %v456 = vpop.f32.mrf.mxu0
      %457 = vdwg.mxu0
      %v458 = vadd.f32 %v418, %v450
      %v459 = vadd.f32 %v419, %v452
      %v460 = vadd.f32 %v420, %v455
      %461 = vst [vmem:[#allocation2] sm:$0xff] %v458
      %462 = vst [vmem:[#allocation2 + $0x8] sm:$0xff] %v459
      %463 = vst [vmem:[#allocation2 + $0x10] sm:$0xff] %v460
      %v464 = vld [vmem:[#allocation2] sm:$0xff]
      %v465 = vld [vmem:[#allocation2 + $0x8] sm:$0xff]
      %v466 = vld [vmem:[#allocation2 + $0x10] sm:$0xff]
      %s467 = scalar_lea.vmem %s1, 32
      %v468 = vld [vmem:[%s467] sm:$0xf]
      %v469 = vld [vmem:[%s467 + $0x4] sm:$0xf]
      %vm470 = vsmask.f32 4352
      %v471 = vrot.slane %v322, 3
      %v472 = vrot.slane %v324, 4
      %v473 = vor.u32 %v471, %v472
      %v474 = vrot.slane %v333, 3
      %v475 = vrot.slane %v329, 4
      %v476 = vor.u32 %v474, %v475
      %v477 = vsel %vm470, %v473, %v476
      %v480 = vunpack.c.l.b16 %v468
      %v481 = vunpack.c.l.b16 %v469
      %v482 = vpack.c.b16 %v481, %v480
      %v485 = vsel %vm284, %v477, 0
      %v488 = vsel %vm284, %v476, 0
      %490 = vmatpush.bf16.msra.mxu0 0
      %491 = vmatpush.bf16.msra.mxu0 0
      %492 = vmatpush.bf16.msra.mxu0 0
      %493 = vmatpush.bf16.msra.mxu0 0
      %494 = vmatpush.bf16.msra.mxu0 0
      %495 = vmatpush.bf16.msra.mxu0 0
      %496 = vmatpush.bf16.msra.mxu0 0
      %497 = vmatpush.bf16.msra.mxu0 %v482
      %498 = vmatmul.bf16.gmra.mxu0 %v485
      %v499 = vpop.f32.mrf.mxu0
      %v500 = vadd.f32 0.0, %v499
      %v501 = vpop.f32.mrf.mxu0
      %v502 = vadd.f32 0.0, %v501
      %503 = vmatmul.bf16.gmra.mxu0 %v488
      %v504 = vpop.f32.mrf.mxu0
      %v505 = vadd.f32 0.0, %v504
      %v506 = vpop.f32.mrf.mxu0
      %507 = vdwg.mxu0
      %v508 = vadd.f32 %v464, %v500
      %v509 = vadd.f32 %v465, %v502
      %v510 = vadd.f32 %v466, %v505
      %511 = vst [vmem:[#allocation2] sm:$0xff] %v508
      %512 = vst [vmem:[#allocation2 + $0x8] sm:$0xff] %v509
      %513 = vst [vmem:[#allocation2 + $0x10] sm:$0xff] %v510
      %v514 = vld [vmem:[#allocation2] sm:$0xff]
      %v515 = vld [vmem:[#allocation2 + $0x8] sm:$0xff]
      %v516 = vld [vmem:[#allocation2 + $0x10] sm:$0xff]
      %s517 = scalar_lea.vmem %s1, 40
      %v518 = vld [vmem:[%s517] sm:$0xf]
      %v519 = vld [vmem:[%s517 + $0x4] sm:$0xf]
      %v520 = vpack.c.b16 %v275, %v274
      %v521 = vpack.c.b16 %v319, %v319
      %v524 = vunpack.c.l.b16 %v518
      %v525 = vunpack.c.l.b16 %v519
      %v526 = vpack.c.b16 %v525, %v524
      %v529 = vsel %vm284, %v520, 0
      %v532 = vsel %vm284, %v521, 0
      %534 = vmatpush.bf16.msra.mxu0 0
      %535 = vmatpush.bf16.msra.mxu0 0
      %536 = vmatpush.bf16.msra.mxu0 0
      %537 = vmatpush.bf16.msra.mxu0 0
      %538 = vmatpush.bf16.msra.mxu0 0
      %539 = vmatpush.bf16.msra.mxu0 0
      %540 = vmatpush.bf16.msra.mxu0 0
      %541 = vmatpush.bf16.msra.mxu0 %v526
      %542 = vmatmul.bf16.gmra.mxu0 %v529
      %v543 = vpop.f32.mrf.mxu0
      %v544 = vadd.f32 0.0, %v543
      %v545 = vpop.f32.mrf.mxu0
      %v546 = vadd.f32 0.0, %v545
      %547 = vmatmul.bf16.gmra.mxu0 %v532
      %v548 = vpop.f32.mrf.mxu0
      %v549 = vadd.f32 0.0, %v548
      %v550 = vpop.f32.mrf.mxu0
      %551 = vdwg.mxu0
      %v552 = vadd.f32 %v514, %v544
      %v553 = vadd.f32 %v515, %v546
      %v554 = vadd.f32 %v516, %v549
      %555 = vst [vmem:[#allocation2] sm:$0xff] %v552
      %556 = vst [vmem:[#allocation2 + $0x8] sm:$0xff] %v553
      %557 = vst [vmem:[#allocation2 + $0x10] sm:$0xff] %v554
      %v558 = vld [vmem:[#allocation2] sm:$0xff]
      %v559 = vld [vmem:[#allocation2 + $0x8] sm:$0xff]
      %v560 = vld [vmem:[#allocation2 + $0x10] sm:$0xff]
      %s561 = scalar_lea.vmem %s1, 48
      %v562 = vld [vmem:[%s561] sm:$0xf]
      %v563 = vld [vmem:[%s561 + $0x4] sm:$0xf]
      %v565 = vunpack.c.l.b16 %v267
      %v566 = vpack.c.b16 %v565, %v319
      %vm567 = vcmask 1045504
      %v568 = vrot.slane %v520, 2
      %v569 = vrot.slane %v566, 2
      %v570 = vsel %vm567, %v568, %v569
      %v573 = vunpack.c.l.b16 %v562
      %v574 = vunpack.c.l.b16 %v563
      %v575 = vpack.c.b16 %v574, %v573
      %v578 = vsel %vm284, %v570, 0
      %v581 = vsel %vm284, %v569, 0
      %583 = vmatpush.bf16.msra.mxu0 0
      %584 = vmatpush.bf16.msra.mxu0 0
      %585 = vmatpush.bf16.msra.mxu0 0
      %586 = vmatpush.bf16.msra.mxu0 0
      %587 = vmatpush.bf16.msra.mxu0 0
      %588 = vmatpush.bf16.msra.mxu0 0
      %589 = vmatpush.bf16.msra.mxu0 0
      %590 = vmatpush.bf16.msra.mxu0 %v575
      %591 = vmatmul.bf16.gmra.mxu0 %v578
      %v592 = vpop.f32.mrf.mxu0
      %v593 = vadd.f32 0.0, %v592
      %v594 = vpop.f32.mrf.mxu0
      %v595 = vadd.f32 0.0, %v594
      %596 = vmatmul.bf16.gmra.mxu0 %v581
      %v597 = vpop.f32.mrf.mxu0
      %v598 = vadd.f32 0.0, %v597
      %v599 = vpop.f32.mrf.mxu0
      %600 = vdwg.mxu0
      %v601 = vadd.f32 %v558, %v593
      %v602 = vadd.f32 %v559, %v595
      %v603 = vadd.f32 %v560, %v598
      %604 = vst [vmem:[#allocation2] sm:$0xff] %v601
      %605 = vst [vmem:[#allocation2 + $0x8] sm:$0xff] %v602
      %606 = vst [vmem:[#allocation2 + $0x10] sm:$0xff] %v603
      %v607 = vld [vmem:[#allocation2] sm:$0xff]
      %v608 = vld [vmem:[#allocation2 + $0x8] sm:$0xff]
      %v609 = vld [vmem:[#allocation2 + $0x10] sm:$0xff]
      %s610 = scalar_lea.vmem %s1, 56
      %v611 = vld [vmem:[%s610] sm:$0xf]
      %v612 = vld [vmem:[%s610 + $0x4] sm:$0xf]
      %vm613 = vsmask.f32 5376
      %v614 = vshrl.u32 %v520, 16
      %v616 = vrot.slane %v614, 2
      %v617 = vshll.u32 %v520, 16
      %v619 = vrot.slane %v617, 3
      %v620 = vor.u32 %v616, %v619
      %v622 = vshrl.u32 %v566, 16
      %v624 = vrot.slane %v622, 2
      %v625 = vshll.u32 %v566, 16
      %v627 = vrot.slane %v625, 3
      %v628 = vor.u32 %v624, %v627
      %v629 = vsel %vm613, %v620, %v628
      %v632 = vunpack.c.l.b16 %v611
      %v633 = vunpack.c.l.b16 %v612
      %v634 = vpack.c.b16 %v633, %v632
      %v637 = vsel %vm284, %v629, 0
      %v640 = vsel %vm284, %v628, 0
      %642 = vmatpush.bf16.msra.mxu0 0
      %643 = vmatpush.bf16.msra.mxu0 0
      %644 = vmatpush.bf16.msra.mxu0 0
      %645 = vmatpush.bf16.msra.mxu0 0
      %646 = vmatpush.bf16.msra.mxu0 0
      %647 = vmatpush.bf16.msra.mxu0 0
      %648 = vmatpush.bf16.msra.mxu0 0
      %649 = vmatpush.bf16.msra.mxu0 %v634
      %650 = vmatmul.bf16.gmra.mxu0 %v637
      %v651 = vpop.f32.mrf.mxu0
      %v652 = vadd.f32 0.0, %v651
      %v653 = vpop.f32.mrf.mxu0
      %v654 = vadd.f32 0.0, %v653
      %655 = vmatmul.bf16.gmra.mxu0 %v640
      %v656 = vpop.f32.mrf.mxu0
      %v657 = vadd.f32 0.0, %v656
      %v658 = vpop.f32.mrf.mxu0
      %659 = vdwg.mxu0
      %v660 = vadd.f32 %v607, %v652
      %v661 = vadd.f32 %v608, %v654
      %v662 = vadd.f32 %v609, %v657
      %663 = vst [vmem:[#allocation2] sm:$0xff] %v660
      %664 = vst [vmem:[#allocation2 + $0x8] sm:$0xff] %v661
      %665 = vst [vmem:[#allocation2 + $0x10] sm:$0xff] %v662
      %v666 = vld [vmem:[#allocation2] sm:$0xff]
      %v667 = vld [vmem:[#allocation2 + $0x8] sm:$0xff]
      %v668 = vld [vmem:[#allocation2 + $0x10] sm:$0xff]
      %s669 = scalar_lea.vmem %s1, 64
      %v670 = vld [vmem:[%s669] sm:$0xf]
      %v671 = vld [vmem:[%s669 + $0x4] sm:$0xf]
      %v672 = vrot.slane %v520, 3
      %v673 = vrot.slane %v566, 3
      %v674 = vsel %vm424, %v672, %v673
      %v677 = vunpack.c.l.b16 %v670
      %v678 = vunpack.c.l.b16 %v671
      %v679 = vpack.c.b16 %v678, %v677
      %v682 = vsel %vm284, %v674, 0
      %v685 = vsel %vm284, %v673, 0
      %687 = vmatpush.bf16.msra.mxu0 0
      %688 = vmatpush.bf16.msra.mxu0 0
      %689 = vmatpush.bf16.msra.mxu0 0
      %690 = vmatpush.bf16.msra.mxu0 0
      %691 = vmatpush.bf16.msra.mxu0 0
      %692 = vmatpush.bf16.msra.mxu0 0
      %693 = vmatpush.bf16.msra.mxu0 0
      %694 = vmatpush.bf16.msra.mxu0 %v679
      %695 = vmatmul.bf16.gmra.mxu0 %v682
      %v696 = vpop.f32.mrf.mxu0
      %v697 = vadd.f32 0.0, %v696
      %v698 = vpop.f32.mrf.mxu0
      %v699 = vadd.f32 0.0, %v698
      %700 = vmatmul.bf16.gmra.mxu0 %v685
      %v701 = vpop.f32.mrf.mxu0
      %v702 = vadd.f32 0.0, %v701
      %v703 = vpop.f32.mrf.mxu0
      %704 = vdwg.mxu0
      %v705 = vadd.f32 %v666, %v697
      %v706 = vadd.f32 %v667, %v699
      %v707 = vadd.f32 %v668, %v702
      %708 = vst [vmem:[#allocation2] sm:$0xff] %v705
      %709 = vst [vmem:[#allocation2 + $0x8] sm:$0xff] %v706
      %710 = vst [vmem:[#allocation2 + $0x10] sm:$0xff] %v707
      %v711 = vld [vmem:[#allocation2] sm:$0xff]
      %v712 = vld [vmem:[#allocation2 + $0x8] sm:$0xff]
      %v713 = vld [vmem:[#allocation2 + $0x10] sm:$0xff]
      %v714 = vld [vmem:[%s2] sm:$0x1]
      %v716 = vperm.slane %v714, 0
      %v718 = vadd.f32 %v711, %v716
      %v719 = vadd.f32 %v712, %v716
      %v720 = vadd.f32 %v713, %v716
      %v721 = vld [vmem:[%s245] sm:$0xf]
      %v722 = vld [vmem:[%s245 + $0x4] sm:$0xf]
      %v723 = vld [vmem:[%s245 + $0x8] sm:$0xf]
      %v724 = vunpack.c.l.bf16 %v721
      %v725 = vunpack.c.l.bf16 %v722
      %v726 = vunpack.c.l.bf16 %v723
      %v727 = vadd.f32 %v718, %v724
      %v728 = vadd.f32 %v719, %v725
      %v729 = vadd.f32 %v720, %v726
      %v730 = vmax.f32 %v727, 0.0
      %v731 = vmax.f32 %v728, 0.0
      %v732 = vmax.f32 %v729, 0.0
      %v733 = vpack.c.bf16 %v730, %v730
      %v734 = vpack.c.bf16 %v731, %v731
      %v735 = vpack.c.bf16 %v732, %v732
      %736 = vst [vmem:[%s255] sm:$0xf] %v733
      %737 = vst [vmem:[%s255 + $0x4] sm:$0xf] %v734
      %738 = vst [vmem:[%s255 + $0x8] sm:$0xf] %v735
      %s739 = smul.u32 3, %s20
      %p740 = scmp.lt.s32.totalorder %s19, 1
      %s741 = scalar_select %p740, %s19, 1
      %p742 = scmp.lt.s32.totalorder %s739, 2
      %s743 = scalar_select %p742, %s739, 2
      %s744 = smul.addr %s741, 3
      %s745 = sadd.s32 %s743, %s744
      %s746 = smul.addr %s745, 4
      %s747 = scalar_lea.vmem %s4, %s746
      // Predicated region
      $region37: #{_forward_impl.22} parent=35 // pred_check
        %p748 = pneg %p143
      $region38: #{_forward_impl.22} parent=35 // pred_check_branch
        %750 = sbr.rel (%p748) target = $region40
      $region39: #{_forward_impl.22} parent=35 // pred_region
        %s751 = smul.u32 3, %s20
      $region40: #{_forward_impl.22} parent=35 // pred_fallthru
        _
    $region36: #{_forward_impl.22} parent=5 // pred_fallthru
      _
    %p752 = scmp.le.s32.totalorder 2, %s10
    // Predicated region
    $region41: #{_forward_impl.22} parent=5 // pred_check
      %p753 = pneg %p752
    $region42: #{_forward_impl.22} parent=5 // pred_check_branch
      %755 = sbr.rel (%p753) target = $region44
    $region43: #{_forward_impl.22} parent=5 // pred_region
      %s756 = ssub.s32 %s10, 2
      // Predicated region
      $region45: #{_forward_impl.22} parent=43 // pred_check
        %p757 = pneg %p149
      $region46: #{_forward_impl.22} parent=43 // pred_check_branch
        %759 = sbr.rel (%p757) target = $region48
      $region47: #{_forward_impl.22} parent=43 // pred_region
        %s760 = smul.u32 3, %s22
        %p761 = scmp.lt.s32.totalorder %s21, 1
        %s762 = scalar_select %p761, %s21, 1
        %p763 = scmp.lt.s32.totalorder %s760, 2
        %s764 = scalar_select %p763, %s760, 2
        %s765 = smul.addr %s762, 3
        %s766 = sadd.s32 %s764, %s765
        %s767 = smul.addr %s766, 4
        %s768 = scalar_lea.vmem %s4, %s767
      $region48: #{_forward_impl.22} parent=43 // pred_fallthru
        _
    $region44: #{_forward_impl.22} parent=5 // pred_fallthru
      _
  $region6: #{_forward_impl.22} parent=0 // loop_footer
    %s14 = sadd.s32 1, %s10
  $region7: #{_forward_impl.22} parent=0 // loop_footer_branch
    %9 = sbr.rel target = $region3
  $region8: #{_forward_impl.22} parent=0 // loop_exit
    _

// kernel: _forward_impl.23
$region0: #{_forward_impl.23}
  #allocation0 [shape = 'u32[]', space=smem, size = 0x4, offset = 0x4, fixed_abs, tag = 'smem constant byte address 0x4 - core index']
  #allocation1 [shape = 'u32[72,128]{1,0:T(1,128)}', space=vmem, size = 0x9000, scoped, tag = 'internal scratch']
  #allocation2 [shape = 'f32[24,128]{1,0:T(8,128)}', space=vmem, size = 0x3000, scoped, tag = 'scratch operand']
  %s0 = inlined_call_operand.vmem [shape: bf16[2,42,16], index: 0, kind: input, shape index: {}]
  %s1 = inlined_call_operand.vmem [shape: bf16[9,16,128], index: 1, kind: input, shape index: {}]
  %s2 = inlined_call_operand.vmem [shape: f32[1,128], index: 2, kind: input, shape index: {}]
  %s3 = inlined_call_operand.vmem [shape: bf16[2,24,128], index: 3, kind: output, shape index: {}]
  %s4 = sld [smem:[#allocation0]]
  $region45: #{_forward_impl.23} parent=0
    _
  %s6 = ssub.s32 1, %s4
  %s7 = scalar_select 0, %s6, %s4
  loop: start=0, step=1, limit=4
  $region2: #{_forward_impl.23} parent=0 // loop_pre_header
    _
  $region3: #{_forward_impl.23} parent=0 // loop_header
    %s9 = sphi 0, %s13
    %p10 = scmp.ge.s32.totalorder %s9, 4
    %s16 = sphi 0, %s28
    %s17 = sphi 0, %s24
    %s18 = sphi 0, %s16
    %s19 = sphi 0, %s17
    %s20 = sphi 0, %s18
    %s21 = sphi 0, %s19
    %s31 = sphi 0, %s33
    %s34 = sphi 0, %s31
    %s35 = sphi 0, %s34
    %s51 = sphi 0, %s35
    %s55 = sphi 0, %s55
    %s57 = sphi 0, %s55
    %s58 = sphi 0, %s57
    %s72 = sphi 0, %s58
    %s76 = sphi 0, %s76
    %s78 = sphi 0, %s76
    %s79 = sphi 0, %s78
    %s93 = sphi 0, %s79
    %s101 = sphi 0, %s103
    %s104 = sphi 0, %s101
    %s105 = sphi 0, %s104
    %s121 = sphi 0, %s105
  $region4: #{_forward_impl.23} parent=0 // loop_header_branch
    %12 = sbr.rel (%p10) target = $region8
  $region5: #{_forward_impl.23} parent=0 // loop_body
    %s14 = ssub.s32 %s9, 1
    %s15 = ssub.s32 %s9, 2
    %s22 = sadd.s32 1, %s17
    %p23 = scmp.ge.s32.totalorder %s22, 1
    %s24 = scalar_select %p23, 0, %s22
    %s25 = sadd.s32 1, %s16
    %s26 = scalar_select %p23, %s25, %s16
    %p27 = scmp.ge.s32.totalorder %s26, 2
    %s28 = scalar_select %p27, 0, %s26
    %s29 = ssub.s32 %s16, %s28
    %p30 = scmp.eq.s32.totalorder %s29, 0
    %s32 = sadd.s32 %s31, 1
    %s33 = scalar_select %p30, %s31, %s32
    %p36 = pneg %p30
    %p37 = scmp.eq.s32.totalorder %s9, 1
    %p38 = por %p36, %p37
    %p39 = scmp.ne.s32.totalorder %s31, %s34
    %p40 = scmp.eq.s32.totalorder %s9, 0
    %p41 = por %p39, %p40
    %p42 = scmp.ne.s32.totalorder %s31, %s34
    %p43 = scmp.eq.s32.totalorder %s14, 1
    %p44 = por %p42, %p43
    %p45 = scmp.ne.s32.totalorder %s34, %s35
    %p46 = scmp.eq.s32.totalorder %s14, 0
    %p47 = por %p45, %p46
    %p48 = scmp.ne.s32.totalorder %s34, %s35
    %p49 = scmp.eq.s32.totalorder %s15, 1
    %p50 = por %p48, %p49
    %p52 = scmp.ne.s32.totalorder %s35, %s51
    %p53 = scmp.eq.s32.totalorder %s15, 0
    %p54 = por %p52, %p53
    %s56 = sadd.s32 %s55, 1
    %p59 = scmp.eq.s32.totalorder %s9, 1
    %p60 = scmp.ne.s32.totalorder %s55, %s57
    %p61 = scmp.eq.s32.totalorder %s9, 0
    %p62 = por %p60, %p61
    %p63 = scmp.ne.s32.totalorder %s55, %s57
    %p64 = scmp.eq.s32.totalorder %s14, 1
    %p65 = por %p63, %p64
    %p66 = scmp.ne.s32.totalorder %s57, %s58
    %p67 = scmp.eq.s32.totalorder %s14, 0
    %p68 = por %p66, %p67
    %p69 = scmp.ne.s32.totalorder %s57, %s58
    %p70 = scmp.eq.s32.totalorder %s15, 1
    %p71 = por %p69, %p70
    %p73 = scmp.ne.s32.totalorder %s58, %s72
    %p74 = scmp.eq.s32.totalorder %s15, 0
    %p75 = por %p73, %p74
    %s77 = sadd.s32 %s76, 1
    %p80 = scmp.eq.s32.totalorder %s9, 1
    %p81 = scmp.ne.s32.totalorder %s76, %s78
    %p82 = scmp.eq.s32.totalorder %s9, 0
    %p83 = por %p81, %p82
    %p84 = scmp.ne.s32.totalorder %s76, %s78
    %p85 = scmp.eq.s32.totalorder %s14, 1
    %p86 = por %p84, %p85
    %p87 = scmp.ne.s32.totalorder %s78, %s79
    %p88 = scmp.eq.s32.totalorder %s14, 0
    %p89 = por %p87, %p88
    %p90 = scmp.ne.s32.totalorder %s78, %s79
    %p91 = scmp.eq.s32.totalorder %s15, 1
    %p92 = por %p90, %p91
    %p94 = scmp.ne.s32.totalorder %s79, %s93
    %p95 = scmp.eq.s32.totalorder %s15, 0
    %p96 = por %p94, %p95
    %s97 = ssub.s32 %s16, %s28
    %s98 = ssub.s32 %s17, %s24
    %s99 = sor.u32 %s97, %s98
    %p100 = scmp.eq.s32.totalorder %s99, 0
    %s102 = sadd.s32 %s101, 1
    %s103 = scalar_select %p100, %s101, %s102
    %p106 = pneg %p100
    %p107 = scmp.eq.s32.totalorder %s9, 1
    %p108 = por %p106, %p107
    %p109 = scmp.ne.s32.totalorder %s101, %s104
    %p110 = scmp.eq.s32.totalorder %s9, 0
    %p111 = por %p109, %p110
    %p112 = scmp.ne.s32.totalorder %s101, %s104
    %p113 = scmp.eq.s32.totalorder %s14, 1
    %p114 = por %p112, %p113
    %p115 = scmp.ne.s32.totalorder %s104, %s105
    %p116 = scmp.eq.s32.totalorder %s14, 0
    %p117 = por %p115, %p116
    %p118 = scmp.ne.s32.totalorder %s104, %s105
    %p119 = scmp.eq.s32.totalorder %s15, 1
    %p120 = por %p118, %p119
    %p122 = scmp.ne.s32.totalorder %s105, %s121
    %p123 = scmp.eq.s32.totalorder %s15, 0
    %p124 = por %p122, %p123
    %p125 = scmp.le.s32.totalorder 1, %s9
    %p126 = scmp.lt.s32.totalorder %s9, 3
    %p127 = pnand %p125, %p126
    %p128 = pneg %p127
    // Predicated region
    $region9: #{_forward_impl.23} parent=5 // pred_check
      _
    $region10: #{_forward_impl.23} parent=5 // pred_check_branch
      %130 = sbr.rel (%p127) target = $region12
    $region11: #{_forward_impl.23} parent=5 // pred_region
      %s131 = ssub.s32 %s9, 1
      // Predicated region
      $region13: #{_forward_impl.23} parent=11 // pred_check
        %p132 = pneg %p68
      $region14: #{_forward_impl.23} parent=11 // pred_check_branch
        %134 = sbr.rel (%p132) target = $region16
      $region15: #{_forward_impl.23} parent=11 // pred_region
        _
      $region16: #{_forward_impl.23} parent=11 // pred_fallthru
        _
      // Predicated region
      $region17: #{_forward_impl.23} parent=11 // pred_check
        %p135 = pneg %p89
      $region18: #{_forward_impl.23} parent=11 // pred_check_branch
        %137 = sbr.rel (%p135) target = $region20
      $region19: #{_forward_impl.23} parent=11 // pred_region
        _
      $region20: #{_forward_impl.23} parent=11 // pred_fallthru
        _
    $region12: #{_forward_impl.23} parent=5 // pred_fallthru
      _
    %p138 = scmp.lt.s32.totalorder %s9, 2
    // Predicated region
    $region21: #{_forward_impl.23} parent=5 // pred_check
      %p139 = pneg %p138
    $region22: #{_forward_impl.23} parent=5 // pred_check_branch
      %141 = sbr.rel (%p139) target = $region24
    $region23: #{_forward_impl.23} parent=5 // pred_region
      // Predicated region
      $region25: #{_forward_impl.23} parent=23 // pred_check
        %p142 = pneg %p41
      $region26: #{_forward_impl.23} parent=23 // pred_check_branch
        %144 = sbr.rel (%p142) target = $region28
      $region27: #{_forward_impl.23} parent=23 // pred_region
        %p145 = scmp.lt.s32.totalorder %s16, 1
        %s146 = scalar_select %p145, %s16, 1
        %s147 = smul.addr %s146, 6
        %s148 = smul.addr %s147, 4
        %s149 = scalar_lea.vmem %s0, %s148
      $region28: #{_forward_impl.23} parent=23 // pred_fallthru
        _
    $region24: #{_forward_impl.23} parent=5 // pred_fallthru
      _
    %p150 = scmp.le.s32.totalorder 1, %s9
    %p151 = scmp.lt.s32.totalorder %s9, 3
    %p152 = pnand %p150, %p151
    %p153 = pneg %p152
    // Predicated region
    $region29: #{_forward_impl.23} parent=5 // pred_check
      _
    $region30: #{_forward_impl.23} parent=5 // pred_check_branch
      %155 = sbr.rel (%p152) target = $region32
    $region31: #{_forward_impl.23} parent=5 // pred_region
      %s156 = ssub.s32 %s9, 1
      %p157 = scmp.lt.s32.totalorder %s18, 1
      %s158 = scalar_select %p157, %s18, 1
      %s159 = smul.addr %s158, 6
      %s160 = smul.addr %s159, 4
      %s161 = scalar_lea.vmem %s0, %s160
      %p162 = pneg %p47
      %p163 = pneg %p44
      %p164 = pneg %p68
      %p165 = pneg %p65
      %p166 = pneg %p89
      %p167 = pneg %p86
      %p168 = pneg %p117
      %p169 = pneg %p114
      %s170 = smul.u32 3, %s19
      %p171 = scmp.lt.s32.totalorder %s18, 1
      %s172 = scalar_select %p171, %s18, 1
      %p173 = scmp.lt.s32.totalorder %s170, 2
      %s174 = scalar_select %p173, %s170, 2
      %s175 = smul.addr %s172, 3
      %s176 = sadd.s32 %s174, %s175
      %s177 = smul.addr %s176, 4
      %s178 = scalar_lea.vmem %s3, %s177
      %p179 = scmp.lt.s32.totalorder %s18, 1
      %s180 = scalar_select %p179, %s18, 1
      %s181 = smul.addr %s180, 6
      %s182 = smul.addr %s181, 4
      %s183 = scalar_lea.vmem %s0, %s182
      %s184 = smul.u32 3, %s19
      %p185 = scmp.lt.s32.totalorder %s18, 1
      %s186 = scalar_select %p185, %s18, 1
      %p187 = scmp.lt.s32.totalorder %s184, 2
      %s188 = scalar_select %p187, %s184, 2
      %s189 = smul.addr %s186, 3
      %s190 = sadd.s32 %s188, %s189
      %s191 = smul.addr %s190, 4
      %s192 = scalar_lea.vmem %s3, %s191
      %s193 = smul.u32 3, %s19
      %s195 = smul.u32 %s19, 24
      %s196 = sshra.s32 %s195, 3
      %s197 = sand.u32 %s195, 7
      %s198 = smul.addr %s196, 4
      %s199 = scalar_lea.vmem %s183, %s198
      %v200 = vld [vmem:[%s199] sm:$0xf]
      %v201 = vld [vmem:[%s199 + $0x4] sm:$0xf]
      %v202 = vld [vmem:[%s199 + $0x8] sm:$0xf]
      %v203 = vld [vmem:[%s199 + $0xc] sm:$0xf]
      %v204 = vld [vmem:[%s199 + $0x10] sm:$0xf]
      %v205 = vld [vmem:[%s1] sm:$0xf]
      %v206 = vld [vmem:[%s1 + $0x4] sm:$0xf]
      %v210 = vunpack.c.l.b16 %v200
      %v211 = vunpack.c.l.b16 %v201
      %v212 = vunpack.c.l.b16 %v202
      %v213 = vpack.c.b16 %v211, %v210
      %v214 = vpack.c.b16 %v212, %v212
      %v217 = vunpack.c.l.b16 %v205
      %v218 = vunpack.c.l.b16 %v206
      %v219 = vpack.c.b16 %v218, %v217
      %vm221 = vcmask 130048
      %v223 = vsel %vm221, %v213, 0
      %v226 = vsel %vm221, %v214, 0
      %228 = vmatpush.bf16.msra.mxu0 0
      %229 = vmatpush.bf16.msra.mxu0 0
      %230 = vmatpush.bf16.msra.mxu0 0
      %231 = vmatpush.bf16.msra.mxu0 0
      %232 = vmatpush.bf16.msra.mxu0 0
      %233 = vmatpush.bf16.msra.mxu0 0
      %234 = vmatpush.bf16.msra.mxu0 0
      %235 = vmatpush.bf16.msra.mxu0 %v219
      %236 = vmatmul.bf16.gmra.mxu0 %v223
      %v237 = vpop.f32.mrf.mxu0
      %v238 = vadd.f32 0.0, %v237
      %v239 = vpop.f32.mrf.mxu0
      %v240 = vadd.f32 0.0, %v239
      %241 = vmatmul.bf16.gmra.mxu0 %v226
      %v242 = vpop.f32.mrf.mxu0
      %v243 = vadd.f32 0.0, %v242
      %v244 = vpop.f32.mrf.mxu0
      %245 = vdwg.mxu0
      %246 = vst [vmem:[#allocation2] sm:$0xff] %v238
      %247 = vst [vmem:[#allocation2 + $0x8] sm:$0xff] %v240
      %248 = vst [vmem:[#allocation2 + $0x10] sm:$0xff] %v243
      %v249 = vld [vmem:[#allocation2] sm:$0xff]
      %v250 = vld [vmem:[#allocation2 + $0x8] sm:$0xff]
      %v251 = vld [vmem:[#allocation2 + $0x10] sm:$0xff]
      %s252 = scalar_lea.vmem %s1, 8
      %v253 = vld [vmem:[%s252] sm:$0xf]
      %v254 = vld [vmem:[%s252 + $0x4] sm:$0xf]
      %v256 = vunpack.c.l.b16 %v203
      %v257 = vpack.c.b16 %v256, %v212
      %vm258 = vsmask.f32 7424
      %v259 = vshrl.u32 %v213, 16
      %v261 = vshll.u32 %v213, 16
      %v263 = vrot.slane %v261, 1
      %v264 = vor.u32 %v259, %v263
      %v266 = vshll.u32 %v257, 16
      %v268 = vrot.slane %v266, 1
      %v269 = vsel %vm258, %v264, %v268
      %v270 = vshrl.u32 %v257, 16
      %v272 = vor.u32 %v270, %v268
      %v275 = vunpack.c.l.b16 %v253
      %v276 = vunpack.c.l.b16 %v254
      %v277 = vpack.c.b16 %v276, %v275
      %v280 = vsel %vm221, %v269, 0
      %v283 = vsel %vm221, %v272, 0
      %285 = vmatpush.bf16.msra.mxu0 0
      %286 = vmatpush.bf16.msra.mxu0 0
      %287 = vmatpush.bf16.msra.mxu0 0
      %288 = vmatpush.bf16.msra.mxu0 0
      %289 = vmatpush.bf16.msra.mxu0 0
      %290 = vmatpush.bf16.msra.mxu0 0
      %291 = vmatpush.bf16.msra.mxu0 0
      %292 = vmatpush.bf16.msra.mxu0 %v277
      %293 = vmatmul.bf16.gmra.mxu0 %v280
      %v294 = vpop.f32.mrf.mxu0
      %v295 = vadd.f32 0.0, %v294
      %v296 = vpop.f32.mrf.mxu0
      %v297 = vadd.f32 0.0, %v296
      %298 = vmatmul.bf16.gmra.mxu0 %v283
      %v299 = vpop.f32.mrf.mxu0
      %v300 = vadd.f32 0.0, %v299
      %v301 = vpop.f32.mrf.mxu0
      %302 = vdwg.mxu0
      %v303 = vadd.f32 %v249, %v295
      %v304 = vadd.f32 %v250, %v297
      %v305 = vadd.f32 %v251, %v300
      %306 = vst [vmem:[#allocation2] sm:$0xff] %v303
      %307 = vst [vmem:[#allocation2 + $0x8] sm:$0xff] %v304
      %308 = vst [vmem:[#allocation2 + $0x10] sm:$0xff] %v305
      %v309 = vld [vmem:[#allocation2] sm:$0xff]
      %v310 = vld [vmem:[#allocation2 + $0x8] sm:$0xff]
      %v311 = vld [vmem:[#allocation2 + $0x10] sm:$0xff]
      %s312 = scalar_lea.vmem %s1, 16
      %v313 = vld [vmem:[%s312] sm:$0xf]
      %v314 = vld [vmem:[%s312 + $0x4] sm:$0xf]
      %vm315 = vcmask 1046528
      %v316 = vrot.slane %v213, 1
      %v317 = vrot.slane %v257, 1
      %v318 = vsel %vm315, %v316, %v317
      %v321 = vunpack.c.l.b16 %v313
      %v322 = vunpack.c.l.b16 %v314
      %v323 = vpack.c.b16 %v322, %v321
      %v326 = vsel %vm221, %v318, 0
      %v329 = vsel %vm221, %v317, 0
      %331 = vmatpush.bf16.msra.mxu0 0
      %332 = vmatpush.bf16.msra.mxu0 0
      %333 = vmatpush.bf16.msra.mxu0 0
      %334 = vmatpush.bf16.msra.mxu0 0
      %335 = vmatpush.bf16.msra.mxu0 0
      %336 = vmatpush.bf16.msra.mxu0 0
      %337 = vmatpush.bf16.msra.mxu0 0
      %338 = vmatpush.bf16.msra.mxu0 %v323
      %339 = vmatmul.bf16.gmra.mxu0 %v326
      %v340 = vpop.f32.mrf.mxu0
      %v341 = vadd.f32 0.0, %v340
      %v342 = vpop.f32.mrf.mxu0
      %v343 = vadd.f32 0.0, %v342
      %344 = vmatmul.bf16.gmra.mxu0 %v329
      %v345 = vpop.f32.mrf.mxu0
      %v346 = vadd.f32 0.0, %v345
      %v347 = vpop.f32.mrf.mxu0
      %348 = vdwg.mxu0
      %v349 = vadd.f32 %v309, %v341
      %v350 = vadd.f32 %v310, %v343
      %v351 = vadd.f32 %v311, %v346
      %352 = vst [vmem:[#allocation2] sm:$0xff] %v349
      %353 = vst [vmem:[#allocation2 + $0x8] sm:$0xff] %v350
      %354 = vst [vmem:[#allocation2 + $0x10] sm:$0xff] %v351
      %v355 = vld [vmem:[#allocation2] sm:$0xff]
      %v356 = vld [vmem:[#allocation2 + $0x8] sm:$0xff]
      %v357 = vld [vmem:[#allocation2 + $0x10] sm:$0xff]
      %s358 = scalar_lea.vmem %s1, 24
      %v359 = vld [vmem:[%s358] sm:$0xf]
      %v360 = vld [vmem:[%s358 + $0x4] sm:$0xf]
      %vm361 = vcmask 1044480
      %v362 = vrot.slane %v213, 3
      %v363 = vrot.slane %v257, 3
      %v364 = vsel %vm361, %v362, %v363
      %v367 = vunpack.c.l.b16 %v359
      %v368 = vunpack.c.l.b16 %v360
      %v369 = vpack.c.b16 %v368, %v367
      %v372 = vsel %vm221, %v364, 0
      %v375 = vsel %vm221, %v363, 0
      %377 = vmatpush.bf16.msra.mxu0 0
      %378 = vmatpush.bf16.msra.mxu0 0
      %379 = vmatpush.bf16.msra.mxu0 0
      %380 = vmatpush.bf16.msra.mxu0 0
      %381 = vmatpush.bf16.msra.mxu0 0
      %382 = vmatpush.bf16.msra.mxu0 0
      %383 = vmatpush.bf16.msra.mxu0 0
      %384 = vmatpush.bf16.msra.mxu0 %v369
      %385 = vmatmul.bf16.gmra.mxu0 %v372
      %v386 = vpop.f32.mrf.mxu0
      %v387 = vadd.f32 0.0, %v386
      %v388 = vpop.f32.mrf.mxu0
      %v389 = vadd.f32 0.0, %v388
      %390 = vmatmul.bf16.gmra.mxu0 %v375
      %v391 = vpop.f32.mrf.mxu0
      %v392 = vadd.f32 0.0, %v391
      %v393 = vpop.f32.mrf.mxu0
      %394 = vdwg.mxu0
      %v395 = vadd.f32 %v355, %v387
      %v396 = vadd.f32 %v356, %v389
      %v397 = vadd.f32 %v357, %v392
      %398 = vst [vmem:[#allocation2] sm:$0xff] %v395
      %399 = vst [vmem:[#allocation2 + $0x8] sm:$0xff] %v396
      %400 = vst [vmem:[#allocation2 + $0x10] sm:$0xff] %v397
      %v401 = vld [vmem:[#allocation2] sm:$0xff]
      %v402 = vld [vmem:[#allocation2 + $0x8] sm:$0xff]
      %v403 = vld [vmem:[#allocation2 + $0x10] sm:$0xff]
      %s404 = scalar_lea.vmem %s1, 32
      %v405 = vld [vmem:[%s404] sm:$0xf]
      %v406 = vld [vmem:[%s404 + $0x4] sm:$0xf]
      %vm407 = vsmask.f32 4352
      %v408 = vrot.slane %v259, 3
      %v409 = vrot.slane %v261, 4
      %v410 = vor.u32 %v408, %v409
      %v411 = vrot.slane %v270, 3
      %v412 = vrot.slane %v266, 4
      %v413 = vor.u32 %v411, %v412
      %v414 = vsel %vm407, %v410, %v413
      %v417 = vunpack.c.l.b16 %v405
      %v418 = vunpack.c.l.b16 %v406
      %v419 = vpack.c.b16 %v418, %v417
      %v422 = vsel %vm221, %v414, 0
      %v425 = vsel %vm221, %v413, 0
      %427 = vmatpush.bf16.msra.mxu0 0
      %428 = vmatpush.bf16.msra.mxu0 0
      %429 = vmatpush.bf16.msra.mxu0 0
      %430 = vmatpush.bf16.msra.mxu0 0
      %431 = vmatpush.bf16.msra.mxu0 0
      %432 = vmatpush.bf16.msra.mxu0 0
      %433 = vmatpush.bf16.msra.mxu0 0
      %434 = vmatpush.bf16.msra.mxu0 %v419
      %435 = vmatmul.bf16.gmra.mxu0 %v422
      %v436 = vpop.f32.mrf.mxu0
      %v437 = vadd.f32 0.0, %v436
      %v438 = vpop.f32.mrf.mxu0
      %v439 = vadd.f32 0.0, %v438
      %440 = vmatmul.bf16.gmra.mxu0 %v425
      %v441 = vpop.f32.mrf.mxu0
      %v442 = vadd.f32 0.0, %v441
      %v443 = vpop.f32.mrf.mxu0
      %444 = vdwg.mxu0
      %v445 = vadd.f32 %v401, %v437
      %v446 = vadd.f32 %v402, %v439
      %v447 = vadd.f32 %v403, %v442
      %448 = vst [vmem:[#allocation2] sm:$0xff] %v445
      %449 = vst [vmem:[#allocation2 + $0x8] sm:$0xff] %v446
      %450 = vst [vmem:[#allocation2 + $0x10] sm:$0xff] %v447
      %v451 = vld [vmem:[#allocation2] sm:$0xff]
      %v452 = vld [vmem:[#allocation2 + $0x8] sm:$0xff]
      %v453 = vld [vmem:[#allocation2 + $0x10] sm:$0xff]
      %s454 = scalar_lea.vmem %s1, 40
      %v455 = vld [vmem:[%s454] sm:$0xf]
      %v456 = vld [vmem:[%s454 + $0x4] sm:$0xf]
      %v457 = vpack.c.b16 %v212, %v211
      %v458 = vpack.c.b16 %v256, %v256
      %v461 = vunpack.c.l.b16 %v455
      %v462 = vunpack.c.l.b16 %v456
      %v463 = vpack.c.b16 %v462, %v461
      %v466 = vsel %vm221, %v457, 0
      %v469 = vsel %vm221, %v458, 0
      %471 = vmatpush.bf16.msra.mxu0 0
      %472 = vmatpush.bf16.msra.mxu0 0
      %473 = vmatpush.bf16.msra.mxu0 0
      %474 = vmatpush.bf16.msra.mxu0 0
      %475 = vmatpush.bf16.msra.mxu0 0
      %476 = vmatpush.bf16.msra.mxu0 0
      %477 = vmatpush.bf16.msra.mxu0 0
      %478 = vmatpush.bf16.msra.mxu0 %v463
      %479 = vmatmul.bf16.gmra.mxu0 %v466
      %v480 = vpop.f32.mrf.mxu0
      %v481 = vadd.f32 0.0, %v480
      %v482 = vpop.f32.mrf.mxu0
      %v483 = vadd.f32 0.0, %v482
      %484 = vmatmul.bf16.gmra.mxu0 %v469
      %v485 = vpop.f32.mrf.mxu0
      %v486 = vadd.f32 0.0, %v485
      %v487 = vpop.f32.mrf.mxu0
      %488 = vdwg.mxu0
      %v489 = vadd.f32 %v451, %v481
      %v490 = vadd.f32 %v452, %v483
      %v491 = vadd.f32 %v453, %v486
      %492 = vst [vmem:[#allocation2] sm:$0xff] %v489
      %493 = vst [vmem:[#allocation2 + $0x8] sm:$0xff] %v490
      %494 = vst [vmem:[#allocation2 + $0x10] sm:$0xff] %v491
      %v495 = vld [vmem:[#allocation2] sm:$0xff]
      %v496 = vld [vmem:[#allocation2 + $0x8] sm:$0xff]
      %v497 = vld [vmem:[#allocation2 + $0x10] sm:$0xff]
      %s498 = scalar_lea.vmem %s1, 48
      %v499 = vld [vmem:[%s498] sm:$0xf]
      %v500 = vld [vmem:[%s498 + $0x4] sm:$0xf]
      %v502 = vunpack.c.l.b16 %v204
      %v503 = vpack.c.b16 %v502, %v256
      %vm504 = vcmask 1045504
      %v505 = vrot.slane %v457, 2
      %v506 = vrot.slane %v503, 2
      %v507 = vsel %vm504, %v505, %v506
      %v510 = vunpack.c.l.b16 %v499
      %v511 = vunpack.c.l.b16 %v500
      %v512 = vpack.c.b16 %v511, %v510
      %v515 = vsel %vm221, %v507, 0
      %v518 = vsel %vm221, %v506, 0
      %520 = vmatpush.bf16.msra.mxu0 0
      %521 = vmatpush.bf16.msra.mxu0 0
      %522 = vmatpush.bf16.msra.mxu0 0
      %523 = vmatpush.bf16.msra.mxu0 0
      %524 = vmatpush.bf16.msra.mxu0 0
      %525 = vmatpush.bf16.msra.mxu0 0
      %526 = vmatpush.bf16.msra.mxu0 0
      %527 = vmatpush.bf16.msra.mxu0 %v512
      %528 = vmatmul.bf16.gmra.mxu0 %v515
      %v529 = vpop.f32.mrf.mxu0
      %v530 = vadd.f32 0.0, %v529
      %v531 = vpop.f32.mrf.mxu0
      %v532 = vadd.f32 0.0, %v531
      %533 = vmatmul.bf16.gmra.mxu0 %v518
      %v534 = vpop.f32.mrf.mxu0
      %v535 = vadd.f32 0.0, %v534
      %v536 = vpop.f32.mrf.mxu0
      %537 = vdwg.mxu0
      %v538 = vadd.f32 %v495, %v530
      %v539 = vadd.f32 %v496, %v532
      %v540 = vadd.f32 %v497, %v535
      %541 = vst [vmem:[#allocation2] sm:$0xff] %v538
      %542 = vst [vmem:[#allocation2 + $0x8] sm:$0xff] %v539
      %543 = vst [vmem:[#allocation2 + $0x10] sm:$0xff] %v540
      %v544 = vld [vmem:[#allocation2] sm:$0xff]
      %v545 = vld [vmem:[#allocation2 + $0x8] sm:$0xff]
      %v546 = vld [vmem:[#allocation2 + $0x10] sm:$0xff]
      %s547 = scalar_lea.vmem %s1, 56
      %v548 = vld [vmem:[%s547] sm:$0xf]
      %v549 = vld [vmem:[%s547 + $0x4] sm:$0xf]
      %vm550 = vsmask.f32 5376
      %v551 = vshrl.u32 %v457, 16
      %v553 = vrot.slane %v551, 2
      %v554 = vshll.u32 %v457, 16
      %v556 = vrot.slane %v554, 3
      %v557 = vor.u32 %v553, %v556
      %v559 = vshrl.u32 %v503, 16
      %v561 = vrot.slane %v559, 2
      %v562 = vshll.u32 %v503, 16
      %v564 = vrot.slane %v562, 3
      %v565 = vor.u32 %v561, %v564
      %v566 = vsel %vm550, %v557, %v565
      %v569 = vunpack.c.l.b16 %v548
      %v570 = vunpack.c.l.b16 %v549
      %v571 = vpack.c.b16 %v570, %v569
      %v574 = vsel %vm221, %v566, 0
      %v577 = vsel %vm221, %v565, 0
      %579 = vmatpush.bf16.msra.mxu0 0
      %580 = vmatpush.bf16.msra.mxu0 0
      %581 = vmatpush.bf16.msra.mxu0 0
      %582 = vmatpush.bf16.msra.mxu0 0
      %583 = vmatpush.bf16.msra.mxu0 0
      %584 = vmatpush.bf16.msra.mxu0 0
      %585 = vmatpush.bf16.msra.mxu0 0
      %586 = vmatpush.bf16.msra.mxu0 %v571
      %587 = vmatmul.bf16.gmra.mxu0 %v574
      %v588 = vpop.f32.mrf.mxu0
      %v589 = vadd.f32 0.0, %v588
      %v590 = vpop.f32.mrf.mxu0
      %v591 = vadd.f32 0.0, %v590
      %592 = vmatmul.bf16.gmra.mxu0 %v577
      %v593 = vpop.f32.mrf.mxu0
      %v594 = vadd.f32 0.0, %v593
      %v595 = vpop.f32.mrf.mxu0
      %596 = vdwg.mxu0
      %v597 = vadd.f32 %v544, %v589
      %v598 = vadd.f32 %v545, %v591
      %v599 = vadd.f32 %v546, %v594
      %600 = vst [vmem:[#allocation2] sm:$0xff] %v597
      %601 = vst [vmem:[#allocation2 + $0x8] sm:$0xff] %v598
      %602 = vst [vmem:[#allocation2 + $0x10] sm:$0xff] %v599
      %v603 = vld [vmem:[#allocation2] sm:$0xff]
      %v604 = vld [vmem:[#allocation2 + $0x8] sm:$0xff]
      %v605 = vld [vmem:[#allocation2 + $0x10] sm:$0xff]
      %s606 = scalar_lea.vmem %s1, 64
      %v607 = vld [vmem:[%s606] sm:$0xf]
      %v608 = vld [vmem:[%s606 + $0x4] sm:$0xf]
      %v609 = vrot.slane %v457, 3
      %v610 = vrot.slane %v503, 3
      %v611 = vsel %vm361, %v609, %v610
      %v614 = vunpack.c.l.b16 %v607
      %v615 = vunpack.c.l.b16 %v608
      %v616 = vpack.c.b16 %v615, %v614
      %v619 = vsel %vm221, %v611, 0
      %v622 = vsel %vm221, %v610, 0
      %624 = vmatpush.bf16.msra.mxu0 0
      %625 = vmatpush.bf16.msra.mxu0 0
      %626 = vmatpush.bf16.msra.mxu0 0
      %627 = vmatpush.bf16.msra.mxu0 0
      %628 = vmatpush.bf16.msra.mxu0 0
      %629 = vmatpush.bf16.msra.mxu0 0
      %630 = vmatpush.bf16.msra.mxu0 0
      %631 = vmatpush.bf16.msra.mxu0 %v616
      %632 = vmatmul.bf16.gmra.mxu0 %v619
      %v633 = vpop.f32.mrf.mxu0
      %v634 = vadd.f32 0.0, %v633
      %v635 = vpop.f32.mrf.mxu0
      %v636 = vadd.f32 0.0, %v635
      %637 = vmatmul.bf16.gmra.mxu0 %v622
      %v638 = vpop.f32.mrf.mxu0
      %v639 = vadd.f32 0.0, %v638
      %v640 = vpop.f32.mrf.mxu0
      %641 = vdwg.mxu0
      %v642 = vadd.f32 %v603, %v634
      %v643 = vadd.f32 %v604, %v636
      %v644 = vadd.f32 %v605, %v639
      %645 = vst [vmem:[#allocation2] sm:$0xff] %v642
      %646 = vst [vmem:[#allocation2 + $0x8] sm:$0xff] %v643
      %647 = vst [vmem:[#allocation2 + $0x10] sm:$0xff] %v644
      %v648 = vld [vmem:[#allocation2] sm:$0xff]
      %v649 = vld [vmem:[#allocation2 + $0x8] sm:$0xff]
      %v650 = vld [vmem:[#allocation2 + $0x10] sm:$0xff]
      %v651 = vld [vmem:[%s2] sm:$0x1]
      %v653 = vperm.slane %v651, 0
      %v655 = vadd.f32 %v648, %v653
      %v656 = vadd.f32 %v649, %v653
      %v657 = vadd.f32 %v650, %v653
      %v658 = vmax.f32 %v655, 0.0
      %v659 = vmax.f32 %v656, 0.0
      %v660 = vmax.f32 %v657, 0.0
      %v661 = vpack.c.bf16 %v658, %v658
      %v662 = vpack.c.bf16 %v659, %v659
      %v663 = vpack.c.bf16 %v660, %v660
      %664 = vst [vmem:[%s192] sm:$0xf] %v661
      %665 = vst [vmem:[%s192 + $0x4] sm:$0xf] %v662
      %666 = vst [vmem:[%s192 + $0x8] sm:$0xf] %v663
      %s667 = smul.u32 3, %s19
      %p668 = scmp.lt.s32.totalorder %s18, 1
      %s669 = scalar_select %p668, %s18, 1
      %p670 = scmp.lt.s32.totalorder %s667, 2
      %s671 = scalar_select %p670, %s667, 2
      %s672 = smul.addr %s669, 3
      %s673 = sadd.s32 %s671, %s672
      %s674 = smul.addr %s673, 4
      %s675 = scalar_lea.vmem %s3, %s674
      // Predicated region
      $region33: #{_forward_impl.23} parent=31 // pred_check
        %p676 = pneg %p114
      $region34: #{_forward_impl.23} parent=31 // pred_check_branch
        %678 = sbr.rel (%p676) target = $region36
      $region35: #{_forward_impl.23} parent=31 // pred_region
        %s679 = smul.u32 3, %s19
      $region36: #{_forward_impl.23} parent=31 // pred_fallthru
        _
    $region32: #{_forward_impl.23} parent=5 // pred_fallthru
      _
    %p680 = scmp.le.s32.totalorder 2, %s9
    // Predicated region
    $region37: #{_forward_impl.23} parent=5 // pred_check
      %p681 = pneg %p680
    $region38: #{_forward_impl.23} parent=5 // pred_check_branch
      %683 = sbr.rel (%p681) target = $region40
    $region39: #{_forward_impl.23} parent=5 // pred_region
      %s684 = ssub.s32 %s9, 2
      // Predicated region
      $region41: #{_forward_impl.23} parent=39 // pred_check
        %p685 = pneg %p120
      $region42: #{_forward_impl.23} parent=39 // pred_check_branch
        %687 = sbr.rel (%p685) target = $region44
      $region43: #{_forward_impl.23} parent=39 // pred_region
        %s688 = smul.u32 3, %s21
        %p689 = scmp.lt.s32.totalorder %s20, 1
        %s690 = scalar_select %p689, %s20, 1
        %p691 = scmp.lt.s32.totalorder %s688, 2
        %s692 = scalar_select %p691, %s688, 2
        %s693 = smul.addr %s690, 3
        %s694 = sadd.s32 %s692, %s693
        %s695 = smul.addr %s694, 4
        %s696 = scalar_lea.vmem %s3, %s695
      $region44: #{_forward_impl.23} parent=39 // pred_fallthru
        _
    $region40: #{_forward_impl.23} parent=5 // pred_fallthru
      _
  $region6: #{_forward_impl.23} parent=0 // loop_footer
    %s13 = sadd.s32 1, %s9
  $region7: #{_forward_impl.23} parent=0 // loop_footer_branch
    %8 = sbr.rel target = $region3
  $region8: #{_forward_impl.23} parent=0 // loop_exit
    _

// kernel: _forward_impl.25
$region0: #{_forward_impl.25}
  #allocation0 [shape = 'u32[]', space=smem, size = 0x4, offset = 0x4, fixed_abs, tag = 'smem constant byte address 0x4 - core index']
  #allocation1 [shape = 'u32[72,128]{1,0:T(1,128)}', space=vmem, size = 0x9000, scoped, tag = 'internal scratch']
  %s0 = inlined_call_operand.vmem [shape: bf16[8,144], index: 0, kind: input, shape index: {}]
  %s1 = inlined_call_operand.vmem [shape: bf16[144,128], index: 1, kind: input, shape index: {}]
  %s2 = inlined_call_operand.vmem [shape: f32[1,128], index: 2, kind: input, shape index: {}]
  %s3 = inlined_call_operand.vmem [shape: bf16[8,128], index: 3, kind: output, shape index: {}]
  %s4 = sld [smem:[#allocation0]]
  $region22: #{_forward_impl.25} parent=0
    _
  %s6 = ssub.s32 1, %s4
  %s7 = scalar_select 0, %s6, %s4
  // Predicated region
  $region2: #{_forward_impl.25} parent=0 // pred_check
    _
  $region3: #{_forward_impl.25} parent=0 // pred_check_branch
    %9 = sbr.rel (0) target = $region5
  $region4: #{_forward_impl.25} parent=0 // pred_region
    _
  $region5: #{_forward_impl.25} parent=0 // pred_fallthru
    _
  // Predicated region
  $region6: #{_forward_impl.25} parent=0 // pred_check
    _
  $region7: #{_forward_impl.25} parent=0 // pred_check_branch
    %11 = sbr.rel (0) target = $region9
  $region8: #{_forward_impl.25} parent=0 // pred_region
    _
  $region9: #{_forward_impl.25} parent=0 // pred_fallthru
    _
  // Predicated region
  $region10: #{_forward_impl.25} parent=0 // pred_check
    _
  $region11: #{_forward_impl.25} parent=0 // pred_check_branch
    %13 = sbr.rel (0) target = $region13
  $region12: #{_forward_impl.25} parent=0 // pred_region
    _
  $region13: #{_forward_impl.25} parent=0 // pred_fallthru
    _
  %v15 = vld [vmem:[%s0] sm:$0xff]
  %v16 = vld [vmem:[%s1] sm:$0xf]
  %v17 = vld [vmem:[%s1 + $0x4] sm:$0xf]
  %v18 = vld [vmem:[%s1 + $0x8] sm:$0xf]
  %v19 = vld [vmem:[%s1 + $0xc] sm:$0xf]
  %v20 = vld [vmem:[%s1 + $0x10] sm:$0xf]
  %v21 = vld [vmem:[%s1 + $0x14] sm:$0xf]
  %v22 = vld [vmem:[%s1 + $0x18] sm:$0xf]
  %v23 = vld [vmem:[%s1 + $0x1c] sm:$0xf]
  %v24 = vld [vmem:[%s1 + $0x20] sm:$0xf]
  %v25 = vld [vmem:[%s1 + $0x24] sm:$0xf]
  %v26 = vld [vmem:[%s1 + $0x28] sm:$0xf]
  %v27 = vld [vmem:[%s1 + $0x2c] sm:$0xf]
  %v28 = vld [vmem:[%s1 + $0x30] sm:$0xf]
  %v29 = vld [vmem:[%s1 + $0x34] sm:$0xf]
  %v30 = vld [vmem:[%s1 + $0x38] sm:$0xf]
  %v31 = vld [vmem:[%s1 + $0x3c] sm:$0xf]
  %v32 = vld [vmem:[%s1 + $0x40] sm:$0xf]
  %v33 = vld [vmem:[%s1 + $0x44] sm:$0xf]
  %v34 = vld [vmem:[%s2] sm:$0x1]
  %v36 = vperm.slane %v34, 0
  %v39 = vunpack.c.l.b16 %v15
  %v40 = vunpack.c.h.b16 %v15
  %v41 = vpack.c.b16 %v39, %v39
  %v42 = vpack.c.b16 %v40, %v40
  %v62 = vunpack.c.l.b16 %v16
  %v63 = vunpack.c.l.b16 %v17
  %v64 = vunpack.c.l.b16 %v18
  %v65 = vunpack.c.l.b16 %v19
  %v66 = vunpack.c.l.b16 %v20
  %v67 = vunpack.c.l.b16 %v21
  %v68 = vunpack.c.l.b16 %v22
  %v69 = vunpack.c.l.b16 %v23
  %v70 = vunpack.c.l.b16 %v24
  %v71 = vunpack.c.l.b16 %v25
  %v72 = vunpack.c.l.b16 %v26
  %v73 = vunpack.c.l.b16 %v27
  %v74 = vunpack.c.l.b16 %v28
  %v75 = vunpack.c.l.b16 %v29
  %v76 = vunpack.c.l.b16 %v30
  %v77 = vunpack.c.l.b16 %v31
  %v78 = vunpack.c.l.b16 %v32
  %v79 = vunpack.c.l.b16 %v33
  %v80 = vpack.c.b16 %v63, %v62
  %v81 = vpack.c.b16 %v65, %v64
  %v82 = vpack.c.b16 %v67, %v66
  %v83 = vpack.c.b16 %v69, %v68
  %v84 = vpack.c.b16 %v71, %v70
  %v85 = vpack.c.b16 %v73, %v72
  %v86 = vpack.c.b16 %v75, %v74
  %v87 = vpack.c.b16 %v77, %v76
  %v88 = vpack.c.b16 %v79, %v78
  %vm98 = vcmask 130048
  %v100 = vsel %vm98, %v42, 0
  %102 = vmatpush.bf16.msra.mxu0 %v87
  %103 = vmatpush.bf16.msra.mxu0 %v86
  %104 = vmatpush.bf16.msra.mxu0 %v85
  %105 = vmatpush.bf16.msra.mxu0 %v84
  %106 = vmatpush.bf16.msra.mxu0 %v83
  %107 = vmatpush.bf16.msra.mxu0 %v82
  %108 = vmatpush.bf16.msra.mxu0 %v81
  %109 = vmatpush.bf16.msra.mxu0 %v80
  %110 = vmatmul.bf16.gmra.mxu0 %v41
  %v111 = vpop.f32.mrf.mxu0
  %v112 = vadd.f32 %v36, %v111
  %v113 = vpop.f32.mrf.mxu0
  %114 = vdwg.mxu0
  %115 = vmatpush.bf16.msra.mxu0 0
  %116 = vmatpush.bf16.msra.mxu0 0
  %117 = vmatpush.bf16.msra.mxu0 0
  %118 = vmatpush.bf16.msra.mxu0 0
  %119 = vmatpush.bf16.msra.mxu0 0
  %120 = vmatpush.bf16.msra.mxu0 0
  %121 = vmatpush.bf16.msra.mxu0 0
  %122 = vmatpush.bf16.msra.mxu0 %v88
  %123 = vmatmul.bf16.gmra.mxu0 %v100
  %v124 = vpop.f32.mrf.mxu0
  %v125 = vadd.f32 %v112, %v124
  %v126 = vpop.f32.mrf.mxu0
  %127 = vdwg.mxu0
  %v128 = vmax.f32 %v125, 0.0
  %v129 = vpack.c.bf16 %v128, %v128
  %130 = vst [vmem:[%s3] sm:$0xf] %v129
  // Predicated region
  $region14: #{_forward_impl.25} parent=0 // pred_check
    _
  $region15: #{_forward_impl.25} parent=0 // pred_check_branch
    %132 = sbr.rel (0) target = $region17
  $region16: #{_forward_impl.25} parent=0 // pred_region
    _
  $region17: #{_forward_impl.25} parent=0 // pred_fallthru
    _
  // Predicated region
  $region18: #{_forward_impl.25} parent=0 // pred_check
    _
  $region19: #{_forward_impl.25} parent=0 // pred_check_branch
    %134 = sbr.rel (0) target = $region21
  $region20: #{_forward_impl.25} parent=0 // pred_region
    _
  $region21: #{_forward_impl.25} parent=0 // pred_fallthru
    _

// kernel: _forward_impl.27
$region0: #{_forward_impl.27}
  #allocation0 [shape = 'u32[]', space=smem, size = 0x4, offset = 0x4, fixed_abs, tag = 'smem constant byte address 0x4 - core index']
  #allocation1 [shape = 'u32[72,128]{1,0:T(1,128)}', space=vmem, size = 0x9000, scoped, tag = 'internal scratch']
  #allocation2 [shape = 'f32[8,128]{1,0:T(8,128)}', space=vmem, size = 0x1000, scoped, tag = 'scratch operand']
  %s0 = inlined_call_operand.vmem [shape: bf16[2,24,32], index: 0, kind: input, shape index: {}]
  %s1 = inlined_call_operand.vmem [shape: bf16[9,32,128], index: 1, kind: input, shape index: {}]
  %s2 = inlined_call_operand.vmem [shape: f32[1,128], index: 2, kind: input, shape index: {}]
  %s3 = inlined_call_operand.vmem [shape: bf16[2,8,128], index: 3, kind: input, shape index: {}]
  %s4 = inlined_call_operand.vmem [shape: bf16[2,8,128], index: 4, kind: output, shape index: {}]
  %s5 = sld [smem:[#allocation0]]
  $region49: #{_forward_impl.27} parent=0
    _
  %s7 = ssub.s32 1, %s5
  %s8 = scalar_select 0, %s7, %s5
  loop: start=0, step=1, limit=4
  $region2: #{_forward_impl.27} parent=0 // loop_pre_header
    _
  $region3: #{_forward_impl.27} parent=0 // loop_header
    %s10 = sphi 0, %s14
    %p11 = scmp.ge.s32.totalorder %s10, 4
    %s17 = sphi 0, %s29
    %s18 = sphi 0, %s25
    %s19 = sphi 0, %s17
    %s20 = sphi 0, %s18
    %s21 = sphi 0, %s19
    %s22 = sphi 0, %s20
    %s32 = sphi 0, %s34
    %s35 = sphi 0, %s32
    %s36 = sphi 0, %s35
    %s52 = sphi 0, %s36
    %s56 = sphi 0, %s56
    %s58 = sphi 0, %s56
    %s59 = sphi 0, %s58
    %s73 = sphi 0, %s59
    %s77 = sphi 0, %s77
    %s79 = sphi 0, %s77
    %s80 = sphi 0, %s79
    %s94 = sphi 0, %s80
    %s102 = sphi 0, %s104
    %s105 = sphi 0, %s102
    %s106 = sphi 0, %s105
    %s122 = sphi 0, %s106
    %s130 = sphi 0, %s132
    %s133 = sphi 0, %s130
    %s134 = sphi 0, %s133
    %s150 = sphi 0, %s134
  $region4: #{_forward_impl.27} parent=0 // loop_header_branch
    %13 = sbr.rel (%p11) target = $region8
  $region5: #{_forward_impl.27} parent=0 // loop_body
    %s15 = ssub.s32 %s10, 1
    %s16 = ssub.s32 %s10, 2
    %s23 = sadd.s32 1, %s18
    %p24 = scmp.ge.s32.totalorder %s23, 1
    %s25 = scalar_select %p24, 0, %s23
    %s26 = sadd.s32 1, %s17
    %s27 = scalar_select %p24, %s26, %s17
    %p28 = scmp.ge.s32.totalorder %s27, 2
    %s29 = scalar_select %p28, 0, %s27
    %s30 = ssub.s32 %s17, %s29
    %p31 = scmp.eq.s32.totalorder %s30, 0
    %s33 = sadd.s32 %s32, 1
    %s34 = scalar_select %p31, %s32, %s33
    %p37 = pneg %p31
    %p38 = scmp.eq.s32.totalorder %s10, 1
    %p39 = por %p37, %p38
    %p40 = scmp.ne.s32.totalorder %s32, %s35
    %p41 = scmp.eq.s32.totalorder %s10, 0
    %p42 = por %p40, %p41
    %p43 = scmp.ne.s32.totalorder %s32, %s35
    %p44 = scmp.eq.s32.totalorder %s15, 1
    %p45 = por %p43, %p44
    %p46 = scmp.ne.s32.totalorder %s35, %s36
    %p47 = scmp.eq.s32.totalorder %s15, 0
    %p48 = por %p46, %p47
    %p49 = scmp.ne.s32.totalorder %s35, %s36
    %p50 = scmp.eq.s32.totalorder %s16, 1
    %p51 = por %p49, %p50
    %p53 = scmp.ne.s32.totalorder %s36, %s52
    %p54 = scmp.eq.s32.totalorder %s16, 0
    %p55 = por %p53, %p54
    %s57 = sadd.s32 %s56, 1
    %p60 = scmp.eq.s32.totalorder %s10, 1
    %p61 = scmp.ne.s32.totalorder %s56, %s58
    %p62 = scmp.eq.s32.totalorder %s10, 0
    %p63 = por %p61, %p62
    %p64 = scmp.ne.s32.totalorder %s56, %s58
    %p65 = scmp.eq.s32.totalorder %s15, 1
    %p66 = por %p64, %p65
    %p67 = scmp.ne.s32.totalorder %s58, %s59
    %p68 = scmp.eq.s32.totalorder %s15, 0
    %p69 = por %p67, %p68
    %p70 = scmp.ne.s32.totalorder %s58, %s59
    %p71 = scmp.eq.s32.totalorder %s16, 1
    %p72 = por %p70, %p71
    %p74 = scmp.ne.s32.totalorder %s59, %s73
    %p75 = scmp.eq.s32.totalorder %s16, 0
    %p76 = por %p74, %p75
    %s78 = sadd.s32 %s77, 1
    %p81 = scmp.eq.s32.totalorder %s10, 1
    %p82 = scmp.ne.s32.totalorder %s77, %s79
    %p83 = scmp.eq.s32.totalorder %s10, 0
    %p84 = por %p82, %p83
    %p85 = scmp.ne.s32.totalorder %s77, %s79
    %p86 = scmp.eq.s32.totalorder %s15, 1
    %p87 = por %p85, %p86
    %p88 = scmp.ne.s32.totalorder %s79, %s80
    %p89 = scmp.eq.s32.totalorder %s15, 0
    %p90 = por %p88, %p89
    %p91 = scmp.ne.s32.totalorder %s79, %s80
    %p92 = scmp.eq.s32.totalorder %s16, 1
    %p93 = por %p91, %p92
    %p95 = scmp.ne.s32.totalorder %s80, %s94
    %p96 = scmp.eq.s32.totalorder %s16, 0
    %p97 = por %p95, %p96
    %s98 = ssub.s32 %s17, %s29
    %s99 = ssub.s32 %s18, %s25
    %s100 = sor.u32 %s98, %s99
    %p101 = scmp.eq.s32.totalorder %s100, 0
    %s103 = sadd.s32 %s102, 1
    %s104 = scalar_select %p101, %s102, %s103
    %p107 = pneg %p101
    %p108 = scmp.eq.s32.totalorder %s10, 1
    %p109 = por %p107, %p108
    %p110 = scmp.ne.s32.totalorder %s102, %s105
    %p111 = scmp.eq.s32.totalorder %s10, 0
    %p112 = por %p110, %p111
    %p113 = scmp.ne.s32.totalorder %s102, %s105
    %p114 = scmp.eq.s32.totalorder %s15, 1
    %p115 = por %p113, %p114
    %p116 = scmp.ne.s32.totalorder %s105, %s106
    %p117 = scmp.eq.s32.totalorder %s15, 0
    %p118 = por %p116, %p117
    %p119 = scmp.ne.s32.totalorder %s105, %s106
    %p120 = scmp.eq.s32.totalorder %s16, 1
    %p121 = por %p119, %p120
    %p123 = scmp.ne.s32.totalorder %s106, %s122
    %p124 = scmp.eq.s32.totalorder %s16, 0
    %p125 = por %p123, %p124
    %s126 = ssub.s32 %s17, %s29
    %s127 = ssub.s32 %s18, %s25
    %s128 = sor.u32 %s126, %s127
    %p129 = scmp.eq.s32.totalorder %s128, 0
    %s131 = sadd.s32 %s130, 1
    %s132 = scalar_select %p129, %s130, %s131
    %p135 = pneg %p129
    %p136 = scmp.eq.s32.totalorder %s10, 1
    %p137 = por %p135, %p136
    %p138 = scmp.ne.s32.totalorder %s130, %s133
    %p139 = scmp.eq.s32.totalorder %s10, 0
    %p140 = por %p138, %p139
    %p141 = scmp.ne.s32.totalorder %s130, %s133
    %p142 = scmp.eq.s32.totalorder %s15, 1
    %p143 = por %p141, %p142
    %p144 = scmp.ne.s32.totalorder %s133, %s134
    %p145 = scmp.eq.s32.totalorder %s15, 0
    %p146 = por %p144, %p145
    %p147 = scmp.ne.s32.totalorder %s133, %s134
    %p148 = scmp.eq.s32.totalorder %s16, 1
    %p149 = por %p147, %p148
    %p151 = scmp.ne.s32.totalorder %s134, %s150
    %p152 = scmp.eq.s32.totalorder %s16, 0
    %p153 = por %p151, %p152
    %p154 = scmp.le.s32.totalorder 1, %s10
    %p155 = scmp.lt.s32.totalorder %s10, 3
    %p156 = pnand %p154, %p155
    %p157 = pneg %p156
    // Predicated region
    $region9: #{_forward_impl.27} parent=5 // pred_check
      _
    $region10: #{_forward_impl.27} parent=5 // pred_check_branch
      %159 = sbr.rel (%p156) target = $region12
    $region11: #{_forward_impl.27} parent=5 // pred_region
      %s160 = ssub.s32 %s10, 1
      // Predicated region
      $region13: #{_forward_impl.27} parent=11 // pred_check
        %p161 = pneg %p69
      $region14: #{_forward_impl.27} parent=11 // pred_check_branch
        %163 = sbr.rel (%p161) target = $region16
      $region15: #{_forward_impl.27} parent=11 // pred_region
        _
      $region16: #{_forward_impl.27} parent=11 // pred_fallthru
        _
      // Predicated region
      $region17: #{_forward_impl.27} parent=11 // pred_check
        %p164 = pneg %p90
      $region18: #{_forward_impl.27} parent=11 // pred_check_branch
        %166 = sbr.rel (%p164) target = $region20
      $region19: #{_forward_impl.27} parent=11 // pred_region
        _
      $region20: #{_forward_impl.27} parent=11 // pred_fallthru
        _
    $region12: #{_forward_impl.27} parent=5 // pred_fallthru
      _
    %p167 = scmp.lt.s32.totalorder %s10, 2
    // Predicated region
    $region21: #{_forward_impl.27} parent=5 // pred_check
      %p168 = pneg %p167
    $region22: #{_forward_impl.27} parent=5 // pred_check_branch
      %170 = sbr.rel (%p168) target = $region24
    $region23: #{_forward_impl.27} parent=5 // pred_region
      // Predicated region
      $region25: #{_forward_impl.27} parent=23 // pred_check
        %p171 = pneg %p42
      $region26: #{_forward_impl.27} parent=23 // pred_check_branch
        %173 = sbr.rel (%p171) target = $region28
      $region27: #{_forward_impl.27} parent=23 // pred_region
        %p174 = scmp.lt.s32.totalorder %s17, 1
        %s175 = scalar_select %p174, %s17, 1
        %s176 = smul.addr %s175, 3
        %s177 = smul.addr %s176, 4
        %s178 = scalar_lea.vmem %s0, %s177
      $region28: #{_forward_impl.27} parent=23 // pred_fallthru
        _
      // Predicated region
      $region29: #{_forward_impl.27} parent=23 // pred_check
        %p179 = pneg %p112
      $region30: #{_forward_impl.27} parent=23 // pred_check_branch
        %181 = sbr.rel (%p179) target = $region32
      $region31: #{_forward_impl.27} parent=23 // pred_region
        %p182 = scmp.lt.s32.totalorder %s17, 1
        %s183 = scalar_select %p182, %s17, 1
        %p184 = scmp.lt.s32.totalorder %s18, 0
        %s185 = scalar_select %p184, %s18, 0
        %s186 = sadd.s32 %s185, %s183
        %s187 = smul.addr %s186, 4
        %s188 = scalar_lea.vmem %s3, %s187
      $region32: #{_forward_impl.27} parent=23 // pred_fallthru
        _
    $region24: #{_forward_impl.27} parent=5 // pred_fallthru
      _
    %p189 = scmp.le.s32.totalorder 1, %s10
    %p190 = scmp.lt.s32.totalorder %s10, 3
    %p191 = pnand %p189, %p190
    %p192 = pneg %p191
    // Predicated region
    $region33: #{_forward_impl.27} parent=5 // pred_check
      _
    $region34: #{_forward_impl.27} parent=5 // pred_check_branch
      %194 = sbr.rel (%p191) target = $region36
    $region35: #{_forward_impl.27} parent=5 // pred_region
      %s195 = ssub.s32 %s10, 1
      %p196 = scmp.lt.s32.totalorder %s19, 1
      %s197 = scalar_select %p196, %s19, 1
      %s198 = smul.addr %s197, 3
      %s199 = smul.addr %s198, 4
      %s200 = scalar_lea.vmem %s0, %s199
      %p201 = pneg %p48
      %p202 = pneg %p45
      %p203 = pneg %p69
      %p204 = pneg %p66
      %p205 = pneg %p90
      %p206 = pneg %p87
      %p207 = scmp.lt.s32.totalorder %s19, 1
      %s208 = scalar_select %p207, %s19, 1
      %p209 = scmp.lt.s32.totalorder %s20, 0
      %s210 = scalar_select %p209, %s20, 0
      %s211 = sadd.s32 %s210, %s208
      %s212 = smul.addr %s211, 4
      %s213 = scalar_lea.vmem %s3, %s212
      %p214 = pneg %p118
      %p215 = pneg %p115
      %p216 = pneg %p146
      %p217 = pneg %p143
      %p218 = scmp.lt.s32.totalorder %s19, 1
      %s219 = scalar_select %p218, %s19, 1
      %p220 = scmp.lt.s32.totalorder %s20, 0
      %s221 = scalar_select %p220, %s20, 0
      %s222 = sadd.s32 %s221, %s219
      %s223 = smul.addr %s222, 4
      %s224 = scalar_lea.vmem %s4, %s223
      %p225 = scmp.lt.s32.totalorder %s19, 1
      %s226 = scalar_select %p225, %s19, 1
      %s227 = smul.addr %s226, 3
      %s228 = smul.addr %s227, 4
      %s229 = scalar_lea.vmem %s0, %s228
      %p230 = scmp.lt.s32.totalorder %s19, 1
      %s231 = scalar_select %p230, %s19, 1
      %p232 = scmp.lt.s32.totalorder %s20, 0
      %s233 = scalar_select %p232, %s20, 0
      %s234 = sadd.s32 %s233, %s231
      %s235 = smul.addr %s234, 4
      %s236 = scalar_lea.vmem %s3, %s235
      %p237 = scmp.lt.s32.totalorder %s19, 1
      %s238 = scalar_select %p237, %s19, 1
      %p239 = scmp.lt.s32.totalorder %s20, 0
      %s240 = scalar_select %p239, %s20, 0
      %s241 = sadd.s32 %s240, %s238
      %s242 = smul.addr %s241, 4
      %s243 = scalar_lea.vmem %s4, %s242
      %s245 = smul.u32 %s20, 8
      %s246 = sshra.s32 %s245, 3
      %s247 = sand.u32 %s245, 7
      %s248 = smul.addr %s246, 4
      %s249 = scalar_lea.vmem %s229, %s248
      %v250 = vld [vmem:[%s249] sm:$0xf]
      %v251 = vld [vmem:[%s249 + $0x4] sm:$0xf]
      %v252 = vld [vmem:[%s249 + $0x8] sm:$0xf]
      %v253 = vld [vmem:[%s1] sm:$0xf]
      %v254 = vld [vmem:[%s1 + $0x4] sm:$0xf]
      %v255 = vld [vmem:[%s1 + $0x8] sm:$0xf]
      %v256 = vld [vmem:[%s1 + $0xc] sm:$0xf]
      %v261 = vunpack.c.l.b16 %v253
      %v262 = vunpack.c.l.b16 %v254
      %v263 = vunpack.c.l.b16 %v255
      %v264 = vunpack.c.l.b16 %v256
      %v265 = vpack.c.b16 %v262, %v261
      %v266 = vpack.c.b16 %v264, %v263
      %vm269 = vcmask 261120
      %v271 = vsel %vm269, %v250, 0
      %273 = vmatpush.bf16.msra.mxu0 0
      %274 = vmatpush.bf16.msra.mxu0 0
      %275 = vmatpush.bf16.msra.mxu0 0
      %276 = vmatpush.bf16.msra.mxu0 0
      %277 = vmatpush.bf16.msra.mxu0 0
      %278 = vmatpush.bf16.msra.mxu0 0
      %279 = vmatpush.bf16.msra.mxu0 %v266
      %280 = vmatpush.bf16.msra.mxu0 %v265
      %281 = vmatmul.bf16.gmra.mxu0 %v271
      %v282 = vpop.f32.mrf.mxu0
      %v283 = vadd.f32 0.0, %v282
      %v284 = vpop.f32.mrf.mxu0
      %285 = vdwg.mxu0
      %286 = vst [vmem:[#allocation2] sm:$0xff] %v283
      %v287 = vld [vmem:[#allocation2] sm:$0xff]
      %s288 = scalar_lea.vmem %s1, 16
      %v289 = vld [vmem:[%s288] sm:$0xf]
      %v290 = vld [vmem:[%s288 + $0x4] sm:$0xf]
      %v291 = vld [vmem:[%s288 + $0x8] sm:$0xf]
      %v292 = vld [vmem:[%s288 + $0xc] sm:$0xf]
      %v295 = vunpack.c.l.b16 %v250
      %v296 = vunpack.c.l.b16 %v251
      %v297 = vpack.c.b16 %v296, %v295
      %v299 = vshrl.u32 %v297, 16
      %v301 = vshll.u32 %v297, 16
      %v303 = vrot.slane %v301, 1
      %v304 = vor.u32 %v299, %v303
      %v309 = vunpack.c.l.b16 %v289
      %v310 = vunpack.c.l.b16 %v290
      %v311 = vunpack.c.l.b16 %v291
      %v312 = vunpack.c.l.b16 %v292
      %v313 = vpack.c.b16 %v310, %v309
      %v314 = vpack.c.b16 %v312, %v311
      %v318 = vsel %vm269, %v304, 0
      %320 = vmatpush.bf16.msra.mxu0 0
      %321 = vmatpush.bf16.msra.mxu0 0
      %322 = vmatpush.bf16.msra.mxu0 0
      %323 = vmatpush.bf16.msra.mxu0 0
      %324 = vmatpush.bf16.msra.mxu0 0
      %325 = vmatpush.bf16.msra.mxu0 0
      %326 = vmatpush.bf16.msra.mxu0 %v314
      %327 = vmatpush.bf16.msra.mxu0 %v313
      %328 = vmatmul.bf16.gmra.mxu0 %v318
      %v329 = vpop.f32.mrf.mxu0
      %v330 = vadd.f32 0.0, %v329
      %v331 = vpop.f32.mrf.mxu0
      %332 = vdwg.mxu0
      %v333 = vadd.f32 %v287, %v330
      %334 = vst [vmem:[#allocation2] sm:$0xff] %v333
      %v335 = vld [vmem:[#allocation2] sm:$0xff]
      %s336 = scalar_lea.vmem %s1, 32
      %v337 = vld [vmem:[%s336] sm:$0xf]
      %v338 = vld [vmem:[%s336 + $0x4] sm:$0xf]
      %v339 = vld [vmem:[%s336 + $0x8] sm:$0xf]
      %v340 = vld [vmem:[%s336 + $0xc] sm:$0xf]
      %v341 = vrot.slane %v297, 1
      %v346 = vunpack.c.l.b16 %v337
      %v347 = vunpack.c.l.b16 %v338
      %v348 = vunpack.c.l.b16 %v339
      %v349 = vunpack.c.l.b16 %v340
      %v350 = vpack.c.b16 %v347, %v346
      %v351 = vpack.c.b16 %v349, %v348
      %v355 = vsel %vm269, %v341, 0
      %357 = vmatpush.bf16.msra.mxu0 0
      %358 = vmatpush.bf16.msra.mxu0 0
      %359 = vmatpush.bf16.msra.mxu0 0
      %360 = vmatpush.bf16.msra.mxu0 0
      %361 = vmatpush.bf16.msra.mxu0 0
      %362 = vmatpush.bf16.msra.mxu0 0
      %363 = vmatpush.bf16.msra.mxu0 %v351
      %364 = vmatpush.bf16.msra.mxu0 %v350
      %365 = vmatmul.bf16.gmra.mxu0 %v355
      %v366 = vpop.f32.mrf.mxu0
      %v367 = vadd.f32 0.0, %v366
      %v368 = vpop.f32.mrf.mxu0
      %369 = vdwg.mxu0
      %v370 = vadd.f32 %v335, %v367
      %371 = vst [vmem:[#allocation2] sm:$0xff] %v370
      %v372 = vld [vmem:[#allocation2] sm:$0xff]
      %s373 = scalar_lea.vmem %s1, 48
      %v374 = vld [vmem:[%s373] sm:$0xf]
      %v375 = vld [vmem:[%s373 + $0x4] sm:$0xf]
      %v376 = vld [vmem:[%s373 + $0x8] sm:$0xf]
      %v377 = vld [vmem:[%s373 + $0xc] sm:$0xf]
      %v378 = vrot.slane %v297, 2
      %v383 = vunpack.c.l.b16 %v374
      %v384 = vunpack.c.l.b16 %v375
      %v385 = vunpack.c.l.b16 %v376
      %v386 = vunpack.c.l.b16 %v377
      %v387 = vpack.c.b16 %v384, %v383
      %v388 = vpack.c.b16 %v386, %v385
      %v392 = vsel %vm269, %v378, 0
      %394 = vmatpush.bf16.msra.mxu0 0
      %395 = vmatpush.bf16.msra.mxu0 0
      %396 = vmatpush.bf16.msra.mxu0 0
      %397 = vmatpush.bf16.msra.mxu0 0
      %398 = vmatpush.bf16.msra.mxu0 0
      %399 = vmatpush.bf16.msra.mxu0 0
      %400 = vmatpush.bf16.msra.mxu0 %v388
      %401 = vmatpush.bf16.msra.mxu0 %v387
      %402 = vmatmul.bf16.gmra.mxu0 %v392
      %v403 = vpop.f32.mrf.mxu0
      %v404 = vadd.f32 0.0, %v403
      %v405 = vpop.f32.mrf.mxu0
      %406 = vdwg.mxu0
      %v407 = vadd.f32 %v372, %v404
      %408 = vst [vmem:[#allocation2] sm:$0xff] %v407
      %v409 = vld [vmem:[#allocation2] sm:$0xff]
      %s410 = scalar_lea.vmem %s1, 64
      %v411 = vld [vmem:[%s410] sm:$0xf]
      %v412 = vld [vmem:[%s410 + $0x4] sm:$0xf]
      %v413 = vld [vmem:[%s410 + $0x8] sm:$0xf]
      %v414 = vld [vmem:[%s410 + $0xc] sm:$0xf]
      %v415 = vrot.slane %v299, 2
      %v416 = vrot.slane %v301, 3
      %v417 = vor.u32 %v415, %v416
      %v422 = vunpack.c.l.b16 %v411
      %v423 = vunpack.c.l.b16 %v412
      %v424 = vunpack.c.l.b16 %v413
      %v425 = vunpack.c.l.b16 %v414
      %v426 = vpack.c.b16 %v423, %v422
      %v427 = vpack.c.b16 %v425, %v424
      %v431 = vsel %vm269, %v417, 0
      %433 = vmatpush.bf16.msra.mxu0 0
      %434 = vmatpush.bf16.msra.mxu0 0
      %435 = vmatpush.bf16.msra.mxu0 0
      %436 = vmatpush.bf16.msra.mxu0 0
      %437 = vmatpush.bf16.msra.mxu0 0
      %438 = vmatpush.bf16.msra.mxu0 0
      %439 = vmatpush.bf16.msra.mxu0 %v427
      %440 = vmatpush.bf16.msra.mxu0 %v426
      %441 = vmatmul.bf16.gmra.mxu0 %v431
      %v442 = vpop.f32.mrf.mxu0
      %v443 = vadd.f32 0.0, %v442
      %v444 = vpop.f32.mrf.mxu0
      %445 = vdwg.mxu0
      %v446 = vadd.f32 %v409, %v443
      %447 = vst [vmem:[#allocation2] sm:$0xff] %v446
      %v448 = vld [vmem:[#allocation2] sm:$0xff]
      %s449 = scalar_lea.vmem %s1, 80
      %v450 = vld [vmem:[%s449] sm:$0xf]
      %v451 = vld [vmem:[%s449 + $0x4] sm:$0xf]
      %v452 = vld [vmem:[%s449 + $0x8] sm:$0xf]
      %v453 = vld [vmem:[%s449 + $0xc] sm:$0xf]
      %v454 = vrot.slane %v297, 3
      %v459 = vunpack.c.l.b16 %v450
      %v460 = vunpack.c.l.b16 %v451
      %v461 = vunpack.c.l.b16 %v452
      %v462 = vunpack.c.l.b16 %v453
      %v463 = vpack.c.b16 %v460, %v459
      %v464 = vpack.c.b16 %v462, %v461
      %v468 = vsel %vm269, %v454, 0
      %470 = vmatpush.bf16.msra.mxu0 0
      %471 = vmatpush.bf16.msra.mxu0 0
      %472 = vmatpush.bf16.msra.mxu0 0
      %473 = vmatpush.bf16.msra.mxu0 0
      %474 = vmatpush.bf16.msra.mxu0 0
      %475 = vmatpush.bf16.msra.mxu0 0
      %476 = vmatpush.bf16.msra.mxu0 %v464
      %477 = vmatpush.bf16.msra.mxu0 %v463
      %478 = vmatmul.bf16.gmra.mxu0 %v468
      %v479 = vpop.f32.mrf.mxu0
      %v480 = vadd.f32 0.0, %v479
      %v481 = vpop.f32.mrf.mxu0
      %482 = vdwg.mxu0
      %v483 = vadd.f32 %v448, %v480
      %484 = vst [vmem:[#allocation2] sm:$0xff] %v483
      %v485 = vld [vmem:[#allocation2] sm:$0xff]
      %s486 = scalar_lea.vmem %s1, 96
      %v487 = vld [vmem:[%s486] sm:$0xf]
      %v488 = vld [vmem:[%s486 + $0x4] sm:$0xf]
      %v489 = vld [vmem:[%s486 + $0x8] sm:$0xf]
      %v490 = vld [vmem:[%s486 + $0xc] sm:$0xf]
      %v495 = vunpack.c.l.b16 %v487
      %v496 = vunpack.c.l.b16 %v488
      %v497 = vunpack.c.l.b16 %v489
      %v498 = vunpack.c.l.b16 %v490
      %v499 = vpack.c.b16 %v496, %v495
      %v500 = vpack.c.b16 %v498, %v497
      %v504 = vsel %vm269, %v251, 0
      %506 = vmatpush.bf16.msra.mxu0 0
      %507 = vmatpush.bf16.msra.mxu0 0
      %508 = vmatpush.bf16.msra.mxu0 0
      %509 = vmatpush.bf16.msra.mxu0 0
      %510 = vmatpush.bf16.msra.mxu0 0
      %511 = vmatpush.bf16.msra.mxu0 0
      %512 = vmatpush.bf16.msra.mxu0 %v500
      %513 = vmatpush.bf16.msra.mxu0 %v499
      %514 = vmatmul.bf16.gmra.mxu0 %v504
      %v515 = vpop.f32.mrf.mxu0
      %v516 = vadd.f32 0.0, %v515
      %v517 = vpop.f32.mrf.mxu0
      %518 = vdwg.mxu0
      %v519 = vadd.f32 %v485, %v516
      %520 = vst [vmem:[#allocation2] sm:$0xff] %v519
      %v521 = vld [vmem:[#allocation2] sm:$0xff]
      %s522 = scalar_lea.vmem %s1, 112
      %v523 = vld [vmem:[%s522] sm:$0xf]
      %v524 = vld [vmem:[%s522 + $0x4] sm:$0xf]
      %v525 = vld [vmem:[%s522 + $0x8] sm:$0xf]
      %v526 = vld [vmem:[%s522 + $0xc] sm:$0xf]
      %v528 = vunpack.c.l.b16 %v252
      %v529 = vpack.c.b16 %v528, %v296
      %v531 = vshrl.u32 %v529, 16
      %v533 = vshll.u32 %v529, 16
      %v535 = vrot.slane %v533, 1
      %v536 = vor.u32 %v531, %v535
      %v541 = vunpack.c.l.b16 %v523
      %v542 = vunpack.c.l.b16 %v524
      %v543 = vunpack.c.l.b16 %v525
      %v544 = vunpack.c.l.b16 %v526
      %v545 = vpack.c.b16 %v542, %v541
      %v546 = vpack.c.b16 %v544, %v543
      %v550 = vsel %vm269, %v536, 0
      %552 = vmatpush.bf16.msra.mxu0 0
      %553 = vmatpush.bf16.msra.mxu0 0
      %554 = vmatpush.bf16.msra.mxu0 0
      %555 = vmatpush.bf16.msra.mxu0 0
      %556 = vmatpush.bf16.msra.mxu0 0
      %557 = vmatpush.bf16.msra.mxu0 0
      %558 = vmatpush.bf16.msra.mxu0 %v546
      %559 = vmatpush.bf16.msra.mxu0 %v545
      %560 = vmatmul.bf16.gmra.mxu0 %v550
      %v561 = vpop.f32.mrf.mxu0
      %v562 = vadd.f32 0.0, %v561
      %v563 = vpop.f32.mrf.mxu0
      %564 = vdwg.mxu0
      %v565 = vadd.f32 %v521, %v562
      %566 = vst [vmem:[#allocation2] sm:$0xff] %v565
      %v567 = vld [vmem:[#allocation2] sm:$0xff]
      %s568 = scalar_lea.vmem %s1, 128
      %v569 = vld [vmem:[%s568] sm:$0xf]
      %v570 = vld [vmem:[%s568 + $0x4] sm:$0xf]
      %v571 = vld [vmem:[%s568 + $0x8] sm:$0xf]
      %v572 = vld [vmem:[%s568 + $0xc] sm:$0xf]
      %v573 = vrot.slane %v529, 1
      %v578 = vunpack.c.l.b16 %v569
      %v579 = vunpack.c.l.b16 %v570
      %v580 = vunpack.c.l.b16 %v571
      %v581 = vunpack.c.l.b16 %v572
      %v582 = vpack.c.b16 %v579, %v578
      %v583 = vpack.c.b16 %v581, %v580
      %v587 = vsel %vm269, %v573, 0
      %589 = vmatpush.bf16.msra.mxu0 0
      %590 = vmatpush.bf16.msra.mxu0 0
      %591 = vmatpush.bf16.msra.mxu0 0
      %592 = vmatpush.bf16.msra.mxu0 0
      %593 = vmatpush.bf16.msra.mxu0 0
      %594 = vmatpush.bf16.msra.mxu0 0
      %595 = vmatpush.bf16.msra.mxu0 %v583
      %596 = vmatpush.bf16.msra.mxu0 %v582
      %597 = vmatmul.bf16.gmra.mxu0 %v587
      %v598 = vpop.f32.mrf.mxu0
      %v599 = vadd.f32 0.0, %v598
      %v600 = vpop.f32.mrf.mxu0
      %601 = vdwg.mxu0
      %v602 = vadd.f32 %v567, %v599
      %603 = vst [vmem:[#allocation2] sm:$0xff] %v602
      %v604 = vld [vmem:[#allocation2] sm:$0xff]
      %v605 = vld [vmem:[%s2] sm:$0x1]
      %v607 = vperm.slane %v605, 0
      %v609 = vadd.f32 %v604, %v607
      %v610 = vld [vmem:[%s236] sm:$0xf]
      %v611 = vunpack.c.l.bf16 %v610
      %v612 = vadd.f32 %v609, %v611
      %v613 = vmax.f32 %v612, 0.0
      %v614 = vpack.c.bf16 %v613, %v613
      %615 = vst [vmem:[%s243] sm:$0xf] %v614
      %p616 = scmp.lt.s32.totalorder %s19, 1
      %s617 = scalar_select %p616, %s19, 1
      %p618 = scmp.lt.s32.totalorder %s20, 0
      %s619 = scalar_select %p618, %s20, 0
      %s620 = sadd.s32 %s619, %s617
      %s621 = smul.addr %s620, 4
      %s622 = scalar_lea.vmem %s4, %s621
      // Predicated region
      $region37: #{_forward_impl.27} parent=35 // pred_check
        %p623 = pneg %p143
      $region38: #{_forward_impl.27} parent=35 // pred_check_branch
        %625 = sbr.rel (%p623) target = $region40
      $region39: #{_forward_impl.27} parent=35 // pred_region
        _
      $region40: #{_forward_impl.27} parent=35 // pred_fallthru
        _
    $region36: #{_forward_impl.27} parent=5 // pred_fallthru
      _
    %p626 = scmp.le.s32.totalorder 2, %s10
    // Predicated region
    $region41: #{_forward_impl.27} parent=5 // pred_check
      %p627 = pneg %p626
    $region42: #{_forward_impl.27} parent=5 // pred_check_branch
      %629 = sbr.rel (%p627) target = $region44
    $region43: #{_forward_impl.27} parent=5 // pred_region
      %s630 = ssub.s32 %s10, 2
      // Predicated region
      $region45: #{_forward_impl.27} parent=43 // pred_check
        %p631 = pneg %p149
      $region46: #{_forward_impl.27} parent=43 // pred_check_branch
        %633 = sbr.rel (%p631) target = $region48
      $region47: #{_forward_impl.27} parent=43 // pred_region
        %p634 = scmp.lt.s32.totalorder %s21, 1
        %s635 = scalar_select %p634, %s21, 1
        %p636 = scmp.lt.s32.totalorder %s22, 0
        %s637 = scalar_select %p636, %s22, 0
        %s638 = sadd.s32 %s637, %s635
        %s639 = smul.addr %s638, 4
        %s640 = scalar_lea.vmem %s4, %s639
      $region48: #{_forward_impl.27} parent=43 // pred_fallthru
        _
    $region44: #{_forward_impl.27} parent=5 // pred_fallthru
      _
  $region6: #{_forward_impl.27} parent=0 // loop_footer
    %s14 = sadd.s32 1, %s10
  $region7: #{_forward_impl.27} parent=0 // loop_footer_branch
    %9 = sbr.rel target = $region3
  $region8: #{_forward_impl.27} parent=0 // loop_exit
    _

// kernel: _forward_impl.28
$region0: #{_forward_impl.28}
  #allocation0 [shape = 'u32[]', space=smem, size = 0x4, offset = 0x4, fixed_abs, tag = 'smem constant byte address 0x4 - core index']
  #allocation1 [shape = 'u32[72,128]{1,0:T(1,128)}', space=vmem, size = 0x9000, scoped, tag = 'internal scratch']
  #allocation2 [shape = 'f32[8,128]{1,0:T(8,128)}', space=vmem, size = 0x1000, scoped, tag = 'scratch operand']
  %s0 = inlined_call_operand.vmem [shape: bf16[2,24,32], index: 0, kind: input, shape index: {}]
  %s1 = inlined_call_operand.vmem [shape: bf16[9,32,128], index: 1, kind: input, shape index: {}]
  %s2 = inlined_call_operand.vmem [shape: f32[1,128], index: 2, kind: input, shape index: {}]
  %s3 = inlined_call_operand.vmem [shape: bf16[2,8,128], index: 3, kind: output, shape index: {}]
  %s4 = sld [smem:[#allocation0]]
  $region45: #{_forward_impl.28} parent=0
    _
  %s6 = ssub.s32 1, %s4
  %s7 = scalar_select 0, %s6, %s4
  loop: start=0, step=1, limit=4
  $region2: #{_forward_impl.28} parent=0 // loop_pre_header
    _
  $region3: #{_forward_impl.28} parent=0 // loop_header
    %s9 = sphi 0, %s13
    %p10 = scmp.ge.s32.totalorder %s9, 4
    %s16 = sphi 0, %s28
    %s17 = sphi 0, %s24
    %s18 = sphi 0, %s16
    %s19 = sphi 0, %s17
    %s20 = sphi 0, %s18
    %s21 = sphi 0, %s19
    %s31 = sphi 0, %s33
    %s34 = sphi 0, %s31
    %s35 = sphi 0, %s34
    %s51 = sphi 0, %s35
    %s55 = sphi 0, %s55
    %s57 = sphi 0, %s55
    %s58 = sphi 0, %s57
    %s72 = sphi 0, %s58
    %s76 = sphi 0, %s76
    %s78 = sphi 0, %s76
    %s79 = sphi 0, %s78
    %s93 = sphi 0, %s79
    %s101 = sphi 0, %s103
    %s104 = sphi 0, %s101
    %s105 = sphi 0, %s104
    %s121 = sphi 0, %s105
  $region4: #{_forward_impl.28} parent=0 // loop_header_branch
    %12 = sbr.rel (%p10) target = $region8
  $region5: #{_forward_impl.28} parent=0 // loop_body
    %s14 = ssub.s32 %s9, 1
    %s15 = ssub.s32 %s9, 2
    %s22 = sadd.s32 1, %s17
    %p23 = scmp.ge.s32.totalorder %s22, 1
    %s24 = scalar_select %p23, 0, %s22
    %s25 = sadd.s32 1, %s16
    %s26 = scalar_select %p23, %s25, %s16
    %p27 = scmp.ge.s32.totalorder %s26, 2
    %s28 = scalar_select %p27, 0, %s26
    %s29 = ssub.s32 %s16, %s28
    %p30 = scmp.eq.s32.totalorder %s29, 0
    %s32 = sadd.s32 %s31, 1
    %s33 = scalar_select %p30, %s31, %s32
    %p36 = pneg %p30
    %p37 = scmp.eq.s32.totalorder %s9, 1
    %p38 = por %p36, %p37
    %p39 = scmp.ne.s32.totalorder %s31, %s34
    %p40 = scmp.eq.s32.totalorder %s9, 0
    %p41 = por %p39, %p40
    %p42 = scmp.ne.s32.totalorder %s31, %s34
    %p43 = scmp.eq.s32.totalorder %s14, 1
    %p44 = por %p42, %p43
    %p45 = scmp.ne.s32.totalorder %s34, %s35
    %p46 = scmp.eq.s32.totalorder %s14, 0
    %p47 = por %p45, %p46
    %p48 = scmp.ne.s32.totalorder %s34, %s35
    %p49 = scmp.eq.s32.totalorder %s15, 1
    %p50 = por %p48, %p49
    %p52 = scmp.ne.s32.totalorder %s35, %s51
    %p53 = scmp.eq.s32.totalorder %s15, 0
    %p54 = por %p52, %p53
    %s56 = sadd.s32 %s55, 1
    %p59 = scmp.eq.s32.totalorder %s9, 1
    %p60 = scmp.ne.s32.totalorder %s55, %s57
    %p61 = scmp.eq.s32.totalorder %s9, 0
    %p62 = por %p60, %p61
    %p63 = scmp.ne.s32.totalorder %s55, %s57
    %p64 = scmp.eq.s32.totalorder %s14, 1
    %p65 = por %p63, %p64
    %p66 = scmp.ne.s32.totalorder %s57, %s58
    %p67 = scmp.eq.s32.totalorder %s14, 0
    %p68 = por %p66, %p67
    %p69 = scmp.ne.s32.totalorder %s57, %s58
    %p70 = scmp.eq.s32.totalorder %s15, 1
    %p71 = por %p69, %p70
    %p73 = scmp.ne.s32.totalorder %s58, %s72
    %p74 = scmp.eq.s32.totalorder %s15, 0
    %p75 = por %p73, %p74
    %s77 = sadd.s32 %s76, 1
    %p80 = scmp.eq.s32.totalorder %s9, 1
    %p81 = scmp.ne.s32.totalorder %s76, %s78
    %p82 = scmp.eq.s32.totalorder %s9, 0
    %p83 = por %p81, %p82
    %p84 = scmp.ne.s32.totalorder %s76, %s78
    %p85 = scmp.eq.s32.totalorder %s14, 1
    %p86 = por %p84, %p85
    %p87 = scmp.ne.s32.totalorder %s78, %s79
    %p88 = scmp.eq.s32.totalorder %s14, 0
    %p89 = por %p87, %p88
    %p90 = scmp.ne.s32.totalorder %s78, %s79
    %p91 = scmp.eq.s32.totalorder %s15, 1
    %p92 = por %p90, %p91
    %p94 = scmp.ne.s32.totalorder %s79, %s93
    %p95 = scmp.eq.s32.totalorder %s15, 0
    %p96 = por %p94, %p95
    %s97 = ssub.s32 %s16, %s28
    %s98 = ssub.s32 %s17, %s24
    %s99 = sor.u32 %s97, %s98
    %p100 = scmp.eq.s32.totalorder %s99, 0
    %s102 = sadd.s32 %s101, 1
    %s103 = scalar_select %p100, %s101, %s102
    %p106 = pneg %p100
    %p107 = scmp.eq.s32.totalorder %s9, 1
    %p108 = por %p106, %p107
    %p109 = scmp.ne.s32.totalorder %s101, %s104
    %p110 = scmp.eq.s32.totalorder %s9, 0
    %p111 = por %p109, %p110
    %p112 = scmp.ne.s32.totalorder %s101, %s104
    %p113 = scmp.eq.s32.totalorder %s14, 1
    %p114 = por %p112, %p113
    %p115 = scmp.ne.s32.totalorder %s104, %s105
    %p116 = scmp.eq.s32.totalorder %s14, 0
    %p117 = por %p115, %p116
    %p118 = scmp.ne.s32.totalorder %s104, %s105
    %p119 = scmp.eq.s32.totalorder %s15, 1
    %p120 = por %p118, %p119
    %p122 = scmp.ne.s32.totalorder %s105, %s121
    %p123 = scmp.eq.s32.totalorder %s15, 0
    %p124 = por %p122, %p123
    %p125 = scmp.le.s32.totalorder 1, %s9
    %p126 = scmp.lt.s32.totalorder %s9, 3
    %p127 = pnand %p125, %p126
    %p128 = pneg %p127
    // Predicated region
    $region9: #{_forward_impl.28} parent=5 // pred_check
      _
    $region10: #{_forward_impl.28} parent=5 // pred_check_branch
      %130 = sbr.rel (%p127) target = $region12
    $region11: #{_forward_impl.28} parent=5 // pred_region
      %s131 = ssub.s32 %s9, 1
      // Predicated region
      $region13: #{_forward_impl.28} parent=11 // pred_check
        %p132 = pneg %p68
      $region14: #{_forward_impl.28} parent=11 // pred_check_branch
        %134 = sbr.rel (%p132) target = $region16
      $region15: #{_forward_impl.28} parent=11 // pred_region
        _
      $region16: #{_forward_impl.28} parent=11 // pred_fallthru
        _
      // Predicated region
      $region17: #{_forward_impl.28} parent=11 // pred_check
        %p135 = pneg %p89
      $region18: #{_forward_impl.28} parent=11 // pred_check_branch
        %137 = sbr.rel (%p135) target = $region20
      $region19: #{_forward_impl.28} parent=11 // pred_region
        _
      $region20: #{_forward_impl.28} parent=11 // pred_fallthru
        _
    $region12: #{_forward_impl.28} parent=5 // pred_fallthru
      _
    %p138 = scmp.lt.s32.totalorder %s9, 2
    // Predicated region
    $region21: #{_forward_impl.28} parent=5 // pred_check
      %p139 = pneg %p138
    $region22: #{_forward_impl.28} parent=5 // pred_check_branch
      %141 = sbr.rel (%p139) target = $region24
    $region23: #{_forward_impl.28} parent=5 // pred_region
      // Predicated region
      $region25: #{_forward_impl.28} parent=23 // pred_check
        %p142 = pneg %p41
      $region26: #{_forward_impl.28} parent=23 // pred_check_branch
        %144 = sbr.rel (%p142) target = $region28
      $region27: #{_forward_impl.28} parent=23 // pred_region
        %p145 = scmp.lt.s32.totalorder %s16, 1
        %s146 = scalar_select %p145, %s16, 1
        %s147 = smul.addr %s146, 3
        %s148 = smul.addr %s147, 4
        %s149 = scalar_lea.vmem %s0, %s148
      $region28: #{_forward_impl.28} parent=23 // pred_fallthru
        _
    $region24: #{_forward_impl.28} parent=5 // pred_fallthru
      _
    %p150 = scmp.le.s32.totalorder 1, %s9
    %p151 = scmp.lt.s32.totalorder %s9, 3
    %p152 = pnand %p150, %p151
    %p153 = pneg %p152
    // Predicated region
    $region29: #{_forward_impl.28} parent=5 // pred_check
      _
    $region30: #{_forward_impl.28} parent=5 // pred_check_branch
      %155 = sbr.rel (%p152) target = $region32
    $region31: #{_forward_impl.28} parent=5 // pred_region
      %s156 = ssub.s32 %s9, 1
      %p157 = scmp.lt.s32.totalorder %s18, 1
      %s158 = scalar_select %p157, %s18, 1
      %s159 = smul.addr %s158, 3
      %s160 = smul.addr %s159, 4
      %s161 = scalar_lea.vmem %s0, %s160
      %p162 = pneg %p47
      %p163 = pneg %p44
      %p164 = pneg %p68
      %p165 = pneg %p65
      %p166 = pneg %p89
      %p167 = pneg %p86
      %p168 = pneg %p117
      %p169 = pneg %p114
      %p170 = scmp.lt.s32.totalorder %s18, 1
      %s171 = scalar_select %p170, %s18, 1
      %p172 = scmp.lt.s32.totalorder %s19, 0
      %s173 = scalar_select %p172, %s19, 0
      %s174 = sadd.s32 %s173, %s171
      %s175 = smul.addr %s174, 4
      %s176 = scalar_lea.vmem %s3, %s175
      %p177 = scmp.lt.s32.totalorder %s18, 1
      %s178 = scalar_select %p177, %s18, 1
      %s179 = smul.addr %s178, 3
      %s180 = smul.addr %s179, 4
      %s181 = scalar_lea.vmem %s0, %s180
      %p182 = scmp.lt.s32.totalorder %s18, 1
      %s183 = scalar_select %p182, %s18, 1
      %p184 = scmp.lt.s32.totalorder %s19, 0
      %s185 = scalar_select %p184, %s19, 0
      %s186 = sadd.s32 %s185, %s183
      %s187 = smul.addr %s186, 4
      %s188 = scalar_lea.vmem %s3, %s187
      %s190 = smul.u32 %s19, 8
      %s191 = sshra.s32 %s190, 3
      %s192 = sand.u32 %s190, 7
      %s193 = smul.addr %s191, 4
      %s194 = scalar_lea.vmem %s181, %s193
      %v195 = vld [vmem:[%s194] sm:$0xf]
      %v196 = vld [vmem:[%s194 + $0x4] sm:$0xf]
      %v197 = vld [vmem:[%s194 + $0x8] sm:$0xf]
      %v198 = vld [vmem:[%s1] sm:$0xf]
      %v199 = vld [vmem:[%s1 + $0x4] sm:$0xf]
      %v200 = vld [vmem:[%s1 + $0x8] sm:$0xf]
      %v201 = vld [vmem:[%s1 + $0xc] sm:$0xf]
      %v206 = vunpack.c.l.b16 %v198
      %v207 = vunpack.c.l.b16 %v199
      %v208 = vunpack.c.l.b16 %v200
      %v209 = vunpack.c.l.b16 %v201
      %v210 = vpack.c.b16 %v207, %v206
      %v211 = vpack.c.b16 %v209, %v208
      %vm214 = vcmask 261120
      %v216 = vsel %vm214, %v195, 0
      %218 = vmatpush.bf16.msra.mxu0 0
      %219 = vmatpush.bf16.msra.mxu0 0
      %220 = vmatpush.bf16.msra.mxu0 0
      %221 = vmatpush.bf16.msra.mxu0 0
      %222 = vmatpush.bf16.msra.mxu0 0
      %223 = vmatpush.bf16.msra.mxu0 0
      %224 = vmatpush.bf16.msra.mxu0 %v211
      %225 = vmatpush.bf16.msra.mxu0 %v210
      %226 = vmatmul.bf16.gmra.mxu0 %v216
      %v227 = vpop.f32.mrf.mxu0
      %v228 = vadd.f32 0.0, %v227
      %v229 = vpop.f32.mrf.mxu0
      %230 = vdwg.mxu0
      %231 = vst [vmem:[#allocation2] sm:$0xff] %v228
      %v232 = vld [vmem:[#allocation2] sm:$0xff]
      %s233 = scalar_lea.vmem %s1, 16
      %v234 = vld [vmem:[%s233] sm:$0xf]
      %v235 = vld [vmem:[%s233 + $0x4] sm:$0xf]
      %v236 = vld [vmem:[%s233 + $0x8] sm:$0xf]
      %v237 = vld [vmem:[%s233 + $0xc] sm:$0xf]
      %v240 = vunpack.c.l.b16 %v195
      %v241 = vunpack.c.l.b16 %v196
      %v242 = vpack.c.b16 %v241, %v240
      %v244 = vshrl.u32 %v242, 16
      %v246 = vshll.u32 %v242, 16
      %v248 = vrot.slane %v246, 1
      %v249 = vor.u32 %v244, %v248
      %v254 = vunpack.c.l.b16 %v234
      %v255 = vunpack.c.l.b16 %v235
      %v256 = vunpack.c.l.b16 %v236
      %v257 = vunpack.c.l.b16 %v237
      %v258 = vpack.c.b16 %v255, %v254
      %v259 = vpack.c.b16 %v257, %v256
      %v263 = vsel %vm214, %v249, 0
      %265 = vmatpush.bf16.msra.mxu0 0
      %266 = vmatpush.bf16.msra.mxu0 0
      %267 = vmatpush.bf16.msra.mxu0 0
      %268 = vmatpush.bf16.msra.mxu0 0
      %269 = vmatpush.bf16.msra.mxu0 0
      %270 = vmatpush.bf16.msra.mxu0 0
      %271 = vmatpush.bf16.msra.mxu0 %v259
      %272 = vmatpush.bf16.msra.mxu0 %v258
      %273 = vmatmul.bf16.gmra.mxu0 %v263
      %v274 = vpop.f32.mrf.mxu0
      %v275 = vadd.f32 0.0, %v274
      %v276 = vpop.f32.mrf.mxu0
      %277 = vdwg.mxu0
      %v278 = vadd.f32 %v232, %v275
      %279 = vst [vmem:[#allocation2] sm:$0xff] %v278
      %v280 = vld [vmem:[#allocation2] sm:$0xff]
      %s281 = scalar_lea.vmem %s1, 32
      %v282 = vld [vmem:[%s281] sm:$0xf]
      %v283 = vld [vmem:[%s281 + $0x4] sm:$0xf]
      %v284 = vld [vmem:[%s281 + $0x8] sm:$0xf]
      %v285 = vld [vmem:[%s281 + $0xc] sm:$0xf]
      %v286 = vrot.slane %v242, 1
      %v291 = vunpack.c.l.b16 %v282
      %v292 = vunpack.c.l.b16 %v283
      %v293 = vunpack.c.l.b16 %v284
      %v294 = vunpack.c.l.b16 %v285
      %v295 = vpack.c.b16 %v292, %v291
      %v296 = vpack.c.b16 %v294, %v293
      %v300 = vsel %vm214, %v286, 0
      %302 = vmatpush.bf16.msra.mxu0 0
      %303 = vmatpush.bf16.msra.mxu0 0
      %304 = vmatpush.bf16.msra.mxu0 0
      %305 = vmatpush.bf16.msra.mxu0 0
      %306 = vmatpush.bf16.msra.mxu0 0
      %307 = vmatpush.bf16.msra.mxu0 0
      %308 = vmatpush.bf16.msra.mxu0 %v296
      %309 = vmatpush.bf16.msra.mxu0 %v295
      %310 = vmatmul.bf16.gmra.mxu0 %v300
      %v311 = vpop.f32.mrf.mxu0
      %v312 = vadd.f32 0.0, %v311
      %v313 = vpop.f32.mrf.mxu0
      %314 = vdwg.mxu0
      %v315 = vadd.f32 %v280, %v312
      %316 = vst [vmem:[#allocation2] sm:$0xff] %v315
      %v317 = vld [vmem:[#allocation2] sm:$0xff]
      %s318 = scalar_lea.vmem %s1, 48
      %v319 = vld [vmem:[%s318] sm:$0xf]
      %v320 = vld [vmem:[%s318 + $0x4] sm:$0xf]
      %v321 = vld [vmem:[%s318 + $0x8] sm:$0xf]
      %v322 = vld [vmem:[%s318 + $0xc] sm:$0xf]
      %v323 = vrot.slane %v242, 2
      %v328 = vunpack.c.l.b16 %v319
      %v329 = vunpack.c.l.b16 %v320
      %v330 = vunpack.c.l.b16 %v321
      %v331 = vunpack.c.l.b16 %v322
      %v332 = vpack.c.b16 %v329, %v328
      %v333 = vpack.c.b16 %v331, %v330
      %v337 = vsel %vm214, %v323, 0
      %339 = vmatpush.bf16.msra.mxu0 0
      %340 = vmatpush.bf16.msra.mxu0 0
      %341 = vmatpush.bf16.msra.mxu0 0
      %342 = vmatpush.bf16.msra.mxu0 0
      %343 = vmatpush.bf16.msra.mxu0 0
      %344 = vmatpush.bf16.msra.mxu0 0
      %345 = vmatpush.bf16.msra.mxu0 %v333
      %346 = vmatpush.bf16.msra.mxu0 %v332
      %347 = vmatmul.bf16.gmra.mxu0 %v337
      %v348 = vpop.f32.mrf.mxu0
      %v349 = vadd.f32 0.0, %v348
      %v350 = vpop.f32.mrf.mxu0
      %351 = vdwg.mxu0
      %v352 = vadd.f32 %v317, %v349
      %353 = vst [vmem:[#allocation2] sm:$0xff] %v352
      %v354 = vld [vmem:[#allocation2] sm:$0xff]
      %s355 = scalar_lea.vmem %s1, 64
      %v356 = vld [vmem:[%s355] sm:$0xf]
      %v357 = vld [vmem:[%s355 + $0x4] sm:$0xf]
      %v358 = vld [vmem:[%s355 + $0x8] sm:$0xf]
      %v359 = vld [vmem:[%s355 + $0xc] sm:$0xf]
      %v360 = vrot.slane %v244, 2
      %v361 = vrot.slane %v246, 3
      %v362 = vor.u32 %v360, %v361
      %v367 = vunpack.c.l.b16 %v356
      %v368 = vunpack.c.l.b16 %v357
      %v369 = vunpack.c.l.b16 %v358
      %v370 = vunpack.c.l.b16 %v359
      %v371 = vpack.c.b16 %v368, %v367
      %v372 = vpack.c.b16 %v370, %v369
      %v376 = vsel %vm214, %v362, 0
      %378 = vmatpush.bf16.msra.mxu0 0
      %379 = vmatpush.bf16.msra.mxu0 0
      %380 = vmatpush.bf16.msra.mxu0 0
      %381 = vmatpush.bf16.msra.mxu0 0
      %382 = vmatpush.bf16.msra.mxu0 0
      %383 = vmatpush.bf16.msra.mxu0 0
      %384 = vmatpush.bf16.msra.mxu0 %v372
      %385 = vmatpush.bf16.msra.mxu0 %v371
      %386 = vmatmul.bf16.gmra.mxu0 %v376
      %v387 = vpop.f32.mrf.mxu0
      %v388 = vadd.f32 0.0, %v387
      %v389 = vpop.f32.mrf.mxu0
      %390 = vdwg.mxu0
      %v391 = vadd.f32 %v354, %v388
      %392 = vst [vmem:[#allocation2] sm:$0xff] %v391
      %v393 = vld [vmem:[#allocation2] sm:$0xff]
      %s394 = scalar_lea.vmem %s1, 80
      %v395 = vld [vmem:[%s394] sm:$0xf]
      %v396 = vld [vmem:[%s394 + $0x4] sm:$0xf]
      %v397 = vld [vmem:[%s394 + $0x8] sm:$0xf]
      %v398 = vld [vmem:[%s394 + $0xc] sm:$0xf]
      %v399 = vrot.slane %v242, 3
      %v404 = vunpack.c.l.b16 %v395
      %v405 = vunpack.c.l.b16 %v396
      %v406 = vunpack.c.l.b16 %v397
      %v407 = vunpack.c.l.b16 %v398
      %v408 = vpack.c.b16 %v405, %v404
      %v409 = vpack.c.b16 %v407, %v406
      %v413 = vsel %vm214, %v399, 0
      %415 = vmatpush.bf16.msra.mxu0 0
      %416 = vmatpush.bf16.msra.mxu0 0
      %417 = vmatpush.bf16.msra.mxu0 0
      %418 = vmatpush.bf16.msra.mxu0 0
      %419 = vmatpush.bf16.msra.mxu0 0
      %420 = vmatpush.bf16.msra.mxu0 0
      %421 = vmatpush.bf16.msra.mxu0 %v409
      %422 = vmatpush.bf16.msra.mxu0 %v408
      %423 = vmatmul.bf16.gmra.mxu0 %v413
      %v424 = vpop.f32.mrf.mxu0
      %v425 = vadd.f32 0.0, %v424
      %v426 = vpop.f32.mrf.mxu0
      %427 = vdwg.mxu0
      %v428 = vadd.f32 %v393, %v425
      %429 = vst [vmem:[#allocation2] sm:$0xff] %v428
      %v430 = vld [vmem:[#allocation2] sm:$0xff]
      %s431 = scalar_lea.vmem %s1, 96
      %v432 = vld [vmem:[%s431] sm:$0xf]
      %v433 = vld [vmem:[%s431 + $0x4] sm:$0xf]
      %v434 = vld [vmem:[%s431 + $0x8] sm:$0xf]
      %v435 = vld [vmem:[%s431 + $0xc] sm:$0xf]
      %v440 = vunpack.c.l.b16 %v432
      %v441 = vunpack.c.l.b16 %v433
      %v442 = vunpack.c.l.b16 %v434
      %v443 = vunpack.c.l.b16 %v435
      %v444 = vpack.c.b16 %v441, %v440
      %v445 = vpack.c.b16 %v443, %v442
      %v449 = vsel %vm214, %v196, 0
      %451 = vmatpush.bf16.msra.mxu0 0
      %452 = vmatpush.bf16.msra.mxu0 0
      %453 = vmatpush.bf16.msra.mxu0 0
      %454 = vmatpush.bf16.msra.mxu0 0
      %455 = vmatpush.bf16.msra.mxu0 0
      %456 = vmatpush.bf16.msra.mxu0 0
      %457 = vmatpush.bf16.msra.mxu0 %v445
      %458 = vmatpush.bf16.msra.mxu0 %v444
      %459 = vmatmul.bf16.gmra.mxu0 %v449
      %v460 = vpop.f32.mrf.mxu0
      %v461 = vadd.f32 0.0, %v460
      %v462 = vpop.f32.mrf.mxu0
      %463 = vdwg.mxu0
      %v464 = vadd.f32 %v430, %v461
      %465 = vst [vmem:[#allocation2] sm:$0xff] %v464
      %v466 = vld [vmem:[#allocation2] sm:$0xff]
      %s467 = scalar_lea.vmem %s1, 112
      %v468 = vld [vmem:[%s467] sm:$0xf]
      %v469 = vld [vmem:[%s467 + $0x4] sm:$0xf]
      %v470 = vld [vmem:[%s467 + $0x8] sm:$0xf]
      %v471 = vld [vmem:[%s467 + $0xc] sm:$0xf]
      %v473 = vunpack.c.l.b16 %v197
      %v474 = vpack.c.b16 %v473, %v241
      %v476 = vshrl.u32 %v474, 16
      %v478 = vshll.u32 %v474, 16
      %v480 = vrot.slane %v478, 1
      %v481 = vor.u32 %v476, %v480
      %v486 = vunpack.c.l.b16 %v468
      %v487 = vunpack.c.l.b16 %v469
      %v488 = vunpack.c.l.b16 %v470
      %v489 = vunpack.c.l.b16 %v471
      %v490 = vpack.c.b16 %v487, %v486
      %v491 = vpack.c.b16 %v489, %v488
      %v495 = vsel %vm214, %v481, 0
      %497 = vmatpush.bf16.msra.mxu0 0
      %498 = vmatpush.bf16.msra.mxu0 0
      %499 = vmatpush.bf16.msra.mxu0 0
      %500 = vmatpush.bf16.msra.mxu0 0
      %501 = vmatpush.bf16.msra.mxu0 0
      %502 = vmatpush.bf16.msra.mxu0 0
      %503 = vmatpush.bf16.msra.mxu0 %v491
      %504 = vmatpush.bf16.msra.mxu0 %v490
      %505 = vmatmul.bf16.gmra.mxu0 %v495
      %v506 = vpop.f32.mrf.mxu0
      %v507 = vadd.f32 0.0, %v506
      %v508 = vpop.f32.mrf.mxu0
      %509 = vdwg.mxu0
      %v510 = vadd.f32 %v466, %v507
      %511 = vst [vmem:[#allocation2] sm:$0xff] %v510
      %v512 = vld [vmem:[#allocation2] sm:$0xff]
      %s513 = scalar_lea.vmem %s1, 128
      %v514 = vld [vmem:[%s513] sm:$0xf]
      %v515 = vld [vmem:[%s513 + $0x4] sm:$0xf]
      %v516 = vld [vmem:[%s513 + $0x8] sm:$0xf]
      %v517 = vld [vmem:[%s513 + $0xc] sm:$0xf]
      %v518 = vrot.slane %v474, 1
      %v523 = vunpack.c.l.b16 %v514
      %v524 = vunpack.c.l.b16 %v515
      %v525 = vunpack.c.l.b16 %v516
      %v526 = vunpack.c.l.b16 %v517
      %v527 = vpack.c.b16 %v524, %v523
      %v528 = vpack.c.b16 %v526, %v525
      %v532 = vsel %vm214, %v518, 0
      %534 = vmatpush.bf16.msra.mxu0 0
      %535 = vmatpush.bf16.msra.mxu0 0
      %536 = vmatpush.bf16.msra.mxu0 0
      %537 = vmatpush.bf16.msra.mxu0 0
      %538 = vmatpush.bf16.msra.mxu0 0
      %539 = vmatpush.bf16.msra.mxu0 0
      %540 = vmatpush.bf16.msra.mxu0 %v528
      %541 = vmatpush.bf16.msra.mxu0 %v527
      %542 = vmatmul.bf16.gmra.mxu0 %v532
      %v543 = vpop.f32.mrf.mxu0
      %v544 = vadd.f32 0.0, %v543
      %v545 = vpop.f32.mrf.mxu0
      %546 = vdwg.mxu0
      %v547 = vadd.f32 %v512, %v544
      %548 = vst [vmem:[#allocation2] sm:$0xff] %v547
      %v549 = vld [vmem:[#allocation2] sm:$0xff]
      %v550 = vld [vmem:[%s2] sm:$0x1]
      %v552 = vperm.slane %v550, 0
      %v554 = vadd.f32 %v549, %v552
      %v555 = vmax.f32 %v554, 0.0
      %v556 = vpack.c.bf16 %v555, %v555
      %557 = vst [vmem:[%s188] sm:$0xf] %v556
      %p558 = scmp.lt.s32.totalorder %s18, 1
      %s559 = scalar_select %p558, %s18, 1
      %p560 = scmp.lt.s32.totalorder %s19, 0
      %s561 = scalar_select %p560, %s19, 0
      %s562 = sadd.s32 %s561, %s559
      %s563 = smul.addr %s562, 4
      %s564 = scalar_lea.vmem %s3, %s563
      // Predicated region
      $region33: #{_forward_impl.28} parent=31 // pred_check
        %p565 = pneg %p114
      $region34: #{_forward_impl.28} parent=31 // pred_check_branch
        %567 = sbr.rel (%p565) target = $region36
      $region35: #{_forward_impl.28} parent=31 // pred_region
        _
      $region36: #{_forward_impl.28} parent=31 // pred_fallthru
        _
    $region32: #{_forward_impl.28} parent=5 // pred_fallthru
      _
    %p568 = scmp.le.s32.totalorder 2, %s9
    // Predicated region
    $region37: #{_forward_impl.28} parent=5 // pred_check
      %p569 = pneg %p568
    $region38: #{_forward_impl.28} parent=5 // pred_check_branch
      %571 = sbr.rel (%p569) target = $region40
    $region39: #{_forward_impl.28} parent=5 // pred_region
      %s572 = ssub.s32 %s9, 2
      // Predicated region
      $region41: #{_forward_impl.28} parent=39 // pred_check
        %p573 = pneg %p120
      $region42: #{_forward_impl.28} parent=39 // pred_check_branch
        %575 = sbr.rel (%p573) target = $region44
      $region43: #{_forward_impl.28} parent=39 // pred_region
        %p576 = scmp.lt.s32.totalorder %s20, 1
        %s577 = scalar_select %p576, %s20, 1
        %p578 = scmp.lt.s32.totalorder %s21, 0
        %s579 = scalar_select %p578, %s21, 0
        %s580 = sadd.s32 %s579, %s577
        %s581 = smul.addr %s580, 4
        %s582 = scalar_lea.vmem %s3, %s581
      $region44: #{_forward_impl.28} parent=39 // pred_fallthru
        _
    $region40: #{_forward_impl.28} parent=5 // pred_fallthru
      _
  $region6: #{_forward_impl.28} parent=0 // loop_footer
    %s13 = sadd.s32 1, %s9
  $region7: #{_forward_impl.28} parent=0 // loop_footer_branch
    %8 = sbr.rel target = $region3
  $region8: #{_forward_impl.28} parent=0 // loop_exit
    _

</llo_original>
